<compile_context>
chip_gen: v7x
topology: tpu7x:2x2x1
jax: 0.10.0
libtpu: 0.0.40
codegen_flags: <defaults>
</compile_context>

<pallas_src>
import functools
from math import sqrt

import jax
import jax.numpy as jnp
from jax import lax
from jax.experimental import pallas as pl
from jax.experimental.pallas import tpu as pltpu

_MASK_VALUE = -0.7 * float(jnp.finfo(jnp.float32).max)


# ---------------------------------------------------------------------------
# Kernels
# ---------------------------------------------------------------------------
def _ds_flash_kernel(tau_ref, q_ref, k_ref, v_ref, delta_ref, o_ref,
                     m_ref, l_ref, acc_ref,
                     *, mask_flag, lblk, kblk, exp_dtype):
    """One (batch, head-tile, L-tile, KV-tile) step with online softmax.

    tau_ref   : SMEM (B, 1)              f32, holds scale * tau[b]
    q_ref     : VMEM (1, hblk, lblk, E)  native dtype
    k_ref     : VMEM (1, hblk, kblk, E)  native dtype
    v_ref     : VMEM (1, hblk, kblk, D)  native dtype
    delta_ref : VMEM (1, 1, kblk)        f32, holds scale * delta[b, kv-tile]
    o_ref     : VMEM (1, hblk, lblk, D)  written on the last KV tile
    m/l/acc   : VMEM f32 scratch for the online softmax.
    """
    b = pl.program_id(0)
    lt = pl.program_id(2)
    kt = pl.program_id(3)
    n_kt = pl.num_programs(3)

    @pl.when(kt == 0)
    def _init():
        m_ref[...] = jnp.full(m_ref.shape, _MASK_VALUE, m_ref.dtype)
        l_ref[...] = jnp.zeros(l_ref.shape, l_ref.dtype)
        acc_ref[...] = jnp.zeros(acc_ref.shape, acc_ref.dtype)

    def _update():
        q = q_ref[0]                     # (hblk, lblk, E)
        k = k_ref[0]                     # (hblk, kblk, E)
        v = v_ref[0]                     # (hblk, kblk, D)
        tau_scale = tau_ref[b, 0]        # scalar: scale * tau[b]

        # scores = (q . k^T) * (scale*tau) + scale*delta   (f32 accumulation)
        s = jnp.einsum('hle,hse->hls', q, k,
                       preferred_element_type=jnp.float32)
        s = s * tau_scale + delta_ref[...]               # (1,1,kblk) broadcast

        if mask_flag:
            row = lt * lblk + lax.broadcasted_iota(jnp.int32, s.shape, 1)
            col = kt * kblk + lax.broadcasted_iota(jnp.int32, s.shape, 2)
            keep = col <= row
            s = jnp.where(keep, s, _MASK_VALUE)

        m_prev = m_ref[...]
        m_new = jnp.maximum(m_prev, jnp.max(s, axis=-1, keepdims=True))
        alpha = jnp.exp(m_prev - m_new)
        p = jnp.exp((s - m_new).astype(exp_dtype))
        if mask_flag:
            # Guard fully-masked rows: exp(MASK - MASK) == 1 would be wrong.
            p = jnp.where(keep, p, jnp.zeros_like(p))

        l_ref[...] = alpha * l_ref[...] + jnp.sum(
            p.astype(jnp.float32), axis=-1, keepdims=True)
        acc_ref[...] = alpha * acc_ref[...] + jnp.einsum(
            'hls,hsd->hld', p.astype(v.dtype), v,
            preferred_element_type=jnp.float32)
        m_ref[...] = m_new

    if mask_flag:
        # Causal block skipping: KV tile is fully masked when its first key
        # column lies beyond the last query row of this L tile.
        @pl.when(kt * kblk <= lt * lblk + (lblk - 1))
        def _():
            _update()
    else:
        _update()

    @pl.when(kt == n_kt - 1)
    def _finalize():
        inv_l = pl.reciprocal(l_ref[...], approx=True)
        o_ref[0] = (acc_ref[...] * inv_l).astype(o_ref.dtype)


def _ds_full_kernel(tau_ref, q_ref, k_ref, v_ref, delta_ref, o_ref, a_ref,
                    *, mask_flag, lblk, exp_dtype):
    """Full-S step (output_attention=True): also writes the attention matrix."""
    b = pl.program_id(0)
    lt = pl.program_id(2)

    q = q_ref[0]                         # (hblk, lblk, E)
    k = k_ref[0]                         # (hblk, S, E)
    v = v_ref[0]                         # (hblk, S, D)
    tau_scale = tau_ref[b, 0]

    s = jnp.einsum('hle,hse->hls', q, k, preferred_element_type=jnp.float32)
    s = s * tau_scale + delta_ref[...]                   # (1,1,S) broadcast

    if mask_flag:
        row = lt * lblk + lax.broadcasted_iota(jnp.int32, s.shape, 1)
        col = lax.broadcasted_iota(jnp.int32, s.shape, 2)
        s = jnp.where(col <= row, s, _MASK_VALUE)

    m = jnp.max(s, axis=-1, keepdims=True)
    e = jnp.exp((s - m).astype(exp_dtype)).astype(jnp.float32)
    denom = jnp.sum(e, axis=-1, keepdims=True)
    attn = e * pl.reciprocal(denom, approx=True)

    a_ref[0] = attn.astype(a_ref.dtype)
    o_ref[0] = jnp.einsum('hls,hsd->hld', attn.astype(v.dtype), v,
                          preferred_element_type=jnp.float32).astype(o_ref.dtype)


# ---------------------------------------------------------------------------
# VMEM-aware tile selection
# ---------------------------------------------------------------------------
def _round_up(x, m):
    return (x + m - 1) // m * m


def _padded_bytes(shape, itemsize):
    """Conservative VMEM footprint: pad last two dims to (8, 128)."""
    if len(shape) < 2:
        n = int(shape[0]) if shape else 1
        return _round_up(n * itemsize, 512)
    lead = 1
    for d in shape[:-2]:
        lead *= int(d)
    return (lead * _round_up(int(shape[-2]), 8)
            * _round_up(int(shape[-1]), 128) * itemsize)


def _vmem_capacity_bytes():
    try:
        cap = getattr(pltpu.get_tpu_info(), "vmem_capacity_bytes", None)
        if cap:
            return int(cap)
    except Exception:
        pass
    return 64 * 1024 * 1024          # conservative fallback (v7x per-core VMEM)


def _vmem_limit_bytes(capacity):
    # v5e/v6e (128 MiB physical): ~100 MiB.  v7x (64 MiB physical): 48 MiB.
    return max(32 * 1024 * 1024,
               min(capacity - 16 * 1024 * 1024, 100 * 1024 * 1024))


_L_CANDS = (1024, 512, 256, 128, 64, 32, 16, 8)
_K_CANDS = (1024, 512, 256, 128)     # delta block needs lane dim %128 (or ==S)


def _divisor_candidates(n, cands):
    out = [c for c in cands if n % c == 0]
    return out if out else [n]


def _flash_vmem_need(hblk, lblk, kblk, E, D, isz, osz):
    q = _padded_bytes((hblk, lblk, E), isz)
    k = _padded_bytes((hblk, kblk, E), isz)
    v = _padded_bytes((hblk, kblk, D), isz)
    o = _padded_bytes((hblk, lblk, D), osz)
    dl = _padded_bytes((1, 1, kblk), 4)
    scratch = (2 * _padded_bytes((hblk, lblk, 1), 4)
               + _padded_bytes((hblk, lblk, D), 4))
    live = 3 * _padded_bytes((hblk, lblk, kblk), 4)      # score intermediates
    return 2 * (q + k + v + o + dl) + scratch + live


def _full_vmem_need(hblk, lblk, S, E, D, isz, osz, asz):
    q = _padded_bytes((hblk, lblk, E), isz)
    k = _padded_bytes((hblk, S, E), isz)
    v = _padded_bytes((hblk, S, D), isz)
    o = _padded_bytes((hblk, lblk, D), osz)
    a = _padded_bytes((hblk, lblk, S), asz)
    dl = _padded_bytes((1, 1, S), 4)
    live = 3 * _padded_bytes((hblk, lblk, S), 4)
    return 2 * (q + k + v + o + a + dl) + live


def _choose_flash_blocks(H, L, S, E, D, isz, osz, budget):
    h_cands = [h for h in range(H, 0, -1) if H % h == 0]
    l_cands = _divisor_candidates(L, _L_CANDS)
    k_cands = _divisor_candidates(S, _K_CANDS)
    best = None
    for hblk in h_cands:
        for lblk in l_cands:
            for kblk in k_cands:
                if _flash_vmem_need(hblk, lblk, kblk, E, D, isz, osz) <= budget:
                    key = (hblk * lblk * kblk, kblk, lblk, hblk)
                    if best is None or key > best[0]:
                        best = (key, (hblk, lblk, kblk))
    if best is None:                 # nothing fits -- take the smallest tiles
        return 1, l_cands[-1], k_cands[-1]
    return best[1]


def _choose_full_blocks(H, L, S, E, D, isz, osz, asz, budget):
    h_cands = [h for h in range(H, 0, -1) if H % h == 0]
    l_cands = _divisor_candidates(L, _L_CANDS)
    best = None
    for hblk in h_cands:
        for lblk in l_cands:
            if _full_vmem_need(hblk, lblk, S, E, D, isz, osz, asz) <= budget:
                key = (hblk * lblk, hblk, lblk)
                if best is None or key > best[0]:
                    best = (key, (hblk, lblk))
    if best is None:
        return 1, l_cands[-1]
    return best[1]


# ---------------------------------------------------------------------------
# Wrapper
# ---------------------------------------------------------------------------
def ds_attention(queries, keys, values, attn_mask=None, tau=None, delta=None,
                 *, mask_flag=True, scale=None, output_attention=False,
                 block_h=None, block_l=None, block_k=None):
    """Pallas forward pass matching DSAttention.forward (eval mode)."""
    if mask_flag and attn_mask is not None:
        raise NotImplementedError(
            "only the default TriangularCausalMask path is supported")

    B, L, H, E = queries.shape
    _, S, _, D = values.shape
    scale = float(scale) if scale is not None else 1.0 / float(sqrt(E))

    # Fold `scale` into tau/delta:
    #   softmax(scale*(qk*tau + delta)) == softmax(qk*(scale*tau) + scale*delta)
    if tau is None:
        tau_s = jnp.full((B, 1), scale, jnp.float32)
    else:
        tau_s = scale * jnp.asarray(tau, jnp.float32).reshape(B, 1)
    if delta is None:
        delta_s = jnp.zeros((B, 1, S), jnp.float32)
    else:
        delta_s = scale * jnp.asarray(delta, jnp.float32).reshape(B, 1, S)

    # Head-major layout so one grid step drives hblk batch-leading MXU matmuls.
    q = jnp.transpose(queries, (0, 2, 1, 3))     # (B, H, L, E)
    k = jnp.transpose(keys,    (0, 2, 1, 3))     # (B, H, S, E)
    v = jnp.transpose(values,  (0, 2, 1, 3))     # (B, H, S, D)

    out_dtype = queries.dtype
    a_dtype = queries.dtype                      # A in input precision
    exp_dtype = jnp.bfloat16 if queries.dtype == jnp.bfloat16 else jnp.float32
    isz = jnp.dtype(q.dtype).itemsize
    osz = jnp.dtype(out_dtype).itemsize
    asz = jnp.dtype(a_dtype).itemsize

    capacity = _vmem_capacity_bytes()
    vmem_limit = _vmem_limit_bytes(capacity)
    budget = int(0.9 * vmem_limit)

    tau_spec = pl.BlockSpec(memory_space=pltpu.MemorySpace.SMEM)

    if output_attention:
        hblk, lblk = _choose_full_blocks(H, L, S, E, D, isz, osz, asz, budget)
        hblk = block_h or hblk
        lblk = block_l or lblk
        assert H % hblk == 0 and L % lblk == 0
        grid = (B, H // hblk, L // lblk)
        kernel = functools.partial(_ds_full_kernel, mask_flag=mask_flag,
                                   lblk=lblk, exp_dtype=exp_dtype)
        in_specs = [
            tau_spec,
            pl.BlockSpec((1, hblk, lblk, E), lambda b, h, lt: (b, h, lt, 0)),
            pl.BlockSpec((1, hblk, S, E),    lambda b, h, lt: (b, h, 0, 0)),
            pl.BlockSpec((1, hblk, S, D),    lambda b, h, lt: (b, h, 0, 0)),
            pl.BlockSpec((1, 1, S),          lambda b, h, lt: (b, 0, 0)),
        ]
        out_shape = (jax.ShapeDtypeStruct((B, H, L, D), out_dtype),
                     jax.ShapeDtypeStruct((B, H, L, S), a_dtype))
        out_specs = (
            pl.BlockSpec((1, hblk, lblk, D), lambda b, h, lt: (b, h, lt, 0)),
            pl.BlockSpec((1, hblk, lblk, S), lambda b, h, lt: (b, h, lt, 0)))
        out_bhld, attn_out = pl.pallas_call(
            kernel, out_shape=out_shape, grid=grid,
            in_specs=in_specs, out_specs=out_specs,
            compiler_params=pltpu.CompilerParams(
                dimension_semantics=("parallel", "parallel", "arbitrary"),
                vmem_limit_bytes=vmem_limit),
        )(tau_s, q, k, v, delta_s)
    else:
        hblk, lblk, kblk = _choose_flash_blocks(H, L, S, E, D, isz, osz, budget)
        hblk = block_h or hblk
        lblk = block_l or lblk
        kblk = block_k or kblk
        assert H % hblk == 0 and L % lblk == 0 and S % kblk == 0
        grid = (B, H // hblk, L // lblk, S // kblk)
        kernel = functools.partial(_ds_flash_kernel, mask_flag=mask_flag,
                                   lblk=lblk, kblk=kblk, exp_dtype=exp_dtype)
        in_specs = [
            tau_spec,
            pl.BlockSpec((1, hblk, lblk, E), lambda b, h, lt, kt: (b, h, lt, 0)),
            pl.BlockSpec((1, hblk, kblk, E), lambda b, h, lt, kt: (b, h, kt, 0)),
            pl.BlockSpec((1, hblk, kblk, D), lambda b, h, lt, kt: (b, h, kt, 0)),
            pl.BlockSpec((1, 1, kblk),       lambda b, h, lt, kt: (b, 0, kt)),
        ]
        out_shape = jax.ShapeDtypeStruct((B, H, L, D), out_dtype)
        out_specs = pl.BlockSpec((1, hblk, lblk, D),
                                 lambda b, h, lt, kt: (b, h, lt, 0))
        scratch_shapes = [
            pltpu.VMEM((hblk, lblk, 1), jnp.float32),    # running max
            pltpu.VMEM((hblk, lblk, 1), jnp.float32),    # running denom
            pltpu.VMEM((hblk, lblk, D), jnp.float32),    # output accumulator
        ]
        out_bhld = pl.pallas_call(
            kernel, out_shape=out_shape, grid=grid,
            in_specs=in_specs, out_specs=out_specs,
            scratch_shapes=scratch_shapes,
            compiler_params=pltpu.CompilerParams(
                # L/KV axes "arbitrary": a v7x megacore shards over B/H and
                # does not re-fetch the same K/V blocks on both cores.
                dimension_semantics=("parallel", "parallel",
                                     "arbitrary", "arbitrary"),
                vmem_limit_bytes=vmem_limit),
        )(tau_s, q, k, v, delta_s)
        attn_out = None

    V = jnp.transpose(out_bhld, (0, 2, 1, 3))    # (B, L, H, D), torch 'blhd'
    return V, attn_out


# ---------------------------------------------------------------------------
# Pure-JAX reference (mirrors the PyTorch forward, eval mode)
# ---------------------------------------------------------------------------
def _ds_attention_ref(queries, keys, values, tau, delta, mask_flag, scale):
    B, L, H, E = queries.shape
    _, S, _, D = values.shape
    scale = scale if scale is not None else 1.0 / sqrt(E)
    t = 1.0 if tau is None else jnp.asarray(tau, jnp.float32).reshape(B, 1, 1, 1)
    d = 0.0 if delta is None else jnp.asarray(delta, jnp.float32).reshape(B, 1, 1, S)
    scores = jnp.einsum('blhe,bshe->bhls',
                        queries.astype(jnp.float32),
                        keys.astype(jnp.float32)) * t + d
    if mask_flag:
        mask = jnp.triu(jnp.ones((L, S), bool), k=1)
        scores = jnp.where(mask[None, None], -jnp.inf, scores)
    A = jax.nn.softmax(scale * scores, axis=-1)
    V = jnp.einsum('bhls,bshd->blhd', A, values.astype(jnp.float32))
    return V, A


if __name__ == "__main__":
    B, H, E, D = 2, 4, 32, 32
    L = S = 256

    key = jax.random.PRNGKey(0)
    kq, kk, kv, kt_, kd = jax.random.split(key, 5)
    queries = jax.random.normal(kq, (B, L, H, E), jnp.float32)
    keys_   = jax.random.normal(kk, (B, S, H, E), jnp.float32)
    values  = jax.random.normal(kv, (B, S, H, D), jnp.float32)
    tau     = jax.nn.softplus(jax.random.normal(kt_, (B, 1), jnp.float32)) + 0.5
    delta   = 0.1 * jax.random.normal(kd, (B, S), jnp.float32)

    # Tolerances sized for the approximate (EUP vrcp) softmax reciprocal.
    TOL = dict(atol=2e-2, rtol=2e-2)

    V_ref, A_ref = _ds_attention_ref(queries, keys_, values, tau, delta,
                                     mask_flag=True, scale=None)

    # Path 1: causal flash path, forced multi-tile L/KV grid -> exercises the
    # online softmax accumulation and causal block skipping.
    V1, A1 = ds_attention(queries, keys_, values, None, tau, delta,
                          mask_flag=True, output_attention=False,
                          block_l=128, block_k=128)
    V1 = jax.block_until_ready(V1)
    assert V1.shape == (B, L, H, D) and A1 is None
    assert jnp.allclose(V1, V_ref, **TOL), "V (flash causal) mismatch"

    # Path 2: causal flash path with automatic (VMEM-budgeted) tiles.
    V2, _ = ds_attention(queries, keys_, values, None, tau, delta,
                         mask_flag=True, output_attention=False)
    V2 = jax.block_until_ready(V2)
    assert jnp.allclose(V2, V_ref, **TOL), "V (flash causal, auto tiles) mismatch"

    # Path 3: output_attention=True (full-S kernel, A written to HBM).
    V3, A3 = ds_attention(queries, keys_, values, None, tau, delta,
                          mask_flag=True, output_attention=True, block_l=128)
    V3 = jax.block_until_ready(V3)
    A3 = jax.block_until_ready(A3)
    assert A3.shape == (B, H, L, S)
    assert jnp.allclose(V3, V_ref, **TOL), "V (full path) mismatch"
    assert jnp.allclose(A3, A_ref, **TOL), "A mismatch"

    # Path 4: non-causal cross-attention (L != S), no tau/delta.
    L2 = 128
    q2 = queries[:, :L2]
    V4, _ = ds_attention(q2, keys_, values, None, None, None,
                         mask_flag=False, output_attention=False,
                         block_l=64, block_k=128)
    V4 = jax.block_until_ready(V4)
    V4_ref, _ = _ds_attention_ref(q2, keys_, values, None, None,
                                  mask_flag=False, scale=None)
    assert jnp.allclose(V4, V4_ref, **TOL), "V (cross, no mask) mismatch"

    print("KERNEL_OK")
</pallas_src>

<mosaic_0001>
module attributes {stable_mosaic.version = 11 : i64} {
  func.func @_ds_flash_kernel(%arg0: i32, %arg1: i32, %arg2: i32, %arg3: i32, %arg4: memref<2x1xf32, #tpu.memory_space<smem>>, %arg5: memref<1x4x128x32xf32, #tpu.memory_space<vmem>>, %arg6: memref<1x4x128x32xf32, #tpu.memory_space<vmem>>, %arg7: memref<1x4x128x32xf32, #tpu.memory_space<vmem>>, %arg8: memref<1x1x128xf32, #tpu.memory_space<vmem>>, %arg9: memref<1x4x128x32xf32, #tpu.memory_space<vmem>>, %arg10: memref<4x128x1xf32, #tpu.memory_space<vmem>>, %arg11: memref<4x128x1xf32, #tpu.memory_space<vmem>>, %arg12: memref<4x128x32xf32, #tpu.memory_space<vmem>>) attributes {dimension_semantics = [#tpu.dimension_semantics<parallel>, #tpu.dimension_semantics<parallel>, #tpu.dimension_semantics<arbitrary>, #tpu.dimension_semantics<arbitrary>], iteration_bounds = array<i64: 2, 1, 2, 2>, scalar_prefetch = 0 : i64, scratch_operands = 3 : i64, tpu.core_type = #tpu.core_type<tc>, window_params = [{transform_indices = @transform_0, window_bounds = array<i64: 2, 1>}, {transform_indices = @transform_1, window_bounds = array<i64: 1, 4, 128, 32>}, {transform_indices = @transform_2, window_bounds = array<i64: 1, 4, 128, 32>}, {transform_indices = @transform_3, window_bounds = array<i64: 1, 4, 128, 32>}, {transform_indices = @transform_4, window_bounds = array<i64: 1, 1, 128>}, {transform_indices = @transform_5, window_bounds = array<i64: 1, 4, 128, 32>}]} {
    %c0_i32 = arith.constant 0 : i32
    %0 = arith.cmpi eq, %arg3, %c0_i32 : i32
    %1 = arith.extui %0 : i1 to i32
    %c0_i32_0 = arith.constant 0 : i32
    %2 = arith.cmpi ne, %1, %c0_i32_0 : i32
    scf.if %2 {
      %cst = arith.constant -2.38197633E+38 : f32
      %12 = vector.broadcast %cst : f32 to vector<4x128x1xf32>
      %c0 = arith.constant 0 : index
      %c0_4 = arith.constant 0 : index
      %c0_5 = arith.constant 0 : index
      %13 = vector.load %arg10[%c0, %c0_4, %c0_5] : memref<4x128x1xf32, #tpu.memory_space<vmem>>, vector<4x128x1xf32>
      tpu.vector_store %arg10[%c0, %c0_4, %c0_5], %12 {strides = array<i32>} : memref<4x128x1xf32, #tpu.memory_space<vmem>>, vector<4x128x1xf32>,
      %cst_6 = arith.constant 0.000000e+00 : f32
      %14 = vector.broadcast %cst_6 : f32 to vector<4x128x1xf32>
      %c0_7 = arith.constant 0 : index
      %c0_8 = arith.constant 0 : index
      %c0_9 = arith.constant 0 : index
      %15 = vector.load %arg11[%c0_7, %c0_8, %c0_9] : memref<4x128x1xf32, #tpu.memory_space<vmem>>, vector<4x128x1xf32>
      tpu.vector_store %arg11[%c0_7, %c0_8, %c0_9], %14 {strides = array<i32>} : memref<4x128x1xf32, #tpu.memory_space<vmem>>, vector<4x128x1xf32>,
      %cst_10 = arith.constant 0.000000e+00 : f32
      %16 = vector.broadcast %cst_10 : f32 to vector<4x128x32xf32>
      %c0_11 = arith.constant 0 : index
      %c0_12 = arith.constant 0 : index
      %c0_13 = arith.constant 0 : index
      %17 = vector.load %arg12[%c0_11, %c0_12, %c0_13] : memref<4x128x32xf32, #tpu.memory_space<vmem>>, vector<4x128x32xf32>
      tpu.vector_store %arg12[%c0_11, %c0_12, %c0_13], %16 {strides = array<i32>} : memref<4x128x32xf32, #tpu.memory_space<vmem>>, vector<4x128x32xf32>,
    } else {
    }
    %c128_i32 = arith.constant 128 : i32
    %3 = arith.muli %arg3, %c128_i32 : i32
    %c128_i32_1 = arith.constant 128 : i32
    %4 = arith.muli %arg2, %c128_i32_1 : i32
    %c127_i32 = arith.constant 127 : i32
    %5 = arith.addi %4, %c127_i32 : i32
    %6 = arith.cmpi sle, %3, %5 : i32
    %7 = arith.extui %6 : i1 to i32
    %c0_i32_2 = arith.constant 0 : i32
    %8 = arith.cmpi ne, %7, %c0_i32_2 : i32
    scf.if %8 {
      %c0 = arith.constant 0 : index
      %c0_4 = arith.constant 0 : index
      %c0_5 = arith.constant 0 : index
      %c0_6 = arith.constant 0 : index
      %12 = vector.load %arg5[%c0, %c0_4, %c0_5, %c0_6] : memref<1x4x128x32xf32, #tpu.memory_space<vmem>>, vector<1x4x128x32xf32>
      %13 = vector.shape_cast %12 : vector<1x4x128x32xf32> to vector<4x128x32xf32>
      %c0_7 = arith.constant 0 : index
      %c0_8 = arith.constant 0 : index
      %c0_9 = arith.constant 0 : index
      %c0_10 = arith.constant 0 : index
      %14 = vector.load %arg6[%c0_7, %c0_8, %c0_9, %c0_10] : memref<1x4x128x32xf32, #tpu.memory_space<vmem>>, vector<1x4x128x32xf32>
      %15 = vector.shape_cast %14 : vector<1x4x128x32xf32> to vector<4x128x32xf32>
      %c0_11 = arith.constant 0 : index
      %c0_12 = arith.constant 0 : index
      %c0_13 = arith.constant 0 : index
      %c0_14 = arith.constant 0 : index
      %16 = vector.load %arg7[%c0_11, %c0_12, %c0_13, %c0_14] : memref<1x4x128x32xf32, #tpu.memory_space<vmem>>, vector<1x4x128x32xf32>
      %17 = vector.shape_cast %16 : vector<1x4x128x32xf32> to vector<4x128x32xf32>
      %18 = arith.index_cast %arg0 : i32 to index
      %c0_15 = arith.constant 0 : index
      %19 = memref.load %arg4[%18, %c0_15] : memref<2x1xf32, #tpu.memory_space<smem>>
      "tpu.trace_start"() <{level = 10 : i32, message = "hle,hse->hls"}> : () -> ()
      %cst = arith.constant dense<0.000000e+00> : vector<4x128x128xf32>
      %20 = tpu.matmul %13, %15, %cst {dimension_numbers = #tpu.dot_dimension_numbers<[2], [2], [1], [1], [0, 0, 0, 1, 1, 1], [0], [0]>} : vector<4x128x32xf32>, vector<4x128x32xf32>, vector<4x128x128xf32> -> vector<4x128x128xf32>
      "tpu.trace_stop"() : () -> ()
      %21 = vector.broadcast %19 : f32 to vector<4x128x128xf32>
      %22 = arith.mulf %20, %21 : vector<4x128x128xf32>
      %c0_16 = arith.constant 0 : index
      %c0_17 = arith.constant 0 : index
      %c0_18 = arith.constant 0 : index
      %23 = vector.load %arg8[%c0_16, %c0_17, %c0_18] : memref<1x1x128xf32, #tpu.memory_space<vmem>>, vector<1x1x128xf32>
      %24 = vector.broadcast %23 : vector<1x1x128xf32> to vector<4x128x128xf32>
      %25 = arith.addf %22, %24 : vector<4x128x128xf32>
      %c128_i32_19 = arith.constant 128 : i32
      %26 = arith.muli %arg2, %c128_i32_19 : i32
      %27 = tpu.iota {dimensions = array<i32: 1>} : vector<4x128x128xi32>
      %28 = vector.broadcast %26 : i32 to vector<4x128x128xi32>
      %29 = arith.addi %28, %27 : vector<4x128x128xi32>
      %c128_i32_20 = arith.constant 128 : i32
      %30 = arith.muli %arg3, %c128_i32_20 : i32
      %31 = tpu.iota {dimensions = array<i32: 2>} : vector<4x128x128xi32>
      %32 = vector.broadcast %30 : i32 to vector<4x128x128xi32>
      %33 = arith.addi %32, %31 : vector<4x128x128xi32>
      %34 = arith.cmpi sle, %33, %29 : vector<4x128x128xi32>
      %cst_21 = arith.constant -2.38197633E+38 : f32
      %35 = vector.broadcast %cst_21 : f32 to vector<4x128x128xf32>
      %36 = arith.select %34, %25, %35 : vector<4x128x128xi1>, vector<4x128x128xf32>
      %c0_22 = arith.constant 0 : index
      %c0_23 = arith.constant 0 : index
      %c0_24 = arith.constant 0 : index
      %37 = vector.load %arg10[%c0_22, %c0_23, %c0_24] : memref<4x128x1xf32, #tpu.memory_space<vmem>>, vector<4x128x1xf32>
      %cst_25 = arith.constant dense<0xFF800000> : vector<4x128xf32>
      %38 = vector.multi_reduction <maximumf>, %36, %cst_25 [2] : vector<4x128x128xf32> to vector<4x128xf32>
      %39 = vector.shape_cast %38 : vector<4x128xf32> to vector<4x128x1xf32>
      %40 = arith.maximumf %37, %39 : vector<4x128x1xf32>
      %41 = arith.subf %37, %40 : vector<4x128x1xf32>
      %42 = math.exp %41 : vector<4x128x1xf32>
      %43 = vector.broadcast %40 : vector<4x128x1xf32> to vector<4x128x128xf32>
      %44 = arith.subf %36, %43 : vector<4x128x128xf32>
      %45 = math.exp %44 : vector<4x128x128xf32>
      %cst_26 = arith.constant 0.000000e+00 : f32
      %46 = vector.broadcast %cst_26 : f32 to vector<4x128x128xf32>
      %47 = arith.select %34, %45, %46 : vector<4x128x128xi1>, vector<4x128x128xf32>
      %c0_27 = arith.constant 0 : index
      %c0_28 = arith.constant 0 : index
      %c0_29 = arith.constant 0 : index
      %48 = vector.load %arg11[%c0_27, %c0_28, %c0_29] : memref<4x128x1xf32, #tpu.memory_space<vmem>>, vector<4x128x1xf32>
      %49 = arith.mulf %42, %48 : vector<4x128x1xf32>
      %cst_30 = arith.constant dense<0.000000e+00> : vector<4x128xf32>
      %50 = vector.multi_reduction <add>, %47, %cst_30 [2] : vector<4x128x128xf32> to vector<4x128xf32>
      %51 = vector.shape_cast %50 : vector<4x128xf32> to vector<4x128x1xf32>
      %52 = arith.addf %49, %51 : vector<4x128x1xf32>
      %c0_31 = arith.constant 0 : index
      %c0_32 = arith.constant 0 : index
      %c0_33 = arith.constant 0 : index
      %53 = vector.load %arg11[%c0_31, %c0_32, %c0_33] : memref<4x128x1xf32, #tpu.memory_space<vmem>>, vector<4x128x1xf32>
      tpu.vector_store %arg11[%c0_31, %c0_32, %c0_33], %52 {strides = array<i32>} : memref<4x128x1xf32, #tpu.memory_space<vmem>>, vector<4x128x1xf32>,
      %c0_34 = arith.constant 0 : index
      %c0_35 = arith.constant 0 : index
      %c0_36 = arith.constant 0 : index
      %54 = vector.load %arg12[%c0_34, %c0_35, %c0_36] : memref<4x128x32xf32, #tpu.memory_space<vmem>>, vector<4x128x32xf32>
      %55 = vector.broadcast %42 : vector<4x128x1xf32> to vector<4x128x32xf32>
      %56 = arith.mulf %55, %54 : vector<4x128x32xf32>
      "tpu.trace_start"() <{level = 10 : i32, message = "hls,hsd->hld"}> : () -> ()
      %cst_37 = arith.constant dense<0.000000e+00> : vector<4x128x32xf32>
      %57 = tpu.matmul %47, %17, %cst_37 {dimension_numbers = #tpu.dot_dimension_numbers<[2], [1], [1], [2], [0, 0, 0, 1, 1, 2], [0], [0]>} : vector<4x128x128xf32>, vector<4x128x32xf32>, vector<4x128x32xf32> -> vector<4x128x32xf32>
      "tpu.trace_stop"() : () -> ()
      %58 = arith.addf %56, %57 : vector<4x128x32xf32>
      %c0_38 = arith.constant 0 : index
      %c0_39 = arith.constant 0 : index
      %c0_40 = arith.constant 0 : index
      %59 = vector.load %arg12[%c0_38, %c0_39, %c0_40] : memref<4x128x32xf32, #tpu.memory_space<vmem>>, vector<4x128x32xf32>
      tpu.vector_store %arg12[%c0_38, %c0_39, %c0_40], %58 {strides = array<i32>} : memref<4x128x32xf32, #tpu.memory_space<vmem>>, vector<4x128x32xf32>,
      %c0_41 = arith.constant 0 : index
      %c0_42 = arith.constant 0 : index
      %c0_43 = arith.constant 0 : index
      %60 = vector.load %arg10[%c0_41, %c0_42, %c0_43] : memref<4x128x1xf32, #tpu.memory_space<vmem>>, vector<4x128x1xf32>
      tpu.vector_store %arg10[%c0_41, %c0_42, %c0_43], %40 {strides = array<i32>} : memref<4x128x1xf32, #tpu.memory_space<vmem>>, vector<4x128x1xf32>,
    } else {
    }
    %c1_i32 = arith.constant 1 : i32
    %9 = arith.cmpi eq, %arg3, %c1_i32 : i32
    %10 = arith.extui %9 : i1 to i32
    %c0_i32_3 = arith.constant 0 : i32
    %11 = arith.cmpi ne, %10, %c0_i32_3 : i32
    scf.if %11 {
      %c0 = arith.constant 0 : index
      %c0_4 = arith.constant 0 : index
      %c0_5 = arith.constant 0 : index
      %12 = vector.load %arg11[%c0, %c0_4, %c0_5] : memref<4x128x1xf32, #tpu.memory_space<vmem>>, vector<4x128x1xf32>
      %13 = tpu.reciprocal %12 {approx = true} : vector<4x128x1xf32> -> vector<4x128x1xf32>
      %c0_6 = arith.constant 0 : index
      %c0_7 = arith.constant 0 : index
      %c0_8 = arith.constant 0 : index
      %14 = vector.load %arg12[%c0_6, %c0_7, %c0_8] : memref<4x128x32xf32, #tpu.memory_space<vmem>>, vector<4x128x32xf32>
      %15 = vector.broadcast %13 : vector<4x128x1xf32> to vector<4x128x32xf32>
      %16 = arith.mulf %14, %15 : vector<4x128x32xf32>
      %c0_9 = arith.constant 0 : index
      %c0_10 = arith.constant 0 : index
      %c0_11 = arith.constant 0 : index
      %c0_12 = arith.constant 0 : index
      %17 = vector.load %arg9[%c0_9, %c0_10, %c0_11, %c0_12] : memref<1x4x128x32xf32, #tpu.memory_space<vmem>>, vector<1x4x128x32xf32>
      %18 = vector.shape_cast %17 : vector<1x4x128x32xf32> to vector<4x128x32xf32>
      %19 = vector.shape_cast %16 : vector<4x128x32xf32> to vector<1x4x128x32xf32>
      tpu.vector_store %arg9[%c0_9, %c0_10, %c0_11, %c0_12], %19 {strides = array<i32>} : memref<1x4x128x32xf32, #tpu.memory_space<vmem>>, vector<1x4x128x32xf32>,
    } else {
    }
    return
  }
  func.func @transform_0(%arg0: i32, %arg1: i32, %arg2: i32, %arg3: i32) -> (i32, i32) {
    %c0_i32 = arith.constant 0 : i32
    %c0_i32_0 = arith.constant 0 : i32
    %c0_i32_1 = arith.constant 0 : i32
    return %c0_i32, %c0_i32_0 : i32, i32
  }
  func.func @transform_1(%arg0: i32, %arg1: i32, %arg2: i32, %arg3: i32) -> (i32, i32, i32, i32) {
    %c0_i32 = arith.constant 0 : i32
    %c0_i32_0 = arith.constant 0 : i32
    return %arg0, %arg1, %arg2, %c0_i32 : i32, i32, i32, i32
  }
  func.func @transform_2(%arg0: i32, %arg1: i32, %arg2: i32, %arg3: i32) -> (i32, i32, i32, i32) {
    %c0_i32 = arith.constant 0 : i32
    %c0_i32_0 = arith.constant 0 : i32
    return %arg0, %arg1, %arg3, %c0_i32 : i32, i32, i32, i32
  }
  func.func @transform_3(%arg0: i32, %arg1: i32, %arg2: i32, %arg3: i32) -> (i32, i32, i32, i32) {
    %c0_i32 = arith.constant 0 : i32
    %c0_i32_0 = arith.constant 0 : i32
    return %arg0, %arg1, %arg3, %c0_i32 : i32, i32, i32, i32
  }
  func.func @transform_4(%arg0: i32, %arg1: i32, %arg2: i32, %arg3: i32) -> (i32, i32, i32) {
    %c0_i32 = arith.constant 0 : i32
    %c0_i32_0 = arith.constant 0 : i32
    return %arg0, %c0_i32, %arg3 : i32, i32, i32
  }
  func.func @transform_5(%arg0: i32, %arg1: i32, %arg2: i32, %arg3: i32) -> (i32, i32, i32, i32) {
    %c0_i32 = arith.constant 0 : i32
    %c0_i32_0 = arith.constant 0 : i32
    return %arg0, %arg1, %arg2, %c0_i32 : i32, i32, i32, i32
  }
}

</mosaic_0001>

<llo_original>
// kernel: tpu_custom_call.1
$region0: #{tpu_custom_call.1}
  #allocation0 [shape = 'u32[]', space=smem, size = 0x4, offset = 0x4, fixed_abs, tag = 'smem constant byte address 0x4 - core index']
  #allocation1 [shape = 'u32[144,128]{1,0:T(1,128)}', space=vmem, size = 0x12000, scoped, tag = 'internal scratch']
  #allocation2 [shape = 'f32[4,128,1]{2,1,0:T(8,128)}', space=vmem, size = 0x40000, scoped, tag = 'scratch operand']
  #allocation3 [shape = 'f32[4,128,1]{2,1,0:T(8,128)}', space=vmem, size = 0x40000, scoped, tag = 'scratch operand']
  #allocation4 [shape = 'f32[4,128,32]{2,1,0:T(8,128)}', space=vmem, size = 0x40000, scoped, tag = 'scratch operand']
  %s0 = inlined_call_operand.vmem [shape: f32[2,1], index: 0, kind: input, shape index: {}]
  %s1 = inlined_call_operand.vmem [shape: f32[2,4,256,32], index: 1, kind: input, shape index: {}]
  %s2 = inlined_call_operand.vmem [shape: f32[2,4,256,32], index: 2, kind: input, shape index: {}]
  %s3 = inlined_call_operand.vmem [shape: f32[2,4,256,32], index: 3, kind: input, shape index: {}]
  %s4 = inlined_call_operand.vmem [shape: f32[2,1,256], index: 4, kind: input, shape index: {}]
  %s5 = inlined_call_operand.vmem [shape: f32[2,4,256,32], index: 5, kind: output, shape index: {}]
  %s6 = sld [smem:[#allocation0]]
  $region217: #{tpu_custom_call.1} parent=0
    _
  %s8 = ssub.s32 1, %s6
  %s9 = scalar_select 0, %s8, %s6
  $region1: #{tpu_custom_call.1} parent=0
    #allocation5 [shape = 'u8[1024]{0}', space=smem, size = 0x400, scoped, tag = 'input window, operand 0, single buffered']
    #allocation6 [shape = 's32[2]{0}', space=sflag, size = 0x8, scoped, tag = 'scoped memory for tpu_custom_call.1']
    #allocation7 [shape = 'u8[524288]{0}', space=vmem, size = 0x80000, scoped, tag = 'input window, operand 1']
    #allocation8 [shape = 'u8[524288]{0}', space=vmem, size = 0x80000, scoped, tag = 'input window, operand 2']
    #allocation9 [shape = 'u8[524288]{0}', space=vmem, size = 0x80000, scoped, tag = 'input window, operand 3']
    #allocation10 [shape = 'u8[524288]{0}', space=vmem, size = 0x80000, scoped, tag = 'output window, operand 0']
    %10 = vsyncpa [#allocation6], 0
    loop: start=0, step=1, limit=10
    $region2: #{tpu_custom_call.1} parent=1 // loop_pre_header
      _
    $region3: #{tpu_custom_call.1} parent=1 // loop_header
      %s12 = sphi 0, %s16
      %p13 = scmp.ge.s32.totalorder %s12, 10
      %s19 = sphi 0, %s45
      %s20 = sphi 0, %s41
      %s21 = sphi 0, %s37
      %s22 = sphi 0, %s33
      %s23 = sphi 0, %s19
      %s24 = sphi 0, %s20
      %s25 = sphi 0, %s21
      %s26 = sphi 0, %s22
      %s27 = sphi 0, %s23
      %s28 = sphi 0, %s24
      %s29 = sphi 0, %s25
      %s30 = sphi 0, %s26
      %s46 = sphi 0, %s46
      %s48 = sphi 0, %s46
      %s49 = sphi 0, %s48
      %s63 = sphi 0, %s49
      %s73 = sphi 0, %s75
      %s76 = sphi 0, %s73
      %s77 = sphi 0, %s76
      %s93 = sphi 0, %s77
      %s103 = sphi 0, %s105
      %s106 = sphi 0, %s103
      %s107 = sphi 0, %s106
      %s123 = sphi 0, %s107
      %s133 = sphi 0, %s135
      %s136 = sphi 0, %s133
      %s137 = sphi 0, %s136
      %s153 = sphi 0, %s137
      %s161 = sphi 0, %s163
      %s164 = sphi 0, %s161
      %s165 = sphi 0, %s164
      %s181 = sphi 0, %s165
      %s191 = sphi 0, %s193
      %s194 = sphi 0, %s191
      %s195 = sphi 0, %s194
      %s211 = sphi 0, %s195
    $region4: #{tpu_custom_call.1} parent=1 // loop_header_branch
      %15 = sbr.rel (%p13) target = $region8
    $region5: #{tpu_custom_call.1} parent=1 // loop_body
      %s17 = ssub.s32 %s12, 1
      %s18 = ssub.s32 %s12, 2
      %s31 = sadd.s32 1, %s22
      %p32 = scmp.ge.s32.totalorder %s31, 2
      %s33 = scalar_select %p32, 0, %s31
      %s34 = sadd.s32 1, %s21
      %s35 = scalar_select %p32, %s34, %s21
      %p36 = scmp.ge.s32.totalorder %s35, 2
      %s37 = scalar_select %p36, 0, %s35
      %s38 = sadd.s32 1, %s20
      %s39 = scalar_select %p36, %s38, %s20
      %p40 = scmp.ge.s32.totalorder %s39, 1
      %s41 = scalar_select %p40, 0, %s39
      %s42 = sadd.s32 1, %s19
      %s43 = scalar_select %p40, %s42, %s19
      %p44 = scmp.ge.s32.totalorder %s43, 2
      %s45 = scalar_select %p44, 0, %s43
      %s47 = sadd.s32 %s46, 1
      %p50 = scmp.eq.s32.totalorder %s12, 7
      %p51 = scmp.ne.s32.totalorder %s46, %s48
      %p52 = scmp.eq.s32.totalorder %s12, 0
      %p53 = por %p51, %p52
      %p54 = scmp.ne.s32.totalorder %s46, %s48
      %p55 = scmp.eq.s32.totalorder %s17, 7
      %p56 = por %p54, %p55
      %p57 = scmp.ne.s32.totalorder %s48, %s49
      %p58 = scmp.eq.s32.totalorder %s17, 0
      %p59 = por %p57, %p58
      %p60 = scmp.ne.s32.totalorder %s48, %s49
      %p61 = scmp.eq.s32.totalorder %s18, 7
      %p62 = por %p60, %p61
      %p64 = scmp.ne.s32.totalorder %s49, %s63
      %p65 = scmp.eq.s32.totalorder %s18, 0
      %p66 = por %p64, %p65
      %s67 = ssub.s32 %s19, %s45
      %s68 = ssub.s32 %s20, %s41
      %s69 = sor.u32 %s67, %s68
      %s70 = ssub.s32 %s21, %s37
      %s71 = sor.u32 %s69, %s70
      %p72 = scmp.eq.s32.totalorder %s71, 0
      %s74 = sadd.s32 %s73, 1
      %s75 = scalar_select %p72, %s73, %s74
      %p78 = pneg %p72
      %p79 = scmp.eq.s32.totalorder %s12, 7
      %p80 = por %p78, %p79
      %p81 = scmp.ne.s32.totalorder %s73, %s76
      %p82 = scmp.eq.s32.totalorder %s12, 0
      %p83 = por %p81, %p82
      %p84 = scmp.ne.s32.totalorder %s73, %s76
      %p85 = scmp.eq.s32.totalorder %s17, 7
      %p86 = por %p84, %p85
      %p87 = scmp.ne.s32.totalorder %s76, %s77
      %p88 = scmp.eq.s32.totalorder %s17, 0
      %p89 = por %p87, %p88
      %p90 = scmp.ne.s32.totalorder %s76, %s77
      %p91 = scmp.eq.s32.totalorder %s18, 7
      %p92 = por %p90, %p91
      %p94 = scmp.ne.s32.totalorder %s77, %s93
      %p95 = scmp.eq.s32.totalorder %s18, 0
      %p96 = por %p94, %p95
      %s97 = ssub.s32 %s19, %s45
      %s98 = ssub.s32 %s20, %s41
      %s99 = sor.u32 %s97, %s98
      %s100 = ssub.s32 %s22, %s33
      %s101 = sor.u32 %s99, %s100
      %p102 = scmp.eq.s32.totalorder %s101, 0
      %s104 = sadd.s32 %s103, 1
      %s105 = scalar_select %p102, %s103, %s104
      %p108 = pneg %p102
      %p109 = scmp.eq.s32.totalorder %s12, 7
      %p110 = por %p108, %p109
      %p111 = scmp.ne.s32.totalorder %s103, %s106
      %p112 = scmp.eq.s32.totalorder %s12, 0
      %p113 = por %p111, %p112
      %p114 = scmp.ne.s32.totalorder %s103, %s106
      %p115 = scmp.eq.s32.totalorder %s17, 7
      %p116 = por %p114, %p115
      %p117 = scmp.ne.s32.totalorder %s106, %s107
      %p118 = scmp.eq.s32.totalorder %s17, 0
      %p119 = por %p117, %p118
      %p120 = scmp.ne.s32.totalorder %s106, %s107
      %p121 = scmp.eq.s32.totalorder %s18, 7
      %p122 = por %p120, %p121
      %p124 = scmp.ne.s32.totalorder %s107, %s123
      %p125 = scmp.eq.s32.totalorder %s18, 0
      %p126 = por %p124, %p125
      %s127 = ssub.s32 %s19, %s45
      %s128 = ssub.s32 %s20, %s41
      %s129 = sor.u32 %s127, %s128
      %s130 = ssub.s32 %s22, %s33
      %s131 = sor.u32 %s129, %s130
      %p132 = scmp.eq.s32.totalorder %s131, 0
      %s134 = sadd.s32 %s133, 1
      %s135 = scalar_select %p132, %s133, %s134
      %p138 = pneg %p132
      %p139 = scmp.eq.s32.totalorder %s12, 7
      %p140 = por %p138, %p139
      %p141 = scmp.ne.s32.totalorder %s133, %s136
      %p142 = scmp.eq.s32.totalorder %s12, 0
      %p143 = por %p141, %p142
      %p144 = scmp.ne.s32.totalorder %s133, %s136
      %p145 = scmp.eq.s32.totalorder %s17, 7
      %p146 = por %p144, %p145
      %p147 = scmp.ne.s32.totalorder %s136, %s137
      %p148 = scmp.eq.s32.totalorder %s17, 0
      %p149 = por %p147, %p148
      %p150 = scmp.ne.s32.totalorder %s136, %s137
      %p151 = scmp.eq.s32.totalorder %s18, 7
      %p152 = por %p150, %p151
      %p154 = scmp.ne.s32.totalorder %s137, %s153
      %p155 = scmp.eq.s32.totalorder %s18, 0
      %p156 = por %p154, %p155
      %s157 = ssub.s32 %s19, %s45
      %s158 = ssub.s32 %s22, %s33
      %s159 = sor.u32 %s157, %s158
      %p160 = scmp.eq.s32.totalorder %s159, 0
      %s162 = sadd.s32 %s161, 1
      %s163 = scalar_select %p160, %s161, %s162
      %p166 = pneg %p160
      %p167 = scmp.eq.s32.totalorder %s12, 7
      %p168 = por %p166, %p167
      %p169 = scmp.ne.s32.totalorder %s161, %s164
      %p170 = scmp.eq.s32.totalorder %s12, 0
      %p171 = por %p169, %p170
      %p172 = scmp.ne.s32.totalorder %s161, %s164
      %p173 = scmp.eq.s32.totalorder %s17, 7
      %p174 = por %p172, %p173
      %p175 = scmp.ne.s32.totalorder %s164, %s165
      %p176 = scmp.eq.s32.totalorder %s17, 0
      %p177 = por %p175, %p176
      %p178 = scmp.ne.s32.totalorder %s164, %s165
      %p179 = scmp.eq.s32.totalorder %s18, 7
      %p180 = por %p178, %p179
      %p182 = scmp.ne.s32.totalorder %s165, %s181
      %p183 = scmp.eq.s32.totalorder %s18, 0
      %p184 = por %p182, %p183
      %s185 = ssub.s32 %s19, %s45
      %s186 = ssub.s32 %s20, %s41
      %s187 = sor.u32 %s185, %s186
      %s188 = ssub.s32 %s21, %s37
      %s189 = sor.u32 %s187, %s188
      %p190 = scmp.eq.s32.totalorder %s189, 0
      %s192 = sadd.s32 %s191, 1
      %s193 = scalar_select %p190, %s191, %s192
      %p196 = pneg %p190
      %p197 = scmp.eq.s32.totalorder %s12, 7
      %p198 = por %p196, %p197
      %p199 = scmp.ne.s32.totalorder %s191, %s194
      %p200 = scmp.eq.s32.totalorder %s12, 0
      %p201 = por %p199, %p200
      %p202 = scmp.ne.s32.totalorder %s191, %s194
      %p203 = scmp.eq.s32.totalorder %s17, 7
      %p204 = por %p202, %p203
      %p205 = scmp.ne.s32.totalorder %s194, %s195
      %p206 = scmp.eq.s32.totalorder %s17, 0
      %p207 = por %p205, %p206
      %p208 = scmp.ne.s32.totalorder %s194, %s195
      %p209 = scmp.eq.s32.totalorder %s18, 7
      %p210 = por %p208, %p209
      %p212 = scmp.ne.s32.totalorder %s195, %s211
      %p213 = scmp.eq.s32.totalorder %s18, 0
      %p214 = por %p212, %p213
      %p215 = scmp.le.s32.totalorder 1, %s12
      %p216 = scmp.lt.s32.totalorder %s12, 9
      %p217 = pnand %p215, %p216
      %p218 = pneg %p217
      // Predicated region
      $region9: #{tpu_custom_call.1} parent=5 // pred_check
        _
      $region10: #{tpu_custom_call.1} parent=5 // pred_check_branch
        %220 = sbr.rel (%p217) target = $region12
      $region11: #{tpu_custom_call.1} parent=5 // pred_region
        %s221 = ssub.s32 %s12, 1
        // Predicated region
        $region13: #{tpu_custom_call.1} parent=11 // pred_check
          %p222 = pneg %p59
        $region14: #{tpu_custom_call.1} parent=11 // pred_check_branch
          %224 = sbr.rel (%p222) target = $region16
        $region15: #{tpu_custom_call.1} parent=11 // pred_region
          %s226 = ssub.s32 32, 32
          %227 = vsyncadd [#allocation6], %s226
          %s229 = sshll.u32 %s0, 4
          %s230 = int_to_ptr.vmem [resolvable:$true] %s229
          %232 = dma.vmem_to_smem %s230, 32, [#allocation5], [#allocation6]
        $region16: #{tpu_custom_call.1} parent=11 // pred_fallthru
          _
      $region12: #{tpu_custom_call.1} parent=5 // pred_fallthru
        _
      %p233 = scmp.lt.s32.totalorder %s12, 8
      // Predicated region
      $region17: #{tpu_custom_call.1} parent=5 // pred_check
        %p234 = pneg %p233
      $region18: #{tpu_custom_call.1} parent=5 // pred_check_branch
        %236 = sbr.rel (%p234) target = $region20
      $region19: #{tpu_custom_call.1} parent=5 // pred_region
        // Predicated region
        $region21: #{tpu_custom_call.1} parent=19 // pred_check
          %p237 = pneg %p83
        $region22: #{tpu_custom_call.1} parent=19 // pred_check_branch
          %239 = sbr.rel (%p237) target = $region24
        $region23: #{tpu_custom_call.1} parent=19 // pred_region
          %s240 = sand.u32 %s73, 1
          %s241 = sand.u32 %s73, 1
          %s242 = smul.addr %s241, 512
          %s243 = scalar_lea.vmem [#allocation7], %s242
          %s244 = smul.u32 4, %s20
          %s245 = smul.u32 16, %s21
          %s246 = smul.addr %s244, 32
          %s247 = sadd.s32 %s245, %s246
          %s248 = smul.addr %s19, 128
          %s249 = sadd.s32 %s247, %s248
          %s250 = smul.addr %s249, 8
          %s251 = scalar_lea.vmem %s1, %s250
          // Predicated region
          $region25: #{tpu_custom_call.1} parent=23 // pred_check
            _
          $region26: #{tpu_custom_call.1} parent=23 // pred_check_branch
            %253 = sbr.rel (0) target = $region28
          $region27: #{tpu_custom_call.1} parent=23 // pred_region
            // Predicated region
            $region29: #{tpu_custom_call.1} parent=27 // pred_check
              _
            $region30: #{tpu_custom_call.1} parent=27 // pred_check_branch
              %255 = sbr.rel (0) target = $region32
            $region31: #{tpu_custom_call.1} parent=27 // pred_region
              // Predicated region
              $region44: #{tpu_custom_call.1} parent=31 // pred_check
                _
              $region45: #{tpu_custom_call.1} parent=31 // pred_check_branch
                %396 = sbr.rel (0) target = $region47
              $region46: #{tpu_custom_call.1} parent=31 // pred_region
                loop: start=0, step=1, limit=1
                $region48: #{tpu_custom_call.1} parent=46 // loop_pre_header
                  _
                $region49: #{tpu_custom_call.1} parent=46 // loop_header
                  %s398 = sphi 0, %s402
                  %p399 = scmp.ge.s32.totalorder %s398, 1
                  %s403 = sphi %s251, %s251
                  %s404 = sphi %s243, %s243
                $region50: #{tpu_custom_call.1} parent=46 // loop_header_branch
                  %401 = sbr.rel (%p399) target = $region54
                $region51: #{tpu_custom_call.1} parent=46 // loop_body
                  %v405 = vld [vmem:[%s403] sm:$0xff]
                  %406 = vst [vmem:[%s404] sm:$0xff] %v405
                  %v407 = vld [vmem:[%s403 + $0x8] sm:$0xff]
                  %408 = vst [vmem:[%s404 + $0x8] sm:$0xff] %v407
                  %v409 = vld [vmem:[%s403 + $0x10] sm:$0xff]
                  %410 = vst [vmem:[%s404 + $0x10] sm:$0xff] %v409
                  %v411 = vld [vmem:[%s403 + $0x18] sm:$0xff]
                  %412 = vst [vmem:[%s404 + $0x18] sm:$0xff] %v411
                  %v413 = vld [vmem:[%s403 + $0x20] sm:$0xff]
                  %414 = vst [vmem:[%s404 + $0x20] sm:$0xff] %v413
                  %v415 = vld [vmem:[%s403 + $0x28] sm:$0xff]
                  %416 = vst [vmem:[%s404 + $0x28] sm:$0xff] %v415
                  %v417 = vld [vmem:[%s403 + $0x30] sm:$0xff]
                  %418 = vst [vmem:[%s404 + $0x30] sm:$0xff] %v417
                  %v419 = vld [vmem:[%s403 + $0x38] sm:$0xff]
                  %420 = vst [vmem:[%s404 + $0x38] sm:$0xff] %v419
                  %v421 = vld [vmem:[%s403 + $0x40] sm:$0xff]
                  %422 = vst [vmem:[%s404 + $0x40] sm:$0xff] %v421
                  %v423 = vld [vmem:[%s403 + $0x48] sm:$0xff]
                  %424 = vst [vmem:[%s404 + $0x48] sm:$0xff] %v423
                  %v425 = vld [vmem:[%s403 + $0x50] sm:$0xff]
                  %426 = vst [vmem:[%s404 + $0x50] sm:$0xff] %v425
                  %v427 = vld [vmem:[%s403 + $0x58] sm:$0xff]
                  %428 = vst [vmem:[%s404 + $0x58] sm:$0xff] %v427
                  %v429 = vld [vmem:[%s403 + $0x60] sm:$0xff]
                  %430 = vst [vmem:[%s404 + $0x60] sm:$0xff] %v429
                  %v431 = vld [vmem:[%s403 + $0x68] sm:$0xff]
                  %432 = vst [vmem:[%s404 + $0x68] sm:$0xff] %v431
                  %v433 = vld [vmem:[%s403 + $0x70] sm:$0xff]
                  %434 = vst [vmem:[%s404 + $0x70] sm:$0xff] %v433
                  %v435 = vld [vmem:[%s403 + $0x78] sm:$0xff]
                  %436 = vst [vmem:[%s404 + $0x78] sm:$0xff] %v435
                  %v437 = vld [vmem:[%s403 + $0x100] sm:$0xff]
                  %438 = vst [vmem:[%s404 + $0x80] sm:$0xff] %v437
                  %v439 = vld [vmem:[%s403 + $0x108] sm:$0xff]
                  %440 = vst [vmem:[%s404 + $0x88] sm:$0xff] %v439
                  %v441 = vld [vmem:[%s403 + $0x110] sm:$0xff]
                  %442 = vst [vmem:[%s404 + $0x90] sm:$0xff] %v441
                  %v443 = vld [vmem:[%s403 + $0x118] sm:$0xff]
                  %444 = vst [vmem:[%s404 + $0x98] sm:$0xff] %v443
                  %v445 = vld [vmem:[%s403 + $0x120] sm:$0xff]
                  %446 = vst [vmem:[%s404 + $0xa0] sm:$0xff] %v445
                  %v447 = vld [vmem:[%s403 + $0x128] sm:$0xff]
                  %448 = vst [vmem:[%s404 + $0xa8] sm:$0xff] %v447
                  %v449 = vld [vmem:[%s403 + $0x130] sm:$0xff]
                  %450 = vst [vmem:[%s404 + $0xb0] sm:$0xff] %v449
                  %v451 = vld [vmem:[%s403 + $0x138] sm:$0xff]
                  %452 = vst [vmem:[%s404 + $0xb8] sm:$0xff] %v451
                  %v453 = vld [vmem:[%s403 + $0x140] sm:$0xff]
                  %454 = vst [vmem:[%s404 + $0xc0] sm:$0xff] %v453
                  %v455 = vld [vmem:[%s403 + $0x148] sm:$0xff]
                  %456 = vst [vmem:[%s404 + $0xc8] sm:$0xff] %v455
                  %v457 = vld [vmem:[%s403 + $0x150] sm:$0xff]
                  %458 = vst [vmem:[%s404 + $0xd0] sm:$0xff] %v457
                  %v459 = vld [vmem:[%s403 + $0x158] sm:$0xff]
                  %460 = vst [vmem:[%s404 + $0xd8] sm:$0xff] %v459
                  %v461 = vld [vmem:[%s403 + $0x160] sm:$0xff]
                  %462 = vst [vmem:[%s404 + $0xe0] sm:$0xff] %v461
                  %v463 = vld [vmem:[%s403 + $0x168] sm:$0xff]
                  %464 = vst [vmem:[%s404 + $0xe8] sm:$0xff] %v463
                  %v465 = vld [vmem:[%s403 + $0x170] sm:$0xff]
                  %466 = vst [vmem:[%s404 + $0xf0] sm:$0xff] %v465
                  %v467 = vld [vmem:[%s403 + $0x178] sm:$0xff]
                  %468 = vst [vmem:[%s404 + $0xf8] sm:$0xff] %v467
                  %v469 = vld [vmem:[%s403 + $0x200] sm:$0xff]
                  %470 = vst [vmem:[%s404 + $0x100] sm:$0xff] %v469
                  %v471 = vld [vmem:[%s403 + $0x208] sm:$0xff]
                  %472 = vst [vmem:[%s404 + $0x108] sm:$0xff] %v471
                  %v473 = vld [vmem:[%s403 + $0x210] sm:$0xff]
                  %474 = vst [vmem:[%s404 + $0x110] sm:$0xff] %v473
                  %v475 = vld [vmem:[%s403 + $0x218] sm:$0xff]
                  %476 = vst [vmem:[%s404 + $0x118] sm:$0xff] %v475
                  %v477 = vld [vmem:[%s403 + $0x220] sm:$0xff]
                  %478 = vst [vmem:[%s404 + $0x120] sm:$0xff] %v477
                  %v479 = vld [vmem:[%s403 + $0x228] sm:$0xff]
                  %480 = vst [vmem:[%s404 + $0x128] sm:$0xff] %v479
                  %v481 = vld [vmem:[%s403 + $0x230] sm:$0xff]
                  %482 = vst [vmem:[%s404 + $0x130] sm:$0xff] %v481
                  %v483 = vld [vmem:[%s403 + $0x238] sm:$0xff]
                  %484 = vst [vmem:[%s404 + $0x138] sm:$0xff] %v483
                  %v485 = vld [vmem:[%s403 + $0x240] sm:$0xff]
                  %486 = vst [vmem:[%s404 + $0x140] sm:$0xff] %v485
                  %v487 = vld [vmem:[%s403 + $0x248] sm:$0xff]
                  %488 = vst [vmem:[%s404 + $0x148] sm:$0xff] %v487
                  %v489 = vld [vmem:[%s403 + $0x250] sm:$0xff]
                  %490 = vst [vmem:[%s404 + $0x150] sm:$0xff] %v489
                  %v491 = vld [vmem:[%s403 + $0x258] sm:$0xff]
                  %492 = vst [vmem:[%s404 + $0x158] sm:$0xff] %v491
                  %v493 = vld [vmem:[%s403 + $0x260] sm:$0xff]
                  %494 = vst [vmem:[%s404 + $0x160] sm:$0xff] %v493
                  %v495 = vld [vmem:[%s403 + $0x268] sm:$0xff]
                  %496 = vst [vmem:[%s404 + $0x168] sm:$0xff] %v495
                  %v497 = vld [vmem:[%s403 + $0x270] sm:$0xff]
                  %498 = vst [vmem:[%s404 + $0x170] sm:$0xff] %v497
                  %v499 = vld [vmem:[%s403 + $0x278] sm:$0xff]
                  %500 = vst [vmem:[%s404 + $0x178] sm:$0xff] %v499
                  %v501 = vld [vmem:[%s403 + $0x300] sm:$0xff]
                  %502 = vst [vmem:[%s404 + $0x180] sm:$0xff] %v501
                  %v503 = vld [vmem:[%s403 + $0x308] sm:$0xff]
                  %504 = vst [vmem:[%s404 + $0x188] sm:$0xff] %v503
                  %v505 = vld [vmem:[%s403 + $0x310] sm:$0xff]
                  %506 = vst [vmem:[%s404 + $0x190] sm:$0xff] %v505
                  %v507 = vld [vmem:[%s403 + $0x318] sm:$0xff]
                  %508 = vst [vmem:[%s404 + $0x198] sm:$0xff] %v507
                  %v509 = vld [vmem:[%s403 + $0x320] sm:$0xff]
                  %510 = vst [vmem:[%s404 + $0x1a0] sm:$0xff] %v509
                  %v511 = vld [vmem:[%s403 + $0x328] sm:$0xff]
                  %512 = vst [vmem:[%s404 + $0x1a8] sm:$0xff] %v511
                  %v513 = vld [vmem:[%s403 + $0x330] sm:$0xff]
                  %514 = vst [vmem:[%s404 + $0x1b0] sm:$0xff] %v513
                  %v515 = vld [vmem:[%s403 + $0x338] sm:$0xff]
                  %516 = vst [vmem:[%s404 + $0x1b8] sm:$0xff] %v515
                  %v517 = vld [vmem:[%s403 + $0x340] sm:$0xff]
                  %518 = vst [vmem:[%s404 + $0x1c0] sm:$0xff] %v517
                  %v519 = vld [vmem:[%s403 + $0x348] sm:$0xff]
                  %520 = vst [vmem:[%s404 + $0x1c8] sm:$0xff] %v519
                  %v521 = vld [vmem:[%s403 + $0x350] sm:$0xff]
                  %522 = vst [vmem:[%s404 + $0x1d0] sm:$0xff] %v521
                  %v523 = vld [vmem:[%s403 + $0x358] sm:$0xff]
                  %524 = vst [vmem:[%s404 + $0x1d8] sm:$0xff] %v523
                  %v525 = vld [vmem:[%s403 + $0x360] sm:$0xff]
                  %526 = vst [vmem:[%s404 + $0x1e0] sm:$0xff] %v525
                  %v527 = vld [vmem:[%s403 + $0x368] sm:$0xff]
                  %528 = vst [vmem:[%s404 + $0x1e8] sm:$0xff] %v527
                  %v529 = vld [vmem:[%s403 + $0x370] sm:$0xff]
                  %530 = vst [vmem:[%s404 + $0x1f0] sm:$0xff] %v529
                  %v531 = vld [vmem:[%s403 + $0x378] sm:$0xff]
                  %532 = vst [vmem:[%s404 + $0x1f8] sm:$0xff] %v531
                $region52: #{tpu_custom_call.1} parent=46 // loop_footer
                  %s402 = sadd.s32 1, %s398
                $region53: #{tpu_custom_call.1} parent=46 // loop_footer_branch
                  %397 = sbr.rel target = $region49
                $region54: #{tpu_custom_call.1} parent=46 // loop_exit
                  _
              $region47: #{tpu_custom_call.1} parent=31 // pred_fallthru
                _
              // Predicated region
              $region55: #{tpu_custom_call.1} parent=31 // pred_check
                _
              $region56: #{tpu_custom_call.1} parent=31 // pred_check_branch
                %534 = sbr.rel target = $region58
              $region57: #{tpu_custom_call.1} parent=31 // pred_region
                _
              $region58: #{tpu_custom_call.1} parent=31 // pred_fallthru
                _
            $region32: #{tpu_custom_call.1} parent=27 // pred_fallthru
              _
            // Predicated region
            $region33: #{tpu_custom_call.1} parent=27 // pred_check
              _
            $region34: #{tpu_custom_call.1} parent=27 // pred_check_branch
              %257 = sbr.rel target = $region36
            $region35: #{tpu_custom_call.1} parent=27 // pred_region
              loop: start=0, step=1, limit=1
              $region37: #{tpu_custom_call.1} parent=35 // loop_pre_header
                _
              $region38: #{tpu_custom_call.1} parent=35 // loop_header
                %s260 = sphi 0, %s264
                %p261 = scmp.ge.s32.totalorder %s260, 1
                %s265 = sphi %s251, %s251
                %s266 = sphi %s243, %s243
              $region39: #{tpu_custom_call.1} parent=35 // loop_header_branch
                %263 = sbr.rel (%p261) target = $region43
              $region40: #{tpu_custom_call.1} parent=35 // loop_body
                %v267 = vld [vmem:[%s265] sm:$0xff]
                %268 = vst [vmem:[%s266] sm:$0xff] %v267
                %v269 = vld [vmem:[%s265 + $0x8] sm:$0xff]
                %270 = vst [vmem:[%s266 + $0x8] sm:$0xff] %v269
                %v271 = vld [vmem:[%s265 + $0x10] sm:$0xff]
                %272 = vst [vmem:[%s266 + $0x10] sm:$0xff] %v271
                %v273 = vld [vmem:[%s265 + $0x18] sm:$0xff]
                %274 = vst [vmem:[%s266 + $0x18] sm:$0xff] %v273
                %v275 = vld [vmem:[%s265 + $0x20] sm:$0xff]
                %276 = vst [vmem:[%s266 + $0x20] sm:$0xff] %v275
                %v277 = vld [vmem:[%s265 + $0x28] sm:$0xff]
                %278 = vst [vmem:[%s266 + $0x28] sm:$0xff] %v277
                %v279 = vld [vmem:[%s265 + $0x30] sm:$0xff]
                %280 = vst [vmem:[%s266 + $0x30] sm:$0xff] %v279
                %v281 = vld [vmem:[%s265 + $0x38] sm:$0xff]
                %282 = vst [vmem:[%s266 + $0x38] sm:$0xff] %v281
                %v283 = vld [vmem:[%s265 + $0x40] sm:$0xff]
                %284 = vst [vmem:[%s266 + $0x40] sm:$0xff] %v283
                %v285 = vld [vmem:[%s265 + $0x48] sm:$0xff]
                %286 = vst [vmem:[%s266 + $0x48] sm:$0xff] %v285
                %v287 = vld [vmem:[%s265 + $0x50] sm:$0xff]
                %288 = vst [vmem:[%s266 + $0x50] sm:$0xff] %v287
                %v289 = vld [vmem:[%s265 + $0x58] sm:$0xff]
                %290 = vst [vmem:[%s266 + $0x58] sm:$0xff] %v289
                %v291 = vld [vmem:[%s265 + $0x60] sm:$0xff]
                %292 = vst [vmem:[%s266 + $0x60] sm:$0xff] %v291
                %v293 = vld [vmem:[%s265 + $0x68] sm:$0xff]
                %294 = vst [vmem:[%s266 + $0x68] sm:$0xff] %v293
                %v295 = vld [vmem:[%s265 + $0x70] sm:$0xff]
                %296 = vst [vmem:[%s266 + $0x70] sm:$0xff] %v295
                %v297 = vld [vmem:[%s265 + $0x78] sm:$0xff]
                %298 = vst [vmem:[%s266 + $0x78] sm:$0xff] %v297
                %v299 = vld [vmem:[%s265 + $0x100] sm:$0xff]
                %300 = vst [vmem:[%s266 + $0x80] sm:$0xff] %v299
                %v301 = vld [vmem:[%s265 + $0x108] sm:$0xff]
                %302 = vst [vmem:[%s266 + $0x88] sm:$0xff] %v301
                %v303 = vld [vmem:[%s265 + $0x110] sm:$0xff]
                %304 = vst [vmem:[%s266 + $0x90] sm:$0xff] %v303
                %v305 = vld [vmem:[%s265 + $0x118] sm:$0xff]
                %306 = vst [vmem:[%s266 + $0x98] sm:$0xff] %v305
                %v307 = vld [vmem:[%s265 + $0x120] sm:$0xff]
                %308 = vst [vmem:[%s266 + $0xa0] sm:$0xff] %v307
                %v309 = vld [vmem:[%s265 + $0x128] sm:$0xff]
                %310 = vst [vmem:[%s266 + $0xa8] sm:$0xff] %v309
                %v311 = vld [vmem:[%s265 + $0x130] sm:$0xff]
                %312 = vst [vmem:[%s266 + $0xb0] sm:$0xff] %v311
                %v313 = vld [vmem:[%s265 + $0x138] sm:$0xff]
                %314 = vst [vmem:[%s266 + $0xb8] sm:$0xff] %v313
                %v315 = vld [vmem:[%s265 + $0x140] sm:$0xff]
                %316 = vst [vmem:[%s266 + $0xc0] sm:$0xff] %v315
                %v317 = vld [vmem:[%s265 + $0x148] sm:$0xff]
                %318 = vst [vmem:[%s266 + $0xc8] sm:$0xff] %v317
                %v319 = vld [vmem:[%s265 + $0x150] sm:$0xff]
                %320 = vst [vmem:[%s266 + $0xd0] sm:$0xff] %v319
                %v321 = vld [vmem:[%s265 + $0x158] sm:$0xff]
                %322 = vst [vmem:[%s266 + $0xd8] sm:$0xff] %v321
                %v323 = vld [vmem:[%s265 + $0x160] sm:$0xff]
                %324 = vst [vmem:[%s266 + $0xe0] sm:$0xff] %v323
                %v325 = vld [vmem:[%s265 + $0x168] sm:$0xff]
                %326 = vst [vmem:[%s266 + $0xe8] sm:$0xff] %v325
                %v327 = vld [vmem:[%s265 + $0x170] sm:$0xff]
                %328 = vst [vmem:[%s266 + $0xf0] sm:$0xff] %v327
                %v329 = vld [vmem:[%s265 + $0x178] sm:$0xff]
                %330 = vst [vmem:[%s266 + $0xf8] sm:$0xff] %v329
                %v331 = vld [vmem:[%s265 + $0x200] sm:$0xff]
                %332 = vst [vmem:[%s266 + $0x100] sm:$0xff] %v331
                %v333 = vld [vmem:[%s265 + $0x208] sm:$0xff]
                %334 = vst [vmem:[%s266 + $0x108] sm:$0xff] %v333
                %v335 = vld [vmem:[%s265 + $0x210] sm:$0xff]
                %336 = vst [vmem:[%s266 + $0x110] sm:$0xff] %v335
                %v337 = vld [vmem:[%s265 + $0x218] sm:$0xff]
                %338 = vst [vmem:[%s266 + $0x118] sm:$0xff] %v337
                %v339 = vld [vmem:[%s265 + $0x220] sm:$0xff]
                %340 = vst [vmem:[%s266 + $0x120] sm:$0xff] %v339
                %v341 = vld [vmem:[%s265 + $0x228] sm:$0xff]
                %342 = vst [vmem:[%s266 + $0x128] sm:$0xff] %v341
                %v343 = vld [vmem:[%s265 + $0x230] sm:$0xff]
                %344 = vst [vmem:[%s266 + $0x130] sm:$0xff] %v343
                %v345 = vld [vmem:[%s265 + $0x238] sm:$0xff]
                %346 = vst [vmem:[%s266 + $0x138] sm:$0xff] %v345
                %v347 = vld [vmem:[%s265 + $0x240] sm:$0xff]
                %348 = vst [vmem:[%s266 + $0x140] sm:$0xff] %v347
                %v349 = vld [vmem:[%s265 + $0x248] sm:$0xff]
                %350 = vst [vmem:[%s266 + $0x148] sm:$0xff] %v349
                %v351 = vld [vmem:[%s265 + $0x250] sm:$0xff]
                %352 = vst [vmem:[%s266 + $0x150] sm:$0xff] %v351
                %v353 = vld [vmem:[%s265 + $0x258] sm:$0xff]
                %354 = vst [vmem:[%s266 + $0x158] sm:$0xff] %v353
                %v355 = vld [vmem:[%s265 + $0x260] sm:$0xff]
                %356 = vst [vmem:[%s266 + $0x160] sm:$0xff] %v355
                %v357 = vld [vmem:[%s265 + $0x268] sm:$0xff]
                %358 = vst [vmem:[%s266 + $0x168] sm:$0xff] %v357
                %v359 = vld [vmem:[%s265 + $0x270] sm:$0xff]
                %360 = vst [vmem:[%s266 + $0x170] sm:$0xff] %v359
                %v361 = vld [vmem:[%s265 + $0x278] sm:$0xff]
                %362 = vst [vmem:[%s266 + $0x178] sm:$0xff] %v361
                %v363 = vld [vmem:[%s265 + $0x300] sm:$0xff]
                %364 = vst [vmem:[%s266 + $0x180] sm:$0xff] %v363
                %v365 = vld [vmem:[%s265 + $0x308] sm:$0xff]
                %366 = vst [vmem:[%s266 + $0x188] sm:$0xff] %v365
                %v367 = vld [vmem:[%s265 + $0x310] sm:$0xff]
                %368 = vst [vmem:[%s266 + $0x190] sm:$0xff] %v367
                %v369 = vld [vmem:[%s265 + $0x318] sm:$0xff]
                %370 = vst [vmem:[%s266 + $0x198] sm:$0xff] %v369
                %v371 = vld [vmem:[%s265 + $0x320] sm:$0xff]
                %372 = vst [vmem:[%s266 + $0x1a0] sm:$0xff] %v371
                %v373 = vld [vmem:[%s265 + $0x328] sm:$0xff]
                %374 = vst [vmem:[%s266 + $0x1a8] sm:$0xff] %v373
                %v375 = vld [vmem:[%s265 + $0x330] sm:$0xff]
                %376 = vst [vmem:[%s266 + $0x1b0] sm:$0xff] %v375
                %v377 = vld [vmem:[%s265 + $0x338] sm:$0xff]
                %378 = vst [vmem:[%s266 + $0x1b8] sm:$0xff] %v377
                %v379 = vld [vmem:[%s265 + $0x340] sm:$0xff]
                %380 = vst [vmem:[%s266 + $0x1c0] sm:$0xff] %v379
                %v381 = vld [vmem:[%s265 + $0x348] sm:$0xff]
                %382 = vst [vmem:[%s266 + $0x1c8] sm:$0xff] %v381
                %v383 = vld [vmem:[%s265 + $0x350] sm:$0xff]
                %384 = vst [vmem:[%s266 + $0x1d0] sm:$0xff] %v383
                %v385 = vld [vmem:[%s265 + $0x358] sm:$0xff]
                %386 = vst [vmem:[%s266 + $0x1d8] sm:$0xff] %v385
                %v387 = vld [vmem:[%s265 + $0x360] sm:$0xff]
                %388 = vst [vmem:[%s266 + $0x1e0] sm:$0xff] %v387
                %v389 = vld [vmem:[%s265 + $0x368] sm:$0xff]
                %390 = vst [vmem:[%s266 + $0x1e8] sm:$0xff] %v389
                %v391 = vld [vmem:[%s265 + $0x370] sm:$0xff]
                %392 = vst [vmem:[%s266 + $0x1f0] sm:$0xff] %v391
                %v393 = vld [vmem:[%s265 + $0x378] sm:$0xff]
                %394 = vst [vmem:[%s266 + $0x1f8] sm:$0xff] %v393
              $region41: #{tpu_custom_call.1} parent=35 // loop_footer
                %s264 = sadd.s32 1, %s260
              $region42: #{tpu_custom_call.1} parent=35 // loop_footer_branch
                %259 = sbr.rel target = $region38
              $region43: #{tpu_custom_call.1} parent=35 // loop_exit
                _
            $region36: #{tpu_custom_call.1} parent=27 // pred_fallthru
              _
          $region28: #{tpu_custom_call.1} parent=23 // pred_fallthru
            _
          %535 = vnop
        $region24: #{tpu_custom_call.1} parent=19 // pred_fallthru
          _
        // Predicated region
        $region59: #{tpu_custom_call.1} parent=19 // pred_check
          %p536 = pneg %p113
        $region60: #{tpu_custom_call.1} parent=19 // pred_check_branch
          %538 = sbr.rel (%p536) target = $region62
        $region61: #{tpu_custom_call.1} parent=19 // pred_region
          %s539 = sand.u32 %s103, 1
          %s540 = sand.u32 %s103, 1
          %s541 = smul.addr %s540, 512
          %s542 = scalar_lea.vmem [#allocation8], %s541
          %s543 = smul.u32 4, %s20
          %s544 = smul.u32 16, %s22
          %s545 = smul.addr %s543, 32
          %s546 = sadd.s32 %s544, %s545
          %s547 = smul.addr %s19, 128
          %s548 = sadd.s32 %s546, %s547
          %s549 = smul.addr %s548, 8
          %s550 = scalar_lea.vmem %s2, %s549
          // Predicated region
          $region63: #{tpu_custom_call.1} parent=61 // pred_check
            _
          $region64: #{tpu_custom_call.1} parent=61 // pred_check_branch
            %552 = sbr.rel (0) target = $region66
          $region65: #{tpu_custom_call.1} parent=61 // pred_region
            // Predicated region
            $region67: #{tpu_custom_call.1} parent=65 // pred_check
              _
            $region68: #{tpu_custom_call.1} parent=65 // pred_check_branch
              %554 = sbr.rel (0) target = $region70
            $region69: #{tpu_custom_call.1} parent=65 // pred_region
              // Predicated region
              $region82: #{tpu_custom_call.1} parent=69 // pred_check
                _
              $region83: #{tpu_custom_call.1} parent=69 // pred_check_branch
                %695 = sbr.rel (0) target = $region85
              $region84: #{tpu_custom_call.1} parent=69 // pred_region
                loop: start=0, step=1, limit=1
                $region86: #{tpu_custom_call.1} parent=84 // loop_pre_header
                  _
                $region87: #{tpu_custom_call.1} parent=84 // loop_header
                  %s697 = sphi 0, %s701
                  %p698 = scmp.ge.s32.totalorder %s697, 1
                  %s702 = sphi %s550, %s550
                  %s703 = sphi %s542, %s542
                $region88: #{tpu_custom_call.1} parent=84 // loop_header_branch
                  %700 = sbr.rel (%p698) target = $region92
                $region89: #{tpu_custom_call.1} parent=84 // loop_body
                  %v704 = vld [vmem:[%s702] sm:$0xff]
                  %705 = vst [vmem:[%s703] sm:$0xff] %v704
                  %v706 = vld [vmem:[%s702 + $0x8] sm:$0xff]
                  %707 = vst [vmem:[%s703 + $0x8] sm:$0xff] %v706
                  %v708 = vld [vmem:[%s702 + $0x10] sm:$0xff]
                  %709 = vst [vmem:[%s703 + $0x10] sm:$0xff] %v708
                  %v710 = vld [vmem:[%s702 + $0x18] sm:$0xff]
                  %711 = vst [vmem:[%s703 + $0x18] sm:$0xff] %v710
                  %v712 = vld [vmem:[%s702 + $0x20] sm:$0xff]
                  %713 = vst [vmem:[%s703 + $0x20] sm:$0xff] %v712
                  %v714 = vld [vmem:[%s702 + $0x28] sm:$0xff]
                  %715 = vst [vmem:[%s703 + $0x28] sm:$0xff] %v714
                  %v716 = vld [vmem:[%s702 + $0x30] sm:$0xff]
                  %717 = vst [vmem:[%s703 + $0x30] sm:$0xff] %v716
                  %v718 = vld [vmem:[%s702 + $0x38] sm:$0xff]
                  %719 = vst [vmem:[%s703 + $0x38] sm:$0xff] %v718
                  %v720 = vld [vmem:[%s702 + $0x40] sm:$0xff]
                  %721 = vst [vmem:[%s703 + $0x40] sm:$0xff] %v720
                  %v722 = vld [vmem:[%s702 + $0x48] sm:$0xff]
                  %723 = vst [vmem:[%s703 + $0x48] sm:$0xff] %v722
                  %v724 = vld [vmem:[%s702 + $0x50] sm:$0xff]
                  %725 = vst [vmem:[%s703 + $0x50] sm:$0xff] %v724
                  %v726 = vld [vmem:[%s702 + $0x58] sm:$0xff]
                  %727 = vst [vmem:[%s703 + $0x58] sm:$0xff] %v726
                  %v728 = vld [vmem:[%s702 + $0x60] sm:$0xff]
                  %729 = vst [vmem:[%s703 + $0x60] sm:$0xff] %v728
                  %v730 = vld [vmem:[%s702 + $0x68] sm:$0xff]
                  %731 = vst [vmem:[%s703 + $0x68] sm:$0xff] %v730
                  %v732 = vld [vmem:[%s702 + $0x70] sm:$0xff]
                  %733 = vst [vmem:[%s703 + $0x70] sm:$0xff] %v732
                  %v734 = vld [vmem:[%s702 + $0x78] sm:$0xff]
                  %735 = vst [vmem:[%s703 + $0x78] sm:$0xff] %v734
                  %v736 = vld [vmem:[%s702 + $0x100] sm:$0xff]
                  %737 = vst [vmem:[%s703 + $0x80] sm:$0xff] %v736
                  %v738 = vld [vmem:[%s702 + $0x108] sm:$0xff]
                  %739 = vst [vmem:[%s703 + $0x88] sm:$0xff] %v738
                  %v740 = vld [vmem:[%s702 + $0x110] sm:$0xff]
                  %741 = vst [vmem:[%s703 + $0x90] sm:$0xff] %v740
                  %v742 = vld [vmem:[%s702 + $0x118] sm:$0xff]
                  %743 = vst [vmem:[%s703 + $0x98] sm:$0xff] %v742
                  %v744 = vld [vmem:[%s702 + $0x120] sm:$0xff]
                  %745 = vst [vmem:[%s703 + $0xa0] sm:$0xff] %v744
                  %v746 = vld [vmem:[%s702 + $0x128] sm:$0xff]
                  %747 = vst [vmem:[%s703 + $0xa8] sm:$0xff] %v746
                  %v748 = vld [vmem:[%s702 + $0x130] sm:$0xff]
                  %749 = vst [vmem:[%s703 + $0xb0] sm:$0xff] %v748
                  %v750 = vld [vmem:[%s702 + $0x138] sm:$0xff]
                  %751 = vst [vmem:[%s703 + $0xb8] sm:$0xff] %v750
                  %v752 = vld [vmem:[%s702 + $0x140] sm:$0xff]
                  %753 = vst [vmem:[%s703 + $0xc0] sm:$0xff] %v752
                  %v754 = vld [vmem:[%s702 + $0x148] sm:$0xff]
                  %755 = vst [vmem:[%s703 + $0xc8] sm:$0xff] %v754
                  %v756 = vld [vmem:[%s702 + $0x150] sm:$0xff]
                  %757 = vst [vmem:[%s703 + $0xd0] sm:$0xff] %v756
                  %v758 = vld [vmem:[%s702 + $0x158] sm:$0xff]
                  %759 = vst [vmem:[%s703 + $0xd8] sm:$0xff] %v758
                  %v760 = vld [vmem:[%s702 + $0x160] sm:$0xff]
                  %761 = vst [vmem:[%s703 + $0xe0] sm:$0xff] %v760
                  %v762 = vld [vmem:[%s702 + $0x168] sm:$0xff]
                  %763 = vst [vmem:[%s703 + $0xe8] sm:$0xff] %v762
                  %v764 = vld [vmem:[%s702 + $0x170] sm:$0xff]
                  %765 = vst [vmem:[%s703 + $0xf0] sm:$0xff] %v764
                  %v766 = vld [vmem:[%s702 + $0x178] sm:$0xff]
                  %767 = vst [vmem:[%s703 + $0xf8] sm:$0xff] %v766
                  %v768 = vld [vmem:[%s702 + $0x200] sm:$0xff]
                  %769 = vst [vmem:[%s703 + $0x100] sm:$0xff] %v768
                  %v770 = vld [vmem:[%s702 + $0x208] sm:$0xff]
                  %771 = vst [vmem:[%s703 + $0x108] sm:$0xff] %v770
                  %v772 = vld [vmem:[%s702 + $0x210] sm:$0xff]
                  %773 = vst [vmem:[%s703 + $0x110] sm:$0xff] %v772
                  %v774 = vld [vmem:[%s702 + $0x218] sm:$0xff]
                  %775 = vst [vmem:[%s703 + $0x118] sm:$0xff] %v774
                  %v776 = vld [vmem:[%s702 + $0x220] sm:$0xff]
                  %777 = vst [vmem:[%s703 + $0x120] sm:$0xff] %v776
                  %v778 = vld [vmem:[%s702 + $0x228] sm:$0xff]
                  %779 = vst [vmem:[%s703 + $0x128] sm:$0xff] %v778
                  %v780 = vld [vmem:[%s702 + $0x230] sm:$0xff]
                  %781 = vst [vmem:[%s703 + $0x130] sm:$0xff] %v780
                  %v782 = vld [vmem:[%s702 + $0x238] sm:$0xff]
                  %783 = vst [vmem:[%s703 + $0x138] sm:$0xff] %v782
                  %v784 = vld [vmem:[%s702 + $0x240] sm:$0xff]
                  %785 = vst [vmem:[%s703 + $0x140] sm:$0xff] %v784
                  %v786 = vld [vmem:[%s702 + $0x248] sm:$0xff]
                  %787 = vst [vmem:[%s703 + $0x148] sm:$0xff] %v786
                  %v788 = vld [vmem:[%s702 + $0x250] sm:$0xff]
                  %789 = vst [vmem:[%s703 + $0x150] sm:$0xff] %v788
                  %v790 = vld [vmem:[%s702 + $0x258] sm:$0xff]
                  %791 = vst [vmem:[%s703 + $0x158] sm:$0xff] %v790
                  %v792 = vld [vmem:[%s702 + $0x260] sm:$0xff]
                  %793 = vst [vmem:[%s703 + $0x160] sm:$0xff] %v792
                  %v794 = vld [vmem:[%s702 + $0x268] sm:$0xff]
                  %795 = vst [vmem:[%s703 + $0x168] sm:$0xff] %v794
                  %v796 = vld [vmem:[%s702 + $0x270] sm:$0xff]
                  %797 = vst [vmem:[%s703 + $0x170] sm:$0xff] %v796
                  %v798 = vld [vmem:[%s702 + $0x278] sm:$0xff]
                  %799 = vst [vmem:[%s703 + $0x178] sm:$0xff] %v798
                  %v800 = vld [vmem:[%s702 + $0x300] sm:$0xff]
                  %801 = vst [vmem:[%s703 + $0x180] sm:$0xff] %v800
                  %v802 = vld [vmem:[%s702 + $0x308] sm:$0xff]
                  %803 = vst [vmem:[%s703 + $0x188] sm:$0xff] %v802
                  %v804 = vld [vmem:[%s702 + $0x310] sm:$0xff]
                  %805 = vst [vmem:[%s703 + $0x190] sm:$0xff] %v804
                  %v806 = vld [vmem:[%s702 + $0x318] sm:$0xff]
                  %807 = vst [vmem:[%s703 + $0x198] sm:$0xff] %v806
                  %v808 = vld [vmem:[%s702 + $0x320] sm:$0xff]
                  %809 = vst [vmem:[%s703 + $0x1a0] sm:$0xff] %v808
                  %v810 = vld [vmem:[%s702 + $0x328] sm:$0xff]
                  %811 = vst [vmem:[%s703 + $0x1a8] sm:$0xff] %v810
                  %v812 = vld [vmem:[%s702 + $0x330] sm:$0xff]
                  %813 = vst [vmem:[%s703 + $0x1b0] sm:$0xff] %v812
                  %v814 = vld [vmem:[%s702 + $0x338] sm:$0xff]
                  %815 = vst [vmem:[%s703 + $0x1b8] sm:$0xff] %v814
                  %v816 = vld [vmem:[%s702 + $0x340] sm:$0xff]
                  %817 = vst [vmem:[%s703 + $0x1c0] sm:$0xff] %v816
                  %v818 = vld [vmem:[%s702 + $0x348] sm:$0xff]
                  %819 = vst [vmem:[%s703 + $0x1c8] sm:$0xff] %v818
                  %v820 = vld [vmem:[%s702 + $0x350] sm:$0xff]
                  %821 = vst [vmem:[%s703 + $0x1d0] sm:$0xff] %v820
                  %v822 = vld [vmem:[%s702 + $0x358] sm:$0xff]
                  %823 = vst [vmem:[%s703 + $0x1d8] sm:$0xff] %v822
                  %v824 = vld [vmem:[%s702 + $0x360] sm:$0xff]
                  %825 = vst [vmem:[%s703 + $0x1e0] sm:$0xff] %v824
                  %v826 = vld [vmem:[%s702 + $0x368] sm:$0xff]
                  %827 = vst [vmem:[%s703 + $0x1e8] sm:$0xff] %v826
                  %v828 = vld [vmem:[%s702 + $0x370] sm:$0xff]
                  %829 = vst [vmem:[%s703 + $0x1f0] sm:$0xff] %v828
                  %v830 = vld [vmem:[%s702 + $0x378] sm:$0xff]
                  %831 = vst [vmem:[%s703 + $0x1f8] sm:$0xff] %v830
                $region90: #{tpu_custom_call.1} parent=84 // loop_footer
                  %s701 = sadd.s32 1, %s697
                $region91: #{tpu_custom_call.1} parent=84 // loop_footer_branch
                  %696 = sbr.rel target = $region87
                $region92: #{tpu_custom_call.1} parent=84 // loop_exit
                  _
              $region85: #{tpu_custom_call.1} parent=69 // pred_fallthru
                _
              // Predicated region
              $region93: #{tpu_custom_call.1} parent=69 // pred_check
                _
              $region94: #{tpu_custom_call.1} parent=69 // pred_check_branch
                %833 = sbr.rel target = $region96
              $region95: #{tpu_custom_call.1} parent=69 // pred_region
                _
              $region96: #{tpu_custom_call.1} parent=69 // pred_fallthru
                _
            $region70: #{tpu_custom_call.1} parent=65 // pred_fallthru
              _
            // Predicated region
            $region71: #{tpu_custom_call.1} parent=65 // pred_check
              _
            $region72: #{tpu_custom_call.1} parent=65 // pred_check_branch
              %556 = sbr.rel target = $region74
            $region73: #{tpu_custom_call.1} parent=65 // pred_region
              loop: start=0, step=1, limit=1
              $region75: #{tpu_custom_call.1} parent=73 // loop_pre_header
                _
              $region76: #{tpu_custom_call.1} parent=73 // loop_header
                %s559 = sphi 0, %s563
                %p560 = scmp.ge.s32.totalorder %s559, 1
                %s564 = sphi %s550, %s550
                %s565 = sphi %s542, %s542
              $region77: #{tpu_custom_call.1} parent=73 // loop_header_branch
                %562 = sbr.rel (%p560) target = $region81
              $region78: #{tpu_custom_call.1} parent=73 // loop_body
                %v566 = vld [vmem:[%s564] sm:$0xff]
                %567 = vst [vmem:[%s565] sm:$0xff] %v566
                %v568 = vld [vmem:[%s564 + $0x8] sm:$0xff]
                %569 = vst [vmem:[%s565 + $0x8] sm:$0xff] %v568
                %v570 = vld [vmem:[%s564 + $0x10] sm:$0xff]
                %571 = vst [vmem:[%s565 + $0x10] sm:$0xff] %v570
                %v572 = vld [vmem:[%s564 + $0x18] sm:$0xff]
                %573 = vst [vmem:[%s565 + $0x18] sm:$0xff] %v572
                %v574 = vld [vmem:[%s564 + $0x20] sm:$0xff]
                %575 = vst [vmem:[%s565 + $0x20] sm:$0xff] %v574
                %v576 = vld [vmem:[%s564 + $0x28] sm:$0xff]
                %577 = vst [vmem:[%s565 + $0x28] sm:$0xff] %v576
                %v578 = vld [vmem:[%s564 + $0x30] sm:$0xff]
                %579 = vst [vmem:[%s565 + $0x30] sm:$0xff] %v578
                %v580 = vld [vmem:[%s564 + $0x38] sm:$0xff]
                %581 = vst [vmem:[%s565 + $0x38] sm:$0xff] %v580
                %v582 = vld [vmem:[%s564 + $0x40] sm:$0xff]
                %583 = vst [vmem:[%s565 + $0x40] sm:$0xff] %v582
                %v584 = vld [vmem:[%s564 + $0x48] sm:$0xff]
                %585 = vst [vmem:[%s565 + $0x48] sm:$0xff] %v584
                %v586 = vld [vmem:[%s564 + $0x50] sm:$0xff]
                %587 = vst [vmem:[%s565 + $0x50] sm:$0xff] %v586
                %v588 = vld [vmem:[%s564 + $0x58] sm:$0xff]
                %589 = vst [vmem:[%s565 + $0x58] sm:$0xff] %v588
                %v590 = vld [vmem:[%s564 + $0x60] sm:$0xff]
                %591 = vst [vmem:[%s565 + $0x60] sm:$0xff] %v590
                %v592 = vld [vmem:[%s564 + $0x68] sm:$0xff]
                %593 = vst [vmem:[%s565 + $0x68] sm:$0xff] %v592
                %v594 = vld [vmem:[%s564 + $0x70] sm:$0xff]
                %595 = vst [vmem:[%s565 + $0x70] sm:$0xff] %v594
                %v596 = vld [vmem:[%s564 + $0x78] sm:$0xff]
                %597 = vst [vmem:[%s565 + $0x78] sm:$0xff] %v596
                %v598 = vld [vmem:[%s564 + $0x100] sm:$0xff]
                %599 = vst [vmem:[%s565 + $0x80] sm:$0xff] %v598
                %v600 = vld [vmem:[%s564 + $0x108] sm:$0xff]
                %601 = vst [vmem:[%s565 + $0x88] sm:$0xff] %v600
                %v602 = vld [vmem:[%s564 + $0x110] sm:$0xff]
                %603 = vst [vmem:[%s565 + $0x90] sm:$0xff] %v602
                %v604 = vld [vmem:[%s564 + $0x118] sm:$0xff]
                %605 = vst [vmem:[%s565 + $0x98] sm:$0xff] %v604
                %v606 = vld [vmem:[%s564 + $0x120] sm:$0xff]
                %607 = vst [vmem:[%s565 + $0xa0] sm:$0xff] %v606
                %v608 = vld [vmem:[%s564 + $0x128] sm:$0xff]
                %609 = vst [vmem:[%s565 + $0xa8] sm:$0xff] %v608
                %v610 = vld [vmem:[%s564 + $0x130] sm:$0xff]
                %611 = vst [vmem:[%s565 + $0xb0] sm:$0xff] %v610
                %v612 = vld [vmem:[%s564 + $0x138] sm:$0xff]
                %613 = vst [vmem:[%s565 + $0xb8] sm:$0xff] %v612
                %v614 = vld [vmem:[%s564 + $0x140] sm:$0xff]
                %615 = vst [vmem:[%s565 + $0xc0] sm:$0xff] %v614
                %v616 = vld [vmem:[%s564 + $0x148] sm:$0xff]
                %617 = vst [vmem:[%s565 + $0xc8] sm:$0xff] %v616
                %v618 = vld [vmem:[%s564 + $0x150] sm:$0xff]
                %619 = vst [vmem:[%s565 + $0xd0] sm:$0xff] %v618
                %v620 = vld [vmem:[%s564 + $0x158] sm:$0xff]
                %621 = vst [vmem:[%s565 + $0xd8] sm:$0xff] %v620
                %v622 = vld [vmem:[%s564 + $0x160] sm:$0xff]
                %623 = vst [vmem:[%s565 + $0xe0] sm:$0xff] %v622
                %v624 = vld [vmem:[%s564 + $0x168] sm:$0xff]
                %625 = vst [vmem:[%s565 + $0xe8] sm:$0xff] %v624
                %v626 = vld [vmem:[%s564 + $0x170] sm:$0xff]
                %627 = vst [vmem:[%s565 + $0xf0] sm:$0xff] %v626
                %v628 = vld [vmem:[%s564 + $0x178] sm:$0xff]
                %629 = vst [vmem:[%s565 + $0xf8] sm:$0xff] %v628
                %v630 = vld [vmem:[%s564 + $0x200] sm:$0xff]
                %631 = vst [vmem:[%s565 + $0x100] sm:$0xff] %v630
                %v632 = vld [vmem:[%s564 + $0x208] sm:$0xff]
                %633 = vst [vmem:[%s565 + $0x108] sm:$0xff] %v632
                %v634 = vld [vmem:[%s564 + $0x210] sm:$0xff]
                %635 = vst [vmem:[%s565 + $0x110] sm:$0xff] %v634
                %v636 = vld [vmem:[%s564 + $0x218] sm:$0xff]
                %637 = vst [vmem:[%s565 + $0x118] sm:$0xff] %v636
                %v638 = vld [vmem:[%s564 + $0x220] sm:$0xff]
                %639 = vst [vmem:[%s565 + $0x120] sm:$0xff] %v638
                %v640 = vld [vmem:[%s564 + $0x228] sm:$0xff]
                %641 = vst [vmem:[%s565 + $0x128] sm:$0xff] %v640
                %v642 = vld [vmem:[%s564 + $0x230] sm:$0xff]
                %643 = vst [vmem:[%s565 + $0x130] sm:$0xff] %v642
                %v644 = vld [vmem:[%s564 + $0x238] sm:$0xff]
                %645 = vst [vmem:[%s565 + $0x138] sm:$0xff] %v644
                %v646 = vld [vmem:[%s564 + $0x240] sm:$0xff]
                %647 = vst [vmem:[%s565 + $0x140] sm:$0xff] %v646
                %v648 = vld [vmem:[%s564 + $0x248] sm:$0xff]
                %649 = vst [vmem:[%s565 + $0x148] sm:$0xff] %v648
                %v650 = vld [vmem:[%s564 + $0x250] sm:$0xff]
                %651 = vst [vmem:[%s565 + $0x150] sm:$0xff] %v650
                %v652 = vld [vmem:[%s564 + $0x258] sm:$0xff]
                %653 = vst [vmem:[%s565 + $0x158] sm:$0xff] %v652
                %v654 = vld [vmem:[%s564 + $0x260] sm:$0xff]
                %655 = vst [vmem:[%s565 + $0x160] sm:$0xff] %v654
                %v656 = vld [vmem:[%s564 + $0x268] sm:$0xff]
                %657 = vst [vmem:[%s565 + $0x168] sm:$0xff] %v656
                %v658 = vld [vmem:[%s564 + $0x270] sm:$0xff]
                %659 = vst [vmem:[%s565 + $0x170] sm:$0xff] %v658
                %v660 = vld [vmem:[%s564 + $0x278] sm:$0xff]
                %661 = vst [vmem:[%s565 + $0x178] sm:$0xff] %v660
                %v662 = vld [vmem:[%s564 + $0x300] sm:$0xff]
                %663 = vst [vmem:[%s565 + $0x180] sm:$0xff] %v662
                %v664 = vld [vmem:[%s564 + $0x308] sm:$0xff]
                %665 = vst [vmem:[%s565 + $0x188] sm:$0xff] %v664
                %v666 = vld [vmem:[%s564 + $0x310] sm:$0xff]
                %667 = vst [vmem:[%s565 + $0x190] sm:$0xff] %v666
                %v668 = vld [vmem:[%s564 + $0x318] sm:$0xff]
                %669 = vst [vmem:[%s565 + $0x198] sm:$0xff] %v668
                %v670 = vld [vmem:[%s564 + $0x320] sm:$0xff]
                %671 = vst [vmem:[%s565 + $0x1a0] sm:$0xff] %v670
                %v672 = vld [vmem:[%s564 + $0x328] sm:$0xff]
                %673 = vst [vmem:[%s565 + $0x1a8] sm:$0xff] %v672
                %v674 = vld [vmem:[%s564 + $0x330] sm:$0xff]
                %675 = vst [vmem:[%s565 + $0x1b0] sm:$0xff] %v674
                %v676 = vld [vmem:[%s564 + $0x338] sm:$0xff]
                %677 = vst [vmem:[%s565 + $0x1b8] sm:$0xff] %v676
                %v678 = vld [vmem:[%s564 + $0x340] sm:$0xff]
                %679 = vst [vmem:[%s565 + $0x1c0] sm:$0xff] %v678
                %v680 = vld [vmem:[%s564 + $0x348] sm:$0xff]
                %681 = vst [vmem:[%s565 + $0x1c8] sm:$0xff] %v680
                %v682 = vld [vmem:[%s564 + $0x350] sm:$0xff]
                %683 = vst [vmem:[%s565 + $0x1d0] sm:$0xff] %v682
                %v684 = vld [vmem:[%s564 + $0x358] sm:$0xff]
                %685 = vst [vmem:[%s565 + $0x1d8] sm:$0xff] %v684
                %v686 = vld [vmem:[%s564 + $0x360] sm:$0xff]
                %687 = vst [vmem:[%s565 + $0x1e0] sm:$0xff] %v686
                %v688 = vld [vmem:[%s564 + $0x368] sm:$0xff]
                %689 = vst [vmem:[%s565 + $0x1e8] sm:$0xff] %v688
                %v690 = vld [vmem:[%s564 + $0x370] sm:$0xff]
                %691 = vst [vmem:[%s565 + $0x1f0] sm:$0xff] %v690
                %v692 = vld [vmem:[%s564 + $0x378] sm:$0xff]
                %693 = vst [vmem:[%s565 + $0x1f8] sm:$0xff] %v692
              $region79: #{tpu_custom_call.1} parent=73 // loop_footer
                %s563 = sadd.s32 1, %s559
              $region80: #{tpu_custom_call.1} parent=73 // loop_footer_branch
                %558 = sbr.rel target = $region76
              $region81: #{tpu_custom_call.1} parent=73 // loop_exit
                _
            $region74: #{tpu_custom_call.1} parent=65 // pred_fallthru
              _
          $region66: #{tpu_custom_call.1} parent=61 // pred_fallthru
            _
          %834 = vnop
        $region62: #{tpu_custom_call.1} parent=19 // pred_fallthru
          _
        // Predicated region
        $region97: #{tpu_custom_call.1} parent=19 // pred_check
          %p835 = pneg %p143
        $region98: #{tpu_custom_call.1} parent=19 // pred_check_branch
          %837 = sbr.rel (%p835) target = $region100
        $region99: #{tpu_custom_call.1} parent=19 // pred_region
          %s838 = sand.u32 %s133, 1
          %s839 = sand.u32 %s133, 1
          %s840 = smul.addr %s839, 512
          %s841 = scalar_lea.vmem [#allocation9], %s840
          %s842 = smul.u32 4, %s20
          %s843 = smul.u32 16, %s22
          %s844 = smul.addr %s842, 32
          %s845 = sadd.s32 %s843, %s844
          %s846 = smul.addr %s19, 128
          %s847 = sadd.s32 %s845, %s846
          %s848 = smul.addr %s847, 8
          %s849 = scalar_lea.vmem %s3, %s848
          // Predicated region
          $region101: #{tpu_custom_call.1} parent=99 // pred_check
            _
          $region102: #{tpu_custom_call.1} parent=99 // pred_check_branch
            %851 = sbr.rel (0) target = $region104
          $region103: #{tpu_custom_call.1} parent=99 // pred_region
            // Predicated region
            $region105: #{tpu_custom_call.1} parent=103 // pred_check
              _
            $region106: #{tpu_custom_call.1} parent=103 // pred_check_branch
              %853 = sbr.rel (0) target = $region108
            $region107: #{tpu_custom_call.1} parent=103 // pred_region
              // Predicated region
              $region120: #{tpu_custom_call.1} parent=107 // pred_check
                _
              $region121: #{tpu_custom_call.1} parent=107 // pred_check_branch
                %994 = sbr.rel (0) target = $region123
              $region122: #{tpu_custom_call.1} parent=107 // pred_region
                loop: start=0, step=1, limit=1
                $region124: #{tpu_custom_call.1} parent=122 // loop_pre_header
                  _
                $region125: #{tpu_custom_call.1} parent=122 // loop_header
                  %s996 = sphi 0, %s1000
                  %p997 = scmp.ge.s32.totalorder %s996, 1
                  %s1001 = sphi %s849, %s849
                  %s1002 = sphi %s841, %s841
                $region126: #{tpu_custom_call.1} parent=122 // loop_header_branch
                  %999 = sbr.rel (%p997) target = $region130
                $region127: #{tpu_custom_call.1} parent=122 // loop_body
                  %v1003 = vld [vmem:[%s1001] sm:$0xff]
                  %1004 = vst [vmem:[%s1002] sm:$0xff] %v1003
                  %v1005 = vld [vmem:[%s1001 + $0x8] sm:$0xff]
                  %1006 = vst [vmem:[%s1002 + $0x8] sm:$0xff] %v1005
                  %v1007 = vld [vmem:[%s1001 + $0x10] sm:$0xff]
                  %1008 = vst [vmem:[%s1002 + $0x10] sm:$0xff] %v1007
                  %v1009 = vld [vmem:[%s1001 + $0x18] sm:$0xff]
                  %1010 = vst [vmem:[%s1002 + $0x18] sm:$0xff] %v1009
                  %v1011 = vld [vmem:[%s1001 + $0x20] sm:$0xff]
                  %1012 = vst [vmem:[%s1002 + $0x20] sm:$0xff] %v1011
                  %v1013 = vld [vmem:[%s1001 + $0x28] sm:$0xff]
                  %1014 = vst [vmem:[%s1002 + $0x28] sm:$0xff] %v1013
                  %v1015 = vld [vmem:[%s1001 + $0x30] sm:$0xff]
                  %1016 = vst [vmem:[%s1002 + $0x30] sm:$0xff] %v1015
                  %v1017 = vld [vmem:[%s1001 + $0x38] sm:$0xff]
                  %1018 = vst [vmem:[%s1002 + $0x38] sm:$0xff] %v1017
                  %v1019 = vld [vmem:[%s1001 + $0x40] sm:$0xff]
                  %1020 = vst [vmem:[%s1002 + $0x40] sm:$0xff] %v1019
                  %v1021 = vld [vmem:[%s1001 + $0x48] sm:$0xff]
                  %1022 = vst [vmem:[%s1002 + $0x48] sm:$0xff] %v1021
                  %v1023 = vld [vmem:[%s1001 + $0x50] sm:$0xff]
                  %1024 = vst [vmem:[%s1002 + $0x50] sm:$0xff] %v1023
                  %v1025 = vld [vmem:[%s1001 + $0x58] sm:$0xff]
                  %1026 = vst [vmem:[%s1002 + $0x58] sm:$0xff] %v1025
                  %v1027 = vld [vmem:[%s1001 + $0x60] sm:$0xff]
                  %1028 = vst [vmem:[%s1002 + $0x60] sm:$0xff] %v1027
                  %v1029 = vld [vmem:[%s1001 + $0x68] sm:$0xff]
                  %1030 = vst [vmem:[%s1002 + $0x68] sm:$0xff] %v1029
                  %v1031 = vld [vmem:[%s1001 + $0x70] sm:$0xff]
                  %1032 = vst [vmem:[%s1002 + $0x70] sm:$0xff] %v1031
                  %v1033 = vld [vmem:[%s1001 + $0x78] sm:$0xff]
                  %1034 = vst [vmem:[%s1002 + $0x78] sm:$0xff] %v1033
                  %v1035 = vld [vmem:[%s1001 + $0x100] sm:$0xff]
                  %1036 = vst [vmem:[%s1002 + $0x80] sm:$0xff] %v1035
                  %v1037 = vld [vmem:[%s1001 + $0x108] sm:$0xff]
                  %1038 = vst [vmem:[%s1002 + $0x88] sm:$0xff] %v1037
                  %v1039 = vld [vmem:[%s1001 + $0x110] sm:$0xff]
                  %1040 = vst [vmem:[%s1002 + $0x90] sm:$0xff] %v1039
                  %v1041 = vld [vmem:[%s1001 + $0x118] sm:$0xff]
                  %1042 = vst [vmem:[%s1002 + $0x98] sm:$0xff] %v1041
                  %v1043 = vld [vmem:[%s1001 + $0x120] sm:$0xff]
                  %1044 = vst [vmem:[%s1002 + $0xa0] sm:$0xff] %v1043
                  %v1045 = vld [vmem:[%s1001 + $0x128] sm:$0xff]
                  %1046 = vst [vmem:[%s1002 + $0xa8] sm:$0xff] %v1045
                  %v1047 = vld [vmem:[%s1001 + $0x130] sm:$0xff]
                  %1048 = vst [vmem:[%s1002 + $0xb0] sm:$0xff] %v1047
                  %v1049 = vld [vmem:[%s1001 + $0x138] sm:$0xff]
                  %1050 = vst [vmem:[%s1002 + $0xb8] sm:$0xff] %v1049
                  %v1051 = vld [vmem:[%s1001 + $0x140] sm:$0xff]
                  %1052 = vst [vmem:[%s1002 + $0xc0] sm:$0xff] %v1051
                  %v1053 = vld [vmem:[%s1001 + $0x148] sm:$0xff]
                  %1054 = vst [vmem:[%s1002 + $0xc8] sm:$0xff] %v1053
                  %v1055 = vld [vmem:[%s1001 + $0x150] sm:$0xff]
                  %1056 = vst [vmem:[%s1002 + $0xd0] sm:$0xff] %v1055
                  %v1057 = vld [vmem:[%s1001 + $0x158] sm:$0xff]
                  %1058 = vst [vmem:[%s1002 + $0xd8] sm:$0xff] %v1057
                  %v1059 = vld [vmem:[%s1001 + $0x160] sm:$0xff]
                  %1060 = vst [vmem:[%s1002 + $0xe0] sm:$0xff] %v1059
                  %v1061 = vld [vmem:[%s1001 + $0x168] sm:$0xff]
                  %1062 = vst [vmem:[%s1002 + $0xe8] sm:$0xff] %v1061
                  %v1063 = vld [vmem:[%s1001 + $0x170] sm:$0xff]
                  %1064 = vst [vmem:[%s1002 + $0xf0] sm:$0xff] %v1063
                  %v1065 = vld [vmem:[%s1001 + $0x178] sm:$0xff]
                  %1066 = vst [vmem:[%s1002 + $0xf8] sm:$0xff] %v1065
                  %v1067 = vld [vmem:[%s1001 + $0x200] sm:$0xff]
                  %1068 = vst [vmem:[%s1002 + $0x100] sm:$0xff] %v1067
                  %v1069 = vld [vmem:[%s1001 + $0x208] sm:$0xff]
                  %1070 = vst [vmem:[%s1002 + $0x108] sm:$0xff] %v1069
                  %v1071 = vld [vmem:[%s1001 + $0x210] sm:$0xff]
                  %1072 = vst [vmem:[%s1002 + $0x110] sm:$0xff] %v1071
                  %v1073 = vld [vmem:[%s1001 + $0x218] sm:$0xff]
                  %1074 = vst [vmem:[%s1002 + $0x118] sm:$0xff] %v1073
                  %v1075 = vld [vmem:[%s1001 + $0x220] sm:$0xff]
                  %1076 = vst [vmem:[%s1002 + $0x120] sm:$0xff] %v1075
                  %v1077 = vld [vmem:[%s1001 + $0x228] sm:$0xff]
                  %1078 = vst [vmem:[%s1002 + $0x128] sm:$0xff] %v1077
                  %v1079 = vld [vmem:[%s1001 + $0x230] sm:$0xff]
                  %1080 = vst [vmem:[%s1002 + $0x130] sm:$0xff] %v1079
                  %v1081 = vld [vmem:[%s1001 + $0x238] sm:$0xff]
                  %1082 = vst [vmem:[%s1002 + $0x138] sm:$0xff] %v1081
                  %v1083 = vld [vmem:[%s1001 + $0x240] sm:$0xff]
                  %1084 = vst [vmem:[%s1002 + $0x140] sm:$0xff] %v1083
                  %v1085 = vld [vmem:[%s1001 + $0x248] sm:$0xff]
                  %1086 = vst [vmem:[%s1002 + $0x148] sm:$0xff] %v1085
                  %v1087 = vld [vmem:[%s1001 + $0x250] sm:$0xff]
                  %1088 = vst [vmem:[%s1002 + $0x150] sm:$0xff] %v1087
                  %v1089 = vld [vmem:[%s1001 + $0x258] sm:$0xff]
                  %1090 = vst [vmem:[%s1002 + $0x158] sm:$0xff] %v1089
                  %v1091 = vld [vmem:[%s1001 + $0x260] sm:$0xff]
                  %1092 = vst [vmem:[%s1002 + $0x160] sm:$0xff] %v1091
                  %v1093 = vld [vmem:[%s1001 + $0x268] sm:$0xff]
                  %1094 = vst [vmem:[%s1002 + $0x168] sm:$0xff] %v1093
                  %v1095 = vld [vmem:[%s1001 + $0x270] sm:$0xff]
                  %1096 = vst [vmem:[%s1002 + $0x170] sm:$0xff] %v1095
                  %v1097 = vld [vmem:[%s1001 + $0x278] sm:$0xff]
                  %1098 = vst [vmem:[%s1002 + $0x178] sm:$0xff] %v1097
                  %v1099 = vld [vmem:[%s1001 + $0x300] sm:$0xff]
                  %1100 = vst [vmem:[%s1002 + $0x180] sm:$0xff] %v1099
                  %v1101 = vld [vmem:[%s1001 + $0x308] sm:$0xff]
                  %1102 = vst [vmem:[%s1002 + $0x188] sm:$0xff] %v1101
                  %v1103 = vld [vmem:[%s1001 + $0x310] sm:$0xff]
                  %1104 = vst [vmem:[%s1002 + $0x190] sm:$0xff] %v1103
                  %v1105 = vld [vmem:[%s1001 + $0x318] sm:$0xff]
                  %1106 = vst [vmem:[%s1002 + $0x198] sm:$0xff] %v1105
                  %v1107 = vld [vmem:[%s1001 + $0x320] sm:$0xff]
                  %1108 = vst [vmem:[%s1002 + $0x1a0] sm:$0xff] %v1107
                  %v1109 = vld [vmem:[%s1001 + $0x328] sm:$0xff]
                  %1110 = vst [vmem:[%s1002 + $0x1a8] sm:$0xff] %v1109
                  %v1111 = vld [vmem:[%s1001 + $0x330] sm:$0xff]
                  %1112 = vst [vmem:[%s1002 + $0x1b0] sm:$0xff] %v1111
                  %v1113 = vld [vmem:[%s1001 + $0x338] sm:$0xff]
                  %1114 = vst [vmem:[%s1002 + $0x1b8] sm:$0xff] %v1113
                  %v1115 = vld [vmem:[%s1001 + $0x340] sm:$0xff]
                  %1116 = vst [vmem:[%s1002 + $0x1c0] sm:$0xff] %v1115
                  %v1117 = vld [vmem:[%s1001 + $0x348] sm:$0xff]
                  %1118 = vst [vmem:[%s1002 + $0x1c8] sm:$0xff] %v1117
                  %v1119 = vld [vmem:[%s1001 + $0x350] sm:$0xff]
                  %1120 = vst [vmem:[%s1002 + $0x1d0] sm:$0xff] %v1119
                  %v1121 = vld [vmem:[%s1001 + $0x358] sm:$0xff]
                  %1122 = vst [vmem:[%s1002 + $0x1d8] sm:$0xff] %v1121
                  %v1123 = vld [vmem:[%s1001 + $0x360] sm:$0xff]
                  %1124 = vst [vmem:[%s1002 + $0x1e0] sm:$0xff] %v1123
                  %v1125 = vld [vmem:[%s1001 + $0x368] sm:$0xff]
                  %1126 = vst [vmem:[%s1002 + $0x1e8] sm:$0xff] %v1125
                  %v1127 = vld [vmem:[%s1001 + $0x370] sm:$0xff]
                  %1128 = vst [vmem:[%s1002 + $0x1f0] sm:$0xff] %v1127
                  %v1129 = vld [vmem:[%s1001 + $0x378] sm:$0xff]
                  %1130 = vst [vmem:[%s1002 + $0x1f8] sm:$0xff] %v1129
                $region128: #{tpu_custom_call.1} parent=122 // loop_footer
                  %s1000 = sadd.s32 1, %s996
                $region129: #{tpu_custom_call.1} parent=122 // loop_footer_branch
                  %995 = sbr.rel target = $region125
                $region130: #{tpu_custom_call.1} parent=122 // loop_exit
                  _
              $region123: #{tpu_custom_call.1} parent=107 // pred_fallthru
                _
              // Predicated region
              $region131: #{tpu_custom_call.1} parent=107 // pred_check
                _
              $region132: #{tpu_custom_call.1} parent=107 // pred_check_branch
                %1132 = sbr.rel target = $region134
              $region133: #{tpu_custom_call.1} parent=107 // pred_region
                _
              $region134: #{tpu_custom_call.1} parent=107 // pred_fallthru
                _
            $region108: #{tpu_custom_call.1} parent=103 // pred_fallthru
              _
            // Predicated region
            $region109: #{tpu_custom_call.1} parent=103 // pred_check
              _
            $region110: #{tpu_custom_call.1} parent=103 // pred_check_branch
              %855 = sbr.rel target = $region112
            $region111: #{tpu_custom_call.1} parent=103 // pred_region
              loop: start=0, step=1, limit=1
              $region113: #{tpu_custom_call.1} parent=111 // loop_pre_header
                _
              $region114: #{tpu_custom_call.1} parent=111 // loop_header
                %s858 = sphi 0, %s862
                %p859 = scmp.ge.s32.totalorder %s858, 1
                %s863 = sphi %s849, %s849
                %s864 = sphi %s841, %s841
              $region115: #{tpu_custom_call.1} parent=111 // loop_header_branch
                %861 = sbr.rel (%p859) target = $region119
              $region116: #{tpu_custom_call.1} parent=111 // loop_body
                %v865 = vld [vmem:[%s863] sm:$0xff]
                %866 = vst [vmem:[%s864] sm:$0xff] %v865
                %v867 = vld [vmem:[%s863 + $0x8] sm:$0xff]
                %868 = vst [vmem:[%s864 + $0x8] sm:$0xff] %v867
                %v869 = vld [vmem:[%s863 + $0x10] sm:$0xff]
                %870 = vst [vmem:[%s864 + $0x10] sm:$0xff] %v869
                %v871 = vld [vmem:[%s863 + $0x18] sm:$0xff]
                %872 = vst [vmem:[%s864 + $0x18] sm:$0xff] %v871
                %v873 = vld [vmem:[%s863 + $0x20] sm:$0xff]
                %874 = vst [vmem:[%s864 + $0x20] sm:$0xff] %v873
                %v875 = vld [vmem:[%s863 + $0x28] sm:$0xff]
                %876 = vst [vmem:[%s864 + $0x28] sm:$0xff] %v875
                %v877 = vld [vmem:[%s863 + $0x30] sm:$0xff]
                %878 = vst [vmem:[%s864 + $0x30] sm:$0xff] %v877
                %v879 = vld [vmem:[%s863 + $0x38] sm:$0xff]
                %880 = vst [vmem:[%s864 + $0x38] sm:$0xff] %v879
                %v881 = vld [vmem:[%s863 + $0x40] sm:$0xff]
                %882 = vst [vmem:[%s864 + $0x40] sm:$0xff] %v881
                %v883 = vld [vmem:[%s863 + $0x48] sm:$0xff]
                %884 = vst [vmem:[%s864 + $0x48] sm:$0xff] %v883
                %v885 = vld [vmem:[%s863 + $0x50] sm:$0xff]
                %886 = vst [vmem:[%s864 + $0x50] sm:$0xff] %v885
                %v887 = vld [vmem:[%s863 + $0x58] sm:$0xff]
                %888 = vst [vmem:[%s864 + $0x58] sm:$0xff] %v887
                %v889 = vld [vmem:[%s863 + $0x60] sm:$0xff]
                %890 = vst [vmem:[%s864 + $0x60] sm:$0xff] %v889
                %v891 = vld [vmem:[%s863 + $0x68] sm:$0xff]
                %892 = vst [vmem:[%s864 + $0x68] sm:$0xff] %v891
                %v893 = vld [vmem:[%s863 + $0x70] sm:$0xff]
                %894 = vst [vmem:[%s864 + $0x70] sm:$0xff] %v893
                %v895 = vld [vmem:[%s863 + $0x78] sm:$0xff]
                %896 = vst [vmem:[%s864 + $0x78] sm:$0xff] %v895
                %v897 = vld [vmem:[%s863 + $0x100] sm:$0xff]
                %898 = vst [vmem:[%s864 + $0x80] sm:$0xff] %v897
                %v899 = vld [vmem:[%s863 + $0x108] sm:$0xff]
                %900 = vst [vmem:[%s864 + $0x88] sm:$0xff] %v899
                %v901 = vld [vmem:[%s863 + $0x110] sm:$0xff]
                %902 = vst [vmem:[%s864 + $0x90] sm:$0xff] %v901
                %v903 = vld [vmem:[%s863 + $0x118] sm:$0xff]
                %904 = vst [vmem:[%s864 + $0x98] sm:$0xff] %v903
                %v905 = vld [vmem:[%s863 + $0x120] sm:$0xff]
                %906 = vst [vmem:[%s864 + $0xa0] sm:$0xff] %v905
                %v907 = vld [vmem:[%s863 + $0x128] sm:$0xff]
                %908 = vst [vmem:[%s864 + $0xa8] sm:$0xff] %v907
                %v909 = vld [vmem:[%s863 + $0x130] sm:$0xff]
                %910 = vst [vmem:[%s864 + $0xb0] sm:$0xff] %v909
                %v911 = vld [vmem:[%s863 + $0x138] sm:$0xff]
                %912 = vst [vmem:[%s864 + $0xb8] sm:$0xff] %v911
                %v913 = vld [vmem:[%s863 + $0x140] sm:$0xff]
                %914 = vst [vmem:[%s864 + $0xc0] sm:$0xff] %v913
                %v915 = vld [vmem:[%s863 + $0x148] sm:$0xff]
                %916 = vst [vmem:[%s864 + $0xc8] sm:$0xff] %v915
                %v917 = vld [vmem:[%s863 + $0x150] sm:$0xff]
                %918 = vst [vmem:[%s864 + $0xd0] sm:$0xff] %v917
                %v919 = vld [vmem:[%s863 + $0x158] sm:$0xff]
                %920 = vst [vmem:[%s864 + $0xd8] sm:$0xff] %v919
                %v921 = vld [vmem:[%s863 + $0x160] sm:$0xff]
                %922 = vst [vmem:[%s864 + $0xe0] sm:$0xff] %v921
                %v923 = vld [vmem:[%s863 + $0x168] sm:$0xff]
                %924 = vst [vmem:[%s864 + $0xe8] sm:$0xff] %v923
                %v925 = vld [vmem:[%s863 + $0x170] sm:$0xff]
                %926 = vst [vmem:[%s864 + $0xf0] sm:$0xff] %v925
                %v927 = vld [vmem:[%s863 + $0x178] sm:$0xff]
                %928 = vst [vmem:[%s864 + $0xf8] sm:$0xff] %v927
                %v929 = vld [vmem:[%s863 + $0x200] sm:$0xff]
                %930 = vst [vmem:[%s864 + $0x100] sm:$0xff] %v929
                %v931 = vld [vmem:[%s863 + $0x208] sm:$0xff]
                %932 = vst [vmem:[%s864 + $0x108] sm:$0xff] %v931
                %v933 = vld [vmem:[%s863 + $0x210] sm:$0xff]
                %934 = vst [vmem:[%s864 + $0x110] sm:$0xff] %v933
                %v935 = vld [vmem:[%s863 + $0x218] sm:$0xff]
                %936 = vst [vmem:[%s864 + $0x118] sm:$0xff] %v935
                %v937 = vld [vmem:[%s863 + $0x220] sm:$0xff]
                %938 = vst [vmem:[%s864 + $0x120] sm:$0xff] %v937
                %v939 = vld [vmem:[%s863 + $0x228] sm:$0xff]
                %940 = vst [vmem:[%s864 + $0x128] sm:$0xff] %v939
                %v941 = vld [vmem:[%s863 + $0x230] sm:$0xff]
                %942 = vst [vmem:[%s864 + $0x130] sm:$0xff] %v941
                %v943 = vld [vmem:[%s863 + $0x238] sm:$0xff]
                %944 = vst [vmem:[%s864 + $0x138] sm:$0xff] %v943
                %v945 = vld [vmem:[%s863 + $0x240] sm:$0xff]
                %946 = vst [vmem:[%s864 + $0x140] sm:$0xff] %v945
                %v947 = vld [vmem:[%s863 + $0x248] sm:$0xff]
                %948 = vst [vmem:[%s864 + $0x148] sm:$0xff] %v947
                %v949 = vld [vmem:[%s863 + $0x250] sm:$0xff]
                %950 = vst [vmem:[%s864 + $0x150] sm:$0xff] %v949
                %v951 = vld [vmem:[%s863 + $0x258] sm:$0xff]
                %952 = vst [vmem:[%s864 + $0x158] sm:$0xff] %v951
                %v953 = vld [vmem:[%s863 + $0x260] sm:$0xff]
                %954 = vst [vmem:[%s864 + $0x160] sm:$0xff] %v953
                %v955 = vld [vmem:[%s863 + $0x268] sm:$0xff]
                %956 = vst [vmem:[%s864 + $0x168] sm:$0xff] %v955
                %v957 = vld [vmem:[%s863 + $0x270] sm:$0xff]
                %958 = vst [vmem:[%s864 + $0x170] sm:$0xff] %v957
                %v959 = vld [vmem:[%s863 + $0x278] sm:$0xff]
                %960 = vst [vmem:[%s864 + $0x178] sm:$0xff] %v959
                %v961 = vld [vmem:[%s863 + $0x300] sm:$0xff]
                %962 = vst [vmem:[%s864 + $0x180] sm:$0xff] %v961
                %v963 = vld [vmem:[%s863 + $0x308] sm:$0xff]
                %964 = vst [vmem:[%s864 + $0x188] sm:$0xff] %v963
                %v965 = vld [vmem:[%s863 + $0x310] sm:$0xff]
                %966 = vst [vmem:[%s864 + $0x190] sm:$0xff] %v965
                %v967 = vld [vmem:[%s863 + $0x318] sm:$0xff]
                %968 = vst [vmem:[%s864 + $0x198] sm:$0xff] %v967
                %v969 = vld [vmem:[%s863 + $0x320] sm:$0xff]
                %970 = vst [vmem:[%s864 + $0x1a0] sm:$0xff] %v969
                %v971 = vld [vmem:[%s863 + $0x328] sm:$0xff]
                %972 = vst [vmem:[%s864 + $0x1a8] sm:$0xff] %v971
                %v973 = vld [vmem:[%s863 + $0x330] sm:$0xff]
                %974 = vst [vmem:[%s864 + $0x1b0] sm:$0xff] %v973
                %v975 = vld [vmem:[%s863 + $0x338] sm:$0xff]
                %976 = vst [vmem:[%s864 + $0x1b8] sm:$0xff] %v975
                %v977 = vld [vmem:[%s863 + $0x340] sm:$0xff]
                %978 = vst [vmem:[%s864 + $0x1c0] sm:$0xff] %v977
                %v979 = vld [vmem:[%s863 + $0x348] sm:$0xff]
                %980 = vst [vmem:[%s864 + $0x1c8] sm:$0xff] %v979
                %v981 = vld [vmem:[%s863 + $0x350] sm:$0xff]
                %982 = vst [vmem:[%s864 + $0x1d0] sm:$0xff] %v981
                %v983 = vld [vmem:[%s863 + $0x358] sm:$0xff]
                %984 = vst [vmem:[%s864 + $0x1d8] sm:$0xff] %v983
                %v985 = vld [vmem:[%s863 + $0x360] sm:$0xff]
                %986 = vst [vmem:[%s864 + $0x1e0] sm:$0xff] %v985
                %v987 = vld [vmem:[%s863 + $0x368] sm:$0xff]
                %988 = vst [vmem:[%s864 + $0x1e8] sm:$0xff] %v987
                %v989 = vld [vmem:[%s863 + $0x370] sm:$0xff]
                %990 = vst [vmem:[%s864 + $0x1f0] sm:$0xff] %v989
                %v991 = vld [vmem:[%s863 + $0x378] sm:$0xff]
                %992 = vst [vmem:[%s864 + $0x1f8] sm:$0xff] %v991
              $region117: #{tpu_custom_call.1} parent=111 // loop_footer
                %s862 = sadd.s32 1, %s858
              $region118: #{tpu_custom_call.1} parent=111 // loop_footer_branch
                %857 = sbr.rel target = $region114
              $region119: #{tpu_custom_call.1} parent=111 // loop_exit
                _
            $region112: #{tpu_custom_call.1} parent=103 // pred_fallthru
              _
          $region104: #{tpu_custom_call.1} parent=99 // pred_fallthru
            _
          %1133 = vnop
        $region100: #{tpu_custom_call.1} parent=19 // pred_fallthru
          _
        // Predicated region
        $region135: #{tpu_custom_call.1} parent=19 // pred_check
          %p1134 = pneg %p171
        $region136: #{tpu_custom_call.1} parent=19 // pred_check_branch
          %1136 = sbr.rel (%p1134) target = $region138
        $region137: #{tpu_custom_call.1} parent=19 // pred_region
          %p1137 = scmp.lt.s32.totalorder %s19, 1
          %s1138 = scalar_select %p1137, %s19, 1
          %p1139 = scmp.lt.s32.totalorder %s22, 1
          %s1140 = scalar_select %p1139, %s22, 1
          %s1141 = smul.addr %s1138, 2
          %s1142 = sadd.s32 %s1140, %s1141
          %s1143 = scalar_lea.vmem %s4, %s1142
        $region138: #{tpu_custom_call.1} parent=19 // pred_fallthru
          _
      $region20: #{tpu_custom_call.1} parent=5 // pred_fallthru
        _
      %p1144 = scmp.le.s32.totalorder 1, %s12
      %p1145 = scmp.lt.s32.totalorder %s12, 9
      %p1146 = pnand %p1144, %p1145
      %p1147 = pneg %p1146
      // Predicated region
      $region139: #{tpu_custom_call.1} parent=5 // pred_check
        _
      $region140: #{tpu_custom_call.1} parent=5 // pred_check_branch
        %1149 = sbr.rel (%p1146) target = $region142
      $region141: #{tpu_custom_call.1} parent=5 // pred_region
        %s1150 = ssub.s32 %s12, 1
        // Predicated region
        $region143: #{tpu_custom_call.1} parent=141 // pred_check
          %p1151 = pneg %p59
        $region144: #{tpu_custom_call.1} parent=141 // pred_check_branch
          %1153 = sbr.rel (%p1151) target = $region146
        $region145: #{tpu_custom_call.1} parent=141 // pred_region
          %1154 = dma.done [#allocation6], 32
        $region146: #{tpu_custom_call.1} parent=141 // pred_fallthru
          _
        %s1155 = sand.u32 %s76, 1
        %s1156 = sand.u32 %s76, 1
        %s1157 = smul.addr %s1156, 512
        %s1158 = scalar_lea.vmem [#allocation7], %s1157
        // Predicated region
        $region147: #{tpu_custom_call.1} parent=141 // pred_check
          %p1159 = pneg %p89
        $region148: #{tpu_custom_call.1} parent=141 // pred_check_branch
          %1161 = sbr.rel (%p1159) target = $region150
        $region149: #{tpu_custom_call.1} parent=141 // pred_region
          _
        $region150: #{tpu_custom_call.1} parent=141 // pred_fallthru
          _
        %s1162 = sand.u32 %s106, 1
        %s1163 = sand.u32 %s106, 1
        %s1164 = smul.addr %s1163, 512
        %s1165 = scalar_lea.vmem [#allocation8], %s1164
        // Predicated region
        $region151: #{tpu_custom_call.1} parent=141 // pred_check
          %p1166 = pneg %p119
        $region152: #{tpu_custom_call.1} parent=141 // pred_check_branch
          %1168 = sbr.rel (%p1166) target = $region154
        $region153: #{tpu_custom_call.1} parent=141 // pred_region
          _
        $region154: #{tpu_custom_call.1} parent=141 // pred_fallthru
          _
        %s1169 = sand.u32 %s136, 1
        %s1170 = sand.u32 %s136, 1
        %s1171 = smul.addr %s1170, 512
        %s1172 = scalar_lea.vmem [#allocation9], %s1171
        // Predicated region
        $region155: #{tpu_custom_call.1} parent=141 // pred_check
          %p1173 = pneg %p149
        $region156: #{tpu_custom_call.1} parent=141 // pred_check_branch
          %1175 = sbr.rel (%p1173) target = $region158
        $region157: #{tpu_custom_call.1} parent=141 // pred_region
          _
        $region158: #{tpu_custom_call.1} parent=141 // pred_fallthru
          _
        %1176 = sfence
        %p1177 = pneg %p59
        %p1178 = pneg %p56
        %s1179 = sand.u32 %s76, 1
        %s1180 = sand.u32 %s76, 1
        %s1181 = smul.addr %s1180, 512
        %s1182 = scalar_lea.vmem [#allocation7], %s1181
        %p1183 = pneg %p89
        %p1184 = pneg %p86
        %s1185 = sand.u32 %s106, 1
        %s1186 = sand.u32 %s106, 1
        %s1187 = smul.addr %s1186, 512
        %s1188 = scalar_lea.vmem [#allocation8], %s1187
        %p1189 = pneg %p119
        %p1190 = pneg %p116
        %s1191 = sand.u32 %s136, 1
        %s1192 = sand.u32 %s136, 1
        %s1193 = smul.addr %s1192, 512
        %s1194 = scalar_lea.vmem [#allocation9], %s1193
        %p1195 = pneg %p149
        %p1196 = pneg %p146
        %p1197 = scmp.lt.s32.totalorder %s23, 1
        %s1198 = scalar_select %p1197, %s23, 1
        %p1199 = scmp.lt.s32.totalorder %s26, 1
        %s1200 = scalar_select %p1199, %s26, 1
        %s1201 = smul.addr %s1198, 2
        %s1202 = sadd.s32 %s1200, %s1201
        %s1203 = scalar_lea.vmem %s4, %s1202
        %p1204 = pneg %p177
        %p1205 = pneg %p174
        %p1206 = pneg %p207
        %p1207 = pneg %p204
        %s1208 = sand.u32 %s194, 1
        %s1209 = sand.u32 %s194, 1
        %s1210 = smul.addr %s1209, 512
        %s1211 = scalar_lea.vmem [#allocation10], %s1210
        %s1212 = smul.u32 4, %s24
        %s1213 = smul.u32 16, %s25
        %s1214 = smul.u32 4, %s24
        %s1215 = smul.u32 16, %s26
        %s1216 = smul.u32 4, %s24
        %s1217 = smul.u32 16, %s26
        %p1218 = scmp.lt.s32.totalorder %s23, 1
        %s1219 = scalar_select %p1218, %s23, 1
        %p1220 = scmp.lt.s32.totalorder %s26, 1
        %s1221 = scalar_select %p1220, %s26, 1
        %s1222 = smul.addr %s1219, 2
        %s1223 = sadd.s32 %s1221, %s1222
        %s1224 = scalar_lea.vmem %s4, %s1223
        %s1225 = smul.u32 4, %s24
        %s1226 = smul.u32 16, %s25
        %p1227 = scmp.eq.s32.totalorder %s26, 0
        // Predicated region
        $region159: #{tpu_custom_call.1} parent=141 // pred_check
          %p1228 = pneg %p1227
        $region160: #{tpu_custom_call.1} parent=141 // pred_check_branch
          %1230 = sbr.rel (%p1228) target = $region162
        $region161: #{tpu_custom_call.1} parent=141 // pred_region
          %vm1231 = vcmask 7168
          %1232 = vst.msk [vmem:[#allocation2] sm:$0xff] %vm1231, -2.3819763e+38
          %1233 = vst.msk [vmem:[#allocation2 + $0x8] sm:$0xff] %vm1231, -2.3819763e+38
          %1234 = vst.msk [vmem:[#allocation2 + $0x10] sm:$0xff] %vm1231, -2.3819763e+38
          %1235 = vst.msk [vmem:[#allocation2 + $0x18] sm:$0xff] %vm1231, -2.3819763e+38
          %1236 = vst.msk [vmem:[#allocation2 + $0x20] sm:$0xff] %vm1231, -2.3819763e+38
          %1237 = vst.msk [vmem:[#allocation2 + $0x28] sm:$0xff] %vm1231, -2.3819763e+38
          %1238 = vst.msk [vmem:[#allocation2 + $0x30] sm:$0xff] %vm1231, -2.3819763e+38
          %1239 = vst.msk [vmem:[#allocation2 + $0x38] sm:$0xff] %vm1231, -2.3819763e+38
          %1240 = vst.msk [vmem:[#allocation2 + $0x40] sm:$0xff] %vm1231, -2.3819763e+38
          %1241 = vst.msk [vmem:[#allocation2 + $0x48] sm:$0xff] %vm1231, -2.3819763e+38
          %1242 = vst.msk [vmem:[#allocation2 + $0x50] sm:$0xff] %vm1231, -2.3819763e+38
          %1243 = vst.msk [vmem:[#allocation2 + $0x58] sm:$0xff] %vm1231, -2.3819763e+38
          %1244 = vst.msk [vmem:[#allocation2 + $0x60] sm:$0xff] %vm1231, -2.3819763e+38
          %1245 = vst.msk [vmem:[#allocation2 + $0x68] sm:$0xff] %vm1231, -2.3819763e+38
          %1246 = vst.msk [vmem:[#allocation2 + $0x70] sm:$0xff] %vm1231, -2.3819763e+38
          %1247 = vst.msk [vmem:[#allocation2 + $0x78] sm:$0xff] %vm1231, -2.3819763e+38
          %1248 = vst.msk [vmem:[#allocation2 + $0x80] sm:$0xff] %vm1231, -2.3819763e+38
          %1249 = vst.msk [vmem:[#allocation2 + $0x88] sm:$0xff] %vm1231, -2.3819763e+38
          %1250 = vst.msk [vmem:[#allocation2 + $0x90] sm:$0xff] %vm1231, -2.3819763e+38
          %1251 = vst.msk [vmem:[#allocation2 + $0x98] sm:$0xff] %vm1231, -2.3819763e+38
          %1252 = vst.msk [vmem:[#allocation2 + $0xa0] sm:$0xff] %vm1231, -2.3819763e+38
          %1253 = vst.msk [vmem:[#allocation2 + $0xa8] sm:$0xff] %vm1231, -2.3819763e+38
          %1254 = vst.msk [vmem:[#allocation2 + $0xb0] sm:$0xff] %vm1231, -2.3819763e+38
          %1255 = vst.msk [vmem:[#allocation2 + $0xb8] sm:$0xff] %vm1231, -2.3819763e+38
          %1256 = vst.msk [vmem:[#allocation2 + $0xc0] sm:$0xff] %vm1231, -2.3819763e+38
          %1257 = vst.msk [vmem:[#allocation2 + $0xc8] sm:$0xff] %vm1231, -2.3819763e+38
          %1258 = vst.msk [vmem:[#allocation2 + $0xd0] sm:$0xff] %vm1231, -2.3819763e+38
          %1259 = vst.msk [vmem:[#allocation2 + $0xd8] sm:$0xff] %vm1231, -2.3819763e+38
          %1260 = vst.msk [vmem:[#allocation2 + $0xe0] sm:$0xff] %vm1231, -2.3819763e+38
          %1261 = vst.msk [vmem:[#allocation2 + $0xe8] sm:$0xff] %vm1231, -2.3819763e+38
          %1262 = vst.msk [vmem:[#allocation2 + $0xf0] sm:$0xff] %vm1231, -2.3819763e+38
          %1263 = vst.msk [vmem:[#allocation2 + $0xf8] sm:$0xff] %vm1231, -2.3819763e+38
          %1264 = vst.msk [vmem:[#allocation2 + $0x100] sm:$0xff] %vm1231, -2.3819763e+38
          %1265 = vst.msk [vmem:[#allocation2 + $0x108] sm:$0xff] %vm1231, -2.3819763e+38
          %1266 = vst.msk [vmem:[#allocation2 + $0x110] sm:$0xff] %vm1231, -2.3819763e+38
          %1267 = vst.msk [vmem:[#allocation2 + $0x118] sm:$0xff] %vm1231, -2.3819763e+38
          %1268 = vst.msk [vmem:[#allocation2 + $0x120] sm:$0xff] %vm1231, -2.3819763e+38
          %1269 = vst.msk [vmem:[#allocation2 + $0x128] sm:$0xff] %vm1231, -2.3819763e+38
          %1270 = vst.msk [vmem:[#allocation2 + $0x130] sm:$0xff] %vm1231, -2.3819763e+38
          %1271 = vst.msk [vmem:[#allocation2 + $0x138] sm:$0xff] %vm1231, -2.3819763e+38
          %1272 = vst.msk [vmem:[#allocation2 + $0x140] sm:$0xff] %vm1231, -2.3819763e+38
          %1273 = vst.msk [vmem:[#allocation2 + $0x148] sm:$0xff] %vm1231, -2.3819763e+38
          %1274 = vst.msk [vmem:[#allocation2 + $0x150] sm:$0xff] %vm1231, -2.3819763e+38
          %1275 = vst.msk [vmem:[#allocation2 + $0x158] sm:$0xff] %vm1231, -2.3819763e+38
          %1276 = vst.msk [vmem:[#allocation2 + $0x160] sm:$0xff] %vm1231, -2.3819763e+38
          %1277 = vst.msk [vmem:[#allocation2 + $0x168] sm:$0xff] %vm1231, -2.3819763e+38
          %1278 = vst.msk [vmem:[#allocation2 + $0x170] sm:$0xff] %vm1231, -2.3819763e+38
          %1279 = vst.msk [vmem:[#allocation2 + $0x178] sm:$0xff] %vm1231, -2.3819763e+38
          %1280 = vst.msk [vmem:[#allocation2 + $0x180] sm:$0xff] %vm1231, -2.3819763e+38
          %1281 = vst.msk [vmem:[#allocation2 + $0x188] sm:$0xff] %vm1231, -2.3819763e+38
          %1282 = vst.msk [vmem:[#allocation2 + $0x190] sm:$0xff] %vm1231, -2.3819763e+38
          %1283 = vst.msk [vmem:[#allocation2 + $0x198] sm:$0xff] %vm1231, -2.3819763e+38
          %1284 = vst.msk [vmem:[#allocation2 + $0x1a0] sm:$0xff] %vm1231, -2.3819763e+38
          %1285 = vst.msk [vmem:[#allocation2 + $0x1a8] sm:$0xff] %vm1231, -2.3819763e+38
          %1286 = vst.msk [vmem:[#allocation2 + $0x1b0] sm:$0xff] %vm1231, -2.3819763e+38
          %1287 = vst.msk [vmem:[#allocation2 + $0x1b8] sm:$0xff] %vm1231, -2.3819763e+38
          %1288 = vst.msk [vmem:[#allocation2 + $0x1c0] sm:$0xff] %vm1231, -2.3819763e+38
          %1289 = vst.msk [vmem:[#allocation2 + $0x1c8] sm:$0xff] %vm1231, -2.3819763e+38
          %1290 = vst.msk [vmem:[#allocation2 + $0x1d0] sm:$0xff] %vm1231, -2.3819763e+38
          %1291 = vst.msk [vmem:[#allocation2 + $0x1d8] sm:$0xff] %vm1231, -2.3819763e+38
          %1292 = vst.msk [vmem:[#allocation2 + $0x1e0] sm:$0xff] %vm1231, -2.3819763e+38
          %1293 = vst.msk [vmem:[#allocation2 + $0x1e8] sm:$0xff] %vm1231, -2.3819763e+38
          %1294 = vst.msk [vmem:[#allocation2 + $0x1f0] sm:$0xff] %vm1231, -2.3819763e+38
          %1295 = vst.msk [vmem:[#allocation2 + $0x1f8] sm:$0xff] %vm1231, -2.3819763e+38
          %1296 = vst.msk [vmem:[#allocation3] sm:$0xff] %vm1231, 0.0
          %1297 = vst.msk [vmem:[#allocation3 + $0x8] sm:$0xff] %vm1231, 0.0
          %1298 = vst.msk [vmem:[#allocation3 + $0x10] sm:$0xff] %vm1231, 0.0
          %1299 = vst.msk [vmem:[#allocation3 + $0x18] sm:$0xff] %vm1231, 0.0
          %1300 = vst.msk [vmem:[#allocation3 + $0x20] sm:$0xff] %vm1231, 0.0
          %1301 = vst.msk [vmem:[#allocation3 + $0x28] sm:$0xff] %vm1231, 0.0
          %1302 = vst.msk [vmem:[#allocation3 + $0x30] sm:$0xff] %vm1231, 0.0
          %1303 = vst.msk [vmem:[#allocation3 + $0x38] sm:$0xff] %vm1231, 0.0
          %1304 = vst.msk [vmem:[#allocation3 + $0x40] sm:$0xff] %vm1231, 0.0
          %1305 = vst.msk [vmem:[#allocation3 + $0x48] sm:$0xff] %vm1231, 0.0
          %1306 = vst.msk [vmem:[#allocation3 + $0x50] sm:$0xff] %vm1231, 0.0
          %1307 = vst.msk [vmem:[#allocation3 + $0x58] sm:$0xff] %vm1231, 0.0
          %1308 = vst.msk [vmem:[#allocation3 + $0x60] sm:$0xff] %vm1231, 0.0
          %1309 = vst.msk [vmem:[#allocation3 + $0x68] sm:$0xff] %vm1231, 0.0
          %1310 = vst.msk [vmem:[#allocation3 + $0x70] sm:$0xff] %vm1231, 0.0
          %1311 = vst.msk [vmem:[#allocation3 + $0x78] sm:$0xff] %vm1231, 0.0
          %1312 = vst.msk [vmem:[#allocation3 + $0x80] sm:$0xff] %vm1231, 0.0
          %1313 = vst.msk [vmem:[#allocation3 + $0x88] sm:$0xff] %vm1231, 0.0
          %1314 = vst.msk [vmem:[#allocation3 + $0x90] sm:$0xff] %vm1231, 0.0
          %1315 = vst.msk [vmem:[#allocation3 + $0x98] sm:$0xff] %vm1231, 0.0
          %1316 = vst.msk [vmem:[#allocation3 + $0xa0] sm:$0xff] %vm1231, 0.0
          %1317 = vst.msk [vmem:[#allocation3 + $0xa8] sm:$0xff] %vm1231, 0.0
          %1318 = vst.msk [vmem:[#allocation3 + $0xb0] sm:$0xff] %vm1231, 0.0
          %1319 = vst.msk [vmem:[#allocation3 + $0xb8] sm:$0xff] %vm1231, 0.0
          %1320 = vst.msk [vmem:[#allocation3 + $0xc0] sm:$0xff] %vm1231, 0.0
          %1321 = vst.msk [vmem:[#allocation3 + $0xc8] sm:$0xff] %vm1231, 0.0
          %1322 = vst.msk [vmem:[#allocation3 + $0xd0] sm:$0xff] %vm1231, 0.0
          %1323 = vst.msk [vmem:[#allocation3 + $0xd8] sm:$0xff] %vm1231, 0.0
          %1324 = vst.msk [vmem:[#allocation3 + $0xe0] sm:$0xff] %vm1231, 0.0
          %1325 = vst.msk [vmem:[#allocation3 + $0xe8] sm:$0xff] %vm1231, 0.0
          %1326 = vst.msk [vmem:[#allocation3 + $0xf0] sm:$0xff] %vm1231, 0.0
          %1327 = vst.msk [vmem:[#allocation3 + $0xf8] sm:$0xff] %vm1231, 0.0
          %1328 = vst.msk [vmem:[#allocation3 + $0x100] sm:$0xff] %vm1231, 0.0
          %1329 = vst.msk [vmem:[#allocation3 + $0x108] sm:$0xff] %vm1231, 0.0
          %1330 = vst.msk [vmem:[#allocation3 + $0x110] sm:$0xff] %vm1231, 0.0
          %1331 = vst.msk [vmem:[#allocation3 + $0x118] sm:$0xff] %vm1231, 0.0
          %1332 = vst.msk [vmem:[#allocation3 + $0x120] sm:$0xff] %vm1231, 0.0
          %1333 = vst.msk [vmem:[#allocation3 + $0x128] sm:$0xff] %vm1231, 0.0
          %1334 = vst.msk [vmem:[#allocation3 + $0x130] sm:$0xff] %vm1231, 0.0
          %1335 = vst.msk [vmem:[#allocation3 + $0x138] sm:$0xff] %vm1231, 0.0
          %1336 = vst.msk [vmem:[#allocation3 + $0x140] sm:$0xff] %vm1231, 0.0
          %1337 = vst.msk [vmem:[#allocation3 + $0x148] sm:$0xff] %vm1231, 0.0
          %1338 = vst.msk [vmem:[#allocation3 + $0x150] sm:$0xff] %vm1231, 0.0
          %1339 = vst.msk [vmem:[#allocation3 + $0x158] sm:$0xff] %vm1231, 0.0
          %1340 = vst.msk [vmem:[#allocation3 + $0x160] sm:$0xff] %vm1231, 0.0
          %1341 = vst.msk [vmem:[#allocation3 + $0x168] sm:$0xff] %vm1231, 0.0
          %1342 = vst.msk [vmem:[#allocation3 + $0x170] sm:$0xff] %vm1231, 0.0
          %1343 = vst.msk [vmem:[#allocation3 + $0x178] sm:$0xff] %vm1231, 0.0
          %1344 = vst.msk [vmem:[#allocation3 + $0x180] sm:$0xff] %vm1231, 0.0
          %1345 = vst.msk [vmem:[#allocation3 + $0x188] sm:$0xff] %vm1231, 0.0
          %1346 = vst.msk [vmem:[#allocation3 + $0x190] sm:$0xff] %vm1231, 0.0
          %1347 = vst.msk [vmem:[#allocation3 + $0x198] sm:$0xff] %vm1231, 0.0
          %1348 = vst.msk [vmem:[#allocation3 + $0x1a0] sm:$0xff] %vm1231, 0.0
          %1349 = vst.msk [vmem:[#allocation3 + $0x1a8] sm:$0xff] %vm1231, 0.0
          %1350 = vst.msk [vmem:[#allocation3 + $0x1b0] sm:$0xff] %vm1231, 0.0
          %1351 = vst.msk [vmem:[#allocation3 + $0x1b8] sm:$0xff] %vm1231, 0.0
          %1352 = vst.msk [vmem:[#allocation3 + $0x1c0] sm:$0xff] %vm1231, 0.0
          %1353 = vst.msk [vmem:[#allocation3 + $0x1c8] sm:$0xff] %vm1231, 0.0
          %1354 = vst.msk [vmem:[#allocation3 + $0x1d0] sm:$0xff] %vm1231, 0.0
          %1355 = vst.msk [vmem:[#allocation3 + $0x1d8] sm:$0xff] %vm1231, 0.0
          %1356 = vst.msk [vmem:[#allocation3 + $0x1e0] sm:$0xff] %vm1231, 0.0
          %1357 = vst.msk [vmem:[#allocation3 + $0x1e8] sm:$0xff] %vm1231, 0.0
          %1358 = vst.msk [vmem:[#allocation3 + $0x1f0] sm:$0xff] %vm1231, 0.0
          %1359 = vst.msk [vmem:[#allocation3 + $0x1f8] sm:$0xff] %vm1231, 0.0
          %vm1360 = vcmask 261120
          %1361 = vst.msk [vmem:[#allocation4] sm:$0xff] %vm1360, 0.0
          %1362 = vst.msk [vmem:[#allocation4 + $0x8] sm:$0xff] %vm1360, 0.0
          %1363 = vst.msk [vmem:[#allocation4 + $0x10] sm:$0xff] %vm1360, 0.0
          %1364 = vst.msk [vmem:[#allocation4 + $0x18] sm:$0xff] %vm1360, 0.0
          %1365 = vst.msk [vmem:[#allocation4 + $0x20] sm:$0xff] %vm1360, 0.0
          %1366 = vst.msk [vmem:[#allocation4 + $0x28] sm:$0xff] %vm1360, 0.0
          %1367 = vst.msk [vmem:[#allocation4 + $0x30] sm:$0xff] %vm1360, 0.0
          %1368 = vst.msk [vmem:[#allocation4 + $0x38] sm:$0xff] %vm1360, 0.0
          %1369 = vst.msk [vmem:[#allocation4 + $0x40] sm:$0xff] %vm1360, 0.0
          %1370 = vst.msk [vmem:[#allocation4 + $0x48] sm:$0xff] %vm1360, 0.0
          %1371 = vst.msk [vmem:[#allocation4 + $0x50] sm:$0xff] %vm1360, 0.0
          %1372 = vst.msk [vmem:[#allocation4 + $0x58] sm:$0xff] %vm1360, 0.0
          %1373 = vst.msk [vmem:[#allocation4 + $0x60] sm:$0xff] %vm1360, 0.0
          %1374 = vst.msk [vmem:[#allocation4 + $0x68] sm:$0xff] %vm1360, 0.0
          %1375 = vst.msk [vmem:[#allocation4 + $0x70] sm:$0xff] %vm1360, 0.0
          %1376 = vst.msk [vmem:[#allocation4 + $0x78] sm:$0xff] %vm1360, 0.0
          %1377 = vst.msk [vmem:[#allocation4 + $0x80] sm:$0xff] %vm1360, 0.0
          %1378 = vst.msk [vmem:[#allocation4 + $0x88] sm:$0xff] %vm1360, 0.0
          %1379 = vst.msk [vmem:[#allocation4 + $0x90] sm:$0xff] %vm1360, 0.0
          %1380 = vst.msk [vmem:[#allocation4 + $0x98] sm:$0xff] %vm1360, 0.0
          %1381 = vst.msk [vmem:[#allocation4 + $0xa0] sm:$0xff] %vm1360, 0.0
          %1382 = vst.msk [vmem:[#allocation4 + $0xa8] sm:$0xff] %vm1360, 0.0
          %1383 = vst.msk [vmem:[#allocation4 + $0xb0] sm:$0xff] %vm1360, 0.0
          %1384 = vst.msk [vmem:[#allocation4 + $0xb8] sm:$0xff] %vm1360, 0.0
          %1385 = vst.msk [vmem:[#allocation4 + $0xc0] sm:$0xff] %vm1360, 0.0
          %1386 = vst.msk [vmem:[#allocation4 + $0xc8] sm:$0xff] %vm1360, 0.0
          %1387 = vst.msk [vmem:[#allocation4 + $0xd0] sm:$0xff] %vm1360, 0.0
          %1388 = vst.msk [vmem:[#allocation4 + $0xd8] sm:$0xff] %vm1360, 0.0
          %1389 = vst.msk [vmem:[#allocation4 + $0xe0] sm:$0xff] %vm1360, 0.0
          %1390 = vst.msk [vmem:[#allocation4 + $0xe8] sm:$0xff] %vm1360, 0.0
          %1391 = vst.msk [vmem:[#allocation4 + $0xf0] sm:$0xff] %vm1360, 0.0
          %1392 = vst.msk [vmem:[#allocation4 + $0xf8] sm:$0xff] %vm1360, 0.0
          %1393 = vst.msk [vmem:[#allocation4 + $0x100] sm:$0xff] %vm1360, 0.0
          %1394 = vst.msk [vmem:[#allocation4 + $0x108] sm:$0xff] %vm1360, 0.0
          %1395 = vst.msk [vmem:[#allocation4 + $0x110] sm:$0xff] %vm1360, 0.0
          %1396 = vst.msk [vmem:[#allocation4 + $0x118] sm:$0xff] %vm1360, 0.0
          %1397 = vst.msk [vmem:[#allocation4 + $0x120] sm:$0xff] %vm1360, 0.0
          %1398 = vst.msk [vmem:[#allocation4 + $0x128] sm:$0xff] %vm1360, 0.0
          %1399 = vst.msk [vmem:[#allocation4 + $0x130] sm:$0xff] %vm1360, 0.0
          %1400 = vst.msk [vmem:[#allocation4 + $0x138] sm:$0xff] %vm1360, 0.0
          %1401 = vst.msk [vmem:[#allocation4 + $0x140] sm:$0xff] %vm1360, 0.0
          %1402 = vst.msk [vmem:[#allocation4 + $0x148] sm:$0xff] %vm1360, 0.0
          %1403 = vst.msk [vmem:[#allocation4 + $0x150] sm:$0xff] %vm1360, 0.0
          %1404 = vst.msk [vmem:[#allocation4 + $0x158] sm:$0xff] %vm1360, 0.0
          %1405 = vst.msk [vmem:[#allocation4 + $0x160] sm:$0xff] %vm1360, 0.0
          %1406 = vst.msk [vmem:[#allocation4 + $0x168] sm:$0xff] %vm1360, 0.0
          %1407 = vst.msk [vmem:[#allocation4 + $0x170] sm:$0xff] %vm1360, 0.0
          %1408 = vst.msk [vmem:[#allocation4 + $0x178] sm:$0xff] %vm1360, 0.0
          %1409 = vst.msk [vmem:[#allocation4 + $0x180] sm:$0xff] %vm1360, 0.0
          %1410 = vst.msk [vmem:[#allocation4 + $0x188] sm:$0xff] %vm1360, 0.0
          %1411 = vst.msk [vmem:[#allocation4 + $0x190] sm:$0xff] %vm1360, 0.0
          %1412 = vst.msk [vmem:[#allocation4 + $0x198] sm:$0xff] %vm1360, 0.0
          %1413 = vst.msk [vmem:[#allocation4 + $0x1a0] sm:$0xff] %vm1360, 0.0
          %1414 = vst.msk [vmem:[#allocation4 + $0x1a8] sm:$0xff] %vm1360, 0.0
          %1415 = vst.msk [vmem:[#allocation4 + $0x1b0] sm:$0xff] %vm1360, 0.0
          %1416 = vst.msk [vmem:[#allocation4 + $0x1b8] sm:$0xff] %vm1360, 0.0
          %1417 = vst.msk [vmem:[#allocation4 + $0x1c0] sm:$0xff] %vm1360, 0.0
          %1418 = vst.msk [vmem:[#allocation4 + $0x1c8] sm:$0xff] %vm1360, 0.0
          %1419 = vst.msk [vmem:[#allocation4 + $0x1d0] sm:$0xff] %vm1360, 0.0
          %1420 = vst.msk [vmem:[#allocation4 + $0x1d8] sm:$0xff] %vm1360, 0.0
          %1421 = vst.msk [vmem:[#allocation4 + $0x1e0] sm:$0xff] %vm1360, 0.0
          %1422 = vst.msk [vmem:[#allocation4 + $0x1e8] sm:$0xff] %vm1360, 0.0
          %1423 = vst.msk [vmem:[#allocation4 + $0x1f0] sm:$0xff] %vm1360, 0.0
          %1424 = vst.msk [vmem:[#allocation4 + $0x1f8] sm:$0xff] %vm1360, 0.0
        $region162: #{tpu_custom_call.1} parent=141 // pred_fallthru
          _
        %s1425 = smul.u32 %s26, 128
        %s1426 = smul.u32 %s25, 128
        %s1427 = sadd.s32 %s1426, 127
        %p1428 = scmp.le.s32.totalorder %s1425, %s1427
        // Predicated region
        $region163: #{tpu_custom_call.1} parent=141 // pred_check
          %p1429 = pneg %p1428
        $region164: #{tpu_custom_call.1} parent=141 // pred_check_branch
          %1431 = sbr.rel (%p1429) target = $region166
        $region165: #{tpu_custom_call.1} parent=141 // pred_region
          %v1432 = vld [vmem:[%s1158] sm:$0xff]
          %v1433 = vld [vmem:[%s1158 + $0x8] sm:$0xff]
          %v1434 = vld [vmem:[%s1158 + $0x10] sm:$0xff]
          %v1435 = vld [vmem:[%s1158 + $0x18] sm:$0xff]
          %v1436 = vld [vmem:[%s1158 + $0x20] sm:$0xff]
          %v1437 = vld [vmem:[%s1158 + $0x28] sm:$0xff]
          %v1438 = vld [vmem:[%s1158 + $0x30] sm:$0xff]
          %v1439 = vld [vmem:[%s1158 + $0x38] sm:$0xff]
          %v1440 = vld [vmem:[%s1158 + $0x40] sm:$0xff]
          %v1441 = vld [vmem:[%s1158 + $0x48] sm:$0xff]
          %v1442 = vld [vmem:[%s1158 + $0x50] sm:$0xff]
          %v1443 = vld [vmem:[%s1158 + $0x58] sm:$0xff]
          %v1444 = vld [vmem:[%s1158 + $0x60] sm:$0xff]
          %v1445 = vld [vmem:[%s1158 + $0x68] sm:$0xff]
          %v1446 = vld [vmem:[%s1158 + $0x70] sm:$0xff]
          %v1447 = vld [vmem:[%s1158 + $0x78] sm:$0xff]
          %v1448 = vld [vmem:[%s1158 + $0x80] sm:$0xff]
          %v1449 = vld [vmem:[%s1158 + $0x88] sm:$0xff]
          %v1450 = vld [vmem:[%s1158 + $0x90] sm:$0xff]
          %v1451 = vld [vmem:[%s1158 + $0x98] sm:$0xff]
          %v1452 = vld [vmem:[%s1158 + $0xa0] sm:$0xff]
          %v1453 = vld [vmem:[%s1158 + $0xa8] sm:$0xff]
          %v1454 = vld [vmem:[%s1158 + $0xb0] sm:$0xff]
          %v1455 = vld [vmem:[%s1158 + $0xb8] sm:$0xff]
          %v1456 = vld [vmem:[%s1158 + $0xc0] sm:$0xff]
          %v1457 = vld [vmem:[%s1158 + $0xc8] sm:$0xff]
          %v1458 = vld [vmem:[%s1158 + $0xd0] sm:$0xff]
          %v1459 = vld [vmem:[%s1158 + $0xd8] sm:$0xff]
          %v1460 = vld [vmem:[%s1158 + $0xe0] sm:$0xff]
          %v1461 = vld [vmem:[%s1158 + $0xe8] sm:$0xff]
          %v1462 = vld [vmem:[%s1158 + $0xf0] sm:$0xff]
          %v1463 = vld [vmem:[%s1158 + $0xf8] sm:$0xff]
          %v1464 = vld [vmem:[%s1158 + $0x100] sm:$0xff]
          %v1465 = vld [vmem:[%s1158 + $0x108] sm:$0xff]
          %v1466 = vld [vmem:[%s1158 + $0x110] sm:$0xff]
          %v1467 = vld [vmem:[%s1158 + $0x118] sm:$0xff]
          %v1468 = vld [vmem:[%s1158 + $0x120] sm:$0xff]
          %v1469 = vld [vmem:[%s1158 + $0x128] sm:$0xff]
          %v1470 = vld [vmem:[%s1158 + $0x130] sm:$0xff]
          %v1471 = vld [vmem:[%s1158 + $0x138] sm:$0xff]
          %v1472 = vld [vmem:[%s1158 + $0x140] sm:$0xff]
          %v1473 = vld [vmem:[%s1158 + $0x148] sm:$0xff]
          %v1474 = vld [vmem:[%s1158 + $0x150] sm:$0xff]
          %v1475 = vld [vmem:[%s1158 + $0x158] sm:$0xff]
          %v1476 = vld [vmem:[%s1158 + $0x160] sm:$0xff]
          %v1477 = vld [vmem:[%s1158 + $0x168] sm:$0xff]
          %v1478 = vld [vmem:[%s1158 + $0x170] sm:$0xff]
          %v1479 = vld [vmem:[%s1158 + $0x178] sm:$0xff]
          %v1480 = vld [vmem:[%s1158 + $0x180] sm:$0xff]
          %v1481 = vld [vmem:[%s1158 + $0x188] sm:$0xff]
          %v1482 = vld [vmem:[%s1158 + $0x190] sm:$0xff]
          %v1483 = vld [vmem:[%s1158 + $0x198] sm:$0xff]
          %v1484 = vld [vmem:[%s1158 + $0x1a0] sm:$0xff]
          %v1485 = vld [vmem:[%s1158 + $0x1a8] sm:$0xff]
          %v1486 = vld [vmem:[%s1158 + $0x1b0] sm:$0xff]
          %v1487 = vld [vmem:[%s1158 + $0x1b8] sm:$0xff]
          %v1488 = vld [vmem:[%s1158 + $0x1c0] sm:$0xff]
          %v1489 = vld [vmem:[%s1158 + $0x1c8] sm:$0xff]
          %v1490 = vld [vmem:[%s1158 + $0x1d0] sm:$0xff]
          %v1491 = vld [vmem:[%s1158 + $0x1d8] sm:$0xff]
          %v1492 = vld [vmem:[%s1158 + $0x1e0] sm:$0xff]
          %v1493 = vld [vmem:[%s1158 + $0x1e8] sm:$0xff]
          %v1494 = vld [vmem:[%s1158 + $0x1f0] sm:$0xff]
          %v1495 = vld [vmem:[%s1158 + $0x1f8] sm:$0xff]
          %v1496 = vld [vmem:[%s1165] sm:$0xff]
          %v1497 = vld [vmem:[%s1165 + $0x8] sm:$0xff]
          %v1498 = vld [vmem:[%s1165 + $0x10] sm:$0xff]
          %v1499 = vld [vmem:[%s1165 + $0x18] sm:$0xff]
          %v1500 = vld [vmem:[%s1165 + $0x20] sm:$0xff]
          %v1501 = vld [vmem:[%s1165 + $0x28] sm:$0xff]
          %v1502 = vld [vmem:[%s1165 + $0x30] sm:$0xff]
          %v1503 = vld [vmem:[%s1165 + $0x38] sm:$0xff]
          %v1504 = vld [vmem:[%s1165 + $0x40] sm:$0xff]
          %v1505 = vld [vmem:[%s1165 + $0x48] sm:$0xff]
          %v1506 = vld [vmem:[%s1165 + $0x50] sm:$0xff]
          %v1507 = vld [vmem:[%s1165 + $0x58] sm:$0xff]
          %v1508 = vld [vmem:[%s1165 + $0x60] sm:$0xff]
          %v1509 = vld [vmem:[%s1165 + $0x68] sm:$0xff]
          %v1510 = vld [vmem:[%s1165 + $0x70] sm:$0xff]
          %v1511 = vld [vmem:[%s1165 + $0x78] sm:$0xff]
          %v1512 = vld [vmem:[%s1165 + $0x80] sm:$0xff]
          %v1513 = vld [vmem:[%s1165 + $0x88] sm:$0xff]
          %v1514 = vld [vmem:[%s1165 + $0x90] sm:$0xff]
          %v1515 = vld [vmem:[%s1165 + $0x98] sm:$0xff]
          %v1516 = vld [vmem:[%s1165 + $0xa0] sm:$0xff]
          %v1517 = vld [vmem:[%s1165 + $0xa8] sm:$0xff]
          %v1518 = vld [vmem:[%s1165 + $0xb0] sm:$0xff]
          %v1519 = vld [vmem:[%s1165 + $0xb8] sm:$0xff]
          %v1520 = vld [vmem:[%s1165 + $0xc0] sm:$0xff]
          %v1521 = vld [vmem:[%s1165 + $0xc8] sm:$0xff]
          %v1522 = vld [vmem:[%s1165 + $0xd0] sm:$0xff]
          %v1523 = vld [vmem:[%s1165 + $0xd8] sm:$0xff]
          %v1524 = vld [vmem:[%s1165 + $0xe0] sm:$0xff]
          %v1525 = vld [vmem:[%s1165 + $0xe8] sm:$0xff]
          %v1526 = vld [vmem:[%s1165 + $0xf0] sm:$0xff]
          %v1527 = vld [vmem:[%s1165 + $0xf8] sm:$0xff]
          %v1528 = vld [vmem:[%s1165 + $0x100] sm:$0xff]
          %v1529 = vld [vmem:[%s1165 + $0x108] sm:$0xff]
          %v1530 = vld [vmem:[%s1165 + $0x110] sm:$0xff]
          %v1531 = vld [vmem:[%s1165 + $0x118] sm:$0xff]
          %v1532 = vld [vmem:[%s1165 + $0x120] sm:$0xff]
          %v1533 = vld [vmem:[%s1165 + $0x128] sm:$0xff]
          %v1534 = vld [vmem:[%s1165 + $0x130] sm:$0xff]
          %v1535 = vld [vmem:[%s1165 + $0x138] sm:$0xff]
          %v1536 = vld [vmem:[%s1165 + $0x140] sm:$0xff]
          %v1537 = vld [vmem:[%s1165 + $0x148] sm:$0xff]
          %v1538 = vld [vmem:[%s1165 + $0x150] sm:$0xff]
          %v1539 = vld [vmem:[%s1165 + $0x158] sm:$0xff]
          %v1540 = vld [vmem:[%s1165 + $0x160] sm:$0xff]
          %v1541 = vld [vmem:[%s1165 + $0x168] sm:$0xff]
          %v1542 = vld [vmem:[%s1165 + $0x170] sm:$0xff]
          %v1543 = vld [vmem:[%s1165 + $0x178] sm:$0xff]
          %v1544 = vld [vmem:[%s1165 + $0x180] sm:$0xff]
          %v1545 = vld [vmem:[%s1165 + $0x188] sm:$0xff]
          %v1546 = vld [vmem:[%s1165 + $0x190] sm:$0xff]
          %v1547 = vld [vmem:[%s1165 + $0x198] sm:$0xff]
          %v1548 = vld [vmem:[%s1165 + $0x1a0] sm:$0xff]
          %v1549 = vld [vmem:[%s1165 + $0x1a8] sm:$0xff]
          %v1550 = vld [vmem:[%s1165 + $0x1b0] sm:$0xff]
          %v1551 = vld [vmem:[%s1165 + $0x1b8] sm:$0xff]
          %v1552 = vld [vmem:[%s1165 + $0x1c0] sm:$0xff]
          %v1553 = vld [vmem:[%s1165 + $0x1c8] sm:$0xff]
          %v1554 = vld [vmem:[%s1165 + $0x1d0] sm:$0xff]
          %v1555 = vld [vmem:[%s1165 + $0x1d8] sm:$0xff]
          %v1556 = vld [vmem:[%s1165 + $0x1e0] sm:$0xff]
          %v1557 = vld [vmem:[%s1165 + $0x1e8] sm:$0xff]
          %v1558 = vld [vmem:[%s1165 + $0x1f0] sm:$0xff]
          %v1559 = vld [vmem:[%s1165 + $0x1f8] sm:$0xff]
          %v1560 = vld [vmem:[%s1172] sm:$0xff]
          %v1561 = vld [vmem:[%s1172 + $0x8] sm:$0xff]
          %v1562 = vld [vmem:[%s1172 + $0x10] sm:$0xff]
          %v1563 = vld [vmem:[%s1172 + $0x18] sm:$0xff]
          %v1564 = vld [vmem:[%s1172 + $0x20] sm:$0xff]
          %v1565 = vld [vmem:[%s1172 + $0x28] sm:$0xff]
          %v1566 = vld [vmem:[%s1172 + $0x30] sm:$0xff]
          %v1567 = vld [vmem:[%s1172 + $0x38] sm:$0xff]
          %v1568 = vld [vmem:[%s1172 + $0x40] sm:$0xff]
          %v1569 = vld [vmem:[%s1172 + $0x48] sm:$0xff]
          %v1570 = vld [vmem:[%s1172 + $0x50] sm:$0xff]
          %v1571 = vld [vmem:[%s1172 + $0x58] sm:$0xff]
          %v1572 = vld [vmem:[%s1172 + $0x60] sm:$0xff]
          %v1573 = vld [vmem:[%s1172 + $0x68] sm:$0xff]
          %v1574 = vld [vmem:[%s1172 + $0x70] sm:$0xff]
          %v1575 = vld [vmem:[%s1172 + $0x78] sm:$0xff]
          %v1576 = vld [vmem:[%s1172 + $0x80] sm:$0xff]
          %v1577 = vld [vmem:[%s1172 + $0x88] sm:$0xff]
          %v1578 = vld [vmem:[%s1172 + $0x90] sm:$0xff]
          %v1579 = vld [vmem:[%s1172 + $0x98] sm:$0xff]
          %v1580 = vld [vmem:[%s1172 + $0xa0] sm:$0xff]
          %v1581 = vld [vmem:[%s1172 + $0xa8] sm:$0xff]
          %v1582 = vld [vmem:[%s1172 + $0xb0] sm:$0xff]
          %v1583 = vld [vmem:[%s1172 + $0xb8] sm:$0xff]
          %v1584 = vld [vmem:[%s1172 + $0xc0] sm:$0xff]
          %v1585 = vld [vmem:[%s1172 + $0xc8] sm:$0xff]
          %v1586 = vld [vmem:[%s1172 + $0xd0] sm:$0xff]
          %v1587 = vld [vmem:[%s1172 + $0xd8] sm:$0xff]
          %v1588 = vld [vmem:[%s1172 + $0xe0] sm:$0xff]
          %v1589 = vld [vmem:[%s1172 + $0xe8] sm:$0xff]
          %v1590 = vld [vmem:[%s1172 + $0xf0] sm:$0xff]
          %v1591 = vld [vmem:[%s1172 + $0xf8] sm:$0xff]
          %v1592 = vld [vmem:[%s1172 + $0x100] sm:$0xff]
          %v1593 = vld [vmem:[%s1172 + $0x108] sm:$0xff]
          %v1594 = vld [vmem:[%s1172 + $0x110] sm:$0xff]
          %v1595 = vld [vmem:[%s1172 + $0x118] sm:$0xff]
          %v1596 = vld [vmem:[%s1172 + $0x120] sm:$0xff]
          %v1597 = vld [vmem:[%s1172 + $0x128] sm:$0xff]
          %v1598 = vld [vmem:[%s1172 + $0x130] sm:$0xff]
          %v1599 = vld [vmem:[%s1172 + $0x138] sm:$0xff]
          %v1600 = vld [vmem:[%s1172 + $0x140] sm:$0xff]
          %v1601 = vld [vmem:[%s1172 + $0x148] sm:$0xff]
          %v1602 = vld [vmem:[%s1172 + $0x150] sm:$0xff]
          %v1603 = vld [vmem:[%s1172 + $0x158] sm:$0xff]
          %v1604 = vld [vmem:[%s1172 + $0x160] sm:$0xff]
          %v1605 = vld [vmem:[%s1172 + $0x168] sm:$0xff]
          %v1606 = vld [vmem:[%s1172 + $0x170] sm:$0xff]
          %v1607 = vld [vmem:[%s1172 + $0x178] sm:$0xff]
          %v1608 = vld [vmem:[%s1172 + $0x180] sm:$0xff]
          %v1609 = vld [vmem:[%s1172 + $0x188] sm:$0xff]
          %v1610 = vld [vmem:[%s1172 + $0x190] sm:$0xff]
          %v1611 = vld [vmem:[%s1172 + $0x198] sm:$0xff]
          %v1612 = vld [vmem:[%s1172 + $0x1a0] sm:$0xff]
          %v1613 = vld [vmem:[%s1172 + $0x1a8] sm:$0xff]
          %v1614 = vld [vmem:[%s1172 + $0x1b0] sm:$0xff]
          %v1615 = vld [vmem:[%s1172 + $0x1b8] sm:$0xff]
          %v1616 = vld [vmem:[%s1172 + $0x1c0] sm:$0xff]
          %v1617 = vld [vmem:[%s1172 + $0x1c8] sm:$0xff]
          %v1618 = vld [vmem:[%s1172 + $0x1d0] sm:$0xff]
          %v1619 = vld [vmem:[%s1172 + $0x1d8] sm:$0xff]
          %v1620 = vld [vmem:[%s1172 + $0x1e0] sm:$0xff]
          %v1621 = vld [vmem:[%s1172 + $0x1e8] sm:$0xff]
          %v1622 = vld [vmem:[%s1172 + $0x1f0] sm:$0xff]
          %v1623 = vld [vmem:[%s1172 + $0x1f8] sm:$0xff]
          %s1624 = smul.u32 %s23, 128
          %s1625 = sld [smem:[#allocation5 + %s1624]]
          %vm1626 = vcmask 261120
          %v1628 = vsel %vm1626, %v1432, 0
          %v1631 = vsel %vm1626, %v1433, 0
          %v1634 = vsel %vm1626, %v1434, 0
          %v1637 = vsel %vm1626, %v1435, 0
          %v1640 = vsel %vm1626, %v1436, 0
          %v1643 = vsel %vm1626, %v1437, 0
          %v1646 = vsel %vm1626, %v1438, 0
          %v1649 = vsel %vm1626, %v1439, 0
          %v1652 = vsel %vm1626, %v1440, 0
          %v1655 = vsel %vm1626, %v1441, 0
          %v1658 = vsel %vm1626, %v1442, 0
          %v1661 = vsel %vm1626, %v1443, 0
          %v1664 = vsel %vm1626, %v1444, 0
          %v1667 = vsel %vm1626, %v1445, 0
          %v1670 = vsel %vm1626, %v1446, 0
          %v1673 = vsel %vm1626, %v1447, 0
          %v1676 = vsel %vm1626, %v1496, 0
          %v1679 = vsel %vm1626, %v1497, 0
          %v1682 = vsel %vm1626, %v1498, 0
          %v1685 = vsel %vm1626, %v1499, 0
          %v1688 = vsel %vm1626, %v1500, 0
          %v1691 = vsel %vm1626, %v1501, 0
          %v1694 = vsel %vm1626, %v1502, 0
          %v1697 = vsel %vm1626, %v1503, 0
          %v1700 = vsel %vm1626, %v1504, 0
          %v1703 = vsel %vm1626, %v1505, 0
          %v1706 = vsel %vm1626, %v1506, 0
          %v1709 = vsel %vm1626, %v1507, 0
          %v1712 = vsel %vm1626, %v1508, 0
          %v1715 = vsel %vm1626, %v1509, 0
          %v1718 = vsel %vm1626, %v1510, 0
          %v1721 = vsel %vm1626, %v1511, 0
          %1723 = vmatprep.subr.mxu0 0.0
          %1724 = vmatpush1.xpose.msra.mxu0 %v1676
          %1725 = vmatprep.subr.mxu0 0.0
          %1726 = vmatpush1.xpose.msra.mxu0 %v1679
          %1727 = vmatprep.subr.mxu0 0.0
          %1728 = vmatpush1.xpose.msra.mxu0 %v1682
          %1729 = vmatprep.subr.mxu0 0.0
          %1730 = vmatpush1.xpose.msra.mxu0 %v1685
          %1731 = vmatprep.subr.mxu0 0.0
          %1732 = vmatpush1.xpose.msra.mxu0 %v1688
          %1733 = vmatprep.subr.mxu0 0.0
          %1734 = vmatpush1.xpose.msra.mxu0 %v1691
          %1735 = vmatprep.subr.mxu0 0.0
          %1736 = vmatpush1.xpose.msra.mxu0 %v1694
          %1737 = vmatprep.subr.mxu0 0.0
          %1738 = vmatpush1.xpose.msra.mxu0 %v1697
          %1739 = vmatprep.subr.mxu0 0.0
          %1740 = vmatpush1.xpose.msra.mxu0 %v1700
          %1741 = vmatprep.subr.mxu0 0.0
          %1742 = vmatpush1.xpose.msra.mxu0 %v1703
          %1743 = vmatprep.subr.mxu0 0.0
          %1744 = vmatpush1.xpose.msra.mxu0 %v1706
          %1745 = vmatprep.subr.mxu0 0.0
          %1746 = vmatpush1.xpose.msra.mxu0 %v1709
          %1747 = vmatprep.subr.mxu0 0.0
          %1748 = vmatpush1.xpose.msra.mxu0 %v1712
          %1749 = vmatprep.subr.mxu0 0.0
          %1750 = vmatpush1.xpose.msra.mxu0 %v1715
          %1751 = vmatprep.subr.mxu0 0.0
          %1752 = vmatpush1.xpose.msra.mxu0 %v1718
          %1753 = vmatprep.subr.mxu0 0.0
          %1754 = vmatpush1.xpose.msra.mxu0 %v1721
          %1755 = vmatprep.subr.mxu0 0.0
          %1756 = vmatpush1.xpose.msra.mxu0 0.0
          %1757 = vmatprep.subr.mxu0 0.0
          %1758 = vmatpush1.xpose.msra.mxu0 0.0
          %1759 = vmatprep.subr.mxu0 0.0
          %1760 = vmatpush1.xpose.msra.mxu0 0.0
          %1761 = vmatprep.subr.mxu0 0.0
          %1762 = vmatpush1.xpose.msra.mxu0 0.0
          %1763 = vmatprep.subr.mxu0 0.0
          %1764 = vmatpush1.xpose.msra.mxu0 0.0
          %1765 = vmatprep.subr.mxu0 0.0
          %1766 = vmatpush1.xpose.msra.mxu0 0.0
          %1767 = vmatprep.subr.mxu0 0.0
          %1768 = vmatpush1.xpose.msra.mxu0 0.0
          %1769 = vmatprep.subr.mxu0 0.0
          %1770 = vmatpush1.xpose.msra.mxu0 0.0
          %1771 = vmatprep.subr.mxu0 0.0
          %1772 = vmatpush1.xpose.msra.mxu0 0.0
          %1773 = vmatprep.subr.mxu0 0.0
          %1774 = vmatpush1.xpose.msra.mxu0 0.0
          %1775 = vmatprep.subr.mxu0 0.0
          %1776 = vmatpush1.xpose.msra.mxu0 0.0
          %1777 = vmatprep.subr.mxu0 0.0
          %1778 = vmatpush1.xpose.msra.mxu0 0.0
          %1779 = vmatprep.subr.mxu0 0.0
          %1780 = vmatpush1.xpose.msra.mxu0 0.0
          %1781 = vmatprep.subr.mxu0 0.0
          %1782 = vmatpush1.xpose.msra.mxu0 0.0
          %1783 = vmatprep.subr.mxu0 0.0
          %1784 = vmatpush1.xpose.msra.mxu0 0.0
          %1785 = vmatprep.subr.mxu0 0.0
          %1786 = vmatpush1.xpose.msra.mxu0 0.0
          %1787 = vmatprep.mubr.f32.mxu0 0.0
          %1788 = vmatmul.mubr.f32.gmra.mrb[0].mxu0 %v1628
          %v1789 = vpop.f32.mrb[0].mxu0
          %v1790 = vadd.f32 0.0, %v1789
          %v1791 = vpop.f32.mrb[0].mxu0
          %1792 = vmatprep.mubr.f32.mxu0 0.0
          %1793 = vmatmul.mubr.f32.gmra.mrb[0].mxu0 %v1631
          %v1794 = vpop.f32.mrb[0].mxu0
          %v1795 = vadd.f32 0.0, %v1794
          %v1796 = vpop.f32.mrb[0].mxu0
          %1797 = vmatprep.mubr.f32.mxu0 0.0
          %1798 = vmatmul.mubr.f32.gmra.mrb[0].mxu0 %v1634
          %v1799 = vpop.f32.mrb[0].mxu0
          %v1800 = vadd.f32 0.0, %v1799
          %v1801 = vpop.f32.mrb[0].mxu0
          %1802 = vmatprep.mubr.f32.mxu0 0.0
          %1803 = vmatmul.mubr.f32.gmra.mrb[0].mxu0 %v1637
          %v1804 = vpop.f32.mrb[0].mxu0
          %v1805 = vadd.f32 0.0, %v1804
          %v1806 = vpop.f32.mrb[0].mxu0
          %1807 = vmatprep.mubr.f32.mxu0 0.0
          %1808 = vmatmul.mubr.f32.gmra.mrb[0].mxu0 %v1640
          %v1809 = vpop.f32.mrb[0].mxu0
          %v1810 = vadd.f32 0.0, %v1809
          %v1811 = vpop.f32.mrb[0].mxu0
          %1812 = vmatprep.mubr.f32.mxu0 0.0
          %1813 = vmatmul.mubr.f32.gmra.mrb[0].mxu0 %v1643
          %v1814 = vpop.f32.mrb[0].mxu0
          %v1815 = vadd.f32 0.0, %v1814
          %v1816 = vpop.f32.mrb[0].mxu0
          %1817 = vmatprep.mubr.f32.mxu0 0.0
          %1818 = vmatmul.mubr.f32.gmra.mrb[0].mxu0 %v1646
          %v1819 = vpop.f32.mrb[0].mxu0
          %v1820 = vadd.f32 0.0, %v1819
          %v1821 = vpop.f32.mrb[0].mxu0
          %1822 = vmatprep.mubr.f32.mxu0 0.0
          %1823 = vmatmul.mubr.f32.gmra.mrb[0].mxu0 %v1649
          %v1824 = vpop.f32.mrb[0].mxu0
          %v1825 = vadd.f32 0.0, %v1824
          %v1826 = vpop.f32.mrb[0].mxu0
          %1827 = vmatprep.mubr.f32.mxu0 0.0
          %1828 = vmatmul.mubr.f32.gmra.mrb[0].mxu0 %v1652
          %v1829 = vpop.f32.mrb[0].mxu0
          %v1830 = vadd.f32 0.0, %v1829
          %v1831 = vpop.f32.mrb[0].mxu0
          %1832 = vmatprep.mubr.f32.mxu0 0.0
          %1833 = vmatmul.mubr.f32.gmra.mrb[0].mxu0 %v1655
          %v1834 = vpop.f32.mrb[0].mxu0
          %v1835 = vadd.f32 0.0, %v1834
          %v1836 = vpop.f32.mrb[0].mxu0
          %1837 = vmatprep.mubr.f32.mxu0 0.0
          %1838 = vmatmul.mubr.f32.gmra.mrb[0].mxu0 %v1658
          %v1839 = vpop.f32.mrb[0].mxu0
          %v1840 = vadd.f32 0.0, %v1839
          %v1841 = vpop.f32.mrb[0].mxu0
          %1842 = vmatprep.mubr.f32.mxu0 0.0
          %1843 = vmatmul.mubr.f32.gmra.mrb[0].mxu0 %v1661
          %v1844 = vpop.f32.mrb[0].mxu0
          %v1845 = vadd.f32 0.0, %v1844
          %v1846 = vpop.f32.mrb[0].mxu0
          %1847 = vmatprep.mubr.f32.mxu0 0.0
          %1848 = vmatmul.mubr.f32.gmra.mrb[0].mxu0 %v1664
          %v1849 = vpop.f32.mrb[0].mxu0
          %v1850 = vadd.f32 0.0, %v1849
          %v1851 = vpop.f32.mrb[0].mxu0
          %1852 = vmatprep.mubr.f32.mxu0 0.0
          %1853 = vmatmul.mubr.f32.gmra.mrb[0].mxu0 %v1667
          %v1854 = vpop.f32.mrb[0].mxu0
          %v1855 = vadd.f32 0.0, %v1854
          %v1856 = vpop.f32.mrb[0].mxu0
          %1857 = vmatprep.mubr.f32.mxu0 0.0
          %1858 = vmatmul.mubr.f32.gmra.mrb[0].mxu0 %v1670
          %v1859 = vpop.f32.mrb[0].mxu0
          %v1860 = vadd.f32 0.0, %v1859
          %v1861 = vpop.f32.mrb[0].mxu0
          %1862 = vmatprep.mubr.f32.mxu0 0.0
          %1863 = vmatmul.mubr.f32.gmra.mrb[0].mxu0 %v1673
          %v1864 = vpop.f32.mrb[0].mxu0
          %v1865 = vadd.f32 0.0, %v1864
          %v1866 = vpop.f32.mrb[0].mxu0
          %1867 = vdwg.mxu0
          %v1869 = vsel %vm1626, %v1448, 0
          %v1872 = vsel %vm1626, %v1449, 0
          %v1875 = vsel %vm1626, %v1450, 0
          %v1878 = vsel %vm1626, %v1451, 0
          %v1881 = vsel %vm1626, %v1452, 0
          %v1884 = vsel %vm1626, %v1453, 0
          %v1887 = vsel %vm1626, %v1454, 0
          %v1890 = vsel %vm1626, %v1455, 0
          %v1893 = vsel %vm1626, %v1456, 0
          %v1896 = vsel %vm1626, %v1457, 0
          %v1899 = vsel %vm1626, %v1458, 0
          %v1902 = vsel %vm1626, %v1459, 0
          %v1905 = vsel %vm1626, %v1460, 0
          %v1908 = vsel %vm1626, %v1461, 0
          %v1911 = vsel %vm1626, %v1462, 0
          %v1914 = vsel %vm1626, %v1463, 0
          %v1917 = vsel %vm1626, %v1512, 0
          %v1920 = vsel %vm1626, %v1513, 0
          %v1923 = vsel %vm1626, %v1514, 0
          %v1926 = vsel %vm1626, %v1515, 0
          %v1929 = vsel %vm1626, %v1516, 0
          %v1932 = vsel %vm1626, %v1517, 0
          %v1935 = vsel %vm1626, %v1518, 0
          %v1938 = vsel %vm1626, %v1519, 0
          %v1941 = vsel %vm1626, %v1520, 0
          %v1944 = vsel %vm1626, %v1521, 0
          %v1947 = vsel %vm1626, %v1522, 0
          %v1950 = vsel %vm1626, %v1523, 0
          %v1953 = vsel %vm1626, %v1524, 0
          %v1956 = vsel %vm1626, %v1525, 0
          %v1959 = vsel %vm1626, %v1526, 0
          %v1962 = vsel %vm1626, %v1527, 0
          %1964 = vmatprep.subr.mxu0 0.0
          %1965 = vmatpush1.xpose.msra.mxu0 %v1917
          %1966 = vmatprep.subr.mxu0 0.0
          %1967 = vmatpush1.xpose.msra.mxu0 %v1920
          %1968 = vmatprep.subr.mxu0 0.0
          %1969 = vmatpush1.xpose.msra.mxu0 %v1923
          %1970 = vmatprep.subr.mxu0 0.0
          %1971 = vmatpush1.xpose.msra.mxu0 %v1926
          %1972 = vmatprep.subr.mxu0 0.0
          %1973 = vmatpush1.xpose.msra.mxu0 %v1929
          %1974 = vmatprep.subr.mxu0 0.0
          %1975 = vmatpush1.xpose.msra.mxu0 %v1932
          %1976 = vmatprep.subr.mxu0 0.0
          %1977 = vmatpush1.xpose.msra.mxu0 %v1935
          %1978 = vmatprep.subr.mxu0 0.0
          %1979 = vmatpush1.xpose.msra.mxu0 %v1938
          %1980 = vmatprep.subr.mxu0 0.0
          %1981 = vmatpush1.xpose.msra.mxu0 %v1941
          %1982 = vmatprep.subr.mxu0 0.0
          %1983 = vmatpush1.xpose.msra.mxu0 %v1944
          %1984 = vmatprep.subr.mxu0 0.0
          %1985 = vmatpush1.xpose.msra.mxu0 %v1947
          %1986 = vmatprep.subr.mxu0 0.0
          %1987 = vmatpush1.xpose.msra.mxu0 %v1950
          %1988 = vmatprep.subr.mxu0 0.0
          %1989 = vmatpush1.xpose.msra.mxu0 %v1953
          %1990 = vmatprep.subr.mxu0 0.0
          %1991 = vmatpush1.xpose.msra.mxu0 %v1956
          %1992 = vmatprep.subr.mxu0 0.0
          %1993 = vmatpush1.xpose.msra.mxu0 %v1959
          %1994 = vmatprep.subr.mxu0 0.0
          %1995 = vmatpush1.xpose.msra.mxu0 %v1962
          %1996 = vmatprep.subr.mxu0 0.0
          %1997 = vmatpush1.xpose.msra.mxu0 0.0
          %1998 = vmatprep.subr.mxu0 0.0
          %1999 = vmatpush1.xpose.msra.mxu0 0.0
          %2000 = vmatprep.subr.mxu0 0.0
          %2001 = vmatpush1.xpose.msra.mxu0 0.0
          %2002 = vmatprep.subr.mxu0 0.0
          %2003 = vmatpush1.xpose.msra.mxu0 0.0
          %2004 = vmatprep.subr.mxu0 0.0
          %2005 = vmatpush1.xpose.msra.mxu0 0.0
          %2006 = vmatprep.subr.mxu0 0.0
          %2007 = vmatpush1.xpose.msra.mxu0 0.0
          %2008 = vmatprep.subr.mxu0 0.0
          %2009 = vmatpush1.xpose.msra.mxu0 0.0
          %2010 = vmatprep.subr.mxu0 0.0
          %2011 = vmatpush1.xpose.msra.mxu0 0.0
          %2012 = vmatprep.subr.mxu0 0.0
          %2013 = vmatpush1.xpose.msra.mxu0 0.0
          %2014 = vmatprep.subr.mxu0 0.0
          %2015 = vmatpush1.xpose.msra.mxu0 0.0
          %2016 = vmatprep.subr.mxu0 0.0
          %2017 = vmatpush1.xpose.msra.mxu0 0.0
          %2018 = vmatprep.subr.mxu0 0.0
          %2019 = vmatpush1.xpose.msra.mxu0 0.0
          %2020 = vmatprep.subr.mxu0 0.0
          %2021 = vmatpush1.xpose.msra.mxu0 0.0
          %2022 = vmatprep.subr.mxu0 0.0
          %2023 = vmatpush1.xpose.msra.mxu0 0.0
          %2024 = vmatprep.subr.mxu0 0.0
          %2025 = vmatpush1.xpose.msra.mxu0 0.0
          %2026 = vmatprep.subr.mxu0 0.0
          %2027 = vmatpush1.xpose.msra.mxu0 0.0
          %2028 = vmatprep.mubr.f32.mxu0 0.0
          %2029 = vmatmul.mubr.f32.gmra.mrb[0].mxu0 %v1869
          %v2030 = vpop.f32.mrb[0].mxu0
          %v2031 = vadd.f32 0.0, %v2030
          %v2032 = vpop.f32.mrb[0].mxu0
          %2033 = vmatprep.mubr.f32.mxu0 0.0
          %2034 = vmatmul.mubr.f32.gmra.mrb[0].mxu0 %v1872
          %v2035 = vpop.f32.mrb[0].mxu0
          %v2036 = vadd.f32 0.0, %v2035
          %v2037 = vpop.f32.mrb[0].mxu0
          %2038 = vmatprep.mubr.f32.mxu0 0.0
          %2039 = vmatmul.mubr.f32.gmra.mrb[0].mxu0 %v1875
          %v2040 = vpop.f32.mrb[0].mxu0
          %v2041 = vadd.f32 0.0, %v2040
          %v2042 = vpop.f32.mrb[0].mxu0
          %2043 = vmatprep.mubr.f32.mxu0 0.0
          %2044 = vmatmul.mubr.f32.gmra.mrb[0].mxu0 %v1878
          %v2045 = vpop.f32.mrb[0].mxu0
          %v2046 = vadd.f32 0.0, %v2045
          %v2047 = vpop.f32.mrb[0].mxu0
          %2048 = vmatprep.mubr.f32.mxu0 0.0
          %2049 = vmatmul.mubr.f32.gmra.mrb[0].mxu0 %v1881
          %v2050 = vpop.f32.mrb[0].mxu0
          %v2051 = vadd.f32 0.0, %v2050
          %v2052 = vpop.f32.mrb[0].mxu0
          %2053 = vmatprep.mubr.f32.mxu0 0.0
          %2054 = vmatmul.mubr.f32.gmra.mrb[0].mxu0 %v1884
          %v2055 = vpop.f32.mrb[0].mxu0
          %v2056 = vadd.f32 0.0, %v2055
          %v2057 = vpop.f32.mrb[0].mxu0
          %2058 = vmatprep.mubr.f32.mxu0 0.0
          %2059 = vmatmul.mubr.f32.gmra.mrb[0].mxu0 %v1887
          %v2060 = vpop.f32.mrb[0].mxu0
          %v2061 = vadd.f32 0.0, %v2060
          %v2062 = vpop.f32.mrb[0].mxu0
          %2063 = vmatprep.mubr.f32.mxu0 0.0
          %2064 = vmatmul.mubr.f32.gmra.mrb[0].mxu0 %v1890
          %v2065 = vpop.f32.mrb[0].mxu0
          %v2066 = vadd.f32 0.0, %v2065
          %v2067 = vpop.f32.mrb[0].mxu0
          %2068 = vmatprep.mubr.f32.mxu0 0.0
          %2069 = vmatmul.mubr.f32.gmra.mrb[0].mxu0 %v1893
          %v2070 = vpop.f32.mrb[0].mxu0
          %v2071 = vadd.f32 0.0, %v2070
          %v2072 = vpop.f32.mrb[0].mxu0
          %2073 = vmatprep.mubr.f32.mxu0 0.0
          %2074 = vmatmul.mubr.f32.gmra.mrb[0].mxu0 %v1896
          %v2075 = vpop.f32.mrb[0].mxu0
          %v2076 = vadd.f32 0.0, %v2075
          %v2077 = vpop.f32.mrb[0].mxu0
          %2078 = vmatprep.mubr.f32.mxu0 0.0
          %2079 = vmatmul.mubr.f32.gmra.mrb[0].mxu0 %v1899
          %v2080 = vpop.f32.mrb[0].mxu0
          %v2081 = vadd.f32 0.0, %v2080
          %v2082 = vpop.f32.mrb[0].mxu0
          %2083 = vmatprep.mubr.f32.mxu0 0.0
          %2084 = vmatmul.mubr.f32.gmra.mrb[0].mxu0 %v1902
          %v2085 = vpop.f32.mrb[0].mxu0
          %v2086 = vadd.f32 0.0, %v2085
          %v2087 = vpop.f32.mrb[0].mxu0
          %2088 = vmatprep.mubr.f32.mxu0 0.0
          %2089 = vmatmul.mubr.f32.gmra.mrb[0].mxu0 %v1905
          %v2090 = vpop.f32.mrb[0].mxu0
          %v2091 = vadd.f32 0.0, %v2090
          %v2092 = vpop.f32.mrb[0].mxu0
          %2093 = vmatprep.mubr.f32.mxu0 0.0
          %2094 = vmatmul.mubr.f32.gmra.mrb[0].mxu0 %v1908
          %v2095 = vpop.f32.mrb[0].mxu0
          %v2096 = vadd.f32 0.0, %v2095
          %v2097 = vpop.f32.mrb[0].mxu0
          %2098 = vmatprep.mubr.f32.mxu0 0.0
          %2099 = vmatmul.mubr.f32.gmra.mrb[0].mxu0 %v1911
          %v2100 = vpop.f32.mrb[0].mxu0
          %v2101 = vadd.f32 0.0, %v2100
          %v2102 = vpop.f32.mrb[0].mxu0
          %2103 = vmatprep.mubr.f32.mxu0 0.0
          %2104 = vmatmul.mubr.f32.gmra.mrb[0].mxu0 %v1914
          %v2105 = vpop.f32.mrb[0].mxu0
          %v2106 = vadd.f32 0.0, %v2105
          %v2107 = vpop.f32.mrb[0].mxu0
          %2108 = vdwg.mxu0
          %v2110 = vsel %vm1626, %v1464, 0
          %v2113 = vsel %vm1626, %v1465, 0
          %v2116 = vsel %vm1626, %v1466, 0
          %v2119 = vsel %vm1626, %v1467, 0
          %v2122 = vsel %vm1626, %v1468, 0
          %v2125 = vsel %vm1626, %v1469, 0
          %v2128 = vsel %vm1626, %v1470, 0
          %v2131 = vsel %vm1626, %v1471, 0
          %v2134 = vsel %vm1626, %v1472, 0
          %v2137 = vsel %vm1626, %v1473, 0
          %v2140 = vsel %vm1626, %v1474, 0
          %v2143 = vsel %vm1626, %v1475, 0
          %v2146 = vsel %vm1626, %v1476, 0
          %v2149 = vsel %vm1626, %v1477, 0
          %v2152 = vsel %vm1626, %v1478, 0
          %v2155 = vsel %vm1626, %v1479, 0
          %v2158 = vsel %vm1626, %v1528, 0
          %v2161 = vsel %vm1626, %v1529, 0
          %v2164 = vsel %vm1626, %v1530, 0
          %v2167 = vsel %vm1626, %v1531, 0
          %v2170 = vsel %vm1626, %v1532, 0
          %v2173 = vsel %vm1626, %v1533, 0
          %v2176 = vsel %vm1626, %v1534, 0
          %v2179 = vsel %vm1626, %v1535, 0
          %v2182 = vsel %vm1626, %v1536, 0
          %v2185 = vsel %vm1626, %v1537, 0
          %v2188 = vsel %vm1626, %v1538, 0
          %v2191 = vsel %vm1626, %v1539, 0
          %v2194 = vsel %vm1626, %v1540, 0
          %v2197 = vsel %vm1626, %v1541, 0
          %v2200 = vsel %vm1626, %v1542, 0
          %v2203 = vsel %vm1626, %v1543, 0
          %2205 = vmatprep.subr.mxu0 0.0
          %2206 = vmatpush1.xpose.msra.mxu0 %v2158
          %2207 = vmatprep.subr.mxu0 0.0
          %2208 = vmatpush1.xpose.msra.mxu0 %v2161
          %2209 = vmatprep.subr.mxu0 0.0
          %2210 = vmatpush1.xpose.msra.mxu0 %v2164
          %2211 = vmatprep.subr.mxu0 0.0
          %2212 = vmatpush1.xpose.msra.mxu0 %v2167
          %2213 = vmatprep.subr.mxu0 0.0
          %2214 = vmatpush1.xpose.msra.mxu0 %v2170
          %2215 = vmatprep.subr.mxu0 0.0
          %2216 = vmatpush1.xpose.msra.mxu0 %v2173
          %2217 = vmatprep.subr.mxu0 0.0
          %2218 = vmatpush1.xpose.msra.mxu0 %v2176
          %2219 = vmatprep.subr.mxu0 0.0
          %2220 = vmatpush1.xpose.msra.mxu0 %v2179
          %2221 = vmatprep.subr.mxu0 0.0
          %2222 = vmatpush1.xpose.msra.mxu0 %v2182
          %2223 = vmatprep.subr.mxu0 0.0
          %2224 = vmatpush1.xpose.msra.mxu0 %v2185
          %2225 = vmatprep.subr.mxu0 0.0
          %2226 = vmatpush1.xpose.msra.mxu0 %v2188
          %2227 = vmatprep.subr.mxu0 0.0
          %2228 = vmatpush1.xpose.msra.mxu0 %v2191
          %2229 = vmatprep.subr.mxu0 0.0
          %2230 = vmatpush1.xpose.msra.mxu0 %v2194
          %2231 = vmatprep.subr.mxu0 0.0
          %2232 = vmatpush1.xpose.msra.mxu0 %v2197
          %2233 = vmatprep.subr.mxu0 0.0
          %2234 = vmatpush1.xpose.msra.mxu0 %v2200
          %2235 = vmatprep.subr.mxu0 0.0
          %2236 = vmatpush1.xpose.msra.mxu0 %v2203
          %2237 = vmatprep.subr.mxu0 0.0
          %2238 = vmatpush1.xpose.msra.mxu0 0.0
          %2239 = vmatprep.subr.mxu0 0.0
          %2240 = vmatpush1.xpose.msra.mxu0 0.0
          %2241 = vmatprep.subr.mxu0 0.0
          %2242 = vmatpush1.xpose.msra.mxu0 0.0
          %2243 = vmatprep.subr.mxu0 0.0
          %2244 = vmatpush1.xpose.msra.mxu0 0.0
          %2245 = vmatprep.subr.mxu0 0.0
          %2246 = vmatpush1.xpose.msra.mxu0 0.0
          %2247 = vmatprep.subr.mxu0 0.0
          %2248 = vmatpush1.xpose.msra.mxu0 0.0
          %2249 = vmatprep.subr.mxu0 0.0
          %2250 = vmatpush1.xpose.msra.mxu0 0.0
          %2251 = vmatprep.subr.mxu0 0.0
          %2252 = vmatpush1.xpose.msra.mxu0 0.0
          %2253 = vmatprep.subr.mxu0 0.0
          %2254 = vmatpush1.xpose.msra.mxu0 0.0
          %2255 = vmatprep.subr.mxu0 0.0
          %2256 = vmatpush1.xpose.msra.mxu0 0.0
          %2257 = vmatprep.subr.mxu0 0.0
          %2258 = vmatpush1.xpose.msra.mxu0 0.0
          %2259 = vmatprep.subr.mxu0 0.0
          %2260 = vmatpush1.xpose.msra.mxu0 0.0
          %2261 = vmatprep.subr.mxu0 0.0
          %2262 = vmatpush1.xpose.msra.mxu0 0.0
          %2263 = vmatprep.subr.mxu0 0.0
          %2264 = vmatpush1.xpose.msra.mxu0 0.0
          %2265 = vmatprep.subr.mxu0 0.0
          %2266 = vmatpush1.xpose.msra.mxu0 0.0
          %2267 = vmatprep.subr.mxu0 0.0
          %2268 = vmatpush1.xpose.msra.mxu0 0.0
          %2269 = vmatprep.mubr.f32.mxu0 0.0
          %2270 = vmatmul.mubr.f32.gmra.mrb[0].mxu0 %v2110
          %v2271 = vpop.f32.mrb[0].mxu0
          %v2272 = vadd.f32 0.0, %v2271
          %v2273 = vpop.f32.mrb[0].mxu0
          %2274 = vmatprep.mubr.f32.mxu0 0.0
          %2275 = vmatmul.mubr.f32.gmra.mrb[0].mxu0 %v2113
          %v2276 = vpop.f32.mrb[0].mxu0
          %v2277 = vadd.f32 0.0, %v2276
          %v2278 = vpop.f32.mrb[0].mxu0
          %2279 = vmatprep.mubr.f32.mxu0 0.0
          %2280 = vmatmul.mubr.f32.gmra.mrb[0].mxu0 %v2116
          %v2281 = vpop.f32.mrb[0].mxu0
          %v2282 = vadd.f32 0.0, %v2281
          %v2283 = vpop.f32.mrb[0].mxu0
          %2284 = vmatprep.mubr.f32.mxu0 0.0
          %2285 = vmatmul.mubr.f32.gmra.mrb[0].mxu0 %v2119
          %v2286 = vpop.f32.mrb[0].mxu0
          %v2287 = vadd.f32 0.0, %v2286
          %v2288 = vpop.f32.mrb[0].mxu0
          %2289 = vmatprep.mubr.f32.mxu0 0.0
          %2290 = vmatmul.mubr.f32.gmra.mrb[0].mxu0 %v2122
          %v2291 = vpop.f32.mrb[0].mxu0
          %v2292 = vadd.f32 0.0, %v2291
          %v2293 = vpop.f32.mrb[0].mxu0
          %2294 = vmatprep.mubr.f32.mxu0 0.0
          %2295 = vmatmul.mubr.f32.gmra.mrb[0].mxu0 %v2125
          %v2296 = vpop.f32.mrb[0].mxu0
          %v2297 = vadd.f32 0.0, %v2296
          %v2298 = vpop.f32.mrb[0].mxu0
          %2299 = vmatprep.mubr.f32.mxu0 0.0
          %2300 = vmatmul.mubr.f32.gmra.mrb[0].mxu0 %v2128
          %v2301 = vpop.f32.mrb[0].mxu0
          %v2302 = vadd.f32 0.0, %v2301
          %v2303 = vpop.f32.mrb[0].mxu0
          %2304 = vmatprep.mubr.f32.mxu0 0.0
          %2305 = vmatmul.mubr.f32.gmra.mrb[0].mxu0 %v2131
          %v2306 = vpop.f32.mrb[0].mxu0
          %v2307 = vadd.f32 0.0, %v2306
          %v2308 = vpop.f32.mrb[0].mxu0
          %2309 = vmatprep.mubr.f32.mxu0 0.0
          %2310 = vmatmul.mubr.f32.gmra.mrb[0].mxu0 %v2134
          %v2311 = vpop.f32.mrb[0].mxu0
          %v2312 = vadd.f32 0.0, %v2311
          %v2313 = vpop.f32.mrb[0].mxu0
          %2314 = vmatprep.mubr.f32.mxu0 0.0
          %2315 = vmatmul.mubr.f32.gmra.mrb[0].mxu0 %v2137
          %v2316 = vpop.f32.mrb[0].mxu0
          %v2317 = vadd.f32 0.0, %v2316
          %v2318 = vpop.f32.mrb[0].mxu0
          %2319 = vmatprep.mubr.f32.mxu0 0.0
          %2320 = vmatmul.mubr.f32.gmra.mrb[0].mxu0 %v2140
          %v2321 = vpop.f32.mrb[0].mxu0
          %v2322 = vadd.f32 0.0, %v2321
          %v2323 = vpop.f32.mrb[0].mxu0
          %2324 = vmatprep.mubr.f32.mxu0 0.0
          %2325 = vmatmul.mubr.f32.gmra.mrb[0].mxu0 %v2143
          %v2326 = vpop.f32.mrb[0].mxu0
          %v2327 = vadd.f32 0.0, %v2326
          %v2328 = vpop.f32.mrb[0].mxu0
          %2329 = vmatprep.mubr.f32.mxu0 0.0
          %2330 = vmatmul.mubr.f32.gmra.mrb[0].mxu0 %v2146
          %v2331 = vpop.f32.mrb[0].mxu0
          %v2332 = vadd.f32 0.0, %v2331
          %v2333 = vpop.f32.mrb[0].mxu0
          %2334 = vmatprep.mubr.f32.mxu0 0.0
          %2335 = vmatmul.mubr.f32.gmra.mrb[0].mxu0 %v2149
          %v2336 = vpop.f32.mrb[0].mxu0
          %v2337 = vadd.f32 0.0, %v2336
          %v2338 = vpop.f32.mrb[0].mxu0
          %2339 = vmatprep.mubr.f32.mxu0 0.0
          %2340 = vmatmul.mubr.f32.gmra.mrb[0].mxu0 %v2152
          %v2341 = vpop.f32.mrb[0].mxu0
          %v2342 = vadd.f32 0.0, %v2341
          %v2343 = vpop.f32.mrb[0].mxu0
          %2344 = vmatprep.mubr.f32.mxu0 0.0
          %2345 = vmatmul.mubr.f32.gmra.mrb[0].mxu0 %v2155
          %v2346 = vpop.f32.mrb[0].mxu0
          %v2347 = vadd.f32 0.0, %v2346
          %v2348 = vpop.f32.mrb[0].mxu0
          %2349 = vdwg.mxu0
          %v2351 = vsel %vm1626, %v1480, 0
          %v2354 = vsel %vm1626, %v1481, 0
          %v2357 = vsel %vm1626, %v1482, 0
          %v2360 = vsel %vm1626, %v1483, 0
          %v2363 = vsel %vm1626, %v1484, 0
          %v2366 = vsel %vm1626, %v1485, 0
          %v2369 = vsel %vm1626, %v1486, 0
          %v2372 = vsel %vm1626, %v1487, 0
          %v2375 = vsel %vm1626, %v1488, 0
          %v2378 = vsel %vm1626, %v1489, 0
          %v2381 = vsel %vm1626, %v1490, 0
          %v2384 = vsel %vm1626, %v1491, 0
          %v2387 = vsel %vm1626, %v1492, 0
          %v2390 = vsel %vm1626, %v1493, 0
          %v2393 = vsel %vm1626, %v1494, 0
          %v2396 = vsel %vm1626, %v1495, 0
          %v2399 = vsel %vm1626, %v1544, 0
          %v2402 = vsel %vm1626, %v1545, 0
          %v2405 = vsel %vm1626, %v1546, 0
          %v2408 = vsel %vm1626, %v1547, 0
          %v2411 = vsel %vm1626, %v1548, 0
          %v2414 = vsel %vm1626, %v1549, 0
          %v2417 = vsel %vm1626, %v1550, 0
          %v2420 = vsel %vm1626, %v1551, 0
          %v2423 = vsel %vm1626, %v1552, 0
          %v2426 = vsel %vm1626, %v1553, 0
          %v2429 = vsel %vm1626, %v1554, 0
          %v2432 = vsel %vm1626, %v1555, 0
          %v2435 = vsel %vm1626, %v1556, 0
          %v2438 = vsel %vm1626, %v1557, 0
          %v2441 = vsel %vm1626, %v1558, 0
          %v2444 = vsel %vm1626, %v1559, 0
          %2446 = vmatprep.subr.mxu0 0.0
          %2447 = vmatpush1.xpose.msra.mxu0 %v2399
          %2448 = vmatprep.subr.mxu0 0.0
          %2449 = vmatpush1.xpose.msra.mxu0 %v2402
          %2450 = vmatprep.subr.mxu0 0.0
          %2451 = vmatpush1.xpose.msra.mxu0 %v2405
          %2452 = vmatprep.subr.mxu0 0.0
          %2453 = vmatpush1.xpose.msra.mxu0 %v2408
          %2454 = vmatprep.subr.mxu0 0.0
          %2455 = vmatpush1.xpose.msra.mxu0 %v2411
          %2456 = vmatprep.subr.mxu0 0.0
          %2457 = vmatpush1.xpose.msra.mxu0 %v2414
          %2458 = vmatprep.subr.mxu0 0.0
          %2459 = vmatpush1.xpose.msra.mxu0 %v2417
          %2460 = vmatprep.subr.mxu0 0.0
          %2461 = vmatpush1.xpose.msra.mxu0 %v2420
          %2462 = vmatprep.subr.mxu0 0.0
          %2463 = vmatpush1.xpose.msra.mxu0 %v2423
          %2464 = vmatprep.subr.mxu0 0.0
          %2465 = vmatpush1.xpose.msra.mxu0 %v2426
          %2466 = vmatprep.subr.mxu0 0.0
          %2467 = vmatpush1.xpose.msra.mxu0 %v2429
          %2468 = vmatprep.subr.mxu0 0.0
          %2469 = vmatpush1.xpose.msra.mxu0 %v2432
          %2470 = vmatprep.subr.mxu0 0.0
          %2471 = vmatpush1.xpose.msra.mxu0 %v2435
          %2472 = vmatprep.subr.mxu0 0.0
          %2473 = vmatpush1.xpose.msra.mxu0 %v2438
          %2474 = vmatprep.subr.mxu0 0.0
          %2475 = vmatpush1.xpose.msra.mxu0 %v2441
          %2476 = vmatprep.subr.mxu0 0.0
          %2477 = vmatpush1.xpose.msra.mxu0 %v2444
          %2478 = vmatprep.subr.mxu0 0.0
          %2479 = vmatpush1.xpose.msra.mxu0 0.0
          %2480 = vmatprep.subr.mxu0 0.0
          %2481 = vmatpush1.xpose.msra.mxu0 0.0
          %2482 = vmatprep.subr.mxu0 0.0
          %2483 = vmatpush1.xpose.msra.mxu0 0.0
          %2484 = vmatprep.subr.mxu0 0.0
          %2485 = vmatpush1.xpose.msra.mxu0 0.0
          %2486 = vmatprep.subr.mxu0 0.0
          %2487 = vmatpush1.xpose.msra.mxu0 0.0
          %2488 = vmatprep.subr.mxu0 0.0
          %2489 = vmatpush1.xpose.msra.mxu0 0.0
          %2490 = vmatprep.subr.mxu0 0.0
          %2491 = vmatpush1.xpose.msra.mxu0 0.0
          %2492 = vmatprep.subr.mxu0 0.0
          %2493 = vmatpush1.xpose.msra.mxu0 0.0
          %2494 = vmatprep.subr.mxu0 0.0
          %2495 = vmatpush1.xpose.msra.mxu0 0.0
          %2496 = vmatprep.subr.mxu0 0.0
          %2497 = vmatpush1.xpose.msra.mxu0 0.0
          %2498 = vmatprep.subr.mxu0 0.0
          %2499 = vmatpush1.xpose.msra.mxu0 0.0
          %2500 = vmatprep.subr.mxu0 0.0
          %2501 = vmatpush1.xpose.msra.mxu0 0.0
          %2502 = vmatprep.subr.mxu0 0.0
          %2503 = vmatpush1.xpose.msra.mxu0 0.0
          %2504 = vmatprep.subr.mxu0 0.0
          %2505 = vmatpush1.xpose.msra.mxu0 0.0
          %2506 = vmatprep.subr.mxu0 0.0
          %2507 = vmatpush1.xpose.msra.mxu0 0.0
          %2508 = vmatprep.subr.mxu0 0.0
          %2509 = vmatpush1.xpose.msra.mxu0 0.0
          %2510 = vmatprep.mubr.f32.mxu0 0.0
          %2511 = vmatmul.mubr.f32.gmra.mrb[0].mxu0 %v2351
          %v2512 = vpop.f32.mrb[0].mxu0
          %v2513 = vadd.f32 0.0, %v2512
          %v2514 = vpop.f32.mrb[0].mxu0
          %2515 = vmatprep.mubr.f32.mxu0 0.0
          %2516 = vmatmul.mubr.f32.gmra.mrb[0].mxu0 %v2354
          %v2517 = vpop.f32.mrb[0].mxu0
          %v2518 = vadd.f32 0.0, %v2517
          %v2519 = vpop.f32.mrb[0].mxu0
          %2520 = vmatprep.mubr.f32.mxu0 0.0
          %2521 = vmatmul.mubr.f32.gmra.mrb[0].mxu0 %v2357
          %v2522 = vpop.f32.mrb[0].mxu0
          %v2523 = vadd.f32 0.0, %v2522
          %v2524 = vpop.f32.mrb[0].mxu0
          %2525 = vmatprep.mubr.f32.mxu0 0.0
          %2526 = vmatmul.mubr.f32.gmra.mrb[0].mxu0 %v2360
          %v2527 = vpop.f32.mrb[0].mxu0
          %v2528 = vadd.f32 0.0, %v2527
          %v2529 = vpop.f32.mrb[0].mxu0
          %2530 = vmatprep.mubr.f32.mxu0 0.0
          %2531 = vmatmul.mubr.f32.gmra.mrb[0].mxu0 %v2363
          %v2532 = vpop.f32.mrb[0].mxu0
          %v2533 = vadd.f32 0.0, %v2532
          %v2534 = vpop.f32.mrb[0].mxu0
          %2535 = vmatprep.mubr.f32.mxu0 0.0
          %2536 = vmatmul.mubr.f32.gmra.mrb[0].mxu0 %v2366
          %v2537 = vpop.f32.mrb[0].mxu0
          %v2538 = vadd.f32 0.0, %v2537
          %v2539 = vpop.f32.mrb[0].mxu0
          %2540 = vmatprep.mubr.f32.mxu0 0.0
          %2541 = vmatmul.mubr.f32.gmra.mrb[0].mxu0 %v2369
          %v2542 = vpop.f32.mrb[0].mxu0
          %v2543 = vadd.f32 0.0, %v2542
          %v2544 = vpop.f32.mrb[0].mxu0
          %2545 = vmatprep.mubr.f32.mxu0 0.0
          %2546 = vmatmul.mubr.f32.gmra.mrb[0].mxu0 %v2372
          %v2547 = vpop.f32.mrb[0].mxu0
          %v2548 = vadd.f32 0.0, %v2547
          %v2549 = vpop.f32.mrb[0].mxu0
          %2550 = vmatprep.mubr.f32.mxu0 0.0
          %2551 = vmatmul.mubr.f32.gmra.mrb[0].mxu0 %v2375
          %v2552 = vpop.f32.mrb[0].mxu0
          %v2553 = vadd.f32 0.0, %v2552
          %v2554 = vpop.f32.mrb[0].mxu0
          %2555 = vmatprep.mubr.f32.mxu0 0.0
          %2556 = vmatmul.mubr.f32.gmra.mrb[0].mxu0 %v2378
          %v2557 = vpop.f32.mrb[0].mxu0
          %v2558 = vadd.f32 0.0, %v2557
          %v2559 = vpop.f32.mrb[0].mxu0
          %2560 = vmatprep.mubr.f32.mxu0 0.0
          %2561 = vmatmul.mubr.f32.gmra.mrb[0].mxu0 %v2381
          %v2562 = vpop.f32.mrb[0].mxu0
          %v2563 = vadd.f32 0.0, %v2562
          %v2564 = vpop.f32.mrb[0].mxu0
          %2565 = vmatprep.mubr.f32.mxu0 0.0
          %2566 = vmatmul.mubr.f32.gmra.mrb[0].mxu0 %v2384
          %v2567 = vpop.f32.mrb[0].mxu0
          %v2568 = vadd.f32 0.0, %v2567
          %v2569 = vpop.f32.mrb[0].mxu0
          %2570 = vmatprep.mubr.f32.mxu0 0.0
          %2571 = vmatmul.mubr.f32.gmra.mrb[0].mxu0 %v2387
          %v2572 = vpop.f32.mrb[0].mxu0
          %v2573 = vadd.f32 0.0, %v2572
          %v2574 = vpop.f32.mrb[0].mxu0
          %2575 = vmatprep.mubr.f32.mxu0 0.0
          %2576 = vmatmul.mubr.f32.gmra.mrb[0].mxu0 %v2390
          %v2577 = vpop.f32.mrb[0].mxu0
          %v2578 = vadd.f32 0.0, %v2577
          %v2579 = vpop.f32.mrb[0].mxu0
          %2580 = vmatprep.mubr.f32.mxu0 0.0
          %2581 = vmatmul.mubr.f32.gmra.mrb[0].mxu0 %v2393
          %v2582 = vpop.f32.mrb[0].mxu0
          %v2583 = vadd.f32 0.0, %v2582
          %v2584 = vpop.f32.mrb[0].mxu0
          %2585 = vmatprep.mubr.f32.mxu0 0.0
          %2586 = vmatmul.mubr.f32.gmra.mrb[0].mxu0 %v2396
          %v2587 = vpop.f32.mrb[0].mxu0
          %v2588 = vadd.f32 0.0, %v2587
          %v2589 = vpop.f32.mrb[0].mxu0
          %2590 = vdwg.mxu0
          %v2591 = vstv %s1625
          %v2592 = vmul.f32 %v1790, %v2591
          %v2593 = vmul.f32 %v1795, %v2591
          %v2594 = vmul.f32 %v1800, %v2591
          %v2595 = vmul.f32 %v1805, %v2591
          %v2596 = vmul.f32 %v1810, %v2591
          %v2597 = vmul.f32 %v1815, %v2591
          %v2598 = vmul.f32 %v1820, %v2591
          %v2599 = vmul.f32 %v1825, %v2591
          %v2600 = vmul.f32 %v1830, %v2591
          %v2601 = vmul.f32 %v1835, %v2591
          %v2602 = vmul.f32 %v1840, %v2591
          %v2603 = vmul.f32 %v1845, %v2591
          %v2604 = vmul.f32 %v1850, %v2591
          %v2605 = vmul.f32 %v1855, %v2591
          %v2606 = vmul.f32 %v1860, %v2591
          %v2607 = vmul.f32 %v1865, %v2591
          %v2608 = vmul.f32 %v2031, %v2591
          %v2609 = vmul.f32 %v2036, %v2591
          %v2610 = vmul.f32 %v2041, %v2591
          %v2611 = vmul.f32 %v2046, %v2591
          %v2612 = vmul.f32 %v2051, %v2591
          %v2613 = vmul.f32 %v2056, %v2591
          %v2614 = vmul.f32 %v2061, %v2591
          %v2615 = vmul.f32 %v2066, %v2591
          %v2616 = vmul.f32 %v2071, %v2591
          %v2617 = vmul.f32 %v2076, %v2591
          %v2618 = vmul.f32 %v2081, %v2591
          %v2619 = vmul.f32 %v2086, %v2591
          %v2620 = vmul.f32 %v2091, %v2591
          %v2621 = vmul.f32 %v2096, %v2591
          %v2622 = vmul.f32 %v2101, %v2591
          %v2623 = vmul.f32 %v2106, %v2591
          %v2624 = vmul.f32 %v2272, %v2591
          %v2625 = vmul.f32 %v2277, %v2591
          %v2626 = vmul.f32 %v2282, %v2591
          %v2627 = vmul.f32 %v2287, %v2591
          %v2628 = vmul.f32 %v2292, %v2591
          %v2629 = vmul.f32 %v2297, %v2591
          %v2630 = vmul.f32 %v2302, %v2591
          %v2631 = vmul.f32 %v2307, %v2591
          %v2632 = vmul.f32 %v2312, %v2591
          %v2633 = vmul.f32 %v2317, %v2591
          %v2634 = vmul.f32 %v2322, %v2591
          %v2635 = vmul.f32 %v2327, %v2591
          %v2636 = vmul.f32 %v2332, %v2591
          %v2637 = vmul.f32 %v2337, %v2591
          %v2638 = vmul.f32 %v2342, %v2591
          %v2639 = vmul.f32 %v2347, %v2591
          %v2640 = vmul.f32 %v2513, %v2591
          %v2641 = vmul.f32 %v2518, %v2591
          %v2642 = vmul.f32 %v2523, %v2591
          %v2643 = vmul.f32 %v2528, %v2591
          %v2644 = vmul.f32 %v2533, %v2591
          %v2645 = vmul.f32 %v2538, %v2591
          %v2646 = vmul.f32 %v2543, %v2591
          %v2647 = vmul.f32 %v2548, %v2591
          %v2648 = vmul.f32 %v2553, %v2591
          %v2649 = vmul.f32 %v2558, %v2591
          %v2650 = vmul.f32 %v2563, %v2591
          %v2651 = vmul.f32 %v2568, %v2591
          %v2652 = vmul.f32 %v2573, %v2591
          %v2653 = vmul.f32 %v2578, %v2591
          %v2654 = vmul.f32 %v2583, %v2591
          %v2655 = vmul.f32 %v2588, %v2591
          %v2656 = vld [vmem:[%s1224] sm:$0x1]
          %v2658 = vlaneseq
          %v2659 = vshrl.u32 %v2658, 7
          %v2660 = vsub.s32 0, %v2659
          %v2661 = vrot.slane %v2656, %v2660
          %v2663 = vadd.f32 %v2592, %v2661
          %v2664 = vadd.f32 %v2593, %v2661
          %v2665 = vadd.f32 %v2594, %v2661
          %v2666 = vadd.f32 %v2595, %v2661
          %v2667 = vadd.f32 %v2596, %v2661
          %v2668 = vadd.f32 %v2597, %v2661
          %v2669 = vadd.f32 %v2598, %v2661
          %v2670 = vadd.f32 %v2599, %v2661
          %v2671 = vadd.f32 %v2600, %v2661
          %v2672 = vadd.f32 %v2601, %v2661
          %v2673 = vadd.f32 %v2602, %v2661
          %v2674 = vadd.f32 %v2603, %v2661
          %v2675 = vadd.f32 %v2604, %v2661
          %v2676 = vadd.f32 %v2605, %v2661
          %v2677 = vadd.f32 %v2606, %v2661
          %v2678 = vadd.f32 %v2607, %v2661
          %v2679 = vadd.f32 %v2608, %v2661
          %v2680 = vadd.f32 %v2609, %v2661
          %v2681 = vadd.f32 %v2610, %v2661
          %v2682 = vadd.f32 %v2611, %v2661
          %v2683 = vadd.f32 %v2612, %v2661
          %v2684 = vadd.f32 %v2613, %v2661
          %v2685 = vadd.f32 %v2614, %v2661
          %v2686 = vadd.f32 %v2615, %v2661
          %v2687 = vadd.f32 %v2616, %v2661
          %v2688 = vadd.f32 %v2617, %v2661
          %v2689 = vadd.f32 %v2618, %v2661
          %v2690 = vadd.f32 %v2619, %v2661
          %v2691 = vadd.f32 %v2620, %v2661
          %v2692 = vadd.f32 %v2621, %v2661
          %v2693 = vadd.f32 %v2622, %v2661
          %v2694 = vadd.f32 %v2623, %v2661
          %v2695 = vadd.f32 %v2624, %v2661
          %v2696 = vadd.f32 %v2625, %v2661
          %v2697 = vadd.f32 %v2626, %v2661
          %v2698 = vadd.f32 %v2627, %v2661
          %v2699 = vadd.f32 %v2628, %v2661
          %v2700 = vadd.f32 %v2629, %v2661
          %v2701 = vadd.f32 %v2630, %v2661
          %v2702 = vadd.f32 %v2631, %v2661
          %v2703 = vadd.f32 %v2632, %v2661
          %v2704 = vadd.f32 %v2633, %v2661
          %v2705 = vadd.f32 %v2634, %v2661
          %v2706 = vadd.f32 %v2635, %v2661
          %v2707 = vadd.f32 %v2636, %v2661
          %v2708 = vadd.f32 %v2637, %v2661
          %v2709 = vadd.f32 %v2638, %v2661
          %v2710 = vadd.f32 %v2639, %v2661
          %v2711 = vadd.f32 %v2640, %v2661
          %v2712 = vadd.f32 %v2641, %v2661
          %v2713 = vadd.f32 %v2642, %v2661
          %v2714 = vadd.f32 %v2643, %v2661
          %v2715 = vadd.f32 %v2644, %v2661
          %v2716 = vadd.f32 %v2645, %v2661
          %v2717 = vadd.f32 %v2646, %v2661
          %v2718 = vadd.f32 %v2647, %v2661
          %v2719 = vadd.f32 %v2648, %v2661
          %v2720 = vadd.f32 %v2649, %v2661
          %v2721 = vadd.f32 %v2650, %v2661
          %v2722 = vadd.f32 %v2651, %v2661
          %v2723 = vadd.f32 %v2652, %v2661
          %v2724 = vadd.f32 %v2653, %v2661
          %v2725 = vadd.f32 %v2654, %v2661
          %v2726 = vadd.f32 %v2655, %v2661
          %v2727 = vlaneseq
          %v2728 = vshrl.u32 %v2727, 7
          %v2729 = vadd.s32 %v2728, 8
          %v2730 = vadd.s32 %v2728, 16
          %v2731 = vadd.s32 %v2728, 24
          %v2732 = vadd.s32 %v2728, 32
          %v2733 = vadd.s32 %v2728, 40
          %v2734 = vadd.s32 %v2728, 48
          %v2735 = vadd.s32 %v2728, 56
          %v2736 = vadd.s32 %v2728, 64
          %v2737 = vadd.s32 %v2728, 72
          %v2738 = vadd.s32 %v2728, 80
          %v2739 = vadd.s32 %v2728, 88
          %v2740 = vadd.s32 %v2728, 96
          %v2741 = vadd.s32 %v2728, 104
          %v2742 = vadd.s32 %v2728, 112
          %v2743 = vadd.s32 %v2728, 120
          %v2744 = vstv %s1426
          %v2745 = vadd.s32 %v2744, %v2728
          %v2746 = vadd.s32 %v2744, %v2729
          %v2747 = vadd.s32 %v2744, %v2730
          %v2748 = vadd.s32 %v2744, %v2731
          %v2749 = vadd.s32 %v2744, %v2732
          %v2750 = vadd.s32 %v2744, %v2733
          %v2751 = vadd.s32 %v2744, %v2734
          %v2752 = vadd.s32 %v2744, %v2735
          %v2753 = vadd.s32 %v2744, %v2736
          %v2754 = vadd.s32 %v2744, %v2737
          %v2755 = vadd.s32 %v2744, %v2738
          %v2756 = vadd.s32 %v2744, %v2739
          %v2757 = vadd.s32 %v2744, %v2740
          %v2758 = vadd.s32 %v2744, %v2741
          %v2759 = vadd.s32 %v2744, %v2742
          %v2760 = vadd.s32 %v2744, %v2743
          %v2761 = vlaneseq
          %v2762 = vand.u32 %v2761, 127
          %v2763 = vstv %s1425
          %v2764 = vadd.s32 %v2763, %v2762
          %vm2765 = vcmp.le.s32.totalorder %v2764, %v2745
          %vm2766 = vcmp.le.s32.totalorder %v2764, %v2746
          %vm2767 = vcmp.le.s32.totalorder %v2764, %v2747
          %vm2768 = vcmp.le.s32.totalorder %v2764, %v2748
          %vm2769 = vcmp.le.s32.totalorder %v2764, %v2749
          %vm2770 = vcmp.le.s32.totalorder %v2764, %v2750
          %vm2771 = vcmp.le.s32.totalorder %v2764, %v2751
          %vm2772 = vcmp.le.s32.totalorder %v2764, %v2752
          %vm2773 = vcmp.le.s32.totalorder %v2764, %v2753
          %vm2774 = vcmp.le.s32.totalorder %v2764, %v2754
          %vm2775 = vcmp.le.s32.totalorder %v2764, %v2755
          %vm2776 = vcmp.le.s32.totalorder %v2764, %v2756
          %vm2777 = vcmp.le.s32.totalorder %v2764, %v2757
          %vm2778 = vcmp.le.s32.totalorder %v2764, %v2758
          %vm2779 = vcmp.le.s32.totalorder %v2764, %v2759
          %vm2780 = vcmp.le.s32.totalorder %v2764, %v2760
          %v2781 = vsel %vm2765, %v2663, -2.3819763e+38
          %v2782 = vsel %vm2766, %v2664, -2.3819763e+38
          %v2783 = vsel %vm2767, %v2665, -2.3819763e+38
          %v2784 = vsel %vm2768, %v2666, -2.3819763e+38
          %v2785 = vsel %vm2769, %v2667, -2.3819763e+38
          %v2786 = vsel %vm2770, %v2668, -2.3819763e+38
          %v2787 = vsel %vm2771, %v2669, -2.3819763e+38
          %v2788 = vsel %vm2772, %v2670, -2.3819763e+38
          %v2789 = vsel %vm2773, %v2671, -2.3819763e+38
          %v2790 = vsel %vm2774, %v2672, -2.3819763e+38
          %v2791 = vsel %vm2775, %v2673, -2.3819763e+38
          %v2792 = vsel %vm2776, %v2674, -2.3819763e+38
          %v2793 = vsel %vm2777, %v2675, -2.3819763e+38
          %v2794 = vsel %vm2778, %v2676, -2.3819763e+38
          %v2795 = vsel %vm2779, %v2677, -2.3819763e+38
          %v2796 = vsel %vm2780, %v2678, -2.3819763e+38
          %v2797 = vsel %vm2765, %v2679, -2.3819763e+38
          %v2798 = vsel %vm2766, %v2680, -2.3819763e+38
          %v2799 = vsel %vm2767, %v2681, -2.3819763e+38
          %v2800 = vsel %vm2768, %v2682, -2.3819763e+38
          %v2801 = vsel %vm2769, %v2683, -2.3819763e+38
          %v2802 = vsel %vm2770, %v2684, -2.3819763e+38
          %v2803 = vsel %vm2771, %v2685, -2.3819763e+38
          %v2804 = vsel %vm2772, %v2686, -2.3819763e+38
          %v2805 = vsel %vm2773, %v2687, -2.3819763e+38
          %v2806 = vsel %vm2774, %v2688, -2.3819763e+38
          %v2807 = vsel %vm2775, %v2689, -2.3819763e+38
          %v2808 = vsel %vm2776, %v2690, -2.3819763e+38
          %v2809 = vsel %vm2777, %v2691, -2.3819763e+38
          %v2810 = vsel %vm2778, %v2692, -2.3819763e+38
          %v2811 = vsel %vm2779, %v2693, -2.3819763e+38
          %v2812 = vsel %vm2780, %v2694, -2.3819763e+38
          %v2813 = vsel %vm2765, %v2695, -2.3819763e+38
          %v2814 = vsel %vm2766, %v2696, -2.3819763e+38
          %v2815 = vsel %vm2767, %v2697, -2.3819763e+38
          %v2816 = vsel %vm2768, %v2698, -2.3819763e+38
          %v2817 = vsel %vm2769, %v2699, -2.3819763e+38
          %v2818 = vsel %vm2770, %v2700, -2.3819763e+38
          %v2819 = vsel %vm2771, %v2701, -2.3819763e+38
          %v2820 = vsel %vm2772, %v2702, -2.3819763e+38
          %v2821 = vsel %vm2773, %v2703, -2.3819763e+38
          %v2822 = vsel %vm2774, %v2704, -2.3819763e+38
          %v2823 = vsel %vm2775, %v2705, -2.3819763e+38
          %v2824 = vsel %vm2776, %v2706, -2.3819763e+38
          %v2825 = vsel %vm2777, %v2707, -2.3819763e+38
          %v2826 = vsel %vm2778, %v2708, -2.3819763e+38
          %v2827 = vsel %vm2779, %v2709, -2.3819763e+38
          %v2828 = vsel %vm2780, %v2710, -2.3819763e+38
          %v2829 = vsel %vm2765, %v2711, -2.3819763e+38
          %v2830 = vsel %vm2766, %v2712, -2.3819763e+38
          %v2831 = vsel %vm2767, %v2713, -2.3819763e+38
          %v2832 = vsel %vm2768, %v2714, -2.3819763e+38
          %v2833 = vsel %vm2769, %v2715, -2.3819763e+38
          %v2834 = vsel %vm2770, %v2716, -2.3819763e+38
          %v2835 = vsel %vm2771, %v2717, -2.3819763e+38
          %v2836 = vsel %vm2772, %v2718, -2.3819763e+38
          %v2837 = vsel %vm2773, %v2719, -2.3819763e+38
          %v2838 = vsel %vm2774, %v2720, -2.3819763e+38
          %v2839 = vsel %vm2775, %v2721, -2.3819763e+38
          %v2840 = vsel %vm2776, %v2722, -2.3819763e+38
          %v2841 = vsel %vm2777, %v2723, -2.3819763e+38
          %v2842 = vsel %vm2778, %v2724, -2.3819763e+38
          %v2843 = vsel %vm2779, %v2725, -2.3819763e+38
          %v2844 = vsel %vm2780, %v2726, -2.3819763e+38
          %v2845 = vld [vmem:[#allocation2] sm:$0xff]
          %v2846 = vld [vmem:[#allocation2 + $0x8] sm:$0xff]
          %v2847 = vld [vmem:[#allocation2 + $0x10] sm:$0xff]
          %v2848 = vld [vmem:[#allocation2 + $0x18] sm:$0xff]
          %v2849 = vld [vmem:[#allocation2 + $0x20] sm:$0xff]
          %v2850 = vld [vmem:[#allocation2 + $0x28] sm:$0xff]
          %v2851 = vld [vmem:[#allocation2 + $0x30] sm:$0xff]
          %v2852 = vld [vmem:[#allocation2 + $0x38] sm:$0xff]
          %v2853 = vld [vmem:[#allocation2 + $0x40] sm:$0xff]
          %v2854 = vld [vmem:[#allocation2 + $0x48] sm:$0xff]
          %v2855 = vld [vmem:[#allocation2 + $0x50] sm:$0xff]
          %v2856 = vld [vmem:[#allocation2 + $0x58] sm:$0xff]
          %v2857 = vld [vmem:[#allocation2 + $0x60] sm:$0xff]
          %v2858 = vld [vmem:[#allocation2 + $0x68] sm:$0xff]
          %v2859 = vld [vmem:[#allocation2 + $0x70] sm:$0xff]
          %v2860 = vld [vmem:[#allocation2 + $0x78] sm:$0xff]
          %v2861 = vld [vmem:[#allocation2 + $0x80] sm:$0xff]
          %v2862 = vld [vmem:[#allocation2 + $0x88] sm:$0xff]
          %v2863 = vld [vmem:[#allocation2 + $0x90] sm:$0xff]
          %v2864 = vld [vmem:[#allocation2 + $0x98] sm:$0xff]
          %v2865 = vld [vmem:[#allocation2 + $0xa0] sm:$0xff]
          %v2866 = vld [vmem:[#allocation2 + $0xa8] sm:$0xff]
          %v2867 = vld [vmem:[#allocation2 + $0xb0] sm:$0xff]
          %v2868 = vld [vmem:[#allocation2 + $0xb8] sm:$0xff]
          %v2869 = vld [vmem:[#allocation2 + $0xc0] sm:$0xff]
          %v2870 = vld [vmem:[#allocation2 + $0xc8] sm:$0xff]
          %v2871 = vld [vmem:[#allocation2 + $0xd0] sm:$0xff]
          %v2872 = vld [vmem:[#allocation2 + $0xd8] sm:$0xff]
          %v2873 = vld [vmem:[#allocation2 + $0xe0] sm:$0xff]
          %v2874 = vld [vmem:[#allocation2 + $0xe8] sm:$0xff]
          %v2875 = vld [vmem:[#allocation2 + $0xf0] sm:$0xff]
          %v2876 = vld [vmem:[#allocation2 + $0xf8] sm:$0xff]
          %v2877 = vld [vmem:[#allocation2 + $0x100] sm:$0xff]
          %v2878 = vld [vmem:[#allocation2 + $0x108] sm:$0xff]
          %v2879 = vld [vmem:[#allocation2 + $0x110] sm:$0xff]
          %v2880 = vld [vmem:[#allocation2 + $0x118] sm:$0xff]
          %v2881 = vld [vmem:[#allocation2 + $0x120] sm:$0xff]
          %v2882 = vld [vmem:[#allocation2 + $0x128] sm:$0xff]
          %v2883 = vld [vmem:[#allocation2 + $0x130] sm:$0xff]
          %v2884 = vld [vmem:[#allocation2 + $0x138] sm:$0xff]
          %v2885 = vld [vmem:[#allocation2 + $0x140] sm:$0xff]
          %v2886 = vld [vmem:[#allocation2 + $0x148] sm:$0xff]
          %v2887 = vld [vmem:[#allocation2 + $0x150] sm:$0xff]
          %v2888 = vld [vmem:[#allocation2 + $0x158] sm:$0xff]
          %v2889 = vld [vmem:[#allocation2 + $0x160] sm:$0xff]
          %v2890 = vld [vmem:[#allocation2 + $0x168] sm:$0xff]
          %v2891 = vld [vmem:[#allocation2 + $0x170] sm:$0xff]
          %v2892 = vld [vmem:[#allocation2 + $0x178] sm:$0xff]
          %v2893 = vld [vmem:[#allocation2 + $0x180] sm:$0xff]
          %v2894 = vld [vmem:[#allocation2 + $0x188] sm:$0xff]
          %v2895 = vld [vmem:[#allocation2 + $0x190] sm:$0xff]
          %v2896 = vld [vmem:[#allocation2 + $0x198] sm:$0xff]
          %v2897 = vld [vmem:[#allocation2 + $0x1a0] sm:$0xff]
          %v2898 = vld [vmem:[#allocation2 + $0x1a8] sm:$0xff]
          %v2899 = vld [vmem:[#allocation2 + $0x1b0] sm:$0xff]
          %v2900 = vld [vmem:[#allocation2 + $0x1b8] sm:$0xff]
          %v2901 = vld [vmem:[#allocation2 + $0x1c0] sm:$0xff]
          %v2902 = vld [vmem:[#allocation2 + $0x1c8] sm:$0xff]
          %v2903 = vld [vmem:[#allocation2 + $0x1d0] sm:$0xff]
          %v2904 = vld [vmem:[#allocation2 + $0x1d8] sm:$0xff]
          %v2905 = vld [vmem:[#allocation2 + $0x1e0] sm:$0xff]
          %v2906 = vld [vmem:[#allocation2 + $0x1e8] sm:$0xff]
          %v2907 = vld [vmem:[#allocation2 + $0x1f0] sm:$0xff]
          %v2908 = vld [vmem:[#allocation2 + $0x1f8] sm:$0xff]
          %2909 = vmax.xlane.f32.xlu0 %v2781
          %v2910 = vpop.xlane.xlu0 %2909
          %2911 = vmax.xlane.f32.xlu0 %v2782
          %v2912 = vpop.xlane.xlu0 %2911
          %2913 = vmax.xlane.f32.xlu0 %v2783
          %v2914 = vpop.xlane.xlu0 %2913
          %2915 = vmax.xlane.f32.xlu0 %v2784
          %v2916 = vpop.xlane.xlu0 %2915
          %2917 = vmax.xlane.f32.xlu0 %v2785
          %v2918 = vpop.xlane.xlu0 %2917
          %2919 = vmax.xlane.f32.xlu0 %v2786
          %v2920 = vpop.xlane.xlu0 %2919
          %2921 = vmax.xlane.f32.xlu0 %v2787
          %v2922 = vpop.xlane.xlu0 %2921
          %2923 = vmax.xlane.f32.xlu0 %v2788
          %v2924 = vpop.xlane.xlu0 %2923
          %2925 = vmax.xlane.f32.xlu0 %v2789
          %v2926 = vpop.xlane.xlu0 %2925
          %2927 = vmax.xlane.f32.xlu0 %v2790
          %v2928 = vpop.xlane.xlu0 %2927
          %2929 = vmax.xlane.f32.xlu0 %v2791
          %v2930 = vpop.xlane.xlu0 %2929
          %2931 = vmax.xlane.f32.xlu0 %v2792
          %v2932 = vpop.xlane.xlu0 %2931
          %2933 = vmax.xlane.f32.xlu0 %v2793
          %v2934 = vpop.xlane.xlu0 %2933
          %2935 = vmax.xlane.f32.xlu0 %v2794
          %v2936 = vpop.xlane.xlu0 %2935
          %2937 = vmax.xlane.f32.xlu0 %v2795
          %v2938 = vpop.xlane.xlu0 %2937
          %2939 = vmax.xlane.f32.xlu0 %v2796
          %v2940 = vpop.xlane.xlu0 %2939
          %2941 = vmax.xlane.f32.xlu0 %v2797
          %v2942 = vpop.xlane.xlu0 %2941
          %2943 = vmax.xlane.f32.xlu0 %v2798
          %v2944 = vpop.xlane.xlu0 %2943
          %2945 = vmax.xlane.f32.xlu0 %v2799
          %v2946 = vpop.xlane.xlu0 %2945
          %2947 = vmax.xlane.f32.xlu0 %v2800
          %v2948 = vpop.xlane.xlu0 %2947
          %2949 = vmax.xlane.f32.xlu0 %v2801
          %v2950 = vpop.xlane.xlu0 %2949
          %2951 = vmax.xlane.f32.xlu0 %v2802
          %v2952 = vpop.xlane.xlu0 %2951
          %2953 = vmax.xlane.f32.xlu0 %v2803
          %v2954 = vpop.xlane.xlu0 %2953
          %2955 = vmax.xlane.f32.xlu0 %v2804
          %v2956 = vpop.xlane.xlu0 %2955
          %2957 = vmax.xlane.f32.xlu0 %v2805
          %v2958 = vpop.xlane.xlu0 %2957
          %2959 = vmax.xlane.f32.xlu0 %v2806
          %v2960 = vpop.xlane.xlu0 %2959
          %2961 = vmax.xlane.f32.xlu0 %v2807
          %v2962 = vpop.xlane.xlu0 %2961
          %2963 = vmax.xlane.f32.xlu0 %v2808
          %v2964 = vpop.xlane.xlu0 %2963
          %2965 = vmax.xlane.f32.xlu0 %v2809
          %v2966 = vpop.xlane.xlu0 %2965
          %2967 = vmax.xlane.f32.xlu0 %v2810
          %v2968 = vpop.xlane.xlu0 %2967
          %2969 = vmax.xlane.f32.xlu0 %v2811
          %v2970 = vpop.xlane.xlu0 %2969
          %2971 = vmax.xlane.f32.xlu0 %v2812
          %v2972 = vpop.xlane.xlu0 %2971
          %2973 = vmax.xlane.f32.xlu0 %v2813
          %v2974 = vpop.xlane.xlu0 %2973
          %2975 = vmax.xlane.f32.xlu0 %v2814
          %v2976 = vpop.xlane.xlu0 %2975
          %2977 = vmax.xlane.f32.xlu0 %v2815
          %v2978 = vpop.xlane.xlu0 %2977
          %2979 = vmax.xlane.f32.xlu0 %v2816
          %v2980 = vpop.xlane.xlu0 %2979
          %2981 = vmax.xlane.f32.xlu0 %v2817
          %v2982 = vpop.xlane.xlu0 %2981
          %2983 = vmax.xlane.f32.xlu0 %v2818
          %v2984 = vpop.xlane.xlu0 %2983
          %2985 = vmax.xlane.f32.xlu0 %v2819
          %v2986 = vpop.xlane.xlu0 %2985
          %2987 = vmax.xlane.f32.xlu0 %v2820
          %v2988 = vpop.xlane.xlu0 %2987
          %2989 = vmax.xlane.f32.xlu0 %v2821
          %v2990 = vpop.xlane.xlu0 %2989
          %2991 = vmax.xlane.f32.xlu0 %v2822
          %v2992 = vpop.xlane.xlu0 %2991
          %2993 = vmax.xlane.f32.xlu0 %v2823
          %v2994 = vpop.xlane.xlu0 %2993
          %2995 = vmax.xlane.f32.xlu0 %v2824
          %v2996 = vpop.xlane.xlu0 %2995
          %2997 = vmax.xlane.f32.xlu0 %v2825
          %v2998 = vpop.xlane.xlu0 %2997
          %2999 = vmax.xlane.f32.xlu0 %v2826
          %v3000 = vpop.xlane.xlu0 %2999
          %3001 = vmax.xlane.f32.xlu0 %v2827
          %v3002 = vpop.xlane.xlu0 %3001
          %3003 = vmax.xlane.f32.xlu0 %v2828
          %v3004 = vpop.xlane.xlu0 %3003
          %3005 = vmax.xlane.f32.xlu0 %v2829
          %v3006 = vpop.xlane.xlu0 %3005
          %3007 = vmax.xlane.f32.xlu0 %v2830
          %v3008 = vpop.xlane.xlu0 %3007
          %3009 = vmax.xlane.f32.xlu0 %v2831
          %v3010 = vpop.xlane.xlu0 %3009
          %3011 = vmax.xlane.f32.xlu0 %v2832
          %v3012 = vpop.xlane.xlu0 %3011
          %3013 = vmax.xlane.f32.xlu0 %v2833
          %v3014 = vpop.xlane.xlu0 %3013
          %3015 = vmax.xlane.f32.xlu0 %v2834
          %v3016 = vpop.xlane.xlu0 %3015
          %3017 = vmax.xlane.f32.xlu0 %v2835
          %v3018 = vpop.xlane.xlu0 %3017
          %3019 = vmax.xlane.f32.xlu0 %v2836
          %v3020 = vpop.xlane.xlu0 %3019
          %3021 = vmax.xlane.f32.xlu0 %v2837
          %v3022 = vpop.xlane.xlu0 %3021
          %3023 = vmax.xlane.f32.xlu0 %v2838
          %v3024 = vpop.xlane.xlu0 %3023
          %3025 = vmax.xlane.f32.xlu0 %v2839
          %v3026 = vpop.xlane.xlu0 %3025
          %3027 = vmax.xlane.f32.xlu0 %v2840
          %v3028 = vpop.xlane.xlu0 %3027
          %3029 = vmax.xlane.f32.xlu0 %v2841
          %v3030 = vpop.xlane.xlu0 %3029
          %3031 = vmax.xlane.f32.xlu0 %v2842
          %v3032 = vpop.xlane.xlu0 %3031
          %3033 = vmax.xlane.f32.xlu0 %v2843
          %v3034 = vpop.xlane.xlu0 %3033
          %3035 = vmax.xlane.f32.xlu0 %v2844
          %v3036 = vpop.xlane.xlu0 %3035
          %v3037 = vmax.f32 %v2845, %v2910
          %v3038 = vmax.f32 %v2846, %v2912
          %v3039 = vmax.f32 %v2847, %v2914
          %v3040 = vmax.f32 %v2848, %v2916
          %v3041 = vmax.f32 %v2849, %v2918
          %v3042 = vmax.f32 %v2850, %v2920
          %v3043 = vmax.f32 %v2851, %v2922
          %v3044 = vmax.f32 %v2852, %v2924
          %v3045 = vmax.f32 %v2853, %v2926
          %v3046 = vmax.f32 %v2854, %v2928
          %v3047 = vmax.f32 %v2855, %v2930
          %v3048 = vmax.f32 %v2856, %v2932
          %v3049 = vmax.f32 %v2857, %v2934
          %v3050 = vmax.f32 %v2858, %v2936
          %v3051 = vmax.f32 %v2859, %v2938
          %v3052 = vmax.f32 %v2860, %v2940
          %v3053 = vmax.f32 %v2861, %v2942
          %v3054 = vmax.f32 %v2862, %v2944
          %v3055 = vmax.f32 %v2863, %v2946
          %v3056 = vmax.f32 %v2864, %v2948
          %v3057 = vmax.f32 %v2865, %v2950
          %v3058 = vmax.f32 %v2866, %v2952
          %v3059 = vmax.f32 %v2867, %v2954
          %v3060 = vmax.f32 %v2868, %v2956
          %v3061 = vmax.f32 %v2869, %v2958
          %v3062 = vmax.f32 %v2870, %v2960
          %v3063 = vmax.f32 %v2871, %v2962
          %v3064 = vmax.f32 %v2872, %v2964
          %v3065 = vmax.f32 %v2873, %v2966
          %v3066 = vmax.f32 %v2874, %v2968
          %v3067 = vmax.f32 %v2875, %v2970
          %v3068 = vmax.f32 %v2876, %v2972
          %v3069 = vmax.f32 %v2877, %v2974
          %v3070 = vmax.f32 %v2878, %v2976
          %v3071 = vmax.f32 %v2879, %v2978
          %v3072 = vmax.f32 %v2880, %v2980
          %v3073 = vmax.f32 %v2881, %v2982
          %v3074 = vmax.f32 %v2882, %v2984
          %v3075 = vmax.f32 %v2883, %v2986
          %v3076 = vmax.f32 %v2884, %v2988
          %v3077 = vmax.f32 %v2885, %v2990
          %v3078 = vmax.f32 %v2886, %v2992
          %v3079 = vmax.f32 %v2887, %v2994
          %v3080 = vmax.f32 %v2888, %v2996
          %v3081 = vmax.f32 %v2889, %v2998
          %v3082 = vmax.f32 %v2890, %v3000
          %v3083 = vmax.f32 %v2891, %v3002
          %v3084 = vmax.f32 %v2892, %v3004
          %v3085 = vmax.f32 %v2893, %v3006
          %v3086 = vmax.f32 %v2894, %v3008
          %v3087 = vmax.f32 %v2895, %v3010
          %v3088 = vmax.f32 %v2896, %v3012
          %v3089 = vmax.f32 %v2897, %v3014
          %v3090 = vmax.f32 %v2898, %v3016
          %v3091 = vmax.f32 %v2899, %v3018
          %v3092 = vmax.f32 %v2900, %v3020
          %v3093 = vmax.f32 %v2901, %v3022
          %v3094 = vmax.f32 %v2902, %v3024
          %v3095 = vmax.f32 %v2903, %v3026
          %v3096 = vmax.f32 %v2904, %v3028
          %v3097 = vmax.f32 %v2905, %v3030
          %v3098 = vmax.f32 %v2906, %v3032
          %v3099 = vmax.f32 %v2907, %v3034
          %v3100 = vmax.f32 %v2908, %v3036
          %v3101 = vsub.f32 %v2845, %v3037
          %v3102 = vsub.f32 %v2846, %v3038
          %v3103 = vsub.f32 %v2847, %v3039
          %v3104 = vsub.f32 %v2848, %v3040
          %v3105 = vsub.f32 %v2849, %v3041
          %v3106 = vsub.f32 %v2850, %v3042
          %v3107 = vsub.f32 %v2851, %v3043
          %v3108 = vsub.f32 %v2852, %v3044
          %v3109 = vsub.f32 %v2853, %v3045
          %v3110 = vsub.f32 %v2854, %v3046
          %v3111 = vsub.f32 %v2855, %v3047
          %v3112 = vsub.f32 %v2856, %v3048
          %v3113 = vsub.f32 %v2857, %v3049
          %v3114 = vsub.f32 %v2858, %v3050
          %v3115 = vsub.f32 %v2859, %v3051
          %v3116 = vsub.f32 %v2860, %v3052
          %v3117 = vsub.f32 %v2861, %v3053
          %v3118 = vsub.f32 %v2862, %v3054
          %v3119 = vsub.f32 %v2863, %v3055
          %v3120 = vsub.f32 %v2864, %v3056
          %v3121 = vsub.f32 %v2865, %v3057
          %v3122 = vsub.f32 %v2866, %v3058
          %v3123 = vsub.f32 %v2867, %v3059
          %v3124 = vsub.f32 %v2868, %v3060
          %v3125 = vsub.f32 %v2869, %v3061
          %v3126 = vsub.f32 %v2870, %v3062
          %v3127 = vsub.f32 %v2871, %v3063
          %v3128 = vsub.f32 %v2872, %v3064
          %v3129 = vsub.f32 %v2873, %v3065
          %v3130 = vsub.f32 %v2874, %v3066
          %v3131 = vsub.f32 %v2875, %v3067
          %v3132 = vsub.f32 %v2876, %v3068
          %v3133 = vsub.f32 %v2877, %v3069
          %v3134 = vsub.f32 %v2878, %v3070
          %v3135 = vsub.f32 %v2879, %v3071
          %v3136 = vsub.f32 %v2880, %v3072
          %v3137 = vsub.f32 %v2881, %v3073
          %v3138 = vsub.f32 %v2882, %v3074
          %v3139 = vsub.f32 %v2883, %v3075
          %v3140 = vsub.f32 %v2884, %v3076
          %v3141 = vsub.f32 %v2885, %v3077
          %v3142 = vsub.f32 %v2886, %v3078
          %v3143 = vsub.f32 %v2887, %v3079
          %v3144 = vsub.f32 %v2888, %v3080
          %v3145 = vsub.f32 %v2889, %v3081
          %v3146 = vsub.f32 %v2890, %v3082
          %v3147 = vsub.f32 %v2891, %v3083
          %v3148 = vsub.f32 %v2892, %v3084
          %v3149 = vsub.f32 %v2893, %v3085
          %v3150 = vsub.f32 %v2894, %v3086
          %v3151 = vsub.f32 %v2895, %v3087
          %v3152 = vsub.f32 %v2896, %v3088
          %v3153 = vsub.f32 %v2897, %v3089
          %v3154 = vsub.f32 %v2898, %v3090
          %v3155 = vsub.f32 %v2899, %v3091
          %v3156 = vsub.f32 %v2900, %v3092
          %v3157 = vsub.f32 %v2901, %v3093
          %v3158 = vsub.f32 %v2902, %v3094
          %v3159 = vsub.f32 %v2903, %v3095
          %v3160 = vsub.f32 %v2904, %v3096
          %v3161 = vsub.f32 %v2905, %v3097
          %v3162 = vsub.f32 %v2906, %v3098
          %v3163 = vsub.f32 %v2907, %v3099
          %v3164 = vsub.f32 %v2908, %v3100
          %v3165 = vmul.f32 %v3101, 1.442695
          %v3166 = vpow.pop %v3165
          %v3167 = vmul.f32 %v3102, 1.442695
          %v3168 = vpow.pop %v3167
          %v3169 = vmul.f32 %v3103, 1.442695
          %v3170 = vpow.pop %v3169
          %v3171 = vmul.f32 %v3104, 1.442695
          %v3172 = vpow.pop %v3171
          %v3173 = vmul.f32 %v3105, 1.442695
          %v3174 = vpow.pop %v3173
          %v3175 = vmul.f32 %v3106, 1.442695
          %v3176 = vpow.pop %v3175
          %v3177 = vmul.f32 %v3107, 1.442695
          %v3178 = vpow.pop %v3177
          %v3179 = vmul.f32 %v3108, 1.442695
          %v3180 = vpow.pop %v3179
          %v3181 = vmul.f32 %v3109, 1.442695
          %v3182 = vpow.pop %v3181
          %v3183 = vmul.f32 %v3110, 1.442695
          %v3184 = vpow.pop %v3183
          %v3185 = vmul.f32 %v3111, 1.442695
          %v3186 = vpow.pop %v3185
          %v3187 = vmul.f32 %v3112, 1.442695
          %v3188 = vpow.pop %v3187
          %v3189 = vmul.f32 %v3113, 1.442695
          %v3190 = vpow.pop %v3189
          %v3191 = vmul.f32 %v3114, 1.442695
          %v3192 = vpow.pop %v3191
          %v3193 = vmul.f32 %v3115, 1.442695
          %v3194 = vpow.pop %v3193
          %v3195 = vmul.f32 %v3116, 1.442695
          %v3196 = vpow.pop %v3195
          %v3197 = vmul.f32 %v3117, 1.442695
          %v3198 = vpow.pop %v3197
          %v3199 = vmul.f32 %v3118, 1.442695
          %v3200 = vpow.pop %v3199
          %v3201 = vmul.f32 %v3119, 1.442695
          %v3202 = vpow.pop %v3201
          %v3203 = vmul.f32 %v3120, 1.442695
          %v3204 = vpow.pop %v3203
          %v3205 = vmul.f32 %v3121, 1.442695
          %v3206 = vpow.pop %v3205
          %v3207 = vmul.f32 %v3122, 1.442695
          %v3208 = vpow.pop %v3207
          %v3209 = vmul.f32 %v3123, 1.442695
          %v3210 = vpow.pop %v3209
          %v3211 = vmul.f32 %v3124, 1.442695
          %v3212 = vpow.pop %v3211
          %v3213 = vmul.f32 %v3125, 1.442695
          %v3214 = vpow.pop %v3213
          %v3215 = vmul.f32 %v3126, 1.442695
          %v3216 = vpow.pop %v3215
          %v3217 = vmul.f32 %v3127, 1.442695
          %v3218 = vpow.pop %v3217
          %v3219 = vmul.f32 %v3128, 1.442695
          %v3220 = vpow.pop %v3219
          %v3221 = vmul.f32 %v3129, 1.442695
          %v3222 = vpow.pop %v3221
          %v3223 = vmul.f32 %v3130, 1.442695
          %v3224 = vpow.pop %v3223
          %v3225 = vmul.f32 %v3131, 1.442695
          %v3226 = vpow.pop %v3225
          %v3227 = vmul.f32 %v3132, 1.442695
          %v3228 = vpow.pop %v3227
          %v3229 = vmul.f32 %v3133, 1.442695
          %v3230 = vpow.pop %v3229
          %v3231 = vmul.f32 %v3134, 1.442695
          %v3232 = vpow.pop %v3231
          %v3233 = vmul.f32 %v3135, 1.442695
          %v3234 = vpow.pop %v3233
          %v3235 = vmul.f32 %v3136, 1.442695
          %v3236 = vpow.pop %v3235
          %v3237 = vmul.f32 %v3137, 1.442695
          %v3238 = vpow.pop %v3237
          %v3239 = vmul.f32 %v3138, 1.442695
          %v3240 = vpow.pop %v3239
          %v3241 = vmul.f32 %v3139, 1.442695
          %v3242 = vpow.pop %v3241
          %v3243 = vmul.f32 %v3140, 1.442695
          %v3244 = vpow.pop %v3243
          %v3245 = vmul.f32 %v3141, 1.442695
          %v3246 = vpow.pop %v3245
          %v3247 = vmul.f32 %v3142, 1.442695
          %v3248 = vpow.pop %v3247
          %v3249 = vmul.f32 %v3143, 1.442695
          %v3250 = vpow.pop %v3249
          %v3251 = vmul.f32 %v3144, 1.442695
          %v3252 = vpow.pop %v3251
          %v3253 = vmul.f32 %v3145, 1.442695
          %v3254 = vpow.pop %v3253
          %v3255 = vmul.f32 %v3146, 1.442695
          %v3256 = vpow.pop %v3255
          %v3257 = vmul.f32 %v3147, 1.442695
          %v3258 = vpow.pop %v3257
          %v3259 = vmul.f32 %v3148, 1.442695
          %v3260 = vpow.pop %v3259
          %v3261 = vmul.f32 %v3149, 1.442695
          %v3262 = vpow.pop %v3261
          %v3263 = vmul.f32 %v3150, 1.442695
          %v3264 = vpow.pop %v3263
          %v3265 = vmul.f32 %v3151, 1.442695
          %v3266 = vpow.pop %v3265
          %v3267 = vmul.f32 %v3152, 1.442695
          %v3268 = vpow.pop %v3267
          %v3269 = vmul.f32 %v3153, 1.442695
          %v3270 = vpow.pop %v3269
          %v3271 = vmul.f32 %v3154, 1.442695
          %v3272 = vpow.pop %v3271
          %v3273 = vmul.f32 %v3155, 1.442695
          %v3274 = vpow.pop %v3273
          %v3275 = vmul.f32 %v3156, 1.442695
          %v3276 = vpow.pop %v3275
          %v3277 = vmul.f32 %v3157, 1.442695
          %v3278 = vpow.pop %v3277
          %v3279 = vmul.f32 %v3158, 1.442695
          %v3280 = vpow.pop %v3279
          %v3281 = vmul.f32 %v3159, 1.442695
          %v3282 = vpow.pop %v3281
          %v3283 = vmul.f32 %v3160, 1.442695
          %v3284 = vpow.pop %v3283
          %v3285 = vmul.f32 %v3161, 1.442695
          %v3286 = vpow.pop %v3285
          %v3287 = vmul.f32 %v3162, 1.442695
          %v3288 = vpow.pop %v3287
          %v3289 = vmul.f32 %v3163, 1.442695
          %v3290 = vpow.pop %v3289
          %v3291 = vmul.f32 %v3164, 1.442695
          %v3292 = vpow.pop %v3291
          %3294 = vset.pattern.permute.xlu0 0
          %3295 = vperm.xlu0 %3294, %v3037
          %v3296 = vpop.permute.xlu0 %3295
          %3299 = vset.pattern.permute.xlu0 0
          %3300 = vperm.xlu0 %3299, %v3038
          %v3301 = vpop.permute.xlu0 %3300
          %3304 = vset.pattern.permute.xlu0 0
          %3305 = vperm.xlu0 %3304, %v3039
          %v3306 = vpop.permute.xlu0 %3305
          %3309 = vset.pattern.permute.xlu0 0
          %3310 = vperm.xlu0 %3309, %v3040
          %v3311 = vpop.permute.xlu0 %3310
          %3314 = vset.pattern.permute.xlu0 0
          %3315 = vperm.xlu0 %3314, %v3041
          %v3316 = vpop.permute.xlu0 %3315
          %3319 = vset.pattern.permute.xlu0 0
          %3320 = vperm.xlu0 %3319, %v3042
          %v3321 = vpop.permute.xlu0 %3320
          %3324 = vset.pattern.permute.xlu0 0
          %3325 = vperm.xlu0 %3324, %v3043
          %v3326 = vpop.permute.xlu0 %3325
          %3329 = vset.pattern.permute.xlu0 0
          %3330 = vperm.xlu0 %3329, %v3044
          %v3331 = vpop.permute.xlu0 %3330
          %3334 = vset.pattern.permute.xlu0 0
          %3335 = vperm.xlu0 %3334, %v3045
          %v3336 = vpop.permute.xlu0 %3335
          %3339 = vset.pattern.permute.xlu0 0
          %3340 = vperm.xlu0 %3339, %v3046
          %v3341 = vpop.permute.xlu0 %3340
          %3344 = vset.pattern.permute.xlu0 0
          %3345 = vperm.xlu0 %3344, %v3047
          %v3346 = vpop.permute.xlu0 %3345
          %3349 = vset.pattern.permute.xlu0 0
          %3350 = vperm.xlu0 %3349, %v3048
          %v3351 = vpop.permute.xlu0 %3350
          %3354 = vset.pattern.permute.xlu0 0
          %3355 = vperm.xlu0 %3354, %v3049
          %v3356 = vpop.permute.xlu0 %3355
          %3359 = vset.pattern.permute.xlu0 0
          %3360 = vperm.xlu0 %3359, %v3050
          %v3361 = vpop.permute.xlu0 %3360
          %3364 = vset.pattern.permute.xlu0 0
          %3365 = vperm.xlu0 %3364, %v3051
          %v3366 = vpop.permute.xlu0 %3365
          %3369 = vset.pattern.permute.xlu0 0
          %3370 = vperm.xlu0 %3369, %v3052
          %v3371 = vpop.permute.xlu0 %3370
          %3374 = vset.pattern.permute.xlu0 0
          %3375 = vperm.xlu0 %3374, %v3053
          %v3376 = vpop.permute.xlu0 %3375
          %3379 = vset.pattern.permute.xlu0 0
          %3380 = vperm.xlu0 %3379, %v3054
          %v3381 = vpop.permute.xlu0 %3380
          %3384 = vset.pattern.permute.xlu0 0
          %3385 = vperm.xlu0 %3384, %v3055
          %v3386 = vpop.permute.xlu0 %3385
          %3389 = vset.pattern.permute.xlu0 0
          %3390 = vperm.xlu0 %3389, %v3056
          %v3391 = vpop.permute.xlu0 %3390
          %3394 = vset.pattern.permute.xlu0 0
          %3395 = vperm.xlu0 %3394, %v3057
          %v3396 = vpop.permute.xlu0 %3395
          %3399 = vset.pattern.permute.xlu0 0
          %3400 = vperm.xlu0 %3399, %v3058
          %v3401 = vpop.permute.xlu0 %3400
          %3404 = vset.pattern.permute.xlu0 0
          %3405 = vperm.xlu0 %3404, %v3059
          %v3406 = vpop.permute.xlu0 %3405
          %3409 = vset.pattern.permute.xlu0 0
          %3410 = vperm.xlu0 %3409, %v3060
          %v3411 = vpop.permute.xlu0 %3410
          %3414 = vset.pattern.permute.xlu0 0
          %3415 = vperm.xlu0 %3414, %v3061
          %v3416 = vpop.permute.xlu0 %3415
          %3419 = vset.pattern.permute.xlu0 0
          %3420 = vperm.xlu0 %3419, %v3062
          %v3421 = vpop.permute.xlu0 %3420
          %3424 = vset.pattern.permute.xlu0 0
          %3425 = vperm.xlu0 %3424, %v3063
          %v3426 = vpop.permute.xlu0 %3425
          %3429 = vset.pattern.permute.xlu0 0
          %3430 = vperm.xlu0 %3429, %v3064
          %v3431 = vpop.permute.xlu0 %3430
          %3434 = vset.pattern.permute.xlu0 0
          %3435 = vperm.xlu0 %3434, %v3065
          %v3436 = vpop.permute.xlu0 %3435
          %3439 = vset.pattern.permute.xlu0 0
          %3440 = vperm.xlu0 %3439, %v3066
          %v3441 = vpop.permute.xlu0 %3440
          %3444 = vset.pattern.permute.xlu0 0
          %3445 = vperm.xlu0 %3444, %v3067
          %v3446 = vpop.permute.xlu0 %3445
          %3449 = vset.pattern.permute.xlu0 0
          %3450 = vperm.xlu0 %3449, %v3068
          %v3451 = vpop.permute.xlu0 %3450
          %3454 = vset.pattern.permute.xlu0 0
          %3455 = vperm.xlu0 %3454, %v3069
          %v3456 = vpop.permute.xlu0 %3455
          %3459 = vset.pattern.permute.xlu0 0
          %3460 = vperm.xlu0 %3459, %v3070
          %v3461 = vpop.permute.xlu0 %3460
          %3464 = vset.pattern.permute.xlu0 0
          %3465 = vperm.xlu0 %3464, %v3071
          %v3466 = vpop.permute.xlu0 %3465
          %3469 = vset.pattern.permute.xlu0 0
          %3470 = vperm.xlu0 %3469, %v3072
          %v3471 = vpop.permute.xlu0 %3470
          %3474 = vset.pattern.permute.xlu0 0
          %3475 = vperm.xlu0 %3474, %v3073
          %v3476 = vpop.permute.xlu0 %3475
          %3479 = vset.pattern.permute.xlu0 0
          %3480 = vperm.xlu0 %3479, %v3074
          %v3481 = vpop.permute.xlu0 %3480
          %3484 = vset.pattern.permute.xlu0 0
          %3485 = vperm.xlu0 %3484, %v3075
          %v3486 = vpop.permute.xlu0 %3485
          %3489 = vset.pattern.permute.xlu0 0
          %3490 = vperm.xlu0 %3489, %v3076
          %v3491 = vpop.permute.xlu0 %3490
          %3494 = vset.pattern.permute.xlu0 0
          %3495 = vperm.xlu0 %3494, %v3077
          %v3496 = vpop.permute.xlu0 %3495
          %3499 = vset.pattern.permute.xlu0 0
          %3500 = vperm.xlu0 %3499, %v3078
          %v3501 = vpop.permute.xlu0 %3500
          %3504 = vset.pattern.permute.xlu0 0
          %3505 = vperm.xlu0 %3504, %v3079
          %v3506 = vpop.permute.xlu0 %3505
          %3509 = vset.pattern.permute.xlu0 0
          %3510 = vperm.xlu0 %3509, %v3080
          %v3511 = vpop.permute.xlu0 %3510
          %3514 = vset.pattern.permute.xlu0 0
          %3515 = vperm.xlu0 %3514, %v3081
          %v3516 = vpop.permute.xlu0 %3515
          %3519 = vset.pattern.permute.xlu0 0
          %3520 = vperm.xlu0 %3519, %v3082
          %v3521 = vpop.permute.xlu0 %3520
          %3524 = vset.pattern.permute.xlu0 0
          %3525 = vperm.xlu0 %3524, %v3083
          %v3526 = vpop.permute.xlu0 %3525
          %3529 = vset.pattern.permute.xlu0 0
          %3530 = vperm.xlu0 %3529, %v3084
          %v3531 = vpop.permute.xlu0 %3530
          %3534 = vset.pattern.permute.xlu0 0
          %3535 = vperm.xlu0 %3534, %v3085
          %v3536 = vpop.permute.xlu0 %3535
          %3539 = vset.pattern.permute.xlu0 0
          %3540 = vperm.xlu0 %3539, %v3086
          %v3541 = vpop.permute.xlu0 %3540
          %3544 = vset.pattern.permute.xlu0 0
          %3545 = vperm.xlu0 %3544, %v3087
          %v3546 = vpop.permute.xlu0 %3545
          %3549 = vset.pattern.permute.xlu0 0
          %3550 = vperm.xlu0 %3549, %v3088
          %v3551 = vpop.permute.xlu0 %3550
          %3554 = vset.pattern.permute.xlu0 0
          %3555 = vperm.xlu0 %3554, %v3089
          %v3556 = vpop.permute.xlu0 %3555
          %3559 = vset.pattern.permute.xlu0 0
          %3560 = vperm.xlu0 %3559, %v3090
          %v3561 = vpop.permute.xlu0 %3560
          %3564 = vset.pattern.permute.xlu0 0
          %3565 = vperm.xlu0 %3564, %v3091
          %v3566 = vpop.permute.xlu0 %3565
          %3569 = vset.pattern.permute.xlu0 0
          %3570 = vperm.xlu0 %3569, %v3092
          %v3571 = vpop.permute.xlu0 %3570
          %3574 = vset.pattern.permute.xlu0 0
          %3575 = vperm.xlu0 %3574, %v3093
          %v3576 = vpop.permute.xlu0 %3575
          %3579 = vset.pattern.permute.xlu0 0
          %3580 = vperm.xlu0 %3579, %v3094
          %v3581 = vpop.permute.xlu0 %3580
          %3584 = vset.pattern.permute.xlu0 0
          %3585 = vperm.xlu0 %3584, %v3095
          %v3586 = vpop.permute.xlu0 %3585
          %3589 = vset.pattern.permute.xlu0 0
          %3590 = vperm.xlu0 %3589, %v3096
          %v3591 = vpop.permute.xlu0 %3590
          %3594 = vset.pattern.permute.xlu0 0
          %3595 = vperm.xlu0 %3594, %v3097
          %v3596 = vpop.permute.xlu0 %3595
          %3599 = vset.pattern.permute.xlu0 0
          %3600 = vperm.xlu0 %3599, %v3098
          %v3601 = vpop.permute.xlu0 %3600
          %3604 = vset.pattern.permute.xlu0 0
          %3605 = vperm.xlu0 %3604, %v3099
          %v3606 = vpop.permute.xlu0 %3605
          %3609 = vset.pattern.permute.xlu0 0
          %3610 = vperm.xlu0 %3609, %v3100
          %v3611 = vpop.permute.xlu0 %3610
          %v3613 = vsub.f32 %v2781, %v3296
          %v3614 = vsub.f32 %v2782, %v3301
          %v3615 = vsub.f32 %v2783, %v3306
          %v3616 = vsub.f32 %v2784, %v3311
          %v3617 = vsub.f32 %v2785, %v3316
          %v3618 = vsub.f32 %v2786, %v3321
          %v3619 = vsub.f32 %v2787, %v3326
          %v3620 = vsub.f32 %v2788, %v3331
          %v3621 = vsub.f32 %v2789, %v3336
          %v3622 = vsub.f32 %v2790, %v3341
          %v3623 = vsub.f32 %v2791, %v3346
          %v3624 = vsub.f32 %v2792, %v3351
          %v3625 = vsub.f32 %v2793, %v3356
          %v3626 = vsub.f32 %v2794, %v3361
          %v3627 = vsub.f32 %v2795, %v3366
          %v3628 = vsub.f32 %v2796, %v3371
          %v3629 = vsub.f32 %v2797, %v3376
          %v3630 = vsub.f32 %v2798, %v3381
          %v3631 = vsub.f32 %v2799, %v3386
          %v3632 = vsub.f32 %v2800, %v3391
          %v3633 = vsub.f32 %v2801, %v3396
          %v3634 = vsub.f32 %v2802, %v3401
          %v3635 = vsub.f32 %v2803, %v3406
          %v3636 = vsub.f32 %v2804, %v3411
          %v3637 = vsub.f32 %v2805, %v3416
          %v3638 = vsub.f32 %v2806, %v3421
          %v3639 = vsub.f32 %v2807, %v3426
          %v3640 = vsub.f32 %v2808, %v3431
          %v3641 = vsub.f32 %v2809, %v3436
          %v3642 = vsub.f32 %v2810, %v3441
          %v3643 = vsub.f32 %v2811, %v3446
          %v3644 = vsub.f32 %v2812, %v3451
          %v3645 = vsub.f32 %v2813, %v3456
          %v3646 = vsub.f32 %v2814, %v3461
          %v3647 = vsub.f32 %v2815, %v3466
          %v3648 = vsub.f32 %v2816, %v3471
          %v3649 = vsub.f32 %v2817, %v3476
          %v3650 = vsub.f32 %v2818, %v3481
          %v3651 = vsub.f32 %v2819, %v3486
          %v3652 = vsub.f32 %v2820, %v3491
          %v3653 = vsub.f32 %v2821, %v3496
          %v3654 = vsub.f32 %v2822, %v3501
          %v3655 = vsub.f32 %v2823, %v3506
          %v3656 = vsub.f32 %v2824, %v3511
          %v3657 = vsub.f32 %v2825, %v3516
          %v3658 = vsub.f32 %v2826, %v3521
          %v3659 = vsub.f32 %v2827, %v3526
          %v3660 = vsub.f32 %v2828, %v3531
          %v3661 = vsub.f32 %v2829, %v3536
          %v3662 = vsub.f32 %v2830, %v3541
          %v3663 = vsub.f32 %v2831, %v3546
          %v3664 = vsub.f32 %v2832, %v3551
          %v3665 = vsub.f32 %v2833, %v3556
          %v3666 = vsub.f32 %v2834, %v3561
          %v3667 = vsub.f32 %v2835, %v3566
          %v3668 = vsub.f32 %v2836, %v3571
          %v3669 = vsub.f32 %v2837, %v3576
          %v3670 = vsub.f32 %v2838, %v3581
          %v3671 = vsub.f32 %v2839, %v3586
          %v3672 = vsub.f32 %v2840, %v3591
          %v3673 = vsub.f32 %v2841, %v3596
          %v3674 = vsub.f32 %v2842, %v3601
          %v3675 = vsub.f32 %v2843, %v3606
          %v3676 = vsub.f32 %v2844, %v3611
          %v3677 = vmul.f32 %v3613, 1.442695
          %v3678 = vpow.pop %v3677
          %v3679 = vmul.f32 %v3614, 1.442695
          %v3680 = vpow.pop %v3679
          %v3681 = vmul.f32 %v3615, 1.442695
          %v3682 = vpow.pop %v3681
          %v3683 = vmul.f32 %v3616, 1.442695
          %v3684 = vpow.pop %v3683
          %v3685 = vmul.f32 %v3617, 1.442695
          %v3686 = vpow.pop %v3685
          %v3687 = vmul.f32 %v3618, 1.442695
          %v3688 = vpow.pop %v3687
          %v3689 = vmul.f32 %v3619, 1.442695
          %v3690 = vpow.pop %v3689
          %v3691 = vmul.f32 %v3620, 1.442695
          %v3692 = vpow.pop %v3691
          %v3693 = vmul.f32 %v3621, 1.442695
          %v3694 = vpow.pop %v3693
          %v3695 = vmul.f32 %v3622, 1.442695
          %v3696 = vpow.pop %v3695
          %v3697 = vmul.f32 %v3623, 1.442695
          %v3698 = vpow.pop %v3697
          %v3699 = vmul.f32 %v3624, 1.442695
          %v3700 = vpow.pop %v3699
          %v3701 = vmul.f32 %v3625, 1.442695
          %v3702 = vpow.pop %v3701
          %v3703 = vmul.f32 %v3626, 1.442695
          %v3704 = vpow.pop %v3703
          %v3705 = vmul.f32 %v3627, 1.442695
          %v3706 = vpow.pop %v3705
          %v3707 = vmul.f32 %v3628, 1.442695
          %v3708 = vpow.pop %v3707
          %v3709 = vmul.f32 %v3629, 1.442695
          %v3710 = vpow.pop %v3709
          %v3711 = vmul.f32 %v3630, 1.442695
          %v3712 = vpow.pop %v3711
          %v3713 = vmul.f32 %v3631, 1.442695
          %v3714 = vpow.pop %v3713
          %v3715 = vmul.f32 %v3632, 1.442695
          %v3716 = vpow.pop %v3715
          %v3717 = vmul.f32 %v3633, 1.442695
          %v3718 = vpow.pop %v3717
          %v3719 = vmul.f32 %v3634, 1.442695
          %v3720 = vpow.pop %v3719
          %v3721 = vmul.f32 %v3635, 1.442695
          %v3722 = vpow.pop %v3721
          %v3723 = vmul.f32 %v3636, 1.442695
          %v3724 = vpow.pop %v3723
          %v3725 = vmul.f32 %v3637, 1.442695
          %v3726 = vpow.pop %v3725
          %v3727 = vmul.f32 %v3638, 1.442695
          %v3728 = vpow.pop %v3727
          %v3729 = vmul.f32 %v3639, 1.442695
          %v3730 = vpow.pop %v3729
          %v3731 = vmul.f32 %v3640, 1.442695
          %v3732 = vpow.pop %v3731
          %v3733 = vmul.f32 %v3641, 1.442695
          %v3734 = vpow.pop %v3733
          %v3735 = vmul.f32 %v3642, 1.442695
          %v3736 = vpow.pop %v3735
          %v3737 = vmul.f32 %v3643, 1.442695
          %v3738 = vpow.pop %v3737
          %v3739 = vmul.f32 %v3644, 1.442695
          %v3740 = vpow.pop %v3739
          %v3741 = vmul.f32 %v3645, 1.442695
          %v3742 = vpow.pop %v3741
          %v3743 = vmul.f32 %v3646, 1.442695
          %v3744 = vpow.pop %v3743
          %v3745 = vmul.f32 %v3647, 1.442695
          %v3746 = vpow.pop %v3745
          %v3747 = vmul.f32 %v3648, 1.442695
          %v3748 = vpow.pop %v3747
          %v3749 = vmul.f32 %v3649, 1.442695
          %v3750 = vpow.pop %v3749
          %v3751 = vmul.f32 %v3650, 1.442695
          %v3752 = vpow.pop %v3751
          %v3753 = vmul.f32 %v3651, 1.442695
          %v3754 = vpow.pop %v3753
          %v3755 = vmul.f32 %v3652, 1.442695
          %v3756 = vpow.pop %v3755
          %v3757 = vmul.f32 %v3653, 1.442695
          %v3758 = vpow.pop %v3757
          %v3759 = vmul.f32 %v3654, 1.442695
          %v3760 = vpow.pop %v3759
          %v3761 = vmul.f32 %v3655, 1.442695
          %v3762 = vpow.pop %v3761
          %v3763 = vmul.f32 %v3656, 1.442695
          %v3764 = vpow.pop %v3763
          %v3765 = vmul.f32 %v3657, 1.442695
          %v3766 = vpow.pop %v3765
          %v3767 = vmul.f32 %v3658, 1.442695
          %v3768 = vpow.pop %v3767
          %v3769 = vmul.f32 %v3659, 1.442695
          %v3770 = vpow.pop %v3769
          %v3771 = vmul.f32 %v3660, 1.442695
          %v3772 = vpow.pop %v3771
          %v3773 = vmul.f32 %v3661, 1.442695
          %v3774 = vpow.pop %v3773
          %v3775 = vmul.f32 %v3662, 1.442695
          %v3776 = vpow.pop %v3775
          %v3777 = vmul.f32 %v3663, 1.442695
          %v3778 = vpow.pop %v3777
          %v3779 = vmul.f32 %v3664, 1.442695
          %v3780 = vpow.pop %v3779
          %v3781 = vmul.f32 %v3665, 1.442695
          %v3782 = vpow.pop %v3781
          %v3783 = vmul.f32 %v3666, 1.442695
          %v3784 = vpow.pop %v3783
          %v3785 = vmul.f32 %v3667, 1.442695
          %v3786 = vpow.pop %v3785
          %v3787 = vmul.f32 %v3668, 1.442695
          %v3788 = vpow.pop %v3787
          %v3789 = vmul.f32 %v3669, 1.442695
          %v3790 = vpow.pop %v3789
          %v3791 = vmul.f32 %v3670, 1.442695
          %v3792 = vpow.pop %v3791
          %v3793 = vmul.f32 %v3671, 1.442695
          %v3794 = vpow.pop %v3793
          %v3795 = vmul.f32 %v3672, 1.442695
          %v3796 = vpow.pop %v3795
          %v3797 = vmul.f32 %v3673, 1.442695
          %v3798 = vpow.pop %v3797
          %v3799 = vmul.f32 %v3674, 1.442695
          %v3800 = vpow.pop %v3799
          %v3801 = vmul.f32 %v3675, 1.442695
          %v3802 = vpow.pop %v3801
          %v3803 = vmul.f32 %v3676, 1.442695
          %v3804 = vpow.pop %v3803
          %v3805 = vsel %vm2765, %v3678, 0.0
          %v3806 = vsel %vm2766, %v3680, 0.0
          %v3807 = vsel %vm2767, %v3682, 0.0
          %v3808 = vsel %vm2768, %v3684, 0.0
          %v3809 = vsel %vm2769, %v3686, 0.0
          %v3810 = vsel %vm2770, %v3688, 0.0
          %v3811 = vsel %vm2771, %v3690, 0.0
          %v3812 = vsel %vm2772, %v3692, 0.0
          %v3813 = vsel %vm2773, %v3694, 0.0
          %v3814 = vsel %vm2774, %v3696, 0.0
          %v3815 = vsel %vm2775, %v3698, 0.0
          %v3816 = vsel %vm2776, %v3700, 0.0
          %v3817 = vsel %vm2777, %v3702, 0.0
          %v3818 = vsel %vm2778, %v3704, 0.0
          %v3819 = vsel %vm2779, %v3706, 0.0
          %v3820 = vsel %vm2780, %v3708, 0.0
          %v3821 = vsel %vm2765, %v3710, 0.0
          %v3822 = vsel %vm2766, %v3712, 0.0
          %v3823 = vsel %vm2767, %v3714, 0.0
          %v3824 = vsel %vm2768, %v3716, 0.0
          %v3825 = vsel %vm2769, %v3718, 0.0
          %v3826 = vsel %vm2770, %v3720, 0.0
          %v3827 = vsel %vm2771, %v3722, 0.0
          %v3828 = vsel %vm2772, %v3724, 0.0
          %v3829 = vsel %vm2773, %v3726, 0.0
          %v3830 = vsel %vm2774, %v3728, 0.0
          %v3831 = vsel %vm2775, %v3730, 0.0
          %v3832 = vsel %vm2776, %v3732, 0.0
          %v3833 = vsel %vm2777, %v3734, 0.0
          %v3834 = vsel %vm2778, %v3736, 0.0
          %v3835 = vsel %vm2779, %v3738, 0.0
          %v3836 = vsel %vm2780, %v3740, 0.0
          %v3837 = vsel %vm2765, %v3742, 0.0
          %v3838 = vsel %vm2766, %v3744, 0.0
          %v3839 = vsel %vm2767, %v3746, 0.0
          %v3840 = vsel %vm2768, %v3748, 0.0
          %v3841 = vsel %vm2769, %v3750, 0.0
          %v3842 = vsel %vm2770, %v3752, 0.0
          %v3843 = vsel %vm2771, %v3754, 0.0
          %v3844 = vsel %vm2772, %v3756, 0.0
          %v3845 = vsel %vm2773, %v3758, 0.0
          %v3846 = vsel %vm2774, %v3760, 0.0
          %v3847 = vsel %vm2775, %v3762, 0.0
          %v3848 = vsel %vm2776, %v3764, 0.0
          %v3849 = vsel %vm2777, %v3766, 0.0
          %v3850 = vsel %vm2778, %v3768, 0.0
          %v3851 = vsel %vm2779, %v3770, 0.0
          %v3852 = vsel %vm2780, %v3772, 0.0
          %v3853 = vsel %vm2765, %v3774, 0.0
          %v3854 = vsel %vm2766, %v3776, 0.0
          %v3855 = vsel %vm2767, %v3778, 0.0
          %v3856 = vsel %vm2768, %v3780, 0.0
          %v3857 = vsel %vm2769, %v3782, 0.0
          %v3858 = vsel %vm2770, %v3784, 0.0
          %v3859 = vsel %vm2771, %v3786, 0.0
          %v3860 = vsel %vm2772, %v3788, 0.0
          %v3861 = vsel %vm2773, %v3790, 0.0
          %v3862 = vsel %vm2774, %v3792, 0.0
          %v3863 = vsel %vm2775, %v3794, 0.0
          %v3864 = vsel %vm2776, %v3796, 0.0
          %v3865 = vsel %vm2777, %v3798, 0.0
          %v3866 = vsel %vm2778, %v3800, 0.0
          %v3867 = vsel %vm2779, %v3802, 0.0
          %v3868 = vsel %vm2780, %v3804, 0.0
          %v3869 = vld [vmem:[#allocation3] sm:$0xff]
          %v3870 = vld [vmem:[#allocation3 + $0x8] sm:$0xff]
          %v3871 = vld [vmem:[#allocation3 + $0x10] sm:$0xff]
          %v3872 = vld [vmem:[#allocation3 + $0x18] sm:$0xff]
          %v3873 = vld [vmem:[#allocation3 + $0x20] sm:$0xff]
          %v3874 = vld [vmem:[#allocation3 + $0x28] sm:$0xff]
          %v3875 = vld [vmem:[#allocation3 + $0x30] sm:$0xff]
          %v3876 = vld [vmem:[#allocation3 + $0x38] sm:$0xff]
          %v3877 = vld [vmem:[#allocation3 + $0x40] sm:$0xff]
          %v3878 = vld [vmem:[#allocation3 + $0x48] sm:$0xff]
          %v3879 = vld [vmem:[#allocation3 + $0x50] sm:$0xff]
          %v3880 = vld [vmem:[#allocation3 + $0x58] sm:$0xff]
          %v3881 = vld [vmem:[#allocation3 + $0x60] sm:$0xff]
          %v3882 = vld [vmem:[#allocation3 + $0x68] sm:$0xff]
          %v3883 = vld [vmem:[#allocation3 + $0x70] sm:$0xff]
          %v3884 = vld [vmem:[#allocation3 + $0x78] sm:$0xff]
          %v3885 = vld [vmem:[#allocation3 + $0x80] sm:$0xff]
          %v3886 = vld [vmem:[#allocation3 + $0x88] sm:$0xff]
          %v3887 = vld [vmem:[#allocation3 + $0x90] sm:$0xff]
          %v3888 = vld [vmem:[#allocation3 + $0x98] sm:$0xff]
          %v3889 = vld [vmem:[#allocation3 + $0xa0] sm:$0xff]
          %v3890 = vld [vmem:[#allocation3 + $0xa8] sm:$0xff]
          %v3891 = vld [vmem:[#allocation3 + $0xb0] sm:$0xff]
          %v3892 = vld [vmem:[#allocation3 + $0xb8] sm:$0xff]
          %v3893 = vld [vmem:[#allocation3 + $0xc0] sm:$0xff]
          %v3894 = vld [vmem:[#allocation3 + $0xc8] sm:$0xff]
          %v3895 = vld [vmem:[#allocation3 + $0xd0] sm:$0xff]
          %v3896 = vld [vmem:[#allocation3 + $0xd8] sm:$0xff]
          %v3897 = vld [vmem:[#allocation3 + $0xe0] sm:$0xff]
          %v3898 = vld [vmem:[#allocation3 + $0xe8] sm:$0xff]
          %v3899 = vld [vmem:[#allocation3 + $0xf0] sm:$0xff]
          %v3900 = vld [vmem:[#allocation3 + $0xf8] sm:$0xff]
          %v3901 = vld [vmem:[#allocation3 + $0x100] sm:$0xff]
          %v3902 = vld [vmem:[#allocation3 + $0x108] sm:$0xff]
          %v3903 = vld [vmem:[#allocation3 + $0x110] sm:$0xff]
          %v3904 = vld [vmem:[#allocation3 + $0x118] sm:$0xff]
          %v3905 = vld [vmem:[#allocation3 + $0x120] sm:$0xff]
          %v3906 = vld [vmem:[#allocation3 + $0x128] sm:$0xff]
          %v3907 = vld [vmem:[#allocation3 + $0x130] sm:$0xff]
          %v3908 = vld [vmem:[#allocation3 + $0x138] sm:$0xff]
          %v3909 = vld [vmem:[#allocation3 + $0x140] sm:$0xff]
          %v3910 = vld [vmem:[#allocation3 + $0x148] sm:$0xff]
          %v3911 = vld [vmem:[#allocation3 + $0x150] sm:$0xff]
          %v3912 = vld [vmem:[#allocation3 + $0x158] sm:$0xff]
          %v3913 = vld [vmem:[#allocation3 + $0x160] sm:$0xff]
          %v3914 = vld [vmem:[#allocation3 + $0x168] sm:$0xff]
          %v3915 = vld [vmem:[#allocation3 + $0x170] sm:$0xff]
          %v3916 = vld [vmem:[#allocation3 + $0x178] sm:$0xff]
          %v3917 = vld [vmem:[#allocation3 + $0x180] sm:$0xff]
          %v3918 = vld [vmem:[#allocation3 + $0x188] sm:$0xff]
          %v3919 = vld [vmem:[#allocation3 + $0x190] sm:$0xff]
          %v3920 = vld [vmem:[#allocation3 + $0x198] sm:$0xff]
          %v3921 = vld [vmem:[#allocation3 + $0x1a0] sm:$0xff]
          %v3922 = vld [vmem:[#allocation3 + $0x1a8] sm:$0xff]
          %v3923 = vld [vmem:[#allocation3 + $0x1b0] sm:$0xff]
          %v3924 = vld [vmem:[#allocation3 + $0x1b8] sm:$0xff]
          %v3925 = vld [vmem:[#allocation3 + $0x1c0] sm:$0xff]
          %v3926 = vld [vmem:[#allocation3 + $0x1c8] sm:$0xff]
          %v3927 = vld [vmem:[#allocation3 + $0x1d0] sm:$0xff]
          %v3928 = vld [vmem:[#allocation3 + $0x1d8] sm:$0xff]
          %v3929 = vld [vmem:[#allocation3 + $0x1e0] sm:$0xff]
          %v3930 = vld [vmem:[#allocation3 + $0x1e8] sm:$0xff]
          %v3931 = vld [vmem:[#allocation3 + $0x1f0] sm:$0xff]
          %v3932 = vld [vmem:[#allocation3 + $0x1f8] sm:$0xff]
          %v3933 = vmul.f32 %v3166, %v3869
          %v3934 = vmul.f32 %v3168, %v3870
          %v3935 = vmul.f32 %v3170, %v3871
          %v3936 = vmul.f32 %v3172, %v3872
          %v3937 = vmul.f32 %v3174, %v3873
          %v3938 = vmul.f32 %v3176, %v3874
          %v3939 = vmul.f32 %v3178, %v3875
          %v3940 = vmul.f32 %v3180, %v3876
          %v3941 = vmul.f32 %v3182, %v3877
          %v3942 = vmul.f32 %v3184, %v3878
          %v3943 = vmul.f32 %v3186, %v3879
          %v3944 = vmul.f32 %v3188, %v3880
          %v3945 = vmul.f32 %v3190, %v3881
          %v3946 = vmul.f32 %v3192, %v3882
          %v3947 = vmul.f32 %v3194, %v3883
          %v3948 = vmul.f32 %v3196, %v3884
          %v3949 = vmul.f32 %v3198, %v3885
          %v3950 = vmul.f32 %v3200, %v3886
          %v3951 = vmul.f32 %v3202, %v3887
          %v3952 = vmul.f32 %v3204, %v3888
          %v3953 = vmul.f32 %v3206, %v3889
          %v3954 = vmul.f32 %v3208, %v3890
          %v3955 = vmul.f32 %v3210, %v3891
          %v3956 = vmul.f32 %v3212, %v3892
          %v3957 = vmul.f32 %v3214, %v3893
          %v3958 = vmul.f32 %v3216, %v3894
          %v3959 = vmul.f32 %v3218, %v3895
          %v3960 = vmul.f32 %v3220, %v3896
          %v3961 = vmul.f32 %v3222, %v3897
          %v3962 = vmul.f32 %v3224, %v3898
          %v3963 = vmul.f32 %v3226, %v3899
          %v3964 = vmul.f32 %v3228, %v3900
          %v3965 = vmul.f32 %v3230, %v3901
          %v3966 = vmul.f32 %v3232, %v3902
          %v3967 = vmul.f32 %v3234, %v3903
          %v3968 = vmul.f32 %v3236, %v3904
          %v3969 = vmul.f32 %v3238, %v3905
          %v3970 = vmul.f32 %v3240, %v3906
          %v3971 = vmul.f32 %v3242, %v3907
          %v3972 = vmul.f32 %v3244, %v3908
          %v3973 = vmul.f32 %v3246, %v3909
          %v3974 = vmul.f32 %v3248, %v3910
          %v3975 = vmul.f32 %v3250, %v3911
          %v3976 = vmul.f32 %v3252, %v3912
          %v3977 = vmul.f32 %v3254, %v3913
          %v3978 = vmul.f32 %v3256, %v3914
          %v3979 = vmul.f32 %v3258, %v3915
          %v3980 = vmul.f32 %v3260, %v3916
          %v3981 = vmul.f32 %v3262, %v3917
          %v3982 = vmul.f32 %v3264, %v3918
          %v3983 = vmul.f32 %v3266, %v3919
          %v3984 = vmul.f32 %v3268, %v3920
          %v3985 = vmul.f32 %v3270, %v3921
          %v3986 = vmul.f32 %v3272, %v3922
          %v3987 = vmul.f32 %v3274, %v3923
          %v3988 = vmul.f32 %v3276, %v3924
          %v3989 = vmul.f32 %v3278, %v3925
          %v3990 = vmul.f32 %v3280, %v3926
          %v3991 = vmul.f32 %v3282, %v3927
          %v3992 = vmul.f32 %v3284, %v3928
          %v3993 = vmul.f32 %v3286, %v3929
          %v3994 = vmul.f32 %v3288, %v3930
          %v3995 = vmul.f32 %v3290, %v3931
          %v3996 = vmul.f32 %v3292, %v3932
          %3997 = vadd.xlane.f32.xlu0 %v3805
          %v3998 = vpop.xlane.xlu0 %3997
          %3999 = vadd.xlane.f32.xlu0 %v3806
          %v4000 = vpop.xlane.xlu0 %3999
          %4001 = vadd.xlane.f32.xlu0 %v3807
          %v4002 = vpop.xlane.xlu0 %4001
          %4003 = vadd.xlane.f32.xlu0 %v3808
          %v4004 = vpop.xlane.xlu0 %4003
          %4005 = vadd.xlane.f32.xlu0 %v3809
          %v4006 = vpop.xlane.xlu0 %4005
          %4007 = vadd.xlane.f32.xlu0 %v3810
          %v4008 = vpop.xlane.xlu0 %4007
          %4009 = vadd.xlane.f32.xlu0 %v3811
          %v4010 = vpop.xlane.xlu0 %4009
          %4011 = vadd.xlane.f32.xlu0 %v3812
          %v4012 = vpop.xlane.xlu0 %4011
          %4013 = vadd.xlane.f32.xlu0 %v3813
          %v4014 = vpop.xlane.xlu0 %4013
          %4015 = vadd.xlane.f32.xlu0 %v3814
          %v4016 = vpop.xlane.xlu0 %4015
          %4017 = vadd.xlane.f32.xlu0 %v3815
          %v4018 = vpop.xlane.xlu0 %4017
          %4019 = vadd.xlane.f32.xlu0 %v3816
          %v4020 = vpop.xlane.xlu0 %4019
          %4021 = vadd.xlane.f32.xlu0 %v3817
          %v4022 = vpop.xlane.xlu0 %4021
          %4023 = vadd.xlane.f32.xlu0 %v3818
          %v4024 = vpop.xlane.xlu0 %4023
          %4025 = vadd.xlane.f32.xlu0 %v3819
          %v4026 = vpop.xlane.xlu0 %4025
          %4027 = vadd.xlane.f32.xlu0 %v3820
          %v4028 = vpop.xlane.xlu0 %4027
          %4029 = vadd.xlane.f32.xlu0 %v3821
          %v4030 = vpop.xlane.xlu0 %4029
          %4031 = vadd.xlane.f32.xlu0 %v3822
          %v4032 = vpop.xlane.xlu0 %4031
          %4033 = vadd.xlane.f32.xlu0 %v3823
          %v4034 = vpop.xlane.xlu0 %4033
          %4035 = vadd.xlane.f32.xlu0 %v3824
          %v4036 = vpop.xlane.xlu0 %4035
          %4037 = vadd.xlane.f32.xlu0 %v3825
          %v4038 = vpop.xlane.xlu0 %4037
          %4039 = vadd.xlane.f32.xlu0 %v3826
          %v4040 = vpop.xlane.xlu0 %4039
          %4041 = vadd.xlane.f32.xlu0 %v3827
          %v4042 = vpop.xlane.xlu0 %4041
          %4043 = vadd.xlane.f32.xlu0 %v3828
          %v4044 = vpop.xlane.xlu0 %4043
          %4045 = vadd.xlane.f32.xlu0 %v3829
          %v4046 = vpop.xlane.xlu0 %4045
          %4047 = vadd.xlane.f32.xlu0 %v3830
          %v4048 = vpop.xlane.xlu0 %4047
          %4049 = vadd.xlane.f32.xlu0 %v3831
          %v4050 = vpop.xlane.xlu0 %4049
          %4051 = vadd.xlane.f32.xlu0 %v3832
          %v4052 = vpop.xlane.xlu0 %4051
          %4053 = vadd.xlane.f32.xlu0 %v3833
          %v4054 = vpop.xlane.xlu0 %4053
          %4055 = vadd.xlane.f32.xlu0 %v3834
          %v4056 = vpop.xlane.xlu0 %4055
          %4057 = vadd.xlane.f32.xlu0 %v3835
          %v4058 = vpop.xlane.xlu0 %4057
          %4059 = vadd.xlane.f32.xlu0 %v3836
          %v4060 = vpop.xlane.xlu0 %4059
          %4061 = vadd.xlane.f32.xlu0 %v3837
          %v4062 = vpop.xlane.xlu0 %4061
          %4063 = vadd.xlane.f32.xlu0 %v3838
          %v4064 = vpop.xlane.xlu0 %4063
          %4065 = vadd.xlane.f32.xlu0 %v3839
          %v4066 = vpop.xlane.xlu0 %4065
          %4067 = vadd.xlane.f32.xlu0 %v3840
          %v4068 = vpop.xlane.xlu0 %4067
          %4069 = vadd.xlane.f32.xlu0 %v3841
          %v4070 = vpop.xlane.xlu0 %4069
          %4071 = vadd.xlane.f32.xlu0 %v3842
          %v4072 = vpop.xlane.xlu0 %4071
          %4073 = vadd.xlane.f32.xlu0 %v3843
          %v4074 = vpop.xlane.xlu0 %4073
          %4075 = vadd.xlane.f32.xlu0 %v3844
          %v4076 = vpop.xlane.xlu0 %4075
          %4077 = vadd.xlane.f32.xlu0 %v3845
          %v4078 = vpop.xlane.xlu0 %4077
          %4079 = vadd.xlane.f32.xlu0 %v3846
          %v4080 = vpop.xlane.xlu0 %4079
          %4081 = vadd.xlane.f32.xlu0 %v3847
          %v4082 = vpop.xlane.xlu0 %4081
          %4083 = vadd.xlane.f32.xlu0 %v3848
          %v4084 = vpop.xlane.xlu0 %4083
          %4085 = vadd.xlane.f32.xlu0 %v3849
          %v4086 = vpop.xlane.xlu0 %4085
          %4087 = vadd.xlane.f32.xlu0 %v3850
          %v4088 = vpop.xlane.xlu0 %4087
          %4089 = vadd.xlane.f32.xlu0 %v3851
          %v4090 = vpop.xlane.xlu0 %4089
          %4091 = vadd.xlane.f32.xlu0 %v3852
          %v4092 = vpop.xlane.xlu0 %4091
          %4093 = vadd.xlane.f32.xlu0 %v3853
          %v4094 = vpop.xlane.xlu0 %4093
          %4095 = vadd.xlane.f32.xlu0 %v3854
          %v4096 = vpop.xlane.xlu0 %4095
          %4097 = vadd.xlane.f32.xlu0 %v3855
          %v4098 = vpop.xlane.xlu0 %4097
          %4099 = vadd.xlane.f32.xlu0 %v3856
          %v4100 = vpop.xlane.xlu0 %4099
          %4101 = vadd.xlane.f32.xlu0 %v3857
          %v4102 = vpop.xlane.xlu0 %4101
          %4103 = vadd.xlane.f32.xlu0 %v3858
          %v4104 = vpop.xlane.xlu0 %4103
          %4105 = vadd.xlane.f32.xlu0 %v3859
          %v4106 = vpop.xlane.xlu0 %4105
          %4107 = vadd.xlane.f32.xlu0 %v3860
          %v4108 = vpop.xlane.xlu0 %4107
          %4109 = vadd.xlane.f32.xlu0 %v3861
          %v4110 = vpop.xlane.xlu0 %4109
          %4111 = vadd.xlane.f32.xlu0 %v3862
          %v4112 = vpop.xlane.xlu0 %4111
          %4113 = vadd.xlane.f32.xlu0 %v3863
          %v4114 = vpop.xlane.xlu0 %4113
          %4115 = vadd.xlane.f32.xlu0 %v3864
          %v4116 = vpop.xlane.xlu0 %4115
          %4117 = vadd.xlane.f32.xlu0 %v3865
          %v4118 = vpop.xlane.xlu0 %4117
          %4119 = vadd.xlane.f32.xlu0 %v3866
          %v4120 = vpop.xlane.xlu0 %4119
          %4121 = vadd.xlane.f32.xlu0 %v3867
          %v4122 = vpop.xlane.xlu0 %4121
          %4123 = vadd.xlane.f32.xlu0 %v3868
          %v4124 = vpop.xlane.xlu0 %4123
          %v4125 = vadd.f32 %v3933, %v3998
          %v4126 = vadd.f32 %v3934, %v4000
          %v4127 = vadd.f32 %v3935, %v4002
          %v4128 = vadd.f32 %v3936, %v4004
          %v4129 = vadd.f32 %v3937, %v4006
          %v4130 = vadd.f32 %v3938, %v4008
          %v4131 = vadd.f32 %v3939, %v4010
          %v4132 = vadd.f32 %v3940, %v4012
          %v4133 = vadd.f32 %v3941, %v4014
          %v4134 = vadd.f32 %v3942, %v4016
          %v4135 = vadd.f32 %v3943, %v4018
          %v4136 = vadd.f32 %v3944, %v4020
          %v4137 = vadd.f32 %v3945, %v4022
          %v4138 = vadd.f32 %v3946, %v4024
          %v4139 = vadd.f32 %v3947, %v4026
          %v4140 = vadd.f32 %v3948, %v4028
          %v4141 = vadd.f32 %v3949, %v4030
          %v4142 = vadd.f32 %v3950, %v4032
          %v4143 = vadd.f32 %v3951, %v4034
          %v4144 = vadd.f32 %v3952, %v4036
          %v4145 = vadd.f32 %v3953, %v4038
          %v4146 = vadd.f32 %v3954, %v4040
          %v4147 = vadd.f32 %v3955, %v4042
          %v4148 = vadd.f32 %v3956, %v4044
          %v4149 = vadd.f32 %v3957, %v4046
          %v4150 = vadd.f32 %v3958, %v4048
          %v4151 = vadd.f32 %v3959, %v4050
          %v4152 = vadd.f32 %v3960, %v4052
          %v4153 = vadd.f32 %v3961, %v4054
          %v4154 = vadd.f32 %v3962, %v4056
          %v4155 = vadd.f32 %v3963, %v4058
          %v4156 = vadd.f32 %v3964, %v4060
          %v4157 = vadd.f32 %v3965, %v4062
          %v4158 = vadd.f32 %v3966, %v4064
          %v4159 = vadd.f32 %v3967, %v4066
          %v4160 = vadd.f32 %v3968, %v4068
          %v4161 = vadd.f32 %v3969, %v4070
          %v4162 = vadd.f32 %v3970, %v4072
          %v4163 = vadd.f32 %v3971, %v4074
          %v4164 = vadd.f32 %v3972, %v4076
          %v4165 = vadd.f32 %v3973, %v4078
          %v4166 = vadd.f32 %v3974, %v4080
          %v4167 = vadd.f32 %v3975, %v4082
          %v4168 = vadd.f32 %v3976, %v4084
          %v4169 = vadd.f32 %v3977, %v4086
          %v4170 = vadd.f32 %v3978, %v4088
          %v4171 = vadd.f32 %v3979, %v4090
          %v4172 = vadd.f32 %v3980, %v4092
          %v4173 = vadd.f32 %v3981, %v4094
          %v4174 = vadd.f32 %v3982, %v4096
          %v4175 = vadd.f32 %v3983, %v4098
          %v4176 = vadd.f32 %v3984, %v4100
          %v4177 = vadd.f32 %v3985, %v4102
          %v4178 = vadd.f32 %v3986, %v4104
          %v4179 = vadd.f32 %v3987, %v4106
          %v4180 = vadd.f32 %v3988, %v4108
          %v4181 = vadd.f32 %v3989, %v4110
          %v4182 = vadd.f32 %v3990, %v4112
          %v4183 = vadd.f32 %v3991, %v4114
          %v4184 = vadd.f32 %v3992, %v4116
          %v4185 = vadd.f32 %v3993, %v4118
          %v4186 = vadd.f32 %v3994, %v4120
          %v4187 = vadd.f32 %v3995, %v4122
          %v4188 = vadd.f32 %v3996, %v4124
          %vm4189 = vcmask 7168
          %4190 = vst.msk [vmem:[#allocation3] sm:$0xff] %vm4189, %v4125
          %4191 = vst.msk [vmem:[#allocation3 + $0x8] sm:$0xff] %vm4189, %v4126
          %4192 = vst.msk [vmem:[#allocation3 + $0x10] sm:$0xff] %vm4189, %v4127
          %4193 = vst.msk [vmem:[#allocation3 + $0x18] sm:$0xff] %vm4189, %v4128
          %4194 = vst.msk [vmem:[#allocation3 + $0x20] sm:$0xff] %vm4189, %v4129
          %4195 = vst.msk [vmem:[#allocation3 + $0x28] sm:$0xff] %vm4189, %v4130
          %4196 = vst.msk [vmem:[#allocation3 + $0x30] sm:$0xff] %vm4189, %v4131
          %4197 = vst.msk [vmem:[#allocation3 + $0x38] sm:$0xff] %vm4189, %v4132
          %4198 = vst.msk [vmem:[#allocation3 + $0x40] sm:$0xff] %vm4189, %v4133
          %4199 = vst.msk [vmem:[#allocation3 + $0x48] sm:$0xff] %vm4189, %v4134
          %4200 = vst.msk [vmem:[#allocation3 + $0x50] sm:$0xff] %vm4189, %v4135
          %4201 = vst.msk [vmem:[#allocation3 + $0x58] sm:$0xff] %vm4189, %v4136
          %4202 = vst.msk [vmem:[#allocation3 + $0x60] sm:$0xff] %vm4189, %v4137
          %4203 = vst.msk [vmem:[#allocation3 + $0x68] sm:$0xff] %vm4189, %v4138
          %4204 = vst.msk [vmem:[#allocation3 + $0x70] sm:$0xff] %vm4189, %v4139
          %4205 = vst.msk [vmem:[#allocation3 + $0x78] sm:$0xff] %vm4189, %v4140
          %4206 = vst.msk [vmem:[#allocation3 + $0x80] sm:$0xff] %vm4189, %v4141
          %4207 = vst.msk [vmem:[#allocation3 + $0x88] sm:$0xff] %vm4189, %v4142
          %4208 = vst.msk [vmem:[#allocation3 + $0x90] sm:$0xff] %vm4189, %v4143
          %4209 = vst.msk [vmem:[#allocation3 + $0x98] sm:$0xff] %vm4189, %v4144
          %4210 = vst.msk [vmem:[#allocation3 + $0xa0] sm:$0xff] %vm4189, %v4145
          %4211 = vst.msk [vmem:[#allocation3 + $0xa8] sm:$0xff] %vm4189, %v4146
          %4212 = vst.msk [vmem:[#allocation3 + $0xb0] sm:$0xff] %vm4189, %v4147
          %4213 = vst.msk [vmem:[#allocation3 + $0xb8] sm:$0xff] %vm4189, %v4148
          %4214 = vst.msk [vmem:[#allocation3 + $0xc0] sm:$0xff] %vm4189, %v4149
          %4215 = vst.msk [vmem:[#allocation3 + $0xc8] sm:$0xff] %vm4189, %v4150
          %4216 = vst.msk [vmem:[#allocation3 + $0xd0] sm:$0xff] %vm4189, %v4151
          %4217 = vst.msk [vmem:[#allocation3 + $0xd8] sm:$0xff] %vm4189, %v4152
          %4218 = vst.msk [vmem:[#allocation3 + $0xe0] sm:$0xff] %vm4189, %v4153
          %4219 = vst.msk [vmem:[#allocation3 + $0xe8] sm:$0xff] %vm4189, %v4154
          %4220 = vst.msk [vmem:[#allocation3 + $0xf0] sm:$0xff] %vm4189, %v4155
          %4221 = vst.msk [vmem:[#allocation3 + $0xf8] sm:$0xff] %vm4189, %v4156
          %4222 = vst.msk [vmem:[#allocation3 + $0x100] sm:$0xff] %vm4189, %v4157
          %4223 = vst.msk [vmem:[#allocation3 + $0x108] sm:$0xff] %vm4189, %v4158
          %4224 = vst.msk [vmem:[#allocation3 + $0x110] sm:$0xff] %vm4189, %v4159
          %4225 = vst.msk [vmem:[#allocation3 + $0x118] sm:$0xff] %vm4189, %v4160
          %4226 = vst.msk [vmem:[#allocation3 + $0x120] sm:$0xff] %vm4189, %v4161
          %4227 = vst.msk [vmem:[#allocation3 + $0x128] sm:$0xff] %vm4189, %v4162
          %4228 = vst.msk [vmem:[#allocation3 + $0x130] sm:$0xff] %vm4189, %v4163
          %4229 = vst.msk [vmem:[#allocation3 + $0x138] sm:$0xff] %vm4189, %v4164
          %4230 = vst.msk [vmem:[#allocation3 + $0x140] sm:$0xff] %vm4189, %v4165
          %4231 = vst.msk [vmem:[#allocation3 + $0x148] sm:$0xff] %vm4189, %v4166
          %4232 = vst.msk [vmem:[#allocation3 + $0x150] sm:$0xff] %vm4189, %v4167
          %4233 = vst.msk [vmem:[#allocation3 + $0x158] sm:$0xff] %vm4189, %v4168
          %4234 = vst.msk [vmem:[#allocation3 + $0x160] sm:$0xff] %vm4189, %v4169
          %4235 = vst.msk [vmem:[#allocation3 + $0x168] sm:$0xff] %vm4189, %v4170
          %4236 = vst.msk [vmem:[#allocation3 + $0x170] sm:$0xff] %vm4189, %v4171
          %4237 = vst.msk [vmem:[#allocation3 + $0x178] sm:$0xff] %vm4189, %v4172
          %4238 = vst.msk [vmem:[#allocation3 + $0x180] sm:$0xff] %vm4189, %v4173
          %4239 = vst.msk [vmem:[#allocation3 + $0x188] sm:$0xff] %vm4189, %v4174
          %4240 = vst.msk [vmem:[#allocation3 + $0x190] sm:$0xff] %vm4189, %v4175
          %4241 = vst.msk [vmem:[#allocation3 + $0x198] sm:$0xff] %vm4189, %v4176
          %4242 = vst.msk [vmem:[#allocation3 + $0x1a0] sm:$0xff] %vm4189, %v4177
          %4243 = vst.msk [vmem:[#allocation3 + $0x1a8] sm:$0xff] %vm4189, %v4178
          %4244 = vst.msk [vmem:[#allocation3 + $0x1b0] sm:$0xff] %vm4189, %v4179
          %4245 = vst.msk [vmem:[#allocation3 + $0x1b8] sm:$0xff] %vm4189, %v4180
          %4246 = vst.msk [vmem:[#allocation3 + $0x1c0] sm:$0xff] %vm4189, %v4181
          %4247 = vst.msk [vmem:[#allocation3 + $0x1c8] sm:$0xff] %vm4189, %v4182
          %4248 = vst.msk [vmem:[#allocation3 + $0x1d0] sm:$0xff] %vm4189, %v4183
          %4249 = vst.msk [vmem:[#allocation3 + $0x1d8] sm:$0xff] %vm4189, %v4184
          %4250 = vst.msk [vmem:[#allocation3 + $0x1e0] sm:$0xff] %vm4189, %v4185
          %4251 = vst.msk [vmem:[#allocation3 + $0x1e8] sm:$0xff] %vm4189, %v4186
          %4252 = vst.msk [vmem:[#allocation3 + $0x1f0] sm:$0xff] %vm4189, %v4187
          %4253 = vst.msk [vmem:[#allocation3 + $0x1f8] sm:$0xff] %vm4189, %v4188
          %v4254 = vld [vmem:[#allocation4] sm:$0xff]
          %v4255 = vld [vmem:[#allocation4 + $0x8] sm:$0xff]
          %v4256 = vld [vmem:[#allocation4 + $0x10] sm:$0xff]
          %v4257 = vld [vmem:[#allocation4 + $0x18] sm:$0xff]
          %v4258 = vld [vmem:[#allocation4 + $0x20] sm:$0xff]
          %v4259 = vld [vmem:[#allocation4 + $0x28] sm:$0xff]
          %v4260 = vld [vmem:[#allocation4 + $0x30] sm:$0xff]
          %v4261 = vld [vmem:[#allocation4 + $0x38] sm:$0xff]
          %v4262 = vld [vmem:[#allocation4 + $0x40] sm:$0xff]
          %v4263 = vld [vmem:[#allocation4 + $0x48] sm:$0xff]
          %v4264 = vld [vmem:[#allocation4 + $0x50] sm:$0xff]
          %v4265 = vld [vmem:[#allocation4 + $0x58] sm:$0xff]
          %v4266 = vld [vmem:[#allocation4 + $0x60] sm:$0xff]
          %v4267 = vld [vmem:[#allocation4 + $0x68] sm:$0xff]
          %v4268 = vld [vmem:[#allocation4 + $0x70] sm:$0xff]
          %v4269 = vld [vmem:[#allocation4 + $0x78] sm:$0xff]
          %v4270 = vld [vmem:[#allocation4 + $0x80] sm:$0xff]
          %v4271 = vld [vmem:[#allocation4 + $0x88] sm:$0xff]
          %v4272 = vld [vmem:[#allocation4 + $0x90] sm:$0xff]
          %v4273 = vld [vmem:[#allocation4 + $0x98] sm:$0xff]
          %v4274 = vld [vmem:[#allocation4 + $0xa0] sm:$0xff]
          %v4275 = vld [vmem:[#allocation4 + $0xa8] sm:$0xff]
          %v4276 = vld [vmem:[#allocation4 + $0xb0] sm:$0xff]
          %v4277 = vld [vmem:[#allocation4 + $0xb8] sm:$0xff]
          %v4278 = vld [vmem:[#allocation4 + $0xc0] sm:$0xff]
          %v4279 = vld [vmem:[#allocation4 + $0xc8] sm:$0xff]
          %v4280 = vld [vmem:[#allocation4 + $0xd0] sm:$0xff]
          %v4281 = vld [vmem:[#allocation4 + $0xd8] sm:$0xff]
          %v4282 = vld [vmem:[#allocation4 + $0xe0] sm:$0xff]
          %v4283 = vld [vmem:[#allocation4 + $0xe8] sm:$0xff]
          %v4284 = vld [vmem:[#allocation4 + $0xf0] sm:$0xff]
          %v4285 = vld [vmem:[#allocation4 + $0xf8] sm:$0xff]
          %v4286 = vld [vmem:[#allocation4 + $0x100] sm:$0xff]
          %v4287 = vld [vmem:[#allocation4 + $0x108] sm:$0xff]
          %v4288 = vld [vmem:[#allocation4 + $0x110] sm:$0xff]
          %v4289 = vld [vmem:[#allocation4 + $0x118] sm:$0xff]
          %v4290 = vld [vmem:[#allocation4 + $0x120] sm:$0xff]
          %v4291 = vld [vmem:[#allocation4 + $0x128] sm:$0xff]
          %v4292 = vld [vmem:[#allocation4 + $0x130] sm:$0xff]
          %v4293 = vld [vmem:[#allocation4 + $0x138] sm:$0xff]
          %v4294 = vld [vmem:[#allocation4 + $0x140] sm:$0xff]
          %v4295 = vld [vmem:[#allocation4 + $0x148] sm:$0xff]
          %v4296 = vld [vmem:[#allocation4 + $0x150] sm:$0xff]
          %v4297 = vld [vmem:[#allocation4 + $0x158] sm:$0xff]
          %v4298 = vld [vmem:[#allocation4 + $0x160] sm:$0xff]
          %v4299 = vld [vmem:[#allocation4 + $0x168] sm:$0xff]
          %v4300 = vld [vmem:[#allocation4 + $0x170] sm:$0xff]
          %v4301 = vld [vmem:[#allocation4 + $0x178] sm:$0xff]
          %v4302 = vld [vmem:[#allocation4 + $0x180] sm:$0xff]
          %v4303 = vld [vmem:[#allocation4 + $0x188] sm:$0xff]
          %v4304 = vld [vmem:[#allocation4 + $0x190] sm:$0xff]
          %v4305 = vld [vmem:[#allocation4 + $0x198] sm:$0xff]
          %v4306 = vld [vmem:[#allocation4 + $0x1a0] sm:$0xff]
          %v4307 = vld [vmem:[#allocation4 + $0x1a8] sm:$0xff]
          %v4308 = vld [vmem:[#allocation4 + $0x1b0] sm:$0xff]
          %v4309 = vld [vmem:[#allocation4 + $0x1b8] sm:$0xff]
          %v4310 = vld [vmem:[#allocation4 + $0x1c0] sm:$0xff]
          %v4311 = vld [vmem:[#allocation4 + $0x1c8] sm:$0xff]
          %v4312 = vld [vmem:[#allocation4 + $0x1d0] sm:$0xff]
          %v4313 = vld [vmem:[#allocation4 + $0x1d8] sm:$0xff]
          %v4314 = vld [vmem:[#allocation4 + $0x1e0] sm:$0xff]
          %v4315 = vld [vmem:[#allocation4 + $0x1e8] sm:$0xff]
          %v4316 = vld [vmem:[#allocation4 + $0x1f0] sm:$0xff]
          %v4317 = vld [vmem:[#allocation4 + $0x1f8] sm:$0xff]
          %4319 = vset.pattern.permute.xlu0 0
          %4320 = vperm.xlu0 %4319, %v3166
          %v4321 = vpop.permute.xlu0 %4320
          %4324 = vset.pattern.permute.xlu0 0
          %4325 = vperm.xlu0 %4324, %v3168
          %v4326 = vpop.permute.xlu0 %4325
          %4329 = vset.pattern.permute.xlu0 0
          %4330 = vperm.xlu0 %4329, %v3170
          %v4331 = vpop.permute.xlu0 %4330
          %4334 = vset.pattern.permute.xlu0 0
          %4335 = vperm.xlu0 %4334, %v3172
          %v4336 = vpop.permute.xlu0 %4335
          %4339 = vset.pattern.permute.xlu0 0
          %4340 = vperm.xlu0 %4339, %v3174
          %v4341 = vpop.permute.xlu0 %4340
          %4344 = vset.pattern.permute.xlu0 0
          %4345 = vperm.xlu0 %4344, %v3176
          %v4346 = vpop.permute.xlu0 %4345
          %4349 = vset.pattern.permute.xlu0 0
          %4350 = vperm.xlu0 %4349, %v3178
          %v4351 = vpop.permute.xlu0 %4350
          %4354 = vset.pattern.permute.xlu0 0
          %4355 = vperm.xlu0 %4354, %v3180
          %v4356 = vpop.permute.xlu0 %4355
          %4359 = vset.pattern.permute.xlu0 0
          %4360 = vperm.xlu0 %4359, %v3182
          %v4361 = vpop.permute.xlu0 %4360
          %4364 = vset.pattern.permute.xlu0 0
          %4365 = vperm.xlu0 %4364, %v3184
          %v4366 = vpop.permute.xlu0 %4365
          %4369 = vset.pattern.permute.xlu0 0
          %4370 = vperm.xlu0 %4369, %v3186
          %v4371 = vpop.permute.xlu0 %4370
          %4374 = vset.pattern.permute.xlu0 0
          %4375 = vperm.xlu0 %4374, %v3188
          %v4376 = vpop.permute.xlu0 %4375
          %4379 = vset.pattern.permute.xlu0 0
          %4380 = vperm.xlu0 %4379, %v3190
          %v4381 = vpop.permute.xlu0 %4380
          %4384 = vset.pattern.permute.xlu0 0
          %4385 = vperm.xlu0 %4384, %v3192
          %v4386 = vpop.permute.xlu0 %4385
          %4389 = vset.pattern.permute.xlu0 0
          %4390 = vperm.xlu0 %4389, %v3194
          %v4391 = vpop.permute.xlu0 %4390
          %4394 = vset.pattern.permute.xlu0 0
          %4395 = vperm.xlu0 %4394, %v3196
          %v4396 = vpop.permute.xlu0 %4395
          %4399 = vset.pattern.permute.xlu0 0
          %4400 = vperm.xlu0 %4399, %v3198
          %v4401 = vpop.permute.xlu0 %4400
          %4404 = vset.pattern.permute.xlu0 0
          %4405 = vperm.xlu0 %4404, %v3200
          %v4406 = vpop.permute.xlu0 %4405
          %4409 = vset.pattern.permute.xlu0 0
          %4410 = vperm.xlu0 %4409, %v3202
          %v4411 = vpop.permute.xlu0 %4410
          %4414 = vset.pattern.permute.xlu0 0
          %4415 = vperm.xlu0 %4414, %v3204
          %v4416 = vpop.permute.xlu0 %4415
          %4419 = vset.pattern.permute.xlu0 0
          %4420 = vperm.xlu0 %4419, %v3206
          %v4421 = vpop.permute.xlu0 %4420
          %4424 = vset.pattern.permute.xlu0 0
          %4425 = vperm.xlu0 %4424, %v3208
          %v4426 = vpop.permute.xlu0 %4425
          %4429 = vset.pattern.permute.xlu0 0
          %4430 = vperm.xlu0 %4429, %v3210
          %v4431 = vpop.permute.xlu0 %4430
          %4434 = vset.pattern.permute.xlu0 0
          %4435 = vperm.xlu0 %4434, %v3212
          %v4436 = vpop.permute.xlu0 %4435
          %4439 = vset.pattern.permute.xlu0 0
          %4440 = vperm.xlu0 %4439, %v3214
          %v4441 = vpop.permute.xlu0 %4440
          %4444 = vset.pattern.permute.xlu0 0
          %4445 = vperm.xlu0 %4444, %v3216
          %v4446 = vpop.permute.xlu0 %4445
          %4449 = vset.pattern.permute.xlu0 0
          %4450 = vperm.xlu0 %4449, %v3218
          %v4451 = vpop.permute.xlu0 %4450
          %4454 = vset.pattern.permute.xlu0 0
          %4455 = vperm.xlu0 %4454, %v3220
          %v4456 = vpop.permute.xlu0 %4455
          %4459 = vset.pattern.permute.xlu0 0
          %4460 = vperm.xlu0 %4459, %v3222
          %v4461 = vpop.permute.xlu0 %4460
          %4464 = vset.pattern.permute.xlu0 0
          %4465 = vperm.xlu0 %4464, %v3224
          %v4466 = vpop.permute.xlu0 %4465
          %4469 = vset.pattern.permute.xlu0 0
          %4470 = vperm.xlu0 %4469, %v3226
          %v4471 = vpop.permute.xlu0 %4470
          %4474 = vset.pattern.permute.xlu0 0
          %4475 = vperm.xlu0 %4474, %v3228
          %v4476 = vpop.permute.xlu0 %4475
          %4479 = vset.pattern.permute.xlu0 0
          %4480 = vperm.xlu0 %4479, %v3230
          %v4481 = vpop.permute.xlu0 %4480
          %4484 = vset.pattern.permute.xlu0 0
          %4485 = vperm.xlu0 %4484, %v3232
          %v4486 = vpop.permute.xlu0 %4485
          %4489 = vset.pattern.permute.xlu0 0
          %4490 = vperm.xlu0 %4489, %v3234
          %v4491 = vpop.permute.xlu0 %4490
          %4494 = vset.pattern.permute.xlu0 0
          %4495 = vperm.xlu0 %4494, %v3236
          %v4496 = vpop.permute.xlu0 %4495
          %4499 = vset.pattern.permute.xlu0 0
          %4500 = vperm.xlu0 %4499, %v3238
          %v4501 = vpop.permute.xlu0 %4500
          %4504 = vset.pattern.permute.xlu0 0
          %4505 = vperm.xlu0 %4504, %v3240
          %v4506 = vpop.permute.xlu0 %4505
          %4509 = vset.pattern.permute.xlu0 0
          %4510 = vperm.xlu0 %4509, %v3242
          %v4511 = vpop.permute.xlu0 %4510
          %4514 = vset.pattern.permute.xlu0 0
          %4515 = vperm.xlu0 %4514, %v3244
          %v4516 = vpop.permute.xlu0 %4515
          %4519 = vset.pattern.permute.xlu0 0
          %4520 = vperm.xlu0 %4519, %v3246
          %v4521 = vpop.permute.xlu0 %4520
          %4524 = vset.pattern.permute.xlu0 0
          %4525 = vperm.xlu0 %4524, %v3248
          %v4526 = vpop.permute.xlu0 %4525
          %4529 = vset.pattern.permute.xlu0 0
          %4530 = vperm.xlu0 %4529, %v3250
          %v4531 = vpop.permute.xlu0 %4530
          %4534 = vset.pattern.permute.xlu0 0
          %4535 = vperm.xlu0 %4534, %v3252
          %v4536 = vpop.permute.xlu0 %4535
          %4539 = vset.pattern.permute.xlu0 0
          %4540 = vperm.xlu0 %4539, %v3254
          %v4541 = vpop.permute.xlu0 %4540
          %4544 = vset.pattern.permute.xlu0 0
          %4545 = vperm.xlu0 %4544, %v3256
          %v4546 = vpop.permute.xlu0 %4545
          %4549 = vset.pattern.permute.xlu0 0
          %4550 = vperm.xlu0 %4549, %v3258
          %v4551 = vpop.permute.xlu0 %4550
          %4554 = vset.pattern.permute.xlu0 0
          %4555 = vperm.xlu0 %4554, %v3260
          %v4556 = vpop.permute.xlu0 %4555
          %4559 = vset.pattern.permute.xlu0 0
          %4560 = vperm.xlu0 %4559, %v3262
          %v4561 = vpop.permute.xlu0 %4560
          %4564 = vset.pattern.permute.xlu0 0
          %4565 = vperm.xlu0 %4564, %v3264
          %v4566 = vpop.permute.xlu0 %4565
          %4569 = vset.pattern.permute.xlu0 0
          %4570 = vperm.xlu0 %4569, %v3266
          %v4571 = vpop.permute.xlu0 %4570
          %4574 = vset.pattern.permute.xlu0 0
          %4575 = vperm.xlu0 %4574, %v3268
          %v4576 = vpop.permute.xlu0 %4575
          %4579 = vset.pattern.permute.xlu0 0
          %4580 = vperm.xlu0 %4579, %v3270
          %v4581 = vpop.permute.xlu0 %4580
          %4584 = vset.pattern.permute.xlu0 0
          %4585 = vperm.xlu0 %4584, %v3272
          %v4586 = vpop.permute.xlu0 %4585
          %4589 = vset.pattern.permute.xlu0 0
          %4590 = vperm.xlu0 %4589, %v3274
          %v4591 = vpop.permute.xlu0 %4590
          %4594 = vset.pattern.permute.xlu0 0
          %4595 = vperm.xlu0 %4594, %v3276
          %v4596 = vpop.permute.xlu0 %4595
          %4599 = vset.pattern.permute.xlu0 0
          %4600 = vperm.xlu0 %4599, %v3278
          %v4601 = vpop.permute.xlu0 %4600
          %4604 = vset.pattern.permute.xlu0 0
          %4605 = vperm.xlu0 %4604, %v3280
          %v4606 = vpop.permute.xlu0 %4605
          %4609 = vset.pattern.permute.xlu0 0
          %4610 = vperm.xlu0 %4609, %v3282
          %v4611 = vpop.permute.xlu0 %4610
          %4614 = vset.pattern.permute.xlu0 0
          %4615 = vperm.xlu0 %4614, %v3284
          %v4616 = vpop.permute.xlu0 %4615
          %4619 = vset.pattern.permute.xlu0 0
          %4620 = vperm.xlu0 %4619, %v3286
          %v4621 = vpop.permute.xlu0 %4620
          %4624 = vset.pattern.permute.xlu0 0
          %4625 = vperm.xlu0 %4624, %v3288
          %v4626 = vpop.permute.xlu0 %4625
          %4629 = vset.pattern.permute.xlu0 0
          %4630 = vperm.xlu0 %4629, %v3290
          %v4631 = vpop.permute.xlu0 %4630
          %4634 = vset.pattern.permute.xlu0 0
          %4635 = vperm.xlu0 %4634, %v3292
          %v4636 = vpop.permute.xlu0 %4635
          %v4638 = vmul.f32 %v4321, %v4254
          %v4639 = vmul.f32 %v4326, %v4255
          %v4640 = vmul.f32 %v4331, %v4256
          %v4641 = vmul.f32 %v4336, %v4257
          %v4642 = vmul.f32 %v4341, %v4258
          %v4643 = vmul.f32 %v4346, %v4259
          %v4644 = vmul.f32 %v4351, %v4260
          %v4645 = vmul.f32 %v4356, %v4261
          %v4646 = vmul.f32 %v4361, %v4262
          %v4647 = vmul.f32 %v4366, %v4263
          %v4648 = vmul.f32 %v4371, %v4264
          %v4649 = vmul.f32 %v4376, %v4265
          %v4650 = vmul.f32 %v4381, %v4266
          %v4651 = vmul.f32 %v4386, %v4267
          %v4652 = vmul.f32 %v4391, %v4268
          %v4653 = vmul.f32 %v4396, %v4269
          %v4654 = vmul.f32 %v4401, %v4270
          %v4655 = vmul.f32 %v4406, %v4271
          %v4656 = vmul.f32 %v4411, %v4272
          %v4657 = vmul.f32 %v4416, %v4273
          %v4658 = vmul.f32 %v4421, %v4274
          %v4659 = vmul.f32 %v4426, %v4275
          %v4660 = vmul.f32 %v4431, %v4276
          %v4661 = vmul.f32 %v4436, %v4277
          %v4662 = vmul.f32 %v4441, %v4278
          %v4663 = vmul.f32 %v4446, %v4279
          %v4664 = vmul.f32 %v4451, %v4280
          %v4665 = vmul.f32 %v4456, %v4281
          %v4666 = vmul.f32 %v4461, %v4282
          %v4667 = vmul.f32 %v4466, %v4283
          %v4668 = vmul.f32 %v4471, %v4284
          %v4669 = vmul.f32 %v4476, %v4285
          %v4670 = vmul.f32 %v4481, %v4286
          %v4671 = vmul.f32 %v4486, %v4287
          %v4672 = vmul.f32 %v4491, %v4288
          %v4673 = vmul.f32 %v4496, %v4289
          %v4674 = vmul.f32 %v4501, %v4290
          %v4675 = vmul.f32 %v4506, %v4291
          %v4676 = vmul.f32 %v4511, %v4292
          %v4677 = vmul.f32 %v4516, %v4293
          %v4678 = vmul.f32 %v4521, %v4294
          %v4679 = vmul.f32 %v4526, %v4295
          %v4680 = vmul.f32 %v4531, %v4296
          %v4681 = vmul.f32 %v4536, %v4297
          %v4682 = vmul.f32 %v4541, %v4298
          %v4683 = vmul.f32 %v4546, %v4299
          %v4684 = vmul.f32 %v4551, %v4300
          %v4685 = vmul.f32 %v4556, %v4301
          %v4686 = vmul.f32 %v4561, %v4302
          %v4687 = vmul.f32 %v4566, %v4303
          %v4688 = vmul.f32 %v4571, %v4304
          %v4689 = vmul.f32 %v4576, %v4305
          %v4690 = vmul.f32 %v4581, %v4306
          %v4691 = vmul.f32 %v4586, %v4307
          %v4692 = vmul.f32 %v4591, %v4308
          %v4693 = vmul.f32 %v4596, %v4309
          %v4694 = vmul.f32 %v4601, %v4310
          %v4695 = vmul.f32 %v4606, %v4311
          %v4696 = vmul.f32 %v4611, %v4312
          %v4697 = vmul.f32 %v4616, %v4313
          %v4698 = vmul.f32 %v4621, %v4314
          %v4699 = vmul.f32 %v4626, %v4315
          %v4700 = vmul.f32 %v4631, %v4316
          %v4701 = vmul.f32 %v4636, %v4317
          %4702 = vmatprep.subr.mxu0 0.0
          %4703 = vmatpush1.msra.mxu0 %v1560
          %4704 = vmatprep.subr.mxu0 0.0
          %4705 = vmatpush1.msra.mxu0 %v1561
          %4706 = vmatprep.subr.mxu0 0.0
          %4707 = vmatpush1.msra.mxu0 %v1562
          %4708 = vmatprep.subr.mxu0 0.0
          %4709 = vmatpush1.msra.mxu0 %v1563
          %4710 = vmatprep.subr.mxu0 0.0
          %4711 = vmatpush1.msra.mxu0 %v1564
          %4712 = vmatprep.subr.mxu0 0.0
          %4713 = vmatpush1.msra.mxu0 %v1565
          %4714 = vmatprep.subr.mxu0 0.0
          %4715 = vmatpush1.msra.mxu0 %v1566
          %4716 = vmatprep.subr.mxu0 0.0
          %4717 = vmatpush1.msra.mxu0 %v1567
          %4718 = vmatprep.subr.mxu0 0.0
          %4719 = vmatpush1.msra.mxu0 %v1568
          %4720 = vmatprep.subr.mxu0 0.0
          %4721 = vmatpush1.msra.mxu0 %v1569
          %4722 = vmatprep.subr.mxu0 0.0
          %4723 = vmatpush1.msra.mxu0 %v1570
          %4724 = vmatprep.subr.mxu0 0.0
          %4725 = vmatpush1.msra.mxu0 %v1571
          %4726 = vmatprep.subr.mxu0 0.0
          %4727 = vmatpush1.msra.mxu0 %v1572
          %4728 = vmatprep.subr.mxu0 0.0
          %4729 = vmatpush1.msra.mxu0 %v1573
          %4730 = vmatprep.subr.mxu0 0.0
          %4731 = vmatpush1.msra.mxu0 %v1574
          %4732 = vmatprep.subr.mxu0 0.0
          %4733 = vmatpush1.msra.mxu0 %v1575
          %4734 = vmatprep.subr.mxu0 0.0
          %4735 = vmatpush1.msra.mxu0 0.0
          %4736 = vmatprep.subr.mxu0 0.0
          %4737 = vmatpush1.msra.mxu0 0.0
          %4738 = vmatprep.subr.mxu0 0.0
          %4739 = vmatpush1.msra.mxu0 0.0
          %4740 = vmatprep.subr.mxu0 0.0
          %4741 = vmatpush1.msra.mxu0 0.0
          %4742 = vmatprep.subr.mxu0 0.0
          %4743 = vmatpush1.msra.mxu0 0.0
          %4744 = vmatprep.subr.mxu0 0.0
          %4745 = vmatpush1.msra.mxu0 0.0
          %4746 = vmatprep.subr.mxu0 0.0
          %4747 = vmatpush1.msra.mxu0 0.0
          %4748 = vmatprep.subr.mxu0 0.0
          %4749 = vmatpush1.msra.mxu0 0.0
          %4750 = vmatprep.subr.mxu0 0.0
          %4751 = vmatpush1.msra.mxu0 0.0
          %4752 = vmatprep.subr.mxu0 0.0
          %4753 = vmatpush1.msra.mxu0 0.0
          %4754 = vmatprep.subr.mxu0 0.0
          %4755 = vmatpush1.msra.mxu0 0.0
          %4756 = vmatprep.subr.mxu0 0.0
          %4757 = vmatpush1.msra.mxu0 0.0
          %4758 = vmatprep.subr.mxu0 0.0
          %4759 = vmatpush1.msra.mxu0 0.0
          %4760 = vmatprep.subr.mxu0 0.0
          %4761 = vmatpush1.msra.mxu0 0.0
          %4762 = vmatprep.subr.mxu0 0.0
          %4763 = vmatpush1.msra.mxu0 0.0
          %4764 = vmatprep.subr.mxu0 0.0
          %4765 = vmatpush1.msra.mxu0 0.0
          %4766 = vmatprep.mubr.f32.mxu0 0.0
          %4767 = vmatmul.mubr.f32.gmra.mrb[0].mxu0 %v3805
          %v4768 = vpop.f32.mrb[0].mxu0
          %v4769 = vadd.f32 0.0, %v4768
          %v4770 = vpop.f32.mrb[0].mxu0
          %4771 = vmatprep.mubr.f32.mxu0 0.0
          %4772 = vmatmul.mubr.f32.gmra.mrb[0].mxu0 %v3806
          %v4773 = vpop.f32.mrb[0].mxu0
          %v4774 = vadd.f32 0.0, %v4773
          %v4775 = vpop.f32.mrb[0].mxu0
          %4776 = vmatprep.mubr.f32.mxu0 0.0
          %4777 = vmatmul.mubr.f32.gmra.mrb[0].mxu0 %v3807
          %v4778 = vpop.f32.mrb[0].mxu0
          %v4779 = vadd.f32 0.0, %v4778
          %v4780 = vpop.f32.mrb[0].mxu0
          %4781 = vmatprep.mubr.f32.mxu0 0.0
          %4782 = vmatmul.mubr.f32.gmra.mrb[0].mxu0 %v3808
          %v4783 = vpop.f32.mrb[0].mxu0
          %v4784 = vadd.f32 0.0, %v4783
          %v4785 = vpop.f32.mrb[0].mxu0
          %4786 = vmatprep.mubr.f32.mxu0 0.0
          %4787 = vmatmul.mubr.f32.gmra.mrb[0].mxu0 %v3809
          %v4788 = vpop.f32.mrb[0].mxu0
          %v4789 = vadd.f32 0.0, %v4788
          %v4790 = vpop.f32.mrb[0].mxu0
          %4791 = vmatprep.mubr.f32.mxu0 0.0
          %4792 = vmatmul.mubr.f32.gmra.mrb[0].mxu0 %v3810
          %v4793 = vpop.f32.mrb[0].mxu0
          %v4794 = vadd.f32 0.0, %v4793
          %v4795 = vpop.f32.mrb[0].mxu0
          %4796 = vmatprep.mubr.f32.mxu0 0.0
          %4797 = vmatmul.mubr.f32.gmra.mrb[0].mxu0 %v3811
          %v4798 = vpop.f32.mrb[0].mxu0
          %v4799 = vadd.f32 0.0, %v4798
          %v4800 = vpop.f32.mrb[0].mxu0
          %4801 = vmatprep.mubr.f32.mxu0 0.0
          %4802 = vmatmul.mubr.f32.gmra.mrb[0].mxu0 %v3812
          %v4803 = vpop.f32.mrb[0].mxu0
          %v4804 = vadd.f32 0.0, %v4803
          %v4805 = vpop.f32.mrb[0].mxu0
          %4806 = vmatprep.mubr.f32.mxu0 0.0
          %4807 = vmatmul.mubr.f32.gmra.mrb[0].mxu0 %v3813
          %v4808 = vpop.f32.mrb[0].mxu0
          %v4809 = vadd.f32 0.0, %v4808
          %v4810 = vpop.f32.mrb[0].mxu0
          %4811 = vmatprep.mubr.f32.mxu0 0.0
          %4812 = vmatmul.mubr.f32.gmra.mrb[0].mxu0 %v3814
          %v4813 = vpop.f32.mrb[0].mxu0
          %v4814 = vadd.f32 0.0, %v4813
          %v4815 = vpop.f32.mrb[0].mxu0
          %4816 = vmatprep.mubr.f32.mxu0 0.0
          %4817 = vmatmul.mubr.f32.gmra.mrb[0].mxu0 %v3815
          %v4818 = vpop.f32.mrb[0].mxu0
          %v4819 = vadd.f32 0.0, %v4818
          %v4820 = vpop.f32.mrb[0].mxu0
          %4821 = vmatprep.mubr.f32.mxu0 0.0
          %4822 = vmatmul.mubr.f32.gmra.mrb[0].mxu0 %v3816
          %v4823 = vpop.f32.mrb[0].mxu0
          %v4824 = vadd.f32 0.0, %v4823
          %v4825 = vpop.f32.mrb[0].mxu0
          %4826 = vmatprep.mubr.f32.mxu0 0.0
          %4827 = vmatmul.mubr.f32.gmra.mrb[0].mxu0 %v3817
          %v4828 = vpop.f32.mrb[0].mxu0
          %v4829 = vadd.f32 0.0, %v4828
          %v4830 = vpop.f32.mrb[0].mxu0
          %4831 = vmatprep.mubr.f32.mxu0 0.0
          %4832 = vmatmul.mubr.f32.gmra.mrb[0].mxu0 %v3818
          %v4833 = vpop.f32.mrb[0].mxu0
          %v4834 = vadd.f32 0.0, %v4833
          %v4835 = vpop.f32.mrb[0].mxu0
          %4836 = vmatprep.mubr.f32.mxu0 0.0
          %4837 = vmatmul.mubr.f32.gmra.mrb[0].mxu0 %v3819
          %v4838 = vpop.f32.mrb[0].mxu0
          %v4839 = vadd.f32 0.0, %v4838
          %v4840 = vpop.f32.mrb[0].mxu0
          %4841 = vmatprep.mubr.f32.mxu0 0.0
          %4842 = vmatmul.mubr.f32.gmra.mrb[0].mxu0 %v3820
          %v4843 = vpop.f32.mrb[0].mxu0
          %v4844 = vadd.f32 0.0, %v4843
          %v4845 = vpop.f32.mrb[0].mxu0
          %4846 = vdwg.mxu0
          %4847 = vmatprep.subr.mxu0 0.0
          %4848 = vmatpush1.msra.mxu0 %v1576
          %4849 = vmatprep.subr.mxu0 0.0
          %4850 = vmatpush1.msra.mxu0 %v1577
          %4851 = vmatprep.subr.mxu0 0.0
          %4852 = vmatpush1.msra.mxu0 %v1578
          %4853 = vmatprep.subr.mxu0 0.0
          %4854 = vmatpush1.msra.mxu0 %v1579
          %4855 = vmatprep.subr.mxu0 0.0
          %4856 = vmatpush1.msra.mxu0 %v1580
          %4857 = vmatprep.subr.mxu0 0.0
          %4858 = vmatpush1.msra.mxu0 %v1581
          %4859 = vmatprep.subr.mxu0 0.0
          %4860 = vmatpush1.msra.mxu0 %v1582
          %4861 = vmatprep.subr.mxu0 0.0
          %4862 = vmatpush1.msra.mxu0 %v1583
          %4863 = vmatprep.subr.mxu0 0.0
          %4864 = vmatpush1.msra.mxu0 %v1584
          %4865 = vmatprep.subr.mxu0 0.0
          %4866 = vmatpush1.msra.mxu0 %v1585
          %4867 = vmatprep.subr.mxu0 0.0
          %4868 = vmatpush1.msra.mxu0 %v1586
          %4869 = vmatprep.subr.mxu0 0.0
          %4870 = vmatpush1.msra.mxu0 %v1587
          %4871 = vmatprep.subr.mxu0 0.0
          %4872 = vmatpush1.msra.mxu0 %v1588
          %4873 = vmatprep.subr.mxu0 0.0
          %4874 = vmatpush1.msra.mxu0 %v1589
          %4875 = vmatprep.subr.mxu0 0.0
          %4876 = vmatpush1.msra.mxu0 %v1590
          %4877 = vmatprep.subr.mxu0 0.0
          %4878 = vmatpush1.msra.mxu0 %v1591
          %4879 = vmatprep.subr.mxu0 0.0
          %4880 = vmatpush1.msra.mxu0 0.0
          %4881 = vmatprep.subr.mxu0 0.0
          %4882 = vmatpush1.msra.mxu0 0.0
          %4883 = vmatprep.subr.mxu0 0.0
          %4884 = vmatpush1.msra.mxu0 0.0
          %4885 = vmatprep.subr.mxu0 0.0
          %4886 = vmatpush1.msra.mxu0 0.0
          %4887 = vmatprep.subr.mxu0 0.0
          %4888 = vmatpush1.msra.mxu0 0.0
          %4889 = vmatprep.subr.mxu0 0.0
          %4890 = vmatpush1.msra.mxu0 0.0
          %4891 = vmatprep.subr.mxu0 0.0
          %4892 = vmatpush1.msra.mxu0 0.0
          %4893 = vmatprep.subr.mxu0 0.0
          %4894 = vmatpush1.msra.mxu0 0.0
          %4895 = vmatprep.subr.mxu0 0.0
          %4896 = vmatpush1.msra.mxu0 0.0
          %4897 = vmatprep.subr.mxu0 0.0
          %4898 = vmatpush1.msra.mxu0 0.0
          %4899 = vmatprep.subr.mxu0 0.0
          %4900 = vmatpush1.msra.mxu0 0.0
          %4901 = vmatprep.subr.mxu0 0.0
          %4902 = vmatpush1.msra.mxu0 0.0
          %4903 = vmatprep.subr.mxu0 0.0
          %4904 = vmatpush1.msra.mxu0 0.0
          %4905 = vmatprep.subr.mxu0 0.0
          %4906 = vmatpush1.msra.mxu0 0.0
          %4907 = vmatprep.subr.mxu0 0.0
          %4908 = vmatpush1.msra.mxu0 0.0
          %4909 = vmatprep.subr.mxu0 0.0
          %4910 = vmatpush1.msra.mxu0 0.0
          %4911 = vmatprep.mubr.f32.mxu0 0.0
          %4912 = vmatmul.mubr.f32.gmra.mrb[0].mxu0 %v3821
          %v4913 = vpop.f32.mrb[0].mxu0
          %v4914 = vadd.f32 0.0, %v4913
          %v4915 = vpop.f32.mrb[0].mxu0
          %4916 = vmatprep.mubr.f32.mxu0 0.0
          %4917 = vmatmul.mubr.f32.gmra.mrb[0].mxu0 %v3822
          %v4918 = vpop.f32.mrb[0].mxu0
          %v4919 = vadd.f32 0.0, %v4918
          %v4920 = vpop.f32.mrb[0].mxu0
          %4921 = vmatprep.mubr.f32.mxu0 0.0
          %4922 = vmatmul.mubr.f32.gmra.mrb[0].mxu0 %v3823
          %v4923 = vpop.f32.mrb[0].mxu0
          %v4924 = vadd.f32 0.0, %v4923
          %v4925 = vpop.f32.mrb[0].mxu0
          %4926 = vmatprep.mubr.f32.mxu0 0.0
          %4927 = vmatmul.mubr.f32.gmra.mrb[0].mxu0 %v3824
          %v4928 = vpop.f32.mrb[0].mxu0
          %v4929 = vadd.f32 0.0, %v4928
          %v4930 = vpop.f32.mrb[0].mxu0
          %4931 = vmatprep.mubr.f32.mxu0 0.0
          %4932 = vmatmul.mubr.f32.gmra.mrb[0].mxu0 %v3825
          %v4933 = vpop.f32.mrb[0].mxu0
          %v4934 = vadd.f32 0.0, %v4933
          %v4935 = vpop.f32.mrb[0].mxu0
          %4936 = vmatprep.mubr.f32.mxu0 0.0
          %4937 = vmatmul.mubr.f32.gmra.mrb[0].mxu0 %v3826
          %v4938 = vpop.f32.mrb[0].mxu0
          %v4939 = vadd.f32 0.0, %v4938
          %v4940 = vpop.f32.mrb[0].mxu0
          %4941 = vmatprep.mubr.f32.mxu0 0.0
          %4942 = vmatmul.mubr.f32.gmra.mrb[0].mxu0 %v3827
          %v4943 = vpop.f32.mrb[0].mxu0
          %v4944 = vadd.f32 0.0, %v4943
          %v4945 = vpop.f32.mrb[0].mxu0
          %4946 = vmatprep.mubr.f32.mxu0 0.0
          %4947 = vmatmul.mubr.f32.gmra.mrb[0].mxu0 %v3828
          %v4948 = vpop.f32.mrb[0].mxu0
          %v4949 = vadd.f32 0.0, %v4948
          %v4950 = vpop.f32.mrb[0].mxu0
          %4951 = vmatprep.mubr.f32.mxu0 0.0
          %4952 = vmatmul.mubr.f32.gmra.mrb[0].mxu0 %v3829
          %v4953 = vpop.f32.mrb[0].mxu0
          %v4954 = vadd.f32 0.0, %v4953
          %v4955 = vpop.f32.mrb[0].mxu0
          %4956 = vmatprep.mubr.f32.mxu0 0.0
          %4957 = vmatmul.mubr.f32.gmra.mrb[0].mxu0 %v3830
          %v4958 = vpop.f32.mrb[0].mxu0
          %v4959 = vadd.f32 0.0, %v4958
          %v4960 = vpop.f32.mrb[0].mxu0
          %4961 = vmatprep.mubr.f32.mxu0 0.0
          %4962 = vmatmul.mubr.f32.gmra.mrb[0].mxu0 %v3831
          %v4963 = vpop.f32.mrb[0].mxu0
          %v4964 = vadd.f32 0.0, %v4963
          %v4965 = vpop.f32.mrb[0].mxu0
          %4966 = vmatprep.mubr.f32.mxu0 0.0
          %4967 = vmatmul.mubr.f32.gmra.mrb[0].mxu0 %v3832
          %v4968 = vpop.f32.mrb[0].mxu0
          %v4969 = vadd.f32 0.0, %v4968
          %v4970 = vpop.f32.mrb[0].mxu0
          %4971 = vmatprep.mubr.f32.mxu0 0.0
          %4972 = vmatmul.mubr.f32.gmra.mrb[0].mxu0 %v3833
          %v4973 = vpop.f32.mrb[0].mxu0
          %v4974 = vadd.f32 0.0, %v4973
          %v4975 = vpop.f32.mrb[0].mxu0
          %4976 = vmatprep.mubr.f32.mxu0 0.0
          %4977 = vmatmul.mubr.f32.gmra.mrb[0].mxu0 %v3834
          %v4978 = vpop.f32.mrb[0].mxu0
          %v4979 = vadd.f32 0.0, %v4978
          %v4980 = vpop.f32.mrb[0].mxu0
          %4981 = vmatprep.mubr.f32.mxu0 0.0
          %4982 = vmatmul.mubr.f32.gmra.mrb[0].mxu0 %v3835
          %v4983 = vpop.f32.mrb[0].mxu0
          %v4984 = vadd.f32 0.0, %v4983
          %v4985 = vpop.f32.mrb[0].mxu0
          %4986 = vmatprep.mubr.f32.mxu0 0.0
          %4987 = vmatmul.mubr.f32.gmra.mrb[0].mxu0 %v3836
          %v4988 = vpop.f32.mrb[0].mxu0
          %v4989 = vadd.f32 0.0, %v4988
          %v4990 = vpop.f32.mrb[0].mxu0
          %4991 = vdwg.mxu0
          %4992 = vmatprep.subr.mxu0 0.0
          %4993 = vmatpush1.msra.mxu0 %v1592
          %4994 = vmatprep.subr.mxu0 0.0
          %4995 = vmatpush1.msra.mxu0 %v1593
          %4996 = vmatprep.subr.mxu0 0.0
          %4997 = vmatpush1.msra.mxu0 %v1594
          %4998 = vmatprep.subr.mxu0 0.0
          %4999 = vmatpush1.msra.mxu0 %v1595
          %5000 = vmatprep.subr.mxu0 0.0
          %5001 = vmatpush1.msra.mxu0 %v1596
          %5002 = vmatprep.subr.mxu0 0.0
          %5003 = vmatpush1.msra.mxu0 %v1597
          %5004 = vmatprep.subr.mxu0 0.0
          %5005 = vmatpush1.msra.mxu0 %v1598
          %5006 = vmatprep.subr.mxu0 0.0
          %5007 = vmatpush1.msra.mxu0 %v1599
          %5008 = vmatprep.subr.mxu0 0.0
          %5009 = vmatpush1.msra.mxu0 %v1600
          %5010 = vmatprep.subr.mxu0 0.0
          %5011 = vmatpush1.msra.mxu0 %v1601
          %5012 = vmatprep.subr.mxu0 0.0
          %5013 = vmatpush1.msra.mxu0 %v1602
          %5014 = vmatprep.subr.mxu0 0.0
          %5015 = vmatpush1.msra.mxu0 %v1603
          %5016 = vmatprep.subr.mxu0 0.0
          %5017 = vmatpush1.msra.mxu0 %v1604
          %5018 = vmatprep.subr.mxu0 0.0
          %5019 = vmatpush1.msra.mxu0 %v1605
          %5020 = vmatprep.subr.mxu0 0.0
          %5021 = vmatpush1.msra.mxu0 %v1606
          %5022 = vmatprep.subr.mxu0 0.0
          %5023 = vmatpush1.msra.mxu0 %v1607
          %5024 = vmatprep.subr.mxu0 0.0
          %5025 = vmatpush1.msra.mxu0 0.0
          %5026 = vmatprep.subr.mxu0 0.0
          %5027 = vmatpush1.msra.mxu0 0.0
          %5028 = vmatprep.subr.mxu0 0.0
          %5029 = vmatpush1.msra.mxu0 0.0
          %5030 = vmatprep.subr.mxu0 0.0
          %5031 = vmatpush1.msra.mxu0 0.0
          %5032 = vmatprep.subr.mxu0 0.0
          %5033 = vmatpush1.msra.mxu0 0.0
          %5034 = vmatprep.subr.mxu0 0.0
          %5035 = vmatpush1.msra.mxu0 0.0
          %5036 = vmatprep.subr.mxu0 0.0
          %5037 = vmatpush1.msra.mxu0 0.0
          %5038 = vmatprep.subr.mxu0 0.0
          %5039 = vmatpush1.msra.mxu0 0.0
          %5040 = vmatprep.subr.mxu0 0.0
          %5041 = vmatpush1.msra.mxu0 0.0
          %5042 = vmatprep.subr.mxu0 0.0
          %5043 = vmatpush1.msra.mxu0 0.0
          %5044 = vmatprep.subr.mxu0 0.0
          %5045 = vmatpush1.msra.mxu0 0.0
          %5046 = vmatprep.subr.mxu0 0.0
          %5047 = vmatpush1.msra.mxu0 0.0
          %5048 = vmatprep.subr.mxu0 0.0
          %5049 = vmatpush1.msra.mxu0 0.0
          %5050 = vmatprep.subr.mxu0 0.0
          %5051 = vmatpush1.msra.mxu0 0.0
          %5052 = vmatprep.subr.mxu0 0.0
          %5053 = vmatpush1.msra.mxu0 0.0
          %5054 = vmatprep.subr.mxu0 0.0
          %5055 = vmatpush1.msra.mxu0 0.0
          %5056 = vmatprep.mubr.f32.mxu0 0.0
          %5057 = vmatmul.mubr.f32.gmra.mrb[0].mxu0 %v3837
          %v5058 = vpop.f32.mrb[0].mxu0
          %v5059 = vadd.f32 0.0, %v5058
          %v5060 = vpop.f32.mrb[0].mxu0
          %5061 = vmatprep.mubr.f32.mxu0 0.0
          %5062 = vmatmul.mubr.f32.gmra.mrb[0].mxu0 %v3838
          %v5063 = vpop.f32.mrb[0].mxu0
          %v5064 = vadd.f32 0.0, %v5063
          %v5065 = vpop.f32.mrb[0].mxu0
          %5066 = vmatprep.mubr.f32.mxu0 0.0
          %5067 = vmatmul.mubr.f32.gmra.mrb[0].mxu0 %v3839
          %v5068 = vpop.f32.mrb[0].mxu0
          %v5069 = vadd.f32 0.0, %v5068
          %v5070 = vpop.f32.mrb[0].mxu0
          %5071 = vmatprep.mubr.f32.mxu0 0.0
          %5072 = vmatmul.mubr.f32.gmra.mrb[0].mxu0 %v3840
          %v5073 = vpop.f32.mrb[0].mxu0
          %v5074 = vadd.f32 0.0, %v5073
          %v5075 = vpop.f32.mrb[0].mxu0
          %5076 = vmatprep.mubr.f32.mxu0 0.0
          %5077 = vmatmul.mubr.f32.gmra.mrb[0].mxu0 %v3841
          %v5078 = vpop.f32.mrb[0].mxu0
          %v5079 = vadd.f32 0.0, %v5078
          %v5080 = vpop.f32.mrb[0].mxu0
          %5081 = vmatprep.mubr.f32.mxu0 0.0
          %5082 = vmatmul.mubr.f32.gmra.mrb[0].mxu0 %v3842
          %v5083 = vpop.f32.mrb[0].mxu0
          %v5084 = vadd.f32 0.0, %v5083
          %v5085 = vpop.f32.mrb[0].mxu0
          %5086 = vmatprep.mubr.f32.mxu0 0.0
          %5087 = vmatmul.mubr.f32.gmra.mrb[0].mxu0 %v3843
          %v5088 = vpop.f32.mrb[0].mxu0
          %v5089 = vadd.f32 0.0, %v5088
          %v5090 = vpop.f32.mrb[0].mxu0
          %5091 = vmatprep.mubr.f32.mxu0 0.0
          %5092 = vmatmul.mubr.f32.gmra.mrb[0].mxu0 %v3844
          %v5093 = vpop.f32.mrb[0].mxu0
          %v5094 = vadd.f32 0.0, %v5093
          %v5095 = vpop.f32.mrb[0].mxu0
          %5096 = vmatprep.mubr.f32.mxu0 0.0
          %5097 = vmatmul.mubr.f32.gmra.mrb[0].mxu0 %v3845
          %v5098 = vpop.f32.mrb[0].mxu0
          %v5099 = vadd.f32 0.0, %v5098
          %v5100 = vpop.f32.mrb[0].mxu0
          %5101 = vmatprep.mubr.f32.mxu0 0.0
          %5102 = vmatmul.mubr.f32.gmra.mrb[0].mxu0 %v3846
          %v5103 = vpop.f32.mrb[0].mxu0
          %v5104 = vadd.f32 0.0, %v5103
          %v5105 = vpop.f32.mrb[0].mxu0
          %5106 = vmatprep.mubr.f32.mxu0 0.0
          %5107 = vmatmul.mubr.f32.gmra.mrb[0].mxu0 %v3847
          %v5108 = vpop.f32.mrb[0].mxu0
          %v5109 = vadd.f32 0.0, %v5108
          %v5110 = vpop.f32.mrb[0].mxu0
          %5111 = vmatprep.mubr.f32.mxu0 0.0
          %5112 = vmatmul.mubr.f32.gmra.mrb[0].mxu0 %v3848
          %v5113 = vpop.f32.mrb[0].mxu0
          %v5114 = vadd.f32 0.0, %v5113
          %v5115 = vpop.f32.mrb[0].mxu0
          %5116 = vmatprep.mubr.f32.mxu0 0.0
          %5117 = vmatmul.mubr.f32.gmra.mrb[0].mxu0 %v3849
          %v5118 = vpop.f32.mrb[0].mxu0
          %v5119 = vadd.f32 0.0, %v5118
          %v5120 = vpop.f32.mrb[0].mxu0
          %5121 = vmatprep.mubr.f32.mxu0 0.0
          %5122 = vmatmul.mubr.f32.gmra.mrb[0].mxu0 %v3850
          %v5123 = vpop.f32.mrb[0].mxu0
          %v5124 = vadd.f32 0.0, %v5123
          %v5125 = vpop.f32.mrb[0].mxu0
          %5126 = vmatprep.mubr.f32.mxu0 0.0
          %5127 = vmatmul.mubr.f32.gmra.mrb[0].mxu0 %v3851
          %v5128 = vpop.f32.mrb[0].mxu0
          %v5129 = vadd.f32 0.0, %v5128
          %v5130 = vpop.f32.mrb[0].mxu0
          %5131 = vmatprep.mubr.f32.mxu0 0.0
          %5132 = vmatmul.mubr.f32.gmra.mrb[0].mxu0 %v3852
          %v5133 = vpop.f32.mrb[0].mxu0
          %v5134 = vadd.f32 0.0, %v5133
          %v5135 = vpop.f32.mrb[0].mxu0
          %5136 = vdwg.mxu0
          %5137 = vmatprep.subr.mxu0 0.0
          %5138 = vmatpush1.msra.mxu0 %v1608
          %5139 = vmatprep.subr.mxu0 0.0
          %5140 = vmatpush1.msra.mxu0 %v1609
          %5141 = vmatprep.subr.mxu0 0.0
          %5142 = vmatpush1.msra.mxu0 %v1610
          %5143 = vmatprep.subr.mxu0 0.0
          %5144 = vmatpush1.msra.mxu0 %v1611
          %5145 = vmatprep.subr.mxu0 0.0
          %5146 = vmatpush1.msra.mxu0 %v1612
          %5147 = vmatprep.subr.mxu0 0.0
          %5148 = vmatpush1.msra.mxu0 %v1613
          %5149 = vmatprep.subr.mxu0 0.0
          %5150 = vmatpush1.msra.mxu0 %v1614
          %5151 = vmatprep.subr.mxu0 0.0
          %5152 = vmatpush1.msra.mxu0 %v1615
          %5153 = vmatprep.subr.mxu0 0.0
          %5154 = vmatpush1.msra.mxu0 %v1616
          %5155 = vmatprep.subr.mxu0 0.0
          %5156 = vmatpush1.msra.mxu0 %v1617
          %5157 = vmatprep.subr.mxu0 0.0
          %5158 = vmatpush1.msra.mxu0 %v1618
          %5159 = vmatprep.subr.mxu0 0.0
          %5160 = vmatpush1.msra.mxu0 %v1619
          %5161 = vmatprep.subr.mxu0 0.0
          %5162 = vmatpush1.msra.mxu0 %v1620
          %5163 = vmatprep.subr.mxu0 0.0
          %5164 = vmatpush1.msra.mxu0 %v1621
          %5165 = vmatprep.subr.mxu0 0.0
          %5166 = vmatpush1.msra.mxu0 %v1622
          %5167 = vmatprep.subr.mxu0 0.0
          %5168 = vmatpush1.msra.mxu0 %v1623
          %5169 = vmatprep.subr.mxu0 0.0
          %5170 = vmatpush1.msra.mxu0 0.0
          %5171 = vmatprep.subr.mxu0 0.0
          %5172 = vmatpush1.msra.mxu0 0.0
          %5173 = vmatprep.subr.mxu0 0.0
          %5174 = vmatpush1.msra.mxu0 0.0
          %5175 = vmatprep.subr.mxu0 0.0
          %5176 = vmatpush1.msra.mxu0 0.0
          %5177 = vmatprep.subr.mxu0 0.0
          %5178 = vmatpush1.msra.mxu0 0.0
          %5179 = vmatprep.subr.mxu0 0.0
          %5180 = vmatpush1.msra.mxu0 0.0
          %5181 = vmatprep.subr.mxu0 0.0
          %5182 = vmatpush1.msra.mxu0 0.0
          %5183 = vmatprep.subr.mxu0 0.0
          %5184 = vmatpush1.msra.mxu0 0.0
          %5185 = vmatprep.subr.mxu0 0.0
          %5186 = vmatpush1.msra.mxu0 0.0
          %5187 = vmatprep.subr.mxu0 0.0
          %5188 = vmatpush1.msra.mxu0 0.0
          %5189 = vmatprep.subr.mxu0 0.0
          %5190 = vmatpush1.msra.mxu0 0.0
          %5191 = vmatprep.subr.mxu0 0.0
          %5192 = vmatpush1.msra.mxu0 0.0
          %5193 = vmatprep.subr.mxu0 0.0
          %5194 = vmatpush1.msra.mxu0 0.0
          %5195 = vmatprep.subr.mxu0 0.0
          %5196 = vmatpush1.msra.mxu0 0.0
          %5197 = vmatprep.subr.mxu0 0.0
          %5198 = vmatpush1.msra.mxu0 0.0
          %5199 = vmatprep.subr.mxu0 0.0
          %5200 = vmatpush1.msra.mxu0 0.0
          %5201 = vmatprep.mubr.f32.mxu0 0.0
          %5202 = vmatmul.mubr.f32.gmra.mrb[0].mxu0 %v3853
          %v5203 = vpop.f32.mrb[0].mxu0
          %v5204 = vadd.f32 0.0, %v5203
          %v5205 = vpop.f32.mrb[0].mxu0
          %5206 = vmatprep.mubr.f32.mxu0 0.0
          %5207 = vmatmul.mubr.f32.gmra.mrb[0].mxu0 %v3854
          %v5208 = vpop.f32.mrb[0].mxu0
          %v5209 = vadd.f32 0.0, %v5208
          %v5210 = vpop.f32.mrb[0].mxu0
          %5211 = vmatprep.mubr.f32.mxu0 0.0
          %5212 = vmatmul.mubr.f32.gmra.mrb[0].mxu0 %v3855
          %v5213 = vpop.f32.mrb[0].mxu0
          %v5214 = vadd.f32 0.0, %v5213
          %v5215 = vpop.f32.mrb[0].mxu0
          %5216 = vmatprep.mubr.f32.mxu0 0.0
          %5217 = vmatmul.mubr.f32.gmra.mrb[0].mxu0 %v3856
          %v5218 = vpop.f32.mrb[0].mxu0
          %v5219 = vadd.f32 0.0, %v5218
          %v5220 = vpop.f32.mrb[0].mxu0
          %5221 = vmatprep.mubr.f32.mxu0 0.0
          %5222 = vmatmul.mubr.f32.gmra.mrb[0].mxu0 %v3857
          %v5223 = vpop.f32.mrb[0].mxu0
          %v5224 = vadd.f32 0.0, %v5223
          %v5225 = vpop.f32.mrb[0].mxu0
          %5226 = vmatprep.mubr.f32.mxu0 0.0
          %5227 = vmatmul.mubr.f32.gmra.mrb[0].mxu0 %v3858
          %v5228 = vpop.f32.mrb[0].mxu0
          %v5229 = vadd.f32 0.0, %v5228
          %v5230 = vpop.f32.mrb[0].mxu0
          %5231 = vmatprep.mubr.f32.mxu0 0.0
          %5232 = vmatmul.mubr.f32.gmra.mrb[0].mxu0 %v3859
          %v5233 = vpop.f32.mrb[0].mxu0
          %v5234 = vadd.f32 0.0, %v5233
          %v5235 = vpop.f32.mrb[0].mxu0
          %5236 = vmatprep.mubr.f32.mxu0 0.0
          %5237 = vmatmul.mubr.f32.gmra.mrb[0].mxu0 %v3860
          %v5238 = vpop.f32.mrb[0].mxu0
          %v5239 = vadd.f32 0.0, %v5238
          %v5240 = vpop.f32.mrb[0].mxu0
          %5241 = vmatprep.mubr.f32.mxu0 0.0
          %5242 = vmatmul.mubr.f32.gmra.mrb[0].mxu0 %v3861
          %v5243 = vpop.f32.mrb[0].mxu0
          %v5244 = vadd.f32 0.0, %v5243
          %v5245 = vpop.f32.mrb[0].mxu0
          %5246 = vmatprep.mubr.f32.mxu0 0.0
          %5247 = vmatmul.mubr.f32.gmra.mrb[0].mxu0 %v3862
          %v5248 = vpop.f32.mrb[0].mxu0
          %v5249 = vadd.f32 0.0, %v5248
          %v5250 = vpop.f32.mrb[0].mxu0
          %5251 = vmatprep.mubr.f32.mxu0 0.0
          %5252 = vmatmul.mubr.f32.gmra.mrb[0].mxu0 %v3863
          %v5253 = vpop.f32.mrb[0].mxu0
          %v5254 = vadd.f32 0.0, %v5253
          %v5255 = vpop.f32.mrb[0].mxu0
          %5256 = vmatprep.mubr.f32.mxu0 0.0
          %5257 = vmatmul.mubr.f32.gmra.mrb[0].mxu0 %v3864
          %v5258 = vpop.f32.mrb[0].mxu0
          %v5259 = vadd.f32 0.0, %v5258
          %v5260 = vpop.f32.mrb[0].mxu0
          %5261 = vmatprep.mubr.f32.mxu0 0.0
          %5262 = vmatmul.mubr.f32.gmra.mrb[0].mxu0 %v3865
          %v5263 = vpop.f32.mrb[0].mxu0
          %v5264 = vadd.f32 0.0, %v5263
          %v5265 = vpop.f32.mrb[0].mxu0
          %5266 = vmatprep.mubr.f32.mxu0 0.0
          %5267 = vmatmul.mubr.f32.gmra.mrb[0].mxu0 %v3866
          %v5268 = vpop.f32.mrb[0].mxu0
          %v5269 = vadd.f32 0.0, %v5268
          %v5270 = vpop.f32.mrb[0].mxu0
          %5271 = vmatprep.mubr.f32.mxu0 0.0
          %5272 = vmatmul.mubr.f32.gmra.mrb[0].mxu0 %v3867
          %v5273 = vpop.f32.mrb[0].mxu0
          %v5274 = vadd.f32 0.0, %v5273
          %v5275 = vpop.f32.mrb[0].mxu0
          %5276 = vmatprep.mubr.f32.mxu0 0.0
          %5277 = vmatmul.mubr.f32.gmra.mrb[0].mxu0 %v3868
          %v5278 = vpop.f32.mrb[0].mxu0
          %v5279 = vadd.f32 0.0, %v5278
          %v5280 = vpop.f32.mrb[0].mxu0
          %5281 = vdwg.mxu0
          %v5282 = vadd.f32 %v4638, %v4769
          %v5283 = vadd.f32 %v4639, %v4774
          %v5284 = vadd.f32 %v4640, %v4779
          %v5285 = vadd.f32 %v4641, %v4784
          %v5286 = vadd.f32 %v4642, %v4789
          %v5287 = vadd.f32 %v4643, %v4794
          %v5288 = vadd.f32 %v4644, %v4799
          %v5289 = vadd.f32 %v4645, %v4804
          %v5290 = vadd.f32 %v4646, %v4809
          %v5291 = vadd.f32 %v4647, %v4814
          %v5292 = vadd.f32 %v4648, %v4819
          %v5293 = vadd.f32 %v4649, %v4824
          %v5294 = vadd.f32 %v4650, %v4829
          %v5295 = vadd.f32 %v4651, %v4834
          %v5296 = vadd.f32 %v4652, %v4839
          %v5297 = vadd.f32 %v4653, %v4844
          %v5298 = vadd.f32 %v4654, %v4914
          %v5299 = vadd.f32 %v4655, %v4919
          %v5300 = vadd.f32 %v4656, %v4924
          %v5301 = vadd.f32 %v4657, %v4929
          %v5302 = vadd.f32 %v4658, %v4934
          %v5303 = vadd.f32 %v4659, %v4939
          %v5304 = vadd.f32 %v4660, %v4944
          %v5305 = vadd.f32 %v4661, %v4949
          %v5306 = vadd.f32 %v4662, %v4954
          %v5307 = vadd.f32 %v4663, %v4959
          %v5308 = vadd.f32 %v4664, %v4964
          %v5309 = vadd.f32 %v4665, %v4969
          %v5310 = vadd.f32 %v4666, %v4974
          %v5311 = vadd.f32 %v4667, %v4979
          %v5312 = vadd.f32 %v4668, %v4984
          %v5313 = vadd.f32 %v4669, %v4989
          %v5314 = vadd.f32 %v4670, %v5059
          %v5315 = vadd.f32 %v4671, %v5064
          %v5316 = vadd.f32 %v4672, %v5069
          %v5317 = vadd.f32 %v4673, %v5074
          %v5318 = vadd.f32 %v4674, %v5079
          %v5319 = vadd.f32 %v4675, %v5084
          %v5320 = vadd.f32 %v4676, %v5089
          %v5321 = vadd.f32 %v4677, %v5094
          %v5322 = vadd.f32 %v4678, %v5099
          %v5323 = vadd.f32 %v4679, %v5104
          %v5324 = vadd.f32 %v4680, %v5109
          %v5325 = vadd.f32 %v4681, %v5114
          %v5326 = vadd.f32 %v4682, %v5119
          %v5327 = vadd.f32 %v4683, %v5124
          %v5328 = vadd.f32 %v4684, %v5129
          %v5329 = vadd.f32 %v4685, %v5134
          %v5330 = vadd.f32 %v4686, %v5204
          %v5331 = vadd.f32 %v4687, %v5209
          %v5332 = vadd.f32 %v4688, %v5214
          %v5333 = vadd.f32 %v4689, %v5219
          %v5334 = vadd.f32 %v4690, %v5224
          %v5335 = vadd.f32 %v4691, %v5229
          %v5336 = vadd.f32 %v4692, %v5234
          %v5337 = vadd.f32 %v4693, %v5239
          %v5338 = vadd.f32 %v4694, %v5244
          %v5339 = vadd.f32 %v4695, %v5249
          %v5340 = vadd.f32 %v4696, %v5254
          %v5341 = vadd.f32 %v4697, %v5259
          %v5342 = vadd.f32 %v4698, %v5264
          %v5343 = vadd.f32 %v4699, %v5269
          %v5344 = vadd.f32 %v4700, %v5274
          %v5345 = vadd.f32 %v4701, %v5279
          %5346 = vst.msk [vmem:[#allocation4] sm:$0xff] %vm1626, %v5282
          %5347 = vst.msk [vmem:[#allocation4 + $0x8] sm:$0xff] %vm1626, %v5283
          %5348 = vst.msk [vmem:[#allocation4 + $0x10] sm:$0xff] %vm1626, %v5284
          %5349 = vst.msk [vmem:[#allocation4 + $0x18] sm:$0xff] %vm1626, %v5285
          %5350 = vst.msk [vmem:[#allocation4 + $0x20] sm:$0xff] %vm1626, %v5286
          %5351 = vst.msk [vmem:[#allocation4 + $0x28] sm:$0xff] %vm1626, %v5287
          %5352 = vst.msk [vmem:[#allocation4 + $0x30] sm:$0xff] %vm1626, %v5288
          %5353 = vst.msk [vmem:[#allocation4 + $0x38] sm:$0xff] %vm1626, %v5289
          %5354 = vst.msk [vmem:[#allocation4 + $0x40] sm:$0xff] %vm1626, %v5290
          %5355 = vst.msk [vmem:[#allocation4 + $0x48] sm:$0xff] %vm1626, %v5291
          %5356 = vst.msk [vmem:[#allocation4 + $0x50] sm:$0xff] %vm1626, %v5292
          %5357 = vst.msk [vmem:[#allocation4 + $0x58] sm:$0xff] %vm1626, %v5293
          %5358 = vst.msk [vmem:[#allocation4 + $0x60] sm:$0xff] %vm1626, %v5294
          %5359 = vst.msk [vmem:[#allocation4 + $0x68] sm:$0xff] %vm1626, %v5295
          %5360 = vst.msk [vmem:[#allocation4 + $0x70] sm:$0xff] %vm1626, %v5296
          %5361 = vst.msk [vmem:[#allocation4 + $0x78] sm:$0xff] %vm1626, %v5297
          %5362 = vst.msk [vmem:[#allocation4 + $0x80] sm:$0xff] %vm1626, %v5298
          %5363 = vst.msk [vmem:[#allocation4 + $0x88] sm:$0xff] %vm1626, %v5299
          %5364 = vst.msk [vmem:[#allocation4 + $0x90] sm:$0xff] %vm1626, %v5300
          %5365 = vst.msk [vmem:[#allocation4 + $0x98] sm:$0xff] %vm1626, %v5301
          %5366 = vst.msk [vmem:[#allocation4 + $0xa0] sm:$0xff] %vm1626, %v5302
          %5367 = vst.msk [vmem:[#allocation4 + $0xa8] sm:$0xff] %vm1626, %v5303
          %5368 = vst.msk [vmem:[#allocation4 + $0xb0] sm:$0xff] %vm1626, %v5304
          %5369 = vst.msk [vmem:[#allocation4 + $0xb8] sm:$0xff] %vm1626, %v5305
          %5370 = vst.msk [vmem:[#allocation4 + $0xc0] sm:$0xff] %vm1626, %v5306
          %5371 = vst.msk [vmem:[#allocation4 + $0xc8] sm:$0xff] %vm1626, %v5307
          %5372 = vst.msk [vmem:[#allocation4 + $0xd0] sm:$0xff] %vm1626, %v5308
          %5373 = vst.msk [vmem:[#allocation4 + $0xd8] sm:$0xff] %vm1626, %v5309
          %5374 = vst.msk [vmem:[#allocation4 + $0xe0] sm:$0xff] %vm1626, %v5310
          %5375 = vst.msk [vmem:[#allocation4 + $0xe8] sm:$0xff] %vm1626, %v5311
          %5376 = vst.msk [vmem:[#allocation4 + $0xf0] sm:$0xff] %vm1626, %v5312
          %5377 = vst.msk [vmem:[#allocation4 + $0xf8] sm:$0xff] %vm1626, %v5313
          %5378 = vst.msk [vmem:[#allocation4 + $0x100] sm:$0xff] %vm1626, %v5314
          %5379 = vst.msk [vmem:[#allocation4 + $0x108] sm:$0xff] %vm1626, %v5315
          %5380 = vst.msk [vmem:[#allocation4 + $0x110] sm:$0xff] %vm1626, %v5316
          %5381 = vst.msk [vmem:[#allocation4 + $0x118] sm:$0xff] %vm1626, %v5317
          %5382 = vst.msk [vmem:[#allocation4 + $0x120] sm:$0xff] %vm1626, %v5318
          %5383 = vst.msk [vmem:[#allocation4 + $0x128] sm:$0xff] %vm1626, %v5319
          %5384 = vst.msk [vmem:[#allocation4 + $0x130] sm:$0xff] %vm1626, %v5320
          %5385 = vst.msk [vmem:[#allocation4 + $0x138] sm:$0xff] %vm1626, %v5321
          %5386 = vst.msk [vmem:[#allocation4 + $0x140] sm:$0xff] %vm1626, %v5322
          %5387 = vst.msk [vmem:[#allocation4 + $0x148] sm:$0xff] %vm1626, %v5323
          %5388 = vst.msk [vmem:[#allocation4 + $0x150] sm:$0xff] %vm1626, %v5324
          %5389 = vst.msk [vmem:[#allocation4 + $0x158] sm:$0xff] %vm1626, %v5325
          %5390 = vst.msk [vmem:[#allocation4 + $0x160] sm:$0xff] %vm1626, %v5326
          %5391 = vst.msk [vmem:[#allocation4 + $0x168] sm:$0xff] %vm1626, %v5327
          %5392 = vst.msk [vmem:[#allocation4 + $0x170] sm:$0xff] %vm1626, %v5328
          %5393 = vst.msk [vmem:[#allocation4 + $0x178] sm:$0xff] %vm1626, %v5329
          %5394 = vst.msk [vmem:[#allocation4 + $0x180] sm:$0xff] %vm1626, %v5330
          %5395 = vst.msk [vmem:[#allocation4 + $0x188] sm:$0xff] %vm1626, %v5331
          %5396 = vst.msk [vmem:[#allocation4 + $0x190] sm:$0xff] %vm1626, %v5332
          %5397 = vst.msk [vmem:[#allocation4 + $0x198] sm:$0xff] %vm1626, %v5333
          %5398 = vst.msk [vmem:[#allocation4 + $0x1a0] sm:$0xff] %vm1626, %v5334
          %5399 = vst.msk [vmem:[#allocation4 + $0x1a8] sm:$0xff] %vm1626, %v5335
          %5400 = vst.msk [vmem:[#allocation4 + $0x1b0] sm:$0xff] %vm1626, %v5336
          %5401 = vst.msk [vmem:[#allocation4 + $0x1b8] sm:$0xff] %vm1626, %v5337
          %5402 = vst.msk [vmem:[#allocation4 + $0x1c0] sm:$0xff] %vm1626, %v5338
          %5403 = vst.msk [vmem:[#allocation4 + $0x1c8] sm:$0xff] %vm1626, %v5339
          %5404 = vst.msk [vmem:[#allocation4 + $0x1d0] sm:$0xff] %vm1626, %v5340
          %5405 = vst.msk [vmem:[#allocation4 + $0x1d8] sm:$0xff] %vm1626, %v5341
          %5406 = vst.msk [vmem:[#allocation4 + $0x1e0] sm:$0xff] %vm1626, %v5342
          %5407 = vst.msk [vmem:[#allocation4 + $0x1e8] sm:$0xff] %vm1626, %v5343
          %5408 = vst.msk [vmem:[#allocation4 + $0x1f0] sm:$0xff] %vm1626, %v5344
          %5409 = vst.msk [vmem:[#allocation4 + $0x1f8] sm:$0xff] %vm1626, %v5345
          %5410 = vst.msk [vmem:[#allocation2] sm:$0xff] %vm4189, %v3037
          %5411 = vst.msk [vmem:[#allocation2 + $0x8] sm:$0xff] %vm4189, %v3038
          %5412 = vst.msk [vmem:[#allocation2 + $0x10] sm:$0xff] %vm4189, %v3039
          %5413 = vst.msk [vmem:[#allocation2 + $0x18] sm:$0xff] %vm4189, %v3040
          %5414 = vst.msk [vmem:[#allocation2 + $0x20] sm:$0xff] %vm4189, %v3041
          %5415 = vst.msk [vmem:[#allocation2 + $0x28] sm:$0xff] %vm4189, %v3042
          %5416 = vst.msk [vmem:[#allocation2 + $0x30] sm:$0xff] %vm4189, %v3043
          %5417 = vst.msk [vmem:[#allocation2 + $0x38] sm:$0xff] %vm4189, %v3044
          %5418 = vst.msk [vmem:[#allocation2 + $0x40] sm:$0xff] %vm4189, %v3045
          %5419 = vst.msk [vmem:[#allocation2 + $0x48] sm:$0xff] %vm4189, %v3046
          %5420 = vst.msk [vmem:[#allocation2 + $0x50] sm:$0xff] %vm4189, %v3047
          %5421 = vst.msk [vmem:[#allocation2 + $0x58] sm:$0xff] %vm4189, %v3048
          %5422 = vst.msk [vmem:[#allocation2 + $0x60] sm:$0xff] %vm4189, %v3049
          %5423 = vst.msk [vmem:[#allocation2 + $0x68] sm:$0xff] %vm4189, %v3050
          %5424 = vst.msk [vmem:[#allocation2 + $0x70] sm:$0xff] %vm4189, %v3051
          %5425 = vst.msk [vmem:[#allocation2 + $0x78] sm:$0xff] %vm4189, %v3052
          %5426 = vst.msk [vmem:[#allocation2 + $0x80] sm:$0xff] %vm4189, %v3053
          %5427 = vst.msk [vmem:[#allocation2 + $0x88] sm:$0xff] %vm4189, %v3054
          %5428 = vst.msk [vmem:[#allocation2 + $0x90] sm:$0xff] %vm4189, %v3055
          %5429 = vst.msk [vmem:[#allocation2 + $0x98] sm:$0xff] %vm4189, %v3056
          %5430 = vst.msk [vmem:[#allocation2 + $0xa0] sm:$0xff] %vm4189, %v3057
          %5431 = vst.msk [vmem:[#allocation2 + $0xa8] sm:$0xff] %vm4189, %v3058
          %5432 = vst.msk [vmem:[#allocation2 + $0xb0] sm:$0xff] %vm4189, %v3059
          %5433 = vst.msk [vmem:[#allocation2 + $0xb8] sm:$0xff] %vm4189, %v3060
          %5434 = vst.msk [vmem:[#allocation2 + $0xc0] sm:$0xff] %vm4189, %v3061
          %5435 = vst.msk [vmem:[#allocation2 + $0xc8] sm:$0xff] %vm4189, %v3062
          %5436 = vst.msk [vmem:[#allocation2 + $0xd0] sm:$0xff] %vm4189, %v3063
          %5437 = vst.msk [vmem:[#allocation2 + $0xd8] sm:$0xff] %vm4189, %v3064
          %5438 = vst.msk [vmem:[#allocation2 + $0xe0] sm:$0xff] %vm4189, %v3065
          %5439 = vst.msk [vmem:[#allocation2 + $0xe8] sm:$0xff] %vm4189, %v3066
          %5440 = vst.msk [vmem:[#allocation2 + $0xf0] sm:$0xff] %vm4189, %v3067
          %5441 = vst.msk [vmem:[#allocation2 + $0xf8] sm:$0xff] %vm4189, %v3068
          %5442 = vst.msk [vmem:[#allocation2 + $0x100] sm:$0xff] %vm4189, %v3069
          %5443 = vst.msk [vmem:[#allocation2 + $0x108] sm:$0xff] %vm4189, %v3070
          %5444 = vst.msk [vmem:[#allocation2 + $0x110] sm:$0xff] %vm4189, %v3071
          %5445 = vst.msk [vmem:[#allocation2 + $0x118] sm:$0xff] %vm4189, %v3072
          %5446 = vst.msk [vmem:[#allocation2 + $0x120] sm:$0xff] %vm4189, %v3073
          %5447 = vst.msk [vmem:[#allocation2 + $0x128] sm:$0xff] %vm4189, %v3074
          %5448 = vst.msk [vmem:[#allocation2 + $0x130] sm:$0xff] %vm4189, %v3075
          %5449 = vst.msk [vmem:[#allocation2 + $0x138] sm:$0xff] %vm4189, %v3076
          %5450 = vst.msk [vmem:[#allocation2 + $0x140] sm:$0xff] %vm4189, %v3077
          %5451 = vst.msk [vmem:[#allocation2 + $0x148] sm:$0xff] %vm4189, %v3078
          %5452 = vst.msk [vmem:[#allocation2 + $0x150] sm:$0xff] %vm4189, %v3079
          %5453 = vst.msk [vmem:[#allocation2 + $0x158] sm:$0xff] %vm4189, %v3080
          %5454 = vst.msk [vmem:[#allocation2 + $0x160] sm:$0xff] %vm4189, %v3081
          %5455 = vst.msk [vmem:[#allocation2 + $0x168] sm:$0xff] %vm4189, %v3082
          %5456 = vst.msk [vmem:[#allocation2 + $0x170] sm:$0xff] %vm4189, %v3083
          %5457 = vst.msk [vmem:[#allocation2 + $0x178] sm:$0xff] %vm4189, %v3084
          %5458 = vst.msk [vmem:[#allocation2 + $0x180] sm:$0xff] %vm4189, %v3085
          %5459 = vst.msk [vmem:[#allocation2 + $0x188] sm:$0xff] %vm4189, %v3086
          %5460 = vst.msk [vmem:[#allocation2 + $0x190] sm:$0xff] %vm4189, %v3087
          %5461 = vst.msk [vmem:[#allocation2 + $0x198] sm:$0xff] %vm4189, %v3088
          %5462 = vst.msk [vmem:[#allocation2 + $0x1a0] sm:$0xff] %vm4189, %v3089
          %5463 = vst.msk [vmem:[#allocation2 + $0x1a8] sm:$0xff] %vm4189, %v3090
          %5464 = vst.msk [vmem:[#allocation2 + $0x1b0] sm:$0xff] %vm4189, %v3091
          %5465 = vst.msk [vmem:[#allocation2 + $0x1b8] sm:$0xff] %vm4189, %v3092
          %5466 = vst.msk [vmem:[#allocation2 + $0x1c0] sm:$0xff] %vm4189, %v3093
          %5467 = vst.msk [vmem:[#allocation2 + $0x1c8] sm:$0xff] %vm4189, %v3094
          %5468 = vst.msk [vmem:[#allocation2 + $0x1d0] sm:$0xff] %vm4189, %v3095
          %5469 = vst.msk [vmem:[#allocation2 + $0x1d8] sm:$0xff] %vm4189, %v3096
          %5470 = vst.msk [vmem:[#allocation2 + $0x1e0] sm:$0xff] %vm4189, %v3097
          %5471 = vst.msk [vmem:[#allocation2 + $0x1e8] sm:$0xff] %vm4189, %v3098
          %5472 = vst.msk [vmem:[#allocation2 + $0x1f0] sm:$0xff] %vm4189, %v3099
          %5473 = vst.msk [vmem:[#allocation2 + $0x1f8] sm:$0xff] %vm4189, %v3100
        $region166: #{tpu_custom_call.1} parent=141 // pred_fallthru
          _
        %p5474 = scmp.eq.s32.totalorder %s26, 1
        // Predicated region
        $region167: #{tpu_custom_call.1} parent=141 // pred_check
          %p5475 = pneg %p5474
        $region168: #{tpu_custom_call.1} parent=141 // pred_check_branch
          %5477 = sbr.rel (%p5475) target = $region170
        $region169: #{tpu_custom_call.1} parent=141 // pred_region
          %v5478 = vld [vmem:[#allocation3] sm:$0xff]
          %v5479 = vld [vmem:[#allocation3 + $0x8] sm:$0xff]
          %v5480 = vld [vmem:[#allocation3 + $0x10] sm:$0xff]
          %v5481 = vld [vmem:[#allocation3 + $0x18] sm:$0xff]
          %v5482 = vld [vmem:[#allocation3 + $0x20] sm:$0xff]
          %v5483 = vld [vmem:[#allocation3 + $0x28] sm:$0xff]
          %v5484 = vld [vmem:[#allocation3 + $0x30] sm:$0xff]
          %v5485 = vld [vmem:[#allocation3 + $0x38] sm:$0xff]
          %v5486 = vld [vmem:[#allocation3 + $0x40] sm:$0xff]
          %v5487 = vld [vmem:[#allocation3 + $0x48] sm:$0xff]
          %v5488 = vld [vmem:[#allocation3 + $0x50] sm:$0xff]
          %v5489 = vld [vmem:[#allocation3 + $0x58] sm:$0xff]
          %v5490 = vld [vmem:[#allocation3 + $0x60] sm:$0xff]
          %v5491 = vld [vmem:[#allocation3 + $0x68] sm:$0xff]
          %v5492 = vld [vmem:[#allocation3 + $0x70] sm:$0xff]
          %v5493 = vld [vmem:[#allocation3 + $0x78] sm:$0xff]
          %v5494 = vld [vmem:[#allocation3 + $0x80] sm:$0xff]
          %v5495 = vld [vmem:[#allocation3 + $0x88] sm:$0xff]
          %v5496 = vld [vmem:[#allocation3 + $0x90] sm:$0xff]
          %v5497 = vld [vmem:[#allocation3 + $0x98] sm:$0xff]
          %v5498 = vld [vmem:[#allocation3 + $0xa0] sm:$0xff]
          %v5499 = vld [vmem:[#allocation3 + $0xa8] sm:$0xff]
          %v5500 = vld [vmem:[#allocation3 + $0xb0] sm:$0xff]
          %v5501 = vld [vmem:[#allocation3 + $0xb8] sm:$0xff]
          %v5502 = vld [vmem:[#allocation3 + $0xc0] sm:$0xff]
          %v5503 = vld [vmem:[#allocation3 + $0xc8] sm:$0xff]
          %v5504 = vld [vmem:[#allocation3 + $0xd0] sm:$0xff]
          %v5505 = vld [vmem:[#allocation3 + $0xd8] sm:$0xff]
          %v5506 = vld [vmem:[#allocation3 + $0xe0] sm:$0xff]
          %v5507 = vld [vmem:[#allocation3 + $0xe8] sm:$0xff]
          %v5508 = vld [vmem:[#allocation3 + $0xf0] sm:$0xff]
          %v5509 = vld [vmem:[#allocation3 + $0xf8] sm:$0xff]
          %v5510 = vld [vmem:[#allocation3 + $0x100] sm:$0xff]
          %v5511 = vld [vmem:[#allocation3 + $0x108] sm:$0xff]
          %v5512 = vld [vmem:[#allocation3 + $0x110] sm:$0xff]
          %v5513 = vld [vmem:[#allocation3 + $0x118] sm:$0xff]
          %v5514 = vld [vmem:[#allocation3 + $0x120] sm:$0xff]
          %v5515 = vld [vmem:[#allocation3 + $0x128] sm:$0xff]
          %v5516 = vld [vmem:[#allocation3 + $0x130] sm:$0xff]
          %v5517 = vld [vmem:[#allocation3 + $0x138] sm:$0xff]
          %v5518 = vld [vmem:[#allocation3 + $0x140] sm:$0xff]
          %v5519 = vld [vmem:[#allocation3 + $0x148] sm:$0xff]
          %v5520 = vld [vmem:[#allocation3 + $0x150] sm:$0xff]
          %v5521 = vld [vmem:[#allocation3 + $0x158] sm:$0xff]
          %v5522 = vld [vmem:[#allocation3 + $0x160] sm:$0xff]
          %v5523 = vld [vmem:[#allocation3 + $0x168] sm:$0xff]
          %v5524 = vld [vmem:[#allocation3 + $0x170] sm:$0xff]
          %v5525 = vld [vmem:[#allocation3 + $0x178] sm:$0xff]
          %v5526 = vld [vmem:[#allocation3 + $0x180] sm:$0xff]
          %v5527 = vld [vmem:[#allocation3 + $0x188] sm:$0xff]
          %v5528 = vld [vmem:[#allocation3 + $0x190] sm:$0xff]
          %v5529 = vld [vmem:[#allocation3 + $0x198] sm:$0xff]
          %v5530 = vld [vmem:[#allocation3 + $0x1a0] sm:$0xff]
          %v5531 = vld [vmem:[#allocation3 + $0x1a8] sm:$0xff]
          %v5532 = vld [vmem:[#allocation3 + $0x1b0] sm:$0xff]
          %v5533 = vld [vmem:[#allocation3 + $0x1b8] sm:$0xff]
          %v5534 = vld [vmem:[#allocation3 + $0x1c0] sm:$0xff]
          %v5535 = vld [vmem:[#allocation3 + $0x1c8] sm:$0xff]
          %v5536 = vld [vmem:[#allocation3 + $0x1d0] sm:$0xff]
          %v5537 = vld [vmem:[#allocation3 + $0x1d8] sm:$0xff]
          %v5538 = vld [vmem:[#allocation3 + $0x1e0] sm:$0xff]
          %v5539 = vld [vmem:[#allocation3 + $0x1e8] sm:$0xff]
          %v5540 = vld [vmem:[#allocation3 + $0x1f0] sm:$0xff]
          %v5541 = vld [vmem:[#allocation3 + $0x1f8] sm:$0xff]
          %v5542 = vrcp.pop %v5478
          %v5543 = vrcp.pop %v5479
          %v5544 = vrcp.pop %v5480
          %v5545 = vrcp.pop %v5481
          %v5546 = vrcp.pop %v5482
          %v5547 = vrcp.pop %v5483
          %v5548 = vrcp.pop %v5484
          %v5549 = vrcp.pop %v5485
          %v5550 = vrcp.pop %v5486
          %v5551 = vrcp.pop %v5487
          %v5552 = vrcp.pop %v5488
          %v5553 = vrcp.pop %v5489
          %v5554 = vrcp.pop %v5490
          %v5555 = vrcp.pop %v5491
          %v5556 = vrcp.pop %v5492
          %v5557 = vrcp.pop %v5493
          %v5558 = vrcp.pop %v5494
          %v5559 = vrcp.pop %v5495
          %v5560 = vrcp.pop %v5496
          %v5561 = vrcp.pop %v5497
          %v5562 = vrcp.pop %v5498
          %v5563 = vrcp.pop %v5499
          %v5564 = vrcp.pop %v5500
          %v5565 = vrcp.pop %v5501
          %v5566 = vrcp.pop %v5502
          %v5567 = vrcp.pop %v5503
          %v5568 = vrcp.pop %v5504
          %v5569 = vrcp.pop %v5505
          %v5570 = vrcp.pop %v5506
          %v5571 = vrcp.pop %v5507
          %v5572 = vrcp.pop %v5508
          %v5573 = vrcp.pop %v5509
          %v5574 = vrcp.pop %v5510
          %v5575 = vrcp.pop %v5511
          %v5576 = vrcp.pop %v5512
          %v5577 = vrcp.pop %v5513
          %v5578 = vrcp.pop %v5514
          %v5579 = vrcp.pop %v5515
          %v5580 = vrcp.pop %v5516
          %v5581 = vrcp.pop %v5517
          %v5582 = vrcp.pop %v5518
          %v5583 = vrcp.pop %v5519
          %v5584 = vrcp.pop %v5520
          %v5585 = vrcp.pop %v5521
          %v5586 = vrcp.pop %v5522
          %v5587 = vrcp.pop %v5523
          %v5588 = vrcp.pop %v5524
          %v5589 = vrcp.pop %v5525
          %v5590 = vrcp.pop %v5526
          %v5591 = vrcp.pop %v5527
          %v5592 = vrcp.pop %v5528
          %v5593 = vrcp.pop %v5529
          %v5594 = vrcp.pop %v5530
          %v5595 = vrcp.pop %v5531
          %v5596 = vrcp.pop %v5532
          %v5597 = vrcp.pop %v5533
          %v5598 = vrcp.pop %v5534
          %v5599 = vrcp.pop %v5535
          %v5600 = vrcp.pop %v5536
          %v5601 = vrcp.pop %v5537
          %v5602 = vrcp.pop %v5538
          %v5603 = vrcp.pop %v5539
          %v5604 = vrcp.pop %v5540
          %v5605 = vrcp.pop %v5541
          %v5606 = vld [vmem:[#allocation4] sm:$0xff]
          %v5607 = vld [vmem:[#allocation4 + $0x8] sm:$0xff]
          %v5608 = vld [vmem:[#allocation4 + $0x10] sm:$0xff]
          %v5609 = vld [vmem:[#allocation4 + $0x18] sm:$0xff]
          %v5610 = vld [vmem:[#allocation4 + $0x20] sm:$0xff]
          %v5611 = vld [vmem:[#allocation4 + $0x28] sm:$0xff]
          %v5612 = vld [vmem:[#allocation4 + $0x30] sm:$0xff]
          %v5613 = vld [vmem:[#allocation4 + $0x38] sm:$0xff]
          %v5614 = vld [vmem:[#allocation4 + $0x40] sm:$0xff]
          %v5615 = vld [vmem:[#allocation4 + $0x48] sm:$0xff]
          %v5616 = vld [vmem:[#allocation4 + $0x50] sm:$0xff]
          %v5617 = vld [vmem:[#allocation4 + $0x58] sm:$0xff]
          %v5618 = vld [vmem:[#allocation4 + $0x60] sm:$0xff]
          %v5619 = vld [vmem:[#allocation4 + $0x68] sm:$0xff]
          %v5620 = vld [vmem:[#allocation4 + $0x70] sm:$0xff]
          %v5621 = vld [vmem:[#allocation4 + $0x78] sm:$0xff]
          %v5622 = vld [vmem:[#allocation4 + $0x80] sm:$0xff]
          %v5623 = vld [vmem:[#allocation4 + $0x88] sm:$0xff]
          %v5624 = vld [vmem:[#allocation4 + $0x90] sm:$0xff]
          %v5625 = vld [vmem:[#allocation4 + $0x98] sm:$0xff]
          %v5626 = vld [vmem:[#allocation4 + $0xa0] sm:$0xff]
          %v5627 = vld [vmem:[#allocation4 + $0xa8] sm:$0xff]
          %v5628 = vld [vmem:[#allocation4 + $0xb0] sm:$0xff]
          %v5629 = vld [vmem:[#allocation4 + $0xb8] sm:$0xff]
          %v5630 = vld [vmem:[#allocation4 + $0xc0] sm:$0xff]
          %v5631 = vld [vmem:[#allocation4 + $0xc8] sm:$0xff]
          %v5632 = vld [vmem:[#allocation4 + $0xd0] sm:$0xff]
          %v5633 = vld [vmem:[#allocation4 + $0xd8] sm:$0xff]
          %v5634 = vld [vmem:[#allocation4 + $0xe0] sm:$0xff]
          %v5635 = vld [vmem:[#allocation4 + $0xe8] sm:$0xff]
          %v5636 = vld [vmem:[#allocation4 + $0xf0] sm:$0xff]
          %v5637 = vld [vmem:[#allocation4 + $0xf8] sm:$0xff]
          %v5638 = vld [vmem:[#allocation4 + $0x100] sm:$0xff]
          %v5639 = vld [vmem:[#allocation4 + $0x108] sm:$0xff]
          %v5640 = vld [vmem:[#allocation4 + $0x110] sm:$0xff]
          %v5641 = vld [vmem:[#allocation4 + $0x118] sm:$0xff]
          %v5642 = vld [vmem:[#allocation4 + $0x120] sm:$0xff]
          %v5643 = vld [vmem:[#allocation4 + $0x128] sm:$0xff]
          %v5644 = vld [vmem:[#allocation4 + $0x130] sm:$0xff]
          %v5645 = vld [vmem:[#allocation4 + $0x138] sm:$0xff]
          %v5646 = vld [vmem:[#allocation4 + $0x140] sm:$0xff]
          %v5647 = vld [vmem:[#allocation4 + $0x148] sm:$0xff]
          %v5648 = vld [vmem:[#allocation4 + $0x150] sm:$0xff]
          %v5649 = vld [vmem:[#allocation4 + $0x158] sm:$0xff]
          %v5650 = vld [vmem:[#allocation4 + $0x160] sm:$0xff]
          %v5651 = vld [vmem:[#allocation4 + $0x168] sm:$0xff]
          %v5652 = vld [vmem:[#allocation4 + $0x170] sm:$0xff]
          %v5653 = vld [vmem:[#allocation4 + $0x178] sm:$0xff]
          %v5654 = vld [vmem:[#allocation4 + $0x180] sm:$0xff]
          %v5655 = vld [vmem:[#allocation4 + $0x188] sm:$0xff]
          %v5656 = vld [vmem:[#allocation4 + $0x190] sm:$0xff]
          %v5657 = vld [vmem:[#allocation4 + $0x198] sm:$0xff]
          %v5658 = vld [vmem:[#allocation4 + $0x1a0] sm:$0xff]
          %v5659 = vld [vmem:[#allocation4 + $0x1a8] sm:$0xff]
          %v5660 = vld [vmem:[#allocation4 + $0x1b0] sm:$0xff]
          %v5661 = vld [vmem:[#allocation4 + $0x1b8] sm:$0xff]
          %v5662 = vld [vmem:[#allocation4 + $0x1c0] sm:$0xff]
          %v5663 = vld [vmem:[#allocation4 + $0x1c8] sm:$0xff]
          %v5664 = vld [vmem:[#allocation4 + $0x1d0] sm:$0xff]
          %v5665 = vld [vmem:[#allocation4 + $0x1d8] sm:$0xff]
          %v5666 = vld [vmem:[#allocation4 + $0x1e0] sm:$0xff]
          %v5667 = vld [vmem:[#allocation4 + $0x1e8] sm:$0xff]
          %v5668 = vld [vmem:[#allocation4 + $0x1f0] sm:$0xff]
          %v5669 = vld [vmem:[#allocation4 + $0x1f8] sm:$0xff]
          %5671 = vset.pattern.permute.xlu0 0
          %5672 = vperm.xlu0 %5671, %v5542
          %v5673 = vpop.permute.xlu0 %5672
          %5676 = vset.pattern.permute.xlu0 0
          %5677 = vperm.xlu0 %5676, %v5543
          %v5678 = vpop.permute.xlu0 %5677
          %5681 = vset.pattern.permute.xlu0 0
          %5682 = vperm.xlu0 %5681, %v5544
          %v5683 = vpop.permute.xlu0 %5682
          %5686 = vset.pattern.permute.xlu0 0
          %5687 = vperm.xlu0 %5686, %v5545
          %v5688 = vpop.permute.xlu0 %5687
          %5691 = vset.pattern.permute.xlu0 0
          %5692 = vperm.xlu0 %5691, %v5546
          %v5693 = vpop.permute.xlu0 %5692
          %5696 = vset.pattern.permute.xlu0 0
          %5697 = vperm.xlu0 %5696, %v5547
          %v5698 = vpop.permute.xlu0 %5697
          %5701 = vset.pattern.permute.xlu0 0
          %5702 = vperm.xlu0 %5701, %v5548
          %v5703 = vpop.permute.xlu0 %5702
          %5706 = vset.pattern.permute.xlu0 0
          %5707 = vperm.xlu0 %5706, %v5549
          %v5708 = vpop.permute.xlu0 %5707
          %5711 = vset.pattern.permute.xlu0 0
          %5712 = vperm.xlu0 %5711, %v5550
          %v5713 = vpop.permute.xlu0 %5712
          %5716 = vset.pattern.permute.xlu0 0
          %5717 = vperm.xlu0 %5716, %v5551
          %v5718 = vpop.permute.xlu0 %5717
          %5721 = vset.pattern.permute.xlu0 0
          %5722 = vperm.xlu0 %5721, %v5552
          %v5723 = vpop.permute.xlu0 %5722
          %5726 = vset.pattern.permute.xlu0 0
          %5727 = vperm.xlu0 %5726, %v5553
          %v5728 = vpop.permute.xlu0 %5727
          %5731 = vset.pattern.permute.xlu0 0
          %5732 = vperm.xlu0 %5731, %v5554
          %v5733 = vpop.permute.xlu0 %5732
          %5736 = vset.pattern.permute.xlu0 0
          %5737 = vperm.xlu0 %5736, %v5555
          %v5738 = vpop.permute.xlu0 %5737
          %5741 = vset.pattern.permute.xlu0 0
          %5742 = vperm.xlu0 %5741, %v5556
          %v5743 = vpop.permute.xlu0 %5742
          %5746 = vset.pattern.permute.xlu0 0
          %5747 = vperm.xlu0 %5746, %v5557
          %v5748 = vpop.permute.xlu0 %5747
          %5751 = vset.pattern.permute.xlu0 0
          %5752 = vperm.xlu0 %5751, %v5558
          %v5753 = vpop.permute.xlu0 %5752
          %5756 = vset.pattern.permute.xlu0 0
          %5757 = vperm.xlu0 %5756, %v5559
          %v5758 = vpop.permute.xlu0 %5757
          %5761 = vset.pattern.permute.xlu0 0
          %5762 = vperm.xlu0 %5761, %v5560
          %v5763 = vpop.permute.xlu0 %5762
          %5766 = vset.pattern.permute.xlu0 0
          %5767 = vperm.xlu0 %5766, %v5561
          %v5768 = vpop.permute.xlu0 %5767
          %5771 = vset.pattern.permute.xlu0 0
          %5772 = vperm.xlu0 %5771, %v5562
          %v5773 = vpop.permute.xlu0 %5772
          %5776 = vset.pattern.permute.xlu0 0
          %5777 = vperm.xlu0 %5776, %v5563
          %v5778 = vpop.permute.xlu0 %5777
          %5781 = vset.pattern.permute.xlu0 0
          %5782 = vperm.xlu0 %5781, %v5564
          %v5783 = vpop.permute.xlu0 %5782
          %5786 = vset.pattern.permute.xlu0 0
          %5787 = vperm.xlu0 %5786, %v5565
          %v5788 = vpop.permute.xlu0 %5787
          %5791 = vset.pattern.permute.xlu0 0
          %5792 = vperm.xlu0 %5791, %v5566
          %v5793 = vpop.permute.xlu0 %5792
          %5796 = vset.pattern.permute.xlu0 0
          %5797 = vperm.xlu0 %5796, %v5567
          %v5798 = vpop.permute.xlu0 %5797
          %5801 = vset.pattern.permute.xlu0 0
          %5802 = vperm.xlu0 %5801, %v5568
          %v5803 = vpop.permute.xlu0 %5802
          %5806 = vset.pattern.permute.xlu0 0
          %5807 = vperm.xlu0 %5806, %v5569
          %v5808 = vpop.permute.xlu0 %5807
          %5811 = vset.pattern.permute.xlu0 0
          %5812 = vperm.xlu0 %5811, %v5570
          %v5813 = vpop.permute.xlu0 %5812
          %5816 = vset.pattern.permute.xlu0 0
          %5817 = vperm.xlu0 %5816, %v5571
          %v5818 = vpop.permute.xlu0 %5817
          %5821 = vset.pattern.permute.xlu0 0
          %5822 = vperm.xlu0 %5821, %v5572
          %v5823 = vpop.permute.xlu0 %5822
          %5826 = vset.pattern.permute.xlu0 0
          %5827 = vperm.xlu0 %5826, %v5573
          %v5828 = vpop.permute.xlu0 %5827
          %5831 = vset.pattern.permute.xlu0 0
          %5832 = vperm.xlu0 %5831, %v5574
          %v5833 = vpop.permute.xlu0 %5832
          %5836 = vset.pattern.permute.xlu0 0
          %5837 = vperm.xlu0 %5836, %v5575
          %v5838 = vpop.permute.xlu0 %5837
          %5841 = vset.pattern.permute.xlu0 0
          %5842 = vperm.xlu0 %5841, %v5576
          %v5843 = vpop.permute.xlu0 %5842
          %5846 = vset.pattern.permute.xlu0 0
          %5847 = vperm.xlu0 %5846, %v5577
          %v5848 = vpop.permute.xlu0 %5847
          %5851 = vset.pattern.permute.xlu0 0
          %5852 = vperm.xlu0 %5851, %v5578
          %v5853 = vpop.permute.xlu0 %5852
          %5856 = vset.pattern.permute.xlu0 0
          %5857 = vperm.xlu0 %5856, %v5579
          %v5858 = vpop.permute.xlu0 %5857
          %5861 = vset.pattern.permute.xlu0 0
          %5862 = vperm.xlu0 %5861, %v5580
          %v5863 = vpop.permute.xlu0 %5862
          %5866 = vset.pattern.permute.xlu0 0
          %5867 = vperm.xlu0 %5866, %v5581
          %v5868 = vpop.permute.xlu0 %5867
          %5871 = vset.pattern.permute.xlu0 0
          %5872 = vperm.xlu0 %5871, %v5582
          %v5873 = vpop.permute.xlu0 %5872
          %5876 = vset.pattern.permute.xlu0 0
          %5877 = vperm.xlu0 %5876, %v5583
          %v5878 = vpop.permute.xlu0 %5877
          %5881 = vset.pattern.permute.xlu0 0
          %5882 = vperm.xlu0 %5881, %v5584
          %v5883 = vpop.permute.xlu0 %5882
          %5886 = vset.pattern.permute.xlu0 0
          %5887 = vperm.xlu0 %5886, %v5585
          %v5888 = vpop.permute.xlu0 %5887
          %5891 = vset.pattern.permute.xlu0 0
          %5892 = vperm.xlu0 %5891, %v5586
          %v5893 = vpop.permute.xlu0 %5892
          %5896 = vset.pattern.permute.xlu0 0
          %5897 = vperm.xlu0 %5896, %v5587
          %v5898 = vpop.permute.xlu0 %5897
          %5901 = vset.pattern.permute.xlu0 0
          %5902 = vperm.xlu0 %5901, %v5588
          %v5903 = vpop.permute.xlu0 %5902
          %5906 = vset.pattern.permute.xlu0 0
          %5907 = vperm.xlu0 %5906, %v5589
          %v5908 = vpop.permute.xlu0 %5907
          %5911 = vset.pattern.permute.xlu0 0
          %5912 = vperm.xlu0 %5911, %v5590
          %v5913 = vpop.permute.xlu0 %5912
          %5916 = vset.pattern.permute.xlu0 0
          %5917 = vperm.xlu0 %5916, %v5591
          %v5918 = vpop.permute.xlu0 %5917
          %5921 = vset.pattern.permute.xlu0 0
          %5922 = vperm.xlu0 %5921, %v5592
          %v5923 = vpop.permute.xlu0 %5922
          %5926 = vset.pattern.permute.xlu0 0
          %5927 = vperm.xlu0 %5926, %v5593
          %v5928 = vpop.permute.xlu0 %5927
          %5931 = vset.pattern.permute.xlu0 0
          %5932 = vperm.xlu0 %5931, %v5594
          %v5933 = vpop.permute.xlu0 %5932
          %5936 = vset.pattern.permute.xlu0 0
          %5937 = vperm.xlu0 %5936, %v5595
          %v5938 = vpop.permute.xlu0 %5937
          %5941 = vset.pattern.permute.xlu0 0
          %5942 = vperm.xlu0 %5941, %v5596
          %v5943 = vpop.permute.xlu0 %5942
          %5946 = vset.pattern.permute.xlu0 0
          %5947 = vperm.xlu0 %5946, %v5597
          %v5948 = vpop.permute.xlu0 %5947
          %5951 = vset.pattern.permute.xlu0 0
          %5952 = vperm.xlu0 %5951, %v5598
          %v5953 = vpop.permute.xlu0 %5952
          %5956 = vset.pattern.permute.xlu0 0
          %5957 = vperm.xlu0 %5956, %v5599
          %v5958 = vpop.permute.xlu0 %5957
          %5961 = vset.pattern.permute.xlu0 0
          %5962 = vperm.xlu0 %5961, %v5600
          %v5963 = vpop.permute.xlu0 %5962
          %5966 = vset.pattern.permute.xlu0 0
          %5967 = vperm.xlu0 %5966, %v5601
          %v5968 = vpop.permute.xlu0 %5967
          %5971 = vset.pattern.permute.xlu0 0
          %5972 = vperm.xlu0 %5971, %v5602
          %v5973 = vpop.permute.xlu0 %5972
          %5976 = vset.pattern.permute.xlu0 0
          %5977 = vperm.xlu0 %5976, %v5603
          %v5978 = vpop.permute.xlu0 %5977
          %5981 = vset.pattern.permute.xlu0 0
          %5982 = vperm.xlu0 %5981, %v5604
          %v5983 = vpop.permute.xlu0 %5982
          %5986 = vset.pattern.permute.xlu0 0
          %5987 = vperm.xlu0 %5986, %v5605
          %v5988 = vpop.permute.xlu0 %5987
          %v5990 = vmul.f32 %v5606, %v5673
          %v5991 = vmul.f32 %v5607, %v5678
          %v5992 = vmul.f32 %v5608, %v5683
          %v5993 = vmul.f32 %v5609, %v5688
          %v5994 = vmul.f32 %v5610, %v5693
          %v5995 = vmul.f32 %v5611, %v5698
          %v5996 = vmul.f32 %v5612, %v5703
          %v5997 = vmul.f32 %v5613, %v5708
          %v5998 = vmul.f32 %v5614, %v5713
          %v5999 = vmul.f32 %v5615, %v5718
          %v6000 = vmul.f32 %v5616, %v5723
          %v6001 = vmul.f32 %v5617, %v5728
          %v6002 = vmul.f32 %v5618, %v5733
          %v6003 = vmul.f32 %v5619, %v5738
          %v6004 = vmul.f32 %v5620, %v5743
          %v6005 = vmul.f32 %v5621, %v5748
          %v6006 = vmul.f32 %v5622, %v5753
          %v6007 = vmul.f32 %v5623, %v5758
          %v6008 = vmul.f32 %v5624, %v5763
          %v6009 = vmul.f32 %v5625, %v5768
          %v6010 = vmul.f32 %v5626, %v5773
          %v6011 = vmul.f32 %v5627, %v5778
          %v6012 = vmul.f32 %v5628, %v5783
          %v6013 = vmul.f32 %v5629, %v5788
          %v6014 = vmul.f32 %v5630, %v5793
          %v6015 = vmul.f32 %v5631, %v5798
          %v6016 = vmul.f32 %v5632, %v5803
          %v6017 = vmul.f32 %v5633, %v5808
          %v6018 = vmul.f32 %v5634, %v5813
          %v6019 = vmul.f32 %v5635, %v5818
          %v6020 = vmul.f32 %v5636, %v5823
          %v6021 = vmul.f32 %v5637, %v5828
          %v6022 = vmul.f32 %v5638, %v5833
          %v6023 = vmul.f32 %v5639, %v5838
          %v6024 = vmul.f32 %v5640, %v5843
          %v6025 = vmul.f32 %v5641, %v5848
          %v6026 = vmul.f32 %v5642, %v5853
          %v6027 = vmul.f32 %v5643, %v5858
          %v6028 = vmul.f32 %v5644, %v5863
          %v6029 = vmul.f32 %v5645, %v5868
          %v6030 = vmul.f32 %v5646, %v5873
          %v6031 = vmul.f32 %v5647, %v5878
          %v6032 = vmul.f32 %v5648, %v5883
          %v6033 = vmul.f32 %v5649, %v5888
          %v6034 = vmul.f32 %v5650, %v5893
          %v6035 = vmul.f32 %v5651, %v5898
          %v6036 = vmul.f32 %v5652, %v5903
          %v6037 = vmul.f32 %v5653, %v5908
          %v6038 = vmul.f32 %v5654, %v5913
          %v6039 = vmul.f32 %v5655, %v5918
          %v6040 = vmul.f32 %v5656, %v5923
          %v6041 = vmul.f32 %v5657, %v5928
          %v6042 = vmul.f32 %v5658, %v5933
          %v6043 = vmul.f32 %v5659, %v5938
          %v6044 = vmul.f32 %v5660, %v5943
          %v6045 = vmul.f32 %v5661, %v5948
          %v6046 = vmul.f32 %v5662, %v5953
          %v6047 = vmul.f32 %v5663, %v5958
          %v6048 = vmul.f32 %v5664, %v5963
          %v6049 = vmul.f32 %v5665, %v5968
          %v6050 = vmul.f32 %v5666, %v5973
          %v6051 = vmul.f32 %v5667, %v5978
          %v6052 = vmul.f32 %v5668, %v5983
          %v6053 = vmul.f32 %v5669, %v5988
          %vm6054 = vcmask 261120
          %6055 = vst.msk [vmem:[%s1211] sm:$0xff] %vm6054, %v5990
          %6056 = vst.msk [vmem:[%s1211 + $0x8] sm:$0xff] %vm6054, %v5991
          %6057 = vst.msk [vmem:[%s1211 + $0x10] sm:$0xff] %vm6054, %v5992
          %6058 = vst.msk [vmem:[%s1211 + $0x18] sm:$0xff] %vm6054, %v5993
          %6059 = vst.msk [vmem:[%s1211 + $0x20] sm:$0xff] %vm6054, %v5994
          %6060 = vst.msk [vmem:[%s1211 + $0x28] sm:$0xff] %vm6054, %v5995
          %6061 = vst.msk [vmem:[%s1211 + $0x30] sm:$0xff] %vm6054, %v5996
          %6062 = vst.msk [vmem:[%s1211 + $0x38] sm:$0xff] %vm6054, %v5997
          %6063 = vst.msk [vmem:[%s1211 + $0x40] sm:$0xff] %vm6054, %v5998
          %6064 = vst.msk [vmem:[%s1211 + $0x48] sm:$0xff] %vm6054, %v5999
          %6065 = vst.msk [vmem:[%s1211 + $0x50] sm:$0xff] %vm6054, %v6000
          %6066 = vst.msk [vmem:[%s1211 + $0x58] sm:$0xff] %vm6054, %v6001
          %6067 = vst.msk [vmem:[%s1211 + $0x60] sm:$0xff] %vm6054, %v6002
          %6068 = vst.msk [vmem:[%s1211 + $0x68] sm:$0xff] %vm6054, %v6003
          %6069 = vst.msk [vmem:[%s1211 + $0x70] sm:$0xff] %vm6054, %v6004
          %6070 = vst.msk [vmem:[%s1211 + $0x78] sm:$0xff] %vm6054, %v6005
          %6071 = vst.msk [vmem:[%s1211 + $0x80] sm:$0xff] %vm6054, %v6006
          %6072 = vst.msk [vmem:[%s1211 + $0x88] sm:$0xff] %vm6054, %v6007
          %6073 = vst.msk [vmem:[%s1211 + $0x90] sm:$0xff] %vm6054, %v6008
          %6074 = vst.msk [vmem:[%s1211 + $0x98] sm:$0xff] %vm6054, %v6009
          %6075 = vst.msk [vmem:[%s1211 + $0xa0] sm:$0xff] %vm6054, %v6010
          %6076 = vst.msk [vmem:[%s1211 + $0xa8] sm:$0xff] %vm6054, %v6011
          %6077 = vst.msk [vmem:[%s1211 + $0xb0] sm:$0xff] %vm6054, %v6012
          %6078 = vst.msk [vmem:[%s1211 + $0xb8] sm:$0xff] %vm6054, %v6013
          %6079 = vst.msk [vmem:[%s1211 + $0xc0] sm:$0xff] %vm6054, %v6014
          %6080 = vst.msk [vmem:[%s1211 + $0xc8] sm:$0xff] %vm6054, %v6015
          %6081 = vst.msk [vmem:[%s1211 + $0xd0] sm:$0xff] %vm6054, %v6016
          %6082 = vst.msk [vmem:[%s1211 + $0xd8] sm:$0xff] %vm6054, %v6017
          %6083 = vst.msk [vmem:[%s1211 + $0xe0] sm:$0xff] %vm6054, %v6018
          %6084 = vst.msk [vmem:[%s1211 + $0xe8] sm:$0xff] %vm6054, %v6019
          %6085 = vst.msk [vmem:[%s1211 + $0xf0] sm:$0xff] %vm6054, %v6020
          %6086 = vst.msk [vmem:[%s1211 + $0xf8] sm:$0xff] %vm6054, %v6021
          %6087 = vst.msk [vmem:[%s1211 + $0x100] sm:$0xff] %vm6054, %v6022
          %6088 = vst.msk [vmem:[%s1211 + $0x108] sm:$0xff] %vm6054, %v6023
          %6089 = vst.msk [vmem:[%s1211 + $0x110] sm:$0xff] %vm6054, %v6024
          %6090 = vst.msk [vmem:[%s1211 + $0x118] sm:$0xff] %vm6054, %v6025
          %6091 = vst.msk [vmem:[%s1211 + $0x120] sm:$0xff] %vm6054, %v6026
          %6092 = vst.msk [vmem:[%s1211 + $0x128] sm:$0xff] %vm6054, %v6027
          %6093 = vst.msk [vmem:[%s1211 + $0x130] sm:$0xff] %vm6054, %v6028
          %6094 = vst.msk [vmem:[%s1211 + $0x138] sm:$0xff] %vm6054, %v6029
          %6095 = vst.msk [vmem:[%s1211 + $0x140] sm:$0xff] %vm6054, %v6030
          %6096 = vst.msk [vmem:[%s1211 + $0x148] sm:$0xff] %vm6054, %v6031
          %6097 = vst.msk [vmem:[%s1211 + $0x150] sm:$0xff] %vm6054, %v6032
          %6098 = vst.msk [vmem:[%s1211 + $0x158] sm:$0xff] %vm6054, %v6033
          %6099 = vst.msk [vmem:[%s1211 + $0x160] sm:$0xff] %vm6054, %v6034
          %6100 = vst.msk [vmem:[%s1211 + $0x168] sm:$0xff] %vm6054, %v6035
          %6101 = vst.msk [vmem:[%s1211 + $0x170] sm:$0xff] %vm6054, %v6036
          %6102 = vst.msk [vmem:[%s1211 + $0x178] sm:$0xff] %vm6054, %v6037
          %6103 = vst.msk [vmem:[%s1211 + $0x180] sm:$0xff] %vm6054, %v6038
          %6104 = vst.msk [vmem:[%s1211 + $0x188] sm:$0xff] %vm6054, %v6039
          %6105 = vst.msk [vmem:[%s1211 + $0x190] sm:$0xff] %vm6054, %v6040
          %6106 = vst.msk [vmem:[%s1211 + $0x198] sm:$0xff] %vm6054, %v6041
          %6107 = vst.msk [vmem:[%s1211 + $0x1a0] sm:$0xff] %vm6054, %v6042
          %6108 = vst.msk [vmem:[%s1211 + $0x1a8] sm:$0xff] %vm6054, %v6043
          %6109 = vst.msk [vmem:[%s1211 + $0x1b0] sm:$0xff] %vm6054, %v6044
          %6110 = vst.msk [vmem:[%s1211 + $0x1b8] sm:$0xff] %vm6054, %v6045
          %6111 = vst.msk [vmem:[%s1211 + $0x1c0] sm:$0xff] %vm6054, %v6046
          %6112 = vst.msk [vmem:[%s1211 + $0x1c8] sm:$0xff] %vm6054, %v6047
          %6113 = vst.msk [vmem:[%s1211 + $0x1d0] sm:$0xff] %vm6054, %v6048
          %6114 = vst.msk [vmem:[%s1211 + $0x1d8] sm:$0xff] %vm6054, %v6049
          %6115 = vst.msk [vmem:[%s1211 + $0x1e0] sm:$0xff] %vm6054, %v6050
          %6116 = vst.msk [vmem:[%s1211 + $0x1e8] sm:$0xff] %vm6054, %v6051
          %6117 = vst.msk [vmem:[%s1211 + $0x1f0] sm:$0xff] %vm6054, %v6052
          %6118 = vst.msk [vmem:[%s1211 + $0x1f8] sm:$0xff] %vm6054, %v6053
        $region170: #{tpu_custom_call.1} parent=141 // pred_fallthru
          _
        %s6119 = sand.u32 %s194, 1
        %s6120 = sand.u32 %s194, 1
        %s6121 = smul.addr %s6120, 512
        %s6122 = scalar_lea.vmem [#allocation10], %s6121
        // Predicated region
        $region171: #{tpu_custom_call.1} parent=141 // pred_check
          %p6123 = pneg %p204
        $region172: #{tpu_custom_call.1} parent=141 // pred_check_branch
          %6125 = sbr.rel (%p6123) target = $region174
        $region173: #{tpu_custom_call.1} parent=141 // pred_region
          %s6126 = smul.u32 4, %s24
          %s6127 = smul.u32 16, %s25
          %s6128 = smul.addr %s6126, 32
          %s6129 = sadd.s32 %s6127, %s6128
          %s6130 = smul.addr %s23, 128
          %s6131 = sadd.s32 %s6129, %s6130
          %s6132 = smul.addr %s6131, 8
          %s6133 = scalar_lea.vmem %s5, %s6132
          // Predicated region
          $region175: #{tpu_custom_call.1} parent=173 // pred_check
            _
          $region176: #{tpu_custom_call.1} parent=173 // pred_check_branch
            %6135 = sbr.rel (0) target = $region178
          $region177: #{tpu_custom_call.1} parent=173 // pred_region
            // Predicated region
            $region179: #{tpu_custom_call.1} parent=177 // pred_check
              _
            $region180: #{tpu_custom_call.1} parent=177 // pred_check_branch
              %6137 = sbr.rel (0) target = $region182
            $region181: #{tpu_custom_call.1} parent=177 // pred_region
              // Predicated region
              $region194: #{tpu_custom_call.1} parent=181 // pred_check
                _
              $region195: #{tpu_custom_call.1} parent=181 // pred_check_branch
                %6278 = sbr.rel (0) target = $region197
              $region196: #{tpu_custom_call.1} parent=181 // pred_region
                loop: start=0, step=1, limit=1
                $region198: #{tpu_custom_call.1} parent=196 // loop_pre_header
                  _
                $region199: #{tpu_custom_call.1} parent=196 // loop_header
                  %s6280 = sphi 0, %s6284
                  %p6281 = scmp.ge.s32.totalorder %s6280, 1
                  %s6285 = sphi %s6122, %s6122
                  %s6286 = sphi %s6133, %s6133
                $region200: #{tpu_custom_call.1} parent=196 // loop_header_branch
                  %6283 = sbr.rel (%p6281) target = $region204
                $region201: #{tpu_custom_call.1} parent=196 // loop_body
                  %v6287 = vld [vmem:[%s6285] sm:$0xff]
                  %6288 = vst [vmem:[%s6286] sm:$0xff] %v6287
                  %v6289 = vld [vmem:[%s6285 + $0x8] sm:$0xff]
                  %6290 = vst [vmem:[%s6286 + $0x8] sm:$0xff] %v6289
                  %v6291 = vld [vmem:[%s6285 + $0x10] sm:$0xff]
                  %6292 = vst [vmem:[%s6286 + $0x10] sm:$0xff] %v6291
                  %v6293 = vld [vmem:[%s6285 + $0x18] sm:$0xff]
                  %6294 = vst [vmem:[%s6286 + $0x18] sm:$0xff] %v6293
                  %v6295 = vld [vmem:[%s6285 + $0x20] sm:$0xff]
                  %6296 = vst [vmem:[%s6286 + $0x20] sm:$0xff] %v6295
                  %v6297 = vld [vmem:[%s6285 + $0x28] sm:$0xff]
                  %6298 = vst [vmem:[%s6286 + $0x28] sm:$0xff] %v6297
                  %v6299 = vld [vmem:[%s6285 + $0x30] sm:$0xff]
                  %6300 = vst [vmem:[%s6286 + $0x30] sm:$0xff] %v6299
                  %v6301 = vld [vmem:[%s6285 + $0x38] sm:$0xff]
                  %6302 = vst [vmem:[%s6286 + $0x38] sm:$0xff] %v6301
                  %v6303 = vld [vmem:[%s6285 + $0x40] sm:$0xff]
                  %6304 = vst [vmem:[%s6286 + $0x40] sm:$0xff] %v6303
                  %v6305 = vld [vmem:[%s6285 + $0x48] sm:$0xff]
                  %6306 = vst [vmem:[%s6286 + $0x48] sm:$0xff] %v6305
                  %v6307 = vld [vmem:[%s6285 + $0x50] sm:$0xff]
                  %6308 = vst [vmem:[%s6286 + $0x50] sm:$0xff] %v6307
                  %v6309 = vld [vmem:[%s6285 + $0x58] sm:$0xff]
                  %6310 = vst [vmem:[%s6286 + $0x58] sm:$0xff] %v6309
                  %v6311 = vld [vmem:[%s6285 + $0x60] sm:$0xff]
                  %6312 = vst [vmem:[%s6286 + $0x60] sm:$0xff] %v6311
                  %v6313 = vld [vmem:[%s6285 + $0x68] sm:$0xff]
                  %6314 = vst [vmem:[%s6286 + $0x68] sm:$0xff] %v6313
                  %v6315 = vld [vmem:[%s6285 + $0x70] sm:$0xff]
                  %6316 = vst [vmem:[%s6286 + $0x70] sm:$0xff] %v6315
                  %v6317 = vld [vmem:[%s6285 + $0x78] sm:$0xff]
                  %6318 = vst [vmem:[%s6286 + $0x78] sm:$0xff] %v6317
                  %v6319 = vld [vmem:[%s6285 + $0x80] sm:$0xff]
                  %6320 = vst [vmem:[%s6286 + $0x100] sm:$0xff] %v6319
                  %v6321 = vld [vmem:[%s6285 + $0x88] sm:$0xff]
                  %6322 = vst [vmem:[%s6286 + $0x108] sm:$0xff] %v6321
                  %v6323 = vld [vmem:[%s6285 + $0x90] sm:$0xff]
                  %6324 = vst [vmem:[%s6286 + $0x110] sm:$0xff] %v6323
                  %v6325 = vld [vmem:[%s6285 + $0x98] sm:$0xff]
                  %6326 = vst [vmem:[%s6286 + $0x118] sm:$0xff] %v6325
                  %v6327 = vld [vmem:[%s6285 + $0xa0] sm:$0xff]
                  %6328 = vst [vmem:[%s6286 + $0x120] sm:$0xff] %v6327
                  %v6329 = vld [vmem:[%s6285 + $0xa8] sm:$0xff]
                  %6330 = vst [vmem:[%s6286 + $0x128] sm:$0xff] %v6329
                  %v6331 = vld [vmem:[%s6285 + $0xb0] sm:$0xff]
                  %6332 = vst [vmem:[%s6286 + $0x130] sm:$0xff] %v6331
                  %v6333 = vld [vmem:[%s6285 + $0xb8] sm:$0xff]
                  %6334 = vst [vmem:[%s6286 + $0x138] sm:$0xff] %v6333
                  %v6335 = vld [vmem:[%s6285 + $0xc0] sm:$0xff]
                  %6336 = vst [vmem:[%s6286 + $0x140] sm:$0xff] %v6335
                  %v6337 = vld [vmem:[%s6285 + $0xc8] sm:$0xff]
                  %6338 = vst [vmem:[%s6286 + $0x148] sm:$0xff] %v6337
                  %v6339 = vld [vmem:[%s6285 + $0xd0] sm:$0xff]
                  %6340 = vst [vmem:[%s6286 + $0x150] sm:$0xff] %v6339
                  %v6341 = vld [vmem:[%s6285 + $0xd8] sm:$0xff]
                  %6342 = vst [vmem:[%s6286 + $0x158] sm:$0xff] %v6341
                  %v6343 = vld [vmem:[%s6285 + $0xe0] sm:$0xff]
                  %6344 = vst [vmem:[%s6286 + $0x160] sm:$0xff] %v6343
                  %v6345 = vld [vmem:[%s6285 + $0xe8] sm:$0xff]
                  %6346 = vst [vmem:[%s6286 + $0x168] sm:$0xff] %v6345
                  %v6347 = vld [vmem:[%s6285 + $0xf0] sm:$0xff]
                  %6348 = vst [vmem:[%s6286 + $0x170] sm:$0xff] %v6347
                  %v6349 = vld [vmem:[%s6285 + $0xf8] sm:$0xff]
                  %6350 = vst [vmem:[%s6286 + $0x178] sm:$0xff] %v6349
                  %v6351 = vld [vmem:[%s6285 + $0x100] sm:$0xff]
                  %6352 = vst [vmem:[%s6286 + $0x200] sm:$0xff] %v6351
                  %v6353 = vld [vmem:[%s6285 + $0x108] sm:$0xff]
                  %6354 = vst [vmem:[%s6286 + $0x208] sm:$0xff] %v6353
                  %v6355 = vld [vmem:[%s6285 + $0x110] sm:$0xff]
                  %6356 = vst [vmem:[%s6286 + $0x210] sm:$0xff] %v6355
                  %v6357 = vld [vmem:[%s6285 + $0x118] sm:$0xff]
                  %6358 = vst [vmem:[%s6286 + $0x218] sm:$0xff] %v6357
                  %v6359 = vld [vmem:[%s6285 + $0x120] sm:$0xff]
                  %6360 = vst [vmem:[%s6286 + $0x220] sm:$0xff] %v6359
                  %v6361 = vld [vmem:[%s6285 + $0x128] sm:$0xff]
                  %6362 = vst [vmem:[%s6286 + $0x228] sm:$0xff] %v6361
                  %v6363 = vld [vmem:[%s6285 + $0x130] sm:$0xff]
                  %6364 = vst [vmem:[%s6286 + $0x230] sm:$0xff] %v6363
                  %v6365 = vld [vmem:[%s6285 + $0x138] sm:$0xff]
                  %6366 = vst [vmem:[%s6286 + $0x238] sm:$0xff] %v6365
                  %v6367 = vld [vmem:[%s6285 + $0x140] sm:$0xff]
                  %6368 = vst [vmem:[%s6286 + $0x240] sm:$0xff] %v6367
                  %v6369 = vld [vmem:[%s6285 + $0x148] sm:$0xff]
                  %6370 = vst [vmem:[%s6286 + $0x248] sm:$0xff] %v6369
                  %v6371 = vld [vmem:[%s6285 + $0x150] sm:$0xff]
                  %6372 = vst [vmem:[%s6286 + $0x250] sm:$0xff] %v6371
                  %v6373 = vld [vmem:[%s6285 + $0x158] sm:$0xff]
                  %6374 = vst [vmem:[%s6286 + $0x258] sm:$0xff] %v6373
                  %v6375 = vld [vmem:[%s6285 + $0x160] sm:$0xff]
                  %6376 = vst [vmem:[%s6286 + $0x260] sm:$0xff] %v6375
                  %v6377 = vld [vmem:[%s6285 + $0x168] sm:$0xff]
                  %6378 = vst [vmem:[%s6286 + $0x268] sm:$0xff] %v6377
                  %v6379 = vld [vmem:[%s6285 + $0x170] sm:$0xff]
                  %6380 = vst [vmem:[%s6286 + $0x270] sm:$0xff] %v6379
                  %v6381 = vld [vmem:[%s6285 + $0x178] sm:$0xff]
                  %6382 = vst [vmem:[%s6286 + $0x278] sm:$0xff] %v6381
                  %v6383 = vld [vmem:[%s6285 + $0x180] sm:$0xff]
                  %6384 = vst [vmem:[%s6286 + $0x300] sm:$0xff] %v6383
                  %v6385 = vld [vmem:[%s6285 + $0x188] sm:$0xff]
                  %6386 = vst [vmem:[%s6286 + $0x308] sm:$0xff] %v6385
                  %v6387 = vld [vmem:[%s6285 + $0x190] sm:$0xff]
                  %6388 = vst [vmem:[%s6286 + $0x310] sm:$0xff] %v6387
                  %v6389 = vld [vmem:[%s6285 + $0x198] sm:$0xff]
                  %6390 = vst [vmem:[%s6286 + $0x318] sm:$0xff] %v6389
                  %v6391 = vld [vmem:[%s6285 + $0x1a0] sm:$0xff]
                  %6392 = vst [vmem:[%s6286 + $0x320] sm:$0xff] %v6391
                  %v6393 = vld [vmem:[%s6285 + $0x1a8] sm:$0xff]
                  %6394 = vst [vmem:[%s6286 + $0x328] sm:$0xff] %v6393
                  %v6395 = vld [vmem:[%s6285 + $0x1b0] sm:$0xff]
                  %6396 = vst [vmem:[%s6286 + $0x330] sm:$0xff] %v6395
                  %v6397 = vld [vmem:[%s6285 + $0x1b8] sm:$0xff]
                  %6398 = vst [vmem:[%s6286 + $0x338] sm:$0xff] %v6397
                  %v6399 = vld [vmem:[%s6285 + $0x1c0] sm:$0xff]
                  %6400 = vst [vmem:[%s6286 + $0x340] sm:$0xff] %v6399
                  %v6401 = vld [vmem:[%s6285 + $0x1c8] sm:$0xff]
                  %6402 = vst [vmem:[%s6286 + $0x348] sm:$0xff] %v6401
                  %v6403 = vld [vmem:[%s6285 + $0x1d0] sm:$0xff]
                  %6404 = vst [vmem:[%s6286 + $0x350] sm:$0xff] %v6403
                  %v6405 = vld [vmem:[%s6285 + $0x1d8] sm:$0xff]
                  %6406 = vst [vmem:[%s6286 + $0x358] sm:$0xff] %v6405
                  %v6407 = vld [vmem:[%s6285 + $0x1e0] sm:$0xff]
                  %6408 = vst [vmem:[%s6286 + $0x360] sm:$0xff] %v6407
                  %v6409 = vld [vmem:[%s6285 + $0x1e8] sm:$0xff]
                  %6410 = vst [vmem:[%s6286 + $0x368] sm:$0xff] %v6409
                  %v6411 = vld [vmem:[%s6285 + $0x1f0] sm:$0xff]
                  %6412 = vst [vmem:[%s6286 + $0x370] sm:$0xff] %v6411
                  %v6413 = vld [vmem:[%s6285 + $0x1f8] sm:$0xff]
                  %6414 = vst [vmem:[%s6286 + $0x378] sm:$0xff] %v6413
                $region202: #{tpu_custom_call.1} parent=196 // loop_footer
                  %s6284 = sadd.s32 1, %s6280
                $region203: #{tpu_custom_call.1} parent=196 // loop_footer_branch
                  %6279 = sbr.rel target = $region199
                $region204: #{tpu_custom_call.1} parent=196 // loop_exit
                  _
              $region197: #{tpu_custom_call.1} parent=181 // pred_fallthru
                _
              // Predicated region
              $region205: #{tpu_custom_call.1} parent=181 // pred_check
                _
              $region206: #{tpu_custom_call.1} parent=181 // pred_check_branch
                %6416 = sbr.rel target = $region208
              $region207: #{tpu_custom_call.1} parent=181 // pred_region
                _
              $region208: #{tpu_custom_call.1} parent=181 // pred_fallthru
                _
            $region182: #{tpu_custom_call.1} parent=177 // pred_fallthru
              _
            // Predicated region
            $region183: #{tpu_custom_call.1} parent=177 // pred_check
              _
            $region184: #{tpu_custom_call.1} parent=177 // pred_check_branch
              %6139 = sbr.rel target = $region186
            $region185: #{tpu_custom_call.1} parent=177 // pred_region
              loop: start=0, step=1, limit=1
              $region187: #{tpu_custom_call.1} parent=185 // loop_pre_header
                _
              $region188: #{tpu_custom_call.1} parent=185 // loop_header
                %s6142 = sphi 0, %s6146
                %p6143 = scmp.ge.s32.totalorder %s6142, 1
                %s6147 = sphi %s6122, %s6122
                %s6148 = sphi %s6133, %s6133
              $region189: #{tpu_custom_call.1} parent=185 // loop_header_branch
                %6145 = sbr.rel (%p6143) target = $region193
              $region190: #{tpu_custom_call.1} parent=185 // loop_body
                %v6149 = vld [vmem:[%s6147] sm:$0xff]
                %6150 = vst [vmem:[%s6148] sm:$0xff] %v6149
                %v6151 = vld [vmem:[%s6147 + $0x8] sm:$0xff]
                %6152 = vst [vmem:[%s6148 + $0x8] sm:$0xff] %v6151
                %v6153 = vld [vmem:[%s6147 + $0x10] sm:$0xff]
                %6154 = vst [vmem:[%s6148 + $0x10] sm:$0xff] %v6153
                %v6155 = vld [vmem:[%s6147 + $0x18] sm:$0xff]
                %6156 = vst [vmem:[%s6148 + $0x18] sm:$0xff] %v6155
                %v6157 = vld [vmem:[%s6147 + $0x20] sm:$0xff]
                %6158 = vst [vmem:[%s6148 + $0x20] sm:$0xff] %v6157
                %v6159 = vld [vmem:[%s6147 + $0x28] sm:$0xff]
                %6160 = vst [vmem:[%s6148 + $0x28] sm:$0xff] %v6159
                %v6161 = vld [vmem:[%s6147 + $0x30] sm:$0xff]
                %6162 = vst [vmem:[%s6148 + $0x30] sm:$0xff] %v6161
                %v6163 = vld [vmem:[%s6147 + $0x38] sm:$0xff]
                %6164 = vst [vmem:[%s6148 + $0x38] sm:$0xff] %v6163
                %v6165 = vld [vmem:[%s6147 + $0x40] sm:$0xff]
                %6166 = vst [vmem:[%s6148 + $0x40] sm:$0xff] %v6165
                %v6167 = vld [vmem:[%s6147 + $0x48] sm:$0xff]
                %6168 = vst [vmem:[%s6148 + $0x48] sm:$0xff] %v6167
                %v6169 = vld [vmem:[%s6147 + $0x50] sm:$0xff]
                %6170 = vst [vmem:[%s6148 + $0x50] sm:$0xff] %v6169
                %v6171 = vld [vmem:[%s6147 + $0x58] sm:$0xff]
                %6172 = vst [vmem:[%s6148 + $0x58] sm:$0xff] %v6171
                %v6173 = vld [vmem:[%s6147 + $0x60] sm:$0xff]
                %6174 = vst [vmem:[%s6148 + $0x60] sm:$0xff] %v6173
                %v6175 = vld [vmem:[%s6147 + $0x68] sm:$0xff]
                %6176 = vst [vmem:[%s6148 + $0x68] sm:$0xff] %v6175
                %v6177 = vld [vmem:[%s6147 + $0x70] sm:$0xff]
                %6178 = vst [vmem:[%s6148 + $0x70] sm:$0xff] %v6177
                %v6179 = vld [vmem:[%s6147 + $0x78] sm:$0xff]
                %6180 = vst [vmem:[%s6148 + $0x78] sm:$0xff] %v6179
                %v6181 = vld [vmem:[%s6147 + $0x80] sm:$0xff]
                %6182 = vst [vmem:[%s6148 + $0x100] sm:$0xff] %v6181
                %v6183 = vld [vmem:[%s6147 + $0x88] sm:$0xff]
                %6184 = vst [vmem:[%s6148 + $0x108] sm:$0xff] %v6183
                %v6185 = vld [vmem:[%s6147 + $0x90] sm:$0xff]
                %6186 = vst [vmem:[%s6148 + $0x110] sm:$0xff] %v6185
                %v6187 = vld [vmem:[%s6147 + $0x98] sm:$0xff]
                %6188 = vst [vmem:[%s6148 + $0x118] sm:$0xff] %v6187
                %v6189 = vld [vmem:[%s6147 + $0xa0] sm:$0xff]
                %6190 = vst [vmem:[%s6148 + $0x120] sm:$0xff] %v6189
                %v6191 = vld [vmem:[%s6147 + $0xa8] sm:$0xff]
                %6192 = vst [vmem:[%s6148 + $0x128] sm:$0xff] %v6191
                %v6193 = vld [vmem:[%s6147 + $0xb0] sm:$0xff]
                %6194 = vst [vmem:[%s6148 + $0x130] sm:$0xff] %v6193
                %v6195 = vld [vmem:[%s6147 + $0xb8] sm:$0xff]
                %6196 = vst [vmem:[%s6148 + $0x138] sm:$0xff] %v6195
                %v6197 = vld [vmem:[%s6147 + $0xc0] sm:$0xff]
                %6198 = vst [vmem:[%s6148 + $0x140] sm:$0xff] %v6197
                %v6199 = vld [vmem:[%s6147 + $0xc8] sm:$0xff]
                %6200 = vst [vmem:[%s6148 + $0x148] sm:$0xff] %v6199
                %v6201 = vld [vmem:[%s6147 + $0xd0] sm:$0xff]
                %6202 = vst [vmem:[%s6148 + $0x150] sm:$0xff] %v6201
                %v6203 = vld [vmem:[%s6147 + $0xd8] sm:$0xff]
                %6204 = vst [vmem:[%s6148 + $0x158] sm:$0xff] %v6203
                %v6205 = vld [vmem:[%s6147 + $0xe0] sm:$0xff]
                %6206 = vst [vmem:[%s6148 + $0x160] sm:$0xff] %v6205
                %v6207 = vld [vmem:[%s6147 + $0xe8] sm:$0xff]
                %6208 = vst [vmem:[%s6148 + $0x168] sm:$0xff] %v6207
                %v6209 = vld [vmem:[%s6147 + $0xf0] sm:$0xff]
                %6210 = vst [vmem:[%s6148 + $0x170] sm:$0xff] %v6209
                %v6211 = vld [vmem:[%s6147 + $0xf8] sm:$0xff]
                %6212 = vst [vmem:[%s6148 + $0x178] sm:$0xff] %v6211
                %v6213 = vld [vmem:[%s6147 + $0x100] sm:$0xff]
                %6214 = vst [vmem:[%s6148 + $0x200] sm:$0xff] %v6213
                %v6215 = vld [vmem:[%s6147 + $0x108] sm:$0xff]
                %6216 = vst [vmem:[%s6148 + $0x208] sm:$0xff] %v6215
                %v6217 = vld [vmem:[%s6147 + $0x110] sm:$0xff]
                %6218 = vst [vmem:[%s6148 + $0x210] sm:$0xff] %v6217
                %v6219 = vld [vmem:[%s6147 + $0x118] sm:$0xff]
                %6220 = vst [vmem:[%s6148 + $0x218] sm:$0xff] %v6219
                %v6221 = vld [vmem:[%s6147 + $0x120] sm:$0xff]
                %6222 = vst [vmem:[%s6148 + $0x220] sm:$0xff] %v6221
                %v6223 = vld [vmem:[%s6147 + $0x128] sm:$0xff]
                %6224 = vst [vmem:[%s6148 + $0x228] sm:$0xff] %v6223
                %v6225 = vld [vmem:[%s6147 + $0x130] sm:$0xff]
                %6226 = vst [vmem:[%s6148 + $0x230] sm:$0xff] %v6225
                %v6227 = vld [vmem:[%s6147 + $0x138] sm:$0xff]
                %6228 = vst [vmem:[%s6148 + $0x238] sm:$0xff] %v6227
                %v6229 = vld [vmem:[%s6147 + $0x140] sm:$0xff]
                %6230 = vst [vmem:[%s6148 + $0x240] sm:$0xff] %v6229
                %v6231 = vld [vmem:[%s6147 + $0x148] sm:$0xff]
                %6232 = vst [vmem:[%s6148 + $0x248] sm:$0xff] %v6231
                %v6233 = vld [vmem:[%s6147 + $0x150] sm:$0xff]
                %6234 = vst [vmem:[%s6148 + $0x250] sm:$0xff] %v6233
                %v6235 = vld [vmem:[%s6147 + $0x158] sm:$0xff]
                %6236 = vst [vmem:[%s6148 + $0x258] sm:$0xff] %v6235
                %v6237 = vld [vmem:[%s6147 + $0x160] sm:$0xff]
                %6238 = vst [vmem:[%s6148 + $0x260] sm:$0xff] %v6237
                %v6239 = vld [vmem:[%s6147 + $0x168] sm:$0xff]
                %6240 = vst [vmem:[%s6148 + $0x268] sm:$0xff] %v6239
                %v6241 = vld [vmem:[%s6147 + $0x170] sm:$0xff]
                %6242 = vst [vmem:[%s6148 + $0x270] sm:$0xff] %v6241
                %v6243 = vld [vmem:[%s6147 + $0x178] sm:$0xff]
                %6244 = vst [vmem:[%s6148 + $0x278] sm:$0xff] %v6243
                %v6245 = vld [vmem:[%s6147 + $0x180] sm:$0xff]
                %6246 = vst [vmem:[%s6148 + $0x300] sm:$0xff] %v6245
                %v6247 = vld [vmem:[%s6147 + $0x188] sm:$0xff]
                %6248 = vst [vmem:[%s6148 + $0x308] sm:$0xff] %v6247
                %v6249 = vld [vmem:[%s6147 + $0x190] sm:$0xff]
                %6250 = vst [vmem:[%s6148 + $0x310] sm:$0xff] %v6249
                %v6251 = vld [vmem:[%s6147 + $0x198] sm:$0xff]
                %6252 = vst [vmem:[%s6148 + $0x318] sm:$0xff] %v6251
                %v6253 = vld [vmem:[%s6147 + $0x1a0] sm:$0xff]
                %6254 = vst [vmem:[%s6148 + $0x320] sm:$0xff] %v6253
                %v6255 = vld [vmem:[%s6147 + $0x1a8] sm:$0xff]
                %6256 = vst [vmem:[%s6148 + $0x328] sm:$0xff] %v6255
                %v6257 = vld [vmem:[%s6147 + $0x1b0] sm:$0xff]
                %6258 = vst [vmem:[%s6148 + $0x330] sm:$0xff] %v6257
                %v6259 = vld [vmem:[%s6147 + $0x1b8] sm:$0xff]
                %6260 = vst [vmem:[%s6148 + $0x338] sm:$0xff] %v6259
                %v6261 = vld [vmem:[%s6147 + $0x1c0] sm:$0xff]
                %6262 = vst [vmem:[%s6148 + $0x340] sm:$0xff] %v6261
                %v6263 = vld [vmem:[%s6147 + $0x1c8] sm:$0xff]
                %6264 = vst [vmem:[%s6148 + $0x348] sm:$0xff] %v6263
                %v6265 = vld [vmem:[%s6147 + $0x1d0] sm:$0xff]
                %6266 = vst [vmem:[%s6148 + $0x350] sm:$0xff] %v6265
                %v6267 = vld [vmem:[%s6147 + $0x1d8] sm:$0xff]
                %6268 = vst [vmem:[%s6148 + $0x358] sm:$0xff] %v6267
                %v6269 = vld [vmem:[%s6147 + $0x1e0] sm:$0xff]
                %6270 = vst [vmem:[%s6148 + $0x360] sm:$0xff] %v6269
                %v6271 = vld [vmem:[%s6147 + $0x1e8] sm:$0xff]
                %6272 = vst [vmem:[%s6148 + $0x368] sm:$0xff] %v6271
                %v6273 = vld [vmem:[%s6147 + $0x1f0] sm:$0xff]
                %6274 = vst [vmem:[%s6148 + $0x370] sm:$0xff] %v6273
                %v6275 = vld [vmem:[%s6147 + $0x1f8] sm:$0xff]
                %6276 = vst [vmem:[%s6148 + $0x378] sm:$0xff] %v6275
              $region191: #{tpu_custom_call.1} parent=185 // loop_footer
                %s6146 = sadd.s32 1, %s6142
              $region192: #{tpu_custom_call.1} parent=185 // loop_footer_branch
                %6141 = sbr.rel target = $region188
              $region193: #{tpu_custom_call.1} parent=185 // loop_exit
                _
            $region186: #{tpu_custom_call.1} parent=177 // pred_fallthru
              _
          $region178: #{tpu_custom_call.1} parent=173 // pred_fallthru
            _
          %6417 = vnop
        $region174: #{tpu_custom_call.1} parent=141 // pred_fallthru
          _
      $region142: #{tpu_custom_call.1} parent=5 // pred_fallthru
        _
      %p6418 = scmp.le.s32.totalorder 2, %s12
      // Predicated region
      $region209: #{tpu_custom_call.1} parent=5 // pred_check
        %p6419 = pneg %p6418
      $region210: #{tpu_custom_call.1} parent=5 // pred_check_branch
        %6421 = sbr.rel (%p6419) target = $region212
      $region211: #{tpu_custom_call.1} parent=5 // pred_region
        %s6422 = ssub.s32 %s12, 2
        // Predicated region
        $region213: #{tpu_custom_call.1} parent=211 // pred_check
          %p6423 = pneg %p210
        $region214: #{tpu_custom_call.1} parent=211 // pred_check_branch
          %6425 = sbr.rel (%p6423) target = $region216
        $region215: #{tpu_custom_call.1} parent=211 // pred_region
          %s6426 = sand.u32 %s195, 1
          %s6427 = sand.u32 %s195, 1
          %s6428 = smul.addr %s6427, 512
          %s6429 = scalar_lea.vmem [#allocation10], %s6428
        $region216: #{tpu_custom_call.1} parent=211 // pred_fallthru
          _
      $region212: #{tpu_custom_call.1} parent=5 // pred_fallthru
        _
    $region6: #{tpu_custom_call.1} parent=1 // loop_footer
      %s16 = sadd.s32 1, %s12
    $region7: #{tpu_custom_call.1} parent=1 // loop_footer_branch
      %11 = sbr.rel target = $region3
    $region8: #{tpu_custom_call.1} parent=1 // loop_exit
      _
    %6430 = vsyncpa [#allocation6], 1
    %s6431 = scalar_lea.sflag [#allocation6], 1
    %6432 = vsyncpa %s6431, 1

</llo_original>
